<compile_context>
chip_gen: v7x
topology: tpu7x:2x2x1
jax: 0.10.0
libtpu: 0.0.40
codegen_flags: <defaults>
</compile_context>

<pallas_src>
import functools

import numpy as np

import jax
import jax.numpy as jnp
from jax.experimental import pallas as pl
from jax.experimental.pallas import tpu as pltpu

_LANE = 128
_MIDP = 128                       # padded mid (cout//2) channel width
_VMEM_LIMIT = 32 * 1024 * 1024    # safe on v7x (64 MiB physical); tiny footprint here


def _ceil_to(x, m):
    return (x + m - 1) // m * m


# ---------------------------- fused Pallas kernel ----------------------------

def _front_kernel(*refs, Ho, Wo, Cs, has_l0):
    it = iter(refs)
    x_ref = next(it)
    wst_ref, sst_ref, bst_ref = next(it), next(it), next(it)

    def take_block(with_l0):
        d = {}
        if with_l0:
            d["wl0"], d["bl0"] = next(it), next(it)
        for l in ("1", "2", "3"):
            d["wl" + l], d["sl" + l], d["bl" + l] = next(it), next(it), next(it)
        return d

    r1 = take_block(has_l0[0])
    r2 = take_block(has_l0[1])
    r3 = take_block(has_l0[2])
    o_ref = next(it)
    pstem_ref, p3_ref, pool_ref, res_ref = next(it), next(it), next(it), next(it)

    HW = Ho * Wo
    Hq, Wq = Ho // 2, Wo // 2
    f32 = jnp.float32
    bf16 = jnp.bfloat16

    # ---- stem: 7x7/s2 conv + BN + ReLU, as a 4-row-tap stride-1 conv on the
    # space-to-depth input (column taps pre-gathered along lanes by the
    # wrapper).  Only the halo rows of the scratch are zeroed each step.
    kst = 4 * Cs
    top = 2 * Wo
    pstem_ref[0:top, :] = jnp.zeros((top, kst), bf16)
    pstem_ref[top:top + HW, :] = x_ref[...]
    pstem_ref[top + HW:top + HW + Wo, :] = jnp.zeros((Wo, kst), bf16)

    acc = jnp.zeros((HW, _LANE), f32)
    for p in range(4):                                     # 4 row taps, K = 128
        start = top + (p - 2) * Wo
        acc = acc + jnp.dot(pstem_ref[start:start + HW, :], wst_ref[p],
                            preferred_element_type=f32)
    h = jnp.maximum(acc * sst_ref[...] + bst_ref[...], 0.0)      # (HW, 128) f32

    # ---- one ResidualModule, fully VMEM-resident --------------------------
    def residual(x, prm, W):
        R = x.shape[0]
        # layer0: channel-matching 1x1 conv (bias only, no BN / activation).
        if "wl0" in prm:
            r = jnp.dot(x.astype(bf16), prm["wl0"][...],
                        preferred_element_type=f32) + prm["bl0"][...]
        else:
            r = x
        cout = r.shape[-1]
        res_ref[0:R, 0:cout] = r            # spill residual; re-read after layer3

        # layer1: 1x1 conv + folded BN + ReLU.
        t = jnp.dot(r.astype(bf16), prm["wl1"][...], preferred_element_type=f32)
        t = jnp.maximum(t * prm["sl1"][...] + prm["bl1"][...], 0.0)   # (R, 128)

        # layer2: 3x3 'same' conv + BN + ReLU.  t is written once into a flat
        # zero-haloed scratch; the nine taps are shifted row slabs of it
        # (column wrap handled by cheap VPU masks).
        base = W + 1
        p3_ref[0:base, :] = jnp.zeros((base, _MIDP), bf16)
        p3_ref[base:base + R, :] = t.astype(bf16)
        p3_ref[base + R:base + R + base, :] = jnp.zeros((base, _MIDP), bf16)

        col = jax.lax.broadcasted_iota(jnp.int32, (R, _MIDP), 0) % W
        acc2 = jnp.zeros((R, _MIDP), f32)
        k = 0
        for di in (-1, 0, 1):
            for dj in (-1, 0, 1):
                start = base + di * W + dj
                slab = p3_ref[start:start + R, :]
                if dj == -1:
                    slab = jnp.where(col >= 1, slab, 0)
                elif dj == 1:
                    slab = jnp.where(col <= W - 2, slab, 0)
                acc2 = acc2 + jnp.dot(slab, prm["wl2"][k],
                                      preferred_element_type=f32)
                k += 1
        t = jnp.maximum(acc2 * prm["sl2"][...] + prm["bl2"][...], 0.0)

        # layer3: 1x1 conv + BN + ReLU, then residual add (no post-add act).
        y = jnp.dot(t.astype(bf16), prm["wl3"][...], preferred_element_type=f32)
        y = jnp.maximum(y * prm["sl3"][...] + prm["bl3"][...], 0.0)
        return y + res_ref[0:R, 0:cout]

    y1 = residual(h, r1, Wo)                                     # (HW, 128)

    # ---- 2x2/s2 max-pool: four strided row slices + elementwise max --------
    pool_ref[0:HW, :] = y1
    for i in range(Hq):
        r0 = 2 * i * Wo
        a = pool_ref[pl.ds(r0, Wq, stride=2), :]
        b = pool_ref[pl.ds(r0 + 1, Wq, stride=2), :]
        c = pool_ref[pl.ds(r0 + Wo, Wq, stride=2), :]
        d = pool_ref[pl.ds(r0 + Wo + 1, Wq, stride=2), :]
        pool_ref[HW + i * Wq:HW + (i + 1) * Wq, :] = jnp.maximum(
            jnp.maximum(a, b), jnp.maximum(c, d))
    h2 = pool_ref[HW:HW + Hq * Wq, :]                            # (Hq*Wq, 128)

    y2 = residual(h2, r2, Wq)                                    # (Hq*Wq, 128)
    y3 = residual(y2, r3, Wq)                                    # (Hq*Wq, 256)
    o_ref[...] = y3


# ---------------------------- forward pass (wrapper) ----------------------------

def front_module(x, params, num_channels=256):
    assert num_channels == 256
    N, H, W, Cin = x.shape
    assert H % 4 == 0 and W % 4 == 0
    Ho, Wo = H // 2, W // 2
    Hq, Wq = Ho // 2, Wo // 2
    Cs = _ceil_to(4 * Cin, 32)

    # space-to-depth: the stride-2 7x7 conv becomes a stride-1 4x4 conv on the
    # half-resolution grid (no data duplication, pure layout transform).
    xs = x.reshape(N, Ho, 2, Wo, 2, Cin).transpose(0, 1, 3, 2, 4, 5)
    xs = xs.reshape(N, Ho, Wo, 4 * Cin)
    xs = jnp.pad(xs, ((0, 0), (0, 0), (0, 0), (0, Cs - 4 * Cin)))
    # Pre-gather the 4 column taps along lanes (zero-filled at the border) so
    # the kernel only needs row-tap shifts and a lane-aligned K = 4*Cs.
    xsp = jnp.pad(xs, ((0, 0), (0, 0), (2, 1), (0, 0)))
    xw = jnp.concatenate([xsp[:, :, q:q + Wo, :] for q in range(4)], axis=-1)
    xw = xw.reshape(N * Ho * Wo, 4 * Cs).astype(jnp.bfloat16)

    operands = [xw]
    in_specs = [pl.BlockSpec((Ho * Wo, 4 * Cs), lambda n: (n, 0))]

    def add_w(a):
        operands.append(a)
        in_specs.append(pl.BlockSpec(a.shape, lambda n, _nd=a.ndim: (0,) * _nd))

    add_w(params["stem_w"]); add_w(params["stem_s"]); add_w(params["stem_b"])
    for blk in ("res1", "res2", "res3"):
        prm = params[blk]
        for name in ("wl0", "bl0", "wl1", "sl1", "bl1",
                     "wl2", "sl2", "bl2", "wl3", "sl3", "bl3"):
            if name in prm:
                add_w(prm[name])
    has_l0 = tuple("wl0" in params[b] for b in ("res1", "res2", "res3"))

    kernel = functools.partial(_front_kernel, Ho=Ho, Wo=Wo, Cs=Cs, has_l0=has_l0)
    out = pl.pallas_call(
        kernel,
        out_shape=jax.ShapeDtypeStruct((N * Hq * Wq, num_channels), jnp.float32),
        grid=(N,),
        in_specs=in_specs,
        out_specs=pl.BlockSpec((Hq * Wq, num_channels), lambda n: (n, 0)),
        scratch_shapes=[
            pltpu.VMEM((Ho * Wo + 3 * Wo, 4 * Cs), jnp.bfloat16),      # stem halo scratch
            pltpu.VMEM((Ho * Wo + 2 * Wo + 2, _MIDP), jnp.bfloat16),   # 3x3 halo scratch
            pltpu.VMEM((Ho * Wo + Hq * Wq, _LANE), jnp.float32),       # max-pool staging
            pltpu.VMEM((Ho * Wo, num_channels), jnp.float32),          # residual spill
        ],
        compiler_params=pltpu.CompilerParams(
            dimension_semantics=("parallel",),
            vmem_limit_bytes=_VMEM_LIMIT),
    )(*operands)
    return out.reshape(N, Hq, Wq, num_channels)


# ---------------------------- parameters (synthetic, deterministic) ----------------------------

def _conv_bn(key, ksz, cin, cout, *, batchnorm):
    kw_, kb, kg, kbe, km, kv = jax.random.split(key, 6)
    w = 0.05 * jax.random.normal(kw_, (ksz, ksz, cin, cout), jnp.float32)
    b = 0.05 * jax.random.normal(kb, (cout,), jnp.float32)
    if batchnorm:
        gamma = 1.0 + 0.1 * jax.random.normal(kg, (cout,), jnp.float32)
        beta = 0.1 * jax.random.normal(kbe, (cout,), jnp.float32)
        mean = 0.1 * jax.random.normal(km, (cout,), jnp.float32)
        var = 1.0 + 0.5 * jax.random.uniform(kv, (cout,), jnp.float32)
        s = gamma / jnp.sqrt(var + 1e-5)
        return w, s, (b - mean) * s + beta
    return w, jnp.ones((cout,), jnp.float32), b


def _pad_row(v, n, fill):
    v = jnp.pad(v, (0, n - v.shape[0]), constant_values=fill)
    return v.reshape(1, n).astype(jnp.float32)


def _res_params(keys, *, cin, cout, cin_pad):
    mid = cout // 2
    p = {}
    if cin != cout:
        w, _, b = _conv_bn(next(keys), 1, cin, cout, batchnorm=False)
        p["wl0"] = jnp.pad(w.reshape(cin, cout),
                           ((0, cin_pad - cin), (0, 0))).astype(jnp.bfloat16)
        p["bl0"] = b.reshape(1, cout).astype(jnp.float32)
        l1_cin, l1_cin_pad = cout, cout
    else:
        l1_cin, l1_cin_pad = cin, cin_pad
    w, s, b = _conv_bn(next(keys), 1, l1_cin, mid, batchnorm=True)
    p["wl1"] = jnp.pad(w.reshape(l1_cin, mid),
                       ((0, l1_cin_pad - l1_cin), (0, _MIDP - mid))).astype(jnp.bfloat16)
    p["sl1"] = _pad_row(s, _MIDP, 1.0)
    p["bl1"] = _pad_row(b, _MIDP, 0.0)
    w, s, b = _conv_bn(next(keys), 3, mid, mid, batchnorm=True)
    w = jnp.pad(w, ((0, 0), (0, 0), (0, _MIDP - mid), (0, _MIDP - mid)))
    p["wl2"] = w.reshape(9, _MIDP, _MIDP).astype(jnp.bfloat16)
    p["sl2"] = _pad_row(s, _MIDP, 1.0)
    p["bl2"] = _pad_row(b, _MIDP, 0.0)
    w, s, b = _conv_bn(next(keys), 1, mid, cout, batchnorm=True)
    p["wl3"] = jnp.pad(w.reshape(mid, cout),
                       ((0, _MIDP - mid), (0, 0))).astype(jnp.bfloat16)
    p["sl3"] = _pad_row(s, cout, 1.0)
    p["bl3"] = _pad_row(b, cout, 0.0)
    return p


def init_params(key, in_ch, num_channels=256):
    assert num_channels == 256
    c4, c2 = num_channels // 4, num_channels // 2
    Cs = _ceil_to(4 * in_ch, 32)
    keys = iter(jax.random.split(key, 16))
    params = {}

    # stem 7x7/s2, reorganised for the space-to-depth formulation:
    # (4 row taps, K = 4*Cs lanes, 64 -> 128 zero-padded output channels).
    w7, s7, b7 = _conv_bn(next(keys), 7, in_ch, c4, batchnorm=True)
    w7 = np.asarray(w7, np.float32)
    wst = np.zeros((4, 4 * Cs, _LANE), np.float32)
    for p in range(4):
        for a in range(2):
            kh = 2 * p + a - 1
            if not 0 <= kh <= 6:
                continue
            for q in range(4):
                for b in range(2):
                    kw = 2 * q + b - 1
                    if not 0 <= kw <= 6:
                        continue
                    off = q * Cs + (a * 2 + b) * in_ch
                    wst[p, off:off + in_ch, 0:c4] = w7[kh, kw]
    params["stem_w"] = jnp.asarray(wst, jnp.bfloat16)
    params["stem_s"] = _pad_row(s7, _LANE, 1.0)
    params["stem_b"] = _pad_row(b7, _LANE, 0.0)

    params["res1"] = _res_params(keys, cin=c4, cout=c2, cin_pad=_LANE)
    params["res2"] = _res_params(keys, cin=c2, cout=c2, cin_pad=c2)
    params["res3"] = _res_params(keys, cin=c2, cout=num_channels, cin_pad=c2)
    return params


# ---------------------------- main ----------------------------

if __name__ == "__main__":
    key = jax.random.PRNGKey(0)
    kx, kp = jax.random.split(key)

    N, H, W, Cin = 2, 16, 16, 4      # NHWC (PyTorch reference: NCHW (2, 4, 16, 16))
    x = jax.random.normal(kx, (N, H, W, Cin), jnp.float32)
    params = init_params(kp, Cin, num_channels=256)

    fwd = jax.jit(functools.partial(front_module, num_channels=256))
    out = jax.block_until_ready(fwd(x, params))

    assert out.shape == (N, H // 4, W // 4, 256), out.shape
    assert bool(jnp.all(jnp.isfinite(out)))
    print("KERNEL_OK")
</pallas_src>

<mosaic_0001>
module attributes {stable_mosaic.version = 11 : i64} {
  func.func @_front_kernel(%arg0: i32, %arg1: memref<64x128xbf16, #tpu.memory_space<vmem>>, %arg2: memref<4x128x128xbf16, #tpu.memory_space<vmem>>, %arg3: memref<1x128xf32, #tpu.memory_space<vmem>>, %arg4: memref<1x128xf32, #tpu.memory_space<vmem>>, %arg5: memref<128x128xbf16, #tpu.memory_space<vmem>>, %arg6: memref<1x128xf32, #tpu.memory_space<vmem>>, %arg7: memref<128x128xbf16, #tpu.memory_space<vmem>>, %arg8: memref<1x128xf32, #tpu.memory_space<vmem>>, %arg9: memref<1x128xf32, #tpu.memory_space<vmem>>, %arg10: memref<9x128x128xbf16, #tpu.memory_space<vmem>>, %arg11: memref<1x128xf32, #tpu.memory_space<vmem>>, %arg12: memref<1x128xf32, #tpu.memory_space<vmem>>, %arg13: memref<128x128xbf16, #tpu.memory_space<vmem>>, %arg14: memref<1x128xf32, #tpu.memory_space<vmem>>, %arg15: memref<1x128xf32, #tpu.memory_space<vmem>>, %arg16: memref<128x128xbf16, #tpu.memory_space<vmem>>, %arg17: memref<1x128xf32, #tpu.memory_space<vmem>>, %arg18: memref<1x128xf32, #tpu.memory_space<vmem>>, %arg19: memref<9x128x128xbf16, #tpu.memory_space<vmem>>, %arg20: memref<1x128xf32, #tpu.memory_space<vmem>>, %arg21: memref<1x128xf32, #tpu.memory_space<vmem>>, %arg22: memref<128x128xbf16, #tpu.memory_space<vmem>>, %arg23: memref<1x128xf32, #tpu.memory_space<vmem>>, %arg24: memref<1x128xf32, #tpu.memory_space<vmem>>, %arg25: memref<128x256xbf16, #tpu.memory_space<vmem>>, %arg26: memref<1x256xf32, #tpu.memory_space<vmem>>, %arg27: memref<256x128xbf16, #tpu.memory_space<vmem>>, %arg28: memref<1x128xf32, #tpu.memory_space<vmem>>, %arg29: memref<1x128xf32, #tpu.memory_space<vmem>>, %arg30: memref<9x128x128xbf16, #tpu.memory_space<vmem>>, %arg31: memref<1x128xf32, #tpu.memory_space<vmem>>, %arg32: memref<1x128xf32, #tpu.memory_space<vmem>>, %arg33: memref<128x256xbf16, #tpu.memory_space<vmem>>, %arg34: memref<1x256xf32, #tpu.memory_space<vmem>>, %arg35: memref<1x256xf32, #tpu.memory_space<vmem>>, %arg36: memref<16x256xf32, #tpu.memory_space<vmem>>, %arg37: memref<88x128xbf16, #tpu.memory_space<vmem>>, %arg38: memref<82x128xbf16, #tpu.memory_space<vmem>>, %arg39: memref<80x128xf32, #tpu.memory_space<vmem>>, %arg40: memref<64x256xf32, #tpu.memory_space<vmem>>) attributes {dimension_semantics = [#tpu.dimension_semantics<parallel>], iteration_bounds = array<i64: 2>, scalar_prefetch = 0 : i64, scratch_operands = 4 : i64, tpu.core_type = #tpu.core_type<tc>, window_params = [{transform_indices = @transform_0, window_bounds = array<i64: 64, 128>}, {pipeline_mode = #tpu.pipeline_mode<synchronous>, transform_indices = @transform_1, window_bounds = array<i64: 4, 128, 128>}, {pipeline_mode = #tpu.pipeline_mode<synchronous>, transform_indices = @transform_2, window_bounds = array<i64: 1, 128>}, {pipeline_mode = #tpu.pipeline_mode<synchronous>, transform_indices = @transform_3, window_bounds = array<i64: 1, 128>}, {pipeline_mode = #tpu.pipeline_mode<synchronous>, transform_indices = @transform_4, window_bounds = array<i64: 128, 128>}, {pipeline_mode = #tpu.pipeline_mode<synchronous>, transform_indices = @transform_5, window_bounds = array<i64: 1, 128>}, {pipeline_mode = #tpu.pipeline_mode<synchronous>, transform_indices = @transform_6, window_bounds = array<i64: 128, 128>}, {pipeline_mode = #tpu.pipeline_mode<synchronous>, transform_indices = @transform_7, window_bounds = array<i64: 1, 128>}, {pipeline_mode = #tpu.pipeline_mode<synchronous>, transform_indices = @transform_8, window_bounds = array<i64: 1, 128>}, {pipeline_mode = #tpu.pipeline_mode<synchronous>, transform_indices = @transform_9, window_bounds = array<i64: 9, 128, 128>}, {pipeline_mode = #tpu.pipeline_mode<synchronous>, transform_indices = @transform_10, window_bounds = array<i64: 1, 128>}, {pipeline_mode = #tpu.pipeline_mode<synchronous>, transform_indices = @transform_11, window_bounds = array<i64: 1, 128>}, {pipeline_mode = #tpu.pipeline_mode<synchronous>, transform_indices = @transform_12, window_bounds = array<i64: 128, 128>}, {pipeline_mode = #tpu.pipeline_mode<synchronous>, transform_indices = @transform_13, window_bounds = array<i64: 1, 128>}, {pipeline_mode = #tpu.pipeline_mode<synchronous>, transform_indices = @transform_14, window_bounds = array<i64: 1, 128>}, {pipeline_mode = #tpu.pipeline_mode<synchronous>, transform_indices = @transform_15, window_bounds = array<i64: 128, 128>}, {pipeline_mode = #tpu.pipeline_mode<synchronous>, transform_indices = @transform_16, window_bounds = array<i64: 1, 128>}, {pipeline_mode = #tpu.pipeline_mode<synchronous>, transform_indices = @transform_17, window_bounds = array<i64: 1, 128>}, {pipeline_mode = #tpu.pipeline_mode<synchronous>, transform_indices = @transform_18, window_bounds = array<i64: 9, 128, 128>}, {pipeline_mode = #tpu.pipeline_mode<synchronous>, transform_indices = @transform_19, window_bounds = array<i64: 1, 128>}, {pipeline_mode = #tpu.pipeline_mode<synchronous>, transform_indices = @transform_20, window_bounds = array<i64: 1, 128>}, {pipeline_mode = #tpu.pipeline_mode<synchronous>, transform_indices = @transform_21, window_bounds = array<i64: 128, 128>}, {pipeline_mode = #tpu.pipeline_mode<synchronous>, transform_indices = @transform_22, window_bounds = array<i64: 1, 128>}, {pipeline_mode = #tpu.pipeline_mode<synchronous>, transform_indices = @transform_23, window_bounds = array<i64: 1, 128>}, {pipeline_mode = #tpu.pipeline_mode<synchronous>, transform_indices = @transform_24, window_bounds = array<i64: 128, 256>}, {pipeline_mode = #tpu.pipeline_mode<synchronous>, transform_indices = @transform_25, window_bounds = array<i64: 1, 256>}, {pipeline_mode = #tpu.pipeline_mode<synchronous>, transform_indices = @transform_26, window_bounds = array<i64: 256, 128>}, {pipeline_mode = #tpu.pipeline_mode<synchronous>, transform_indices = @transform_27, window_bounds = array<i64: 1, 128>}, {pipeline_mode = #tpu.pipeline_mode<synchronous>, transform_indices = @transform_28, window_bounds = array<i64: 1, 128>}, {pipeline_mode = #tpu.pipeline_mode<synchronous>, transform_indices = @transform_29, window_bounds = array<i64: 9, 128, 128>}, {pipeline_mode = #tpu.pipeline_mode<synchronous>, transform_indices = @transform_30, window_bounds = array<i64: 1, 128>}, {pipeline_mode = #tpu.pipeline_mode<synchronous>, transform_indices = @transform_31, window_bounds = array<i64: 1, 128>}, {pipeline_mode = #tpu.pipeline_mode<synchronous>, transform_indices = @transform_32, window_bounds = array<i64: 128, 256>}, {pipeline_mode = #tpu.pipeline_mode<synchronous>, transform_indices = @transform_33, window_bounds = array<i64: 1, 256>}, {pipeline_mode = #tpu.pipeline_mode<synchronous>, transform_indices = @transform_34, window_bounds = array<i64: 1, 256>}, {transform_indices = @transform_35, window_bounds = array<i64: 16, 256>}]} {
    %cst = arith.constant 0.000000e+00 : bf16
    %0 = vector.broadcast %cst : bf16 to vector<16x128xbf16>
    %c0 = arith.constant 0 : index
    %c0_0 = arith.constant 0 : index
    %1 = vector.load %arg37[%c0, %c0_0] : memref<88x128xbf16, #tpu.memory_space<vmem>>, vector<16x128xbf16>
    tpu.vector_store %arg37[%c0, %c0_0], %0 {strides = array<i32>} : memref<88x128xbf16, #tpu.memory_space<vmem>>, vector<16x128xbf16>,
    %c0_1 = arith.constant 0 : index
    %c0_2 = arith.constant 0 : index
    %2 = vector.load %arg1[%c0_1, %c0_2] : memref<64x128xbf16, #tpu.memory_space<vmem>>, vector<64x128xbf16>
    %c16 = arith.constant 16 : index
    %c0_3 = arith.constant 0 : index
    %3 = vector.load %arg37[%c16, %c0_3] : memref<88x128xbf16, #tpu.memory_space<vmem>>, vector<64x128xbf16>
    tpu.vector_store %arg37[%c16, %c0_3], %2 {strides = array<i32>} : memref<88x128xbf16, #tpu.memory_space<vmem>>, vector<64x128xbf16>,
    %cst_4 = arith.constant 0.000000e+00 : bf16
    %4 = vector.broadcast %cst_4 : bf16 to vector<8x128xbf16>
    %c80 = arith.constant 80 : index
    %c0_5 = arith.constant 0 : index
    %5 = vector.load %arg37[%c80, %c0_5] : memref<88x128xbf16, #tpu.memory_space<vmem>>, vector<8x128xbf16>
    tpu.vector_store %arg37[%c80, %c0_5], %4 {strides = array<i32>} : memref<88x128xbf16, #tpu.memory_space<vmem>>, vector<8x128xbf16>,
    %cst_6 = arith.constant 0.000000e+00 : f32
    %6 = vector.broadcast %cst_6 : f32 to vector<64x128xf32>
    %c0_7 = arith.constant 0 : index
    %c0_8 = arith.constant 0 : index
    %7 = vector.load %arg37[%c0_7, %c0_8] : memref<88x128xbf16, #tpu.memory_space<vmem>>, vector<64x128xbf16>
    %c0_9 = arith.constant 0 : index
    %c0_10 = arith.constant 0 : index
    %c0_11 = arith.constant 0 : index
    %8 = vector.load %arg2[%c0_9, %c0_10, %c0_11] : memref<4x128x128xbf16, #tpu.memory_space<vmem>>, vector<1x128x128xbf16>
    %9 = vector.shape_cast %8 : vector<1x128x128xbf16> to vector<128x128xbf16>
    %cst_12 = arith.constant dense<0.000000e+00> : vector<64x128xf32>
    %10 = tpu.matmul %7, %9, %cst_12 {dimension_numbers = #tpu.dot_dimension_numbers<[1], [0], [0], [1], [0, 0, 1, 1], [], []>} : vector<64x128xbf16>, vector<128x128xbf16>, vector<64x128xf32> -> vector<64x128xf32>
    %11 = arith.addf %6, %10 : vector<64x128xf32>
    %c8 = arith.constant 8 : index
    %c0_13 = arith.constant 0 : index
    %12 = vector.load %arg37[%c8, %c0_13] : memref<88x128xbf16, #tpu.memory_space<vmem>>, vector<64x128xbf16>
    %c1 = arith.constant 1 : index
    %c0_14 = arith.constant 0 : index
    %c0_15 = arith.constant 0 : index
    %13 = vector.load %arg2[%c1, %c0_14, %c0_15] : memref<4x128x128xbf16, #tpu.memory_space<vmem>>, vector<1x128x128xbf16>
    %14 = vector.shape_cast %13 : vector<1x128x128xbf16> to vector<128x128xbf16>
    %cst_16 = arith.constant dense<0.000000e+00> : vector<64x128xf32>
    %15 = tpu.matmul %12, %14, %cst_16 {dimension_numbers = #tpu.dot_dimension_numbers<[1], [0], [0], [1], [0, 0, 1, 1], [], []>} : vector<64x128xbf16>, vector<128x128xbf16>, vector<64x128xf32> -> vector<64x128xf32>
    %16 = arith.addf %11, %15 : vector<64x128xf32>
    %c16_17 = arith.constant 16 : index
    %c0_18 = arith.constant 0 : index
    %17 = vector.load %arg37[%c16_17, %c0_18] : memref<88x128xbf16, #tpu.memory_space<vmem>>, vector<64x128xbf16>
    %c2 = arith.constant 2 : index
    %c0_19 = arith.constant 0 : index
    %c0_20 = arith.constant 0 : index
    %18 = vector.load %arg2[%c2, %c0_19, %c0_20] : memref<4x128x128xbf16, #tpu.memory_space<vmem>>, vector<1x128x128xbf16>
    %19 = vector.shape_cast %18 : vector<1x128x128xbf16> to vector<128x128xbf16>
    %cst_21 = arith.constant dense<0.000000e+00> : vector<64x128xf32>
    %20 = tpu.matmul %17, %19, %cst_21 {dimension_numbers = #tpu.dot_dimension_numbers<[1], [0], [0], [1], [0, 0, 1, 1], [], []>} : vector<64x128xbf16>, vector<128x128xbf16>, vector<64x128xf32> -> vector<64x128xf32>
    %21 = arith.addf %16, %20 : vector<64x128xf32>
    %c24 = arith.constant 24 : index
    %c0_22 = arith.constant 0 : index
    %22 = vector.load %arg37[%c24, %c0_22] : memref<88x128xbf16, #tpu.memory_space<vmem>>, vector<64x128xbf16>
    %c3 = arith.constant 3 : index
    %c0_23 = arith.constant 0 : index
    %c0_24 = arith.constant 0 : index
    %23 = vector.load %arg2[%c3, %c0_23, %c0_24] : memref<4x128x128xbf16, #tpu.memory_space<vmem>>, vector<1x128x128xbf16>
    %24 = vector.shape_cast %23 : vector<1x128x128xbf16> to vector<128x128xbf16>
    %cst_25 = arith.constant dense<0.000000e+00> : vector<64x128xf32>
    %25 = tpu.matmul %22, %24, %cst_25 {dimension_numbers = #tpu.dot_dimension_numbers<[1], [0], [0], [1], [0, 0, 1, 1], [], []>} : vector<64x128xbf16>, vector<128x128xbf16>, vector<64x128xf32> -> vector<64x128xf32>
    %26 = arith.addf %21, %25 : vector<64x128xf32>
    %c0_26 = arith.constant 0 : index
    %c0_27 = arith.constant 0 : index
    %27 = vector.load %arg3[%c0_26, %c0_27] : memref<1x128xf32, #tpu.memory_space<vmem>>, vector<1x128xf32>
    %28 = vector.broadcast %27 : vector<1x128xf32> to vector<64x128xf32>
    %29 = arith.mulf %26, %28 : vector<64x128xf32>
    %c0_28 = arith.constant 0 : index
    %c0_29 = arith.constant 0 : index
    %30 = vector.load %arg4[%c0_28, %c0_29] : memref<1x128xf32, #tpu.memory_space<vmem>>, vector<1x128xf32>
    %31 = vector.broadcast %30 : vector<1x128xf32> to vector<64x128xf32>
    %32 = arith.addf %29, %31 : vector<64x128xf32>
    %cst_30 = arith.constant 0.000000e+00 : f32
    %33 = vector.broadcast %cst_30 : f32 to vector<64x128xf32>
    %34 = arith.maximumf %32, %33 : vector<64x128xf32>
    %35 = arith.truncf %34 : vector<64x128xf32> to vector<64x128xbf16>
    %c0_31 = arith.constant 0 : index
    %c0_32 = arith.constant 0 : index
    %36 = vector.load %arg5[%c0_31, %c0_32] : memref<128x128xbf16, #tpu.memory_space<vmem>>, vector<128x128xbf16>
    %cst_33 = arith.constant dense<0.000000e+00> : vector<64x128xf32>
    %37 = tpu.matmul %35, %36, %cst_33 {dimension_numbers = #tpu.dot_dimension_numbers<[1], [0], [0], [1], [0, 0, 1, 1], [], []>} : vector<64x128xbf16>, vector<128x128xbf16>, vector<64x128xf32> -> vector<64x128xf32>
    %c0_34 = arith.constant 0 : index
    %c0_35 = arith.constant 0 : index
    %38 = vector.load %arg6[%c0_34, %c0_35] : memref<1x128xf32, #tpu.memory_space<vmem>>, vector<1x128xf32>
    %39 = vector.broadcast %38 : vector<1x128xf32> to vector<64x128xf32>
    %40 = arith.addf %37, %39 : vector<64x128xf32>
    %c0_36 = arith.constant 0 : index
    %c0_37 = arith.constant 0 : index
    %41 = vector.load %arg40[%c0_36, %c0_37] : memref<64x256xf32, #tpu.memory_space<vmem>>, vector<64x128xf32>
    tpu.vector_store %arg40[%c0_36, %c0_37], %40 {strides = array<i32>} : memref<64x256xf32, #tpu.memory_space<vmem>>, vector<64x128xf32>,
    %42 = arith.truncf %40 : vector<64x128xf32> to vector<64x128xbf16>
    %c0_38 = arith.constant 0 : index
    %c0_39 = arith.constant 0 : index
    %43 = vector.load %arg7[%c0_38, %c0_39] : memref<128x128xbf16, #tpu.memory_space<vmem>>, vector<128x128xbf16>
    %cst_40 = arith.constant dense<0.000000e+00> : vector<64x128xf32>
    %44 = tpu.matmul %42, %43, %cst_40 {dimension_numbers = #tpu.dot_dimension_numbers<[1], [0], [0], [1], [0, 0, 1, 1], [], []>} : vector<64x128xbf16>, vector<128x128xbf16>, vector<64x128xf32> -> vector<64x128xf32>
    %c0_41 = arith.constant 0 : index
    %c0_42 = arith.constant 0 : index
    %45 = vector.load %arg8[%c0_41, %c0_42] : memref<1x128xf32, #tpu.memory_space<vmem>>, vector<1x128xf32>
    %46 = vector.broadcast %45 : vector<1x128xf32> to vector<64x128xf32>
    %47 = arith.mulf %44, %46 : vector<64x128xf32>
    %c0_43 = arith.constant 0 : index
    %c0_44 = arith.constant 0 : index
    %48 = vector.load %arg9[%c0_43, %c0_44] : memref<1x128xf32, #tpu.memory_space<vmem>>, vector<1x128xf32>
    %49 = vector.broadcast %48 : vector<1x128xf32> to vector<64x128xf32>
    %50 = arith.addf %47, %49 : vector<64x128xf32>
    %cst_45 = arith.constant 0.000000e+00 : f32
    %51 = vector.broadcast %cst_45 : f32 to vector<64x128xf32>
    %52 = arith.maximumf %50, %51 : vector<64x128xf32>
    %cst_46 = arith.constant 0.000000e+00 : bf16
    %53 = vector.broadcast %cst_46 : bf16 to vector<9x128xbf16>
    %c0_47 = arith.constant 0 : index
    %c0_48 = arith.constant 0 : index
    %54 = vector.load %arg38[%c0_47, %c0_48] : memref<82x128xbf16, #tpu.memory_space<vmem>>, vector<9x128xbf16>
    tpu.vector_store %arg38[%c0_47, %c0_48], %53 {strides = array<i32>} : memref<82x128xbf16, #tpu.memory_space<vmem>>, vector<9x128xbf16>,
    %55 = arith.truncf %52 : vector<64x128xf32> to vector<64x128xbf16>
    %c9 = arith.constant 9 : index
    %c0_49 = arith.constant 0 : index
    %56 = vector.load %arg38[%c9, %c0_49] : memref<82x128xbf16, #tpu.memory_space<vmem>>, vector<64x128xbf16>
    tpu.vector_store %arg38[%c9, %c0_49], %55 {strides = array<i32>} : memref<82x128xbf16, #tpu.memory_space<vmem>>, vector<64x128xbf16>,
    %cst_50 = arith.constant 0.000000e+00 : bf16
    %57 = vector.broadcast %cst_50 : bf16 to vector<9x128xbf16>
    %c73 = arith.constant 73 : index
    %c0_51 = arith.constant 0 : index
    %58 = vector.load %arg38[%c73, %c0_51] : memref<82x128xbf16, #tpu.memory_space<vmem>>, vector<9x128xbf16>
    tpu.vector_store %arg38[%c73, %c0_51], %57 {strides = array<i32>} : memref<82x128xbf16, #tpu.memory_space<vmem>>, vector<9x128xbf16>,
    %59 = tpu.iota {dimensions = array<i32: 0>} : vector<64x128xi32>
    %c8_i32 = arith.constant 8 : i32
    %c0_i32 = arith.constant 0 : i32
    %60 = arith.cmpi eq, %c8_i32, %c0_i32 : i32
    %c1_i32 = arith.constant 1 : i32
    %61 = arith.select %60, %c1_i32, %c8_i32 : i32
    %62 = vector.broadcast %61 : i32 to vector<64x128xi32>
    %63 = arith.remsi %59, %62 : vector<64x128xi32>
    %c0_i32_52 = arith.constant 0 : i32
    %64 = vector.broadcast %c0_i32_52 : i32 to vector<64x128xi32>
    %65 = arith.cmpi ne, %63, %64 : vector<64x128xi32>
    %c0_i32_53 = arith.constant 0 : i32
    %66 = vector.broadcast %c0_i32_53 : i32 to vector<64x128xi32>
    %67 = arith.cmpi slt, %63, %66 : vector<64x128xi32>
    %c0_i32_54 = arith.constant 0 : i32
    %68 = arith.cmpi slt, %61, %c0_i32_54 : i32
    %69 = vector.broadcast %68 : i1 to vector<64x128xi1>
    %70 = vector.broadcast %69 : vector<64x128xi1> to vector<64x128xi1>
    %71 = arith.xori %67, %70 : vector<64x128xi1>
    %72 = arith.andi %71, %65 : vector<64x128xi1>
    %73 = vector.broadcast %61 : i32 to vector<64x128xi32>
    %74 = arith.addi %63, %73 : vector<64x128xi32>
    %75 = arith.select %72, %74, %63 : vector<64x128xi1>, vector<64x128xi32>
    %cst_55 = arith.constant 0.000000e+00 : f32
    %76 = vector.broadcast %cst_55 : f32 to vector<64x128xf32>
    %c0_56 = arith.constant 0 : index
    %c0_57 = arith.constant 0 : index
    %77 = vector.load %arg38[%c0_56, %c0_57] : memref<82x128xbf16, #tpu.memory_space<vmem>>, vector<64x128xbf16>
    %c1_i32_58 = arith.constant 1 : i32
    %78 = vector.broadcast %c1_i32_58 : i32 to vector<64x128xi32>
    %79 = arith.cmpi sge, %75, %78 : vector<64x128xi32>
    %c0_i32_59 = arith.constant 0 : i32
    %80 = arith.sitofp %c0_i32_59 : i32 to bf16
    %81 = vector.broadcast %80 : bf16 to vector<64x128xbf16>
    %82 = arith.select %79, %77, %81 : vector<64x128xi1>, vector<64x128xbf16>
    %c0_60 = arith.constant 0 : index
    %c0_61 = arith.constant 0 : index
    %c0_62 = arith.constant 0 : index
    %83 = vector.load %arg10[%c0_60, %c0_61, %c0_62] : memref<9x128x128xbf16, #tpu.memory_space<vmem>>, vector<1x128x128xbf16>
    %84 = vector.shape_cast %83 : vector<1x128x128xbf16> to vector<128x128xbf16>
    %cst_63 = arith.constant dense<0.000000e+00> : vector<64x128xf32>
    %85 = tpu.matmul %82, %84, %cst_63 {dimension_numbers = #tpu.dot_dimension_numbers<[1], [0], [0], [1], [0, 0, 1, 1], [], []>} : vector<64x128xbf16>, vector<128x128xbf16>, vector<64x128xf32> -> vector<64x128xf32>
    %86 = arith.addf %76, %85 : vector<64x128xf32>
    %c1_64 = arith.constant 1 : index
    %c0_65 = arith.constant 0 : index
    %87 = vector.load %arg38[%c1_64, %c0_65] : memref<82x128xbf16, #tpu.memory_space<vmem>>, vector<64x128xbf16>
    %c1_66 = arith.constant 1 : index
    %c0_67 = arith.constant 0 : index
    %c0_68 = arith.constant 0 : index
    %88 = vector.load %arg10[%c1_66, %c0_67, %c0_68] : memref<9x128x128xbf16, #tpu.memory_space<vmem>>, vector<1x128x128xbf16>
    %89 = vector.shape_cast %88 : vector<1x128x128xbf16> to vector<128x128xbf16>
    %cst_69 = arith.constant dense<0.000000e+00> : vector<64x128xf32>
    %90 = tpu.matmul %87, %89, %cst_69 {dimension_numbers = #tpu.dot_dimension_numbers<[1], [0], [0], [1], [0, 0, 1, 1], [], []>} : vector<64x128xbf16>, vector<128x128xbf16>, vector<64x128xf32> -> vector<64x128xf32>
    %91 = arith.addf %86, %90 : vector<64x128xf32>
    %c2_70 = arith.constant 2 : index
    %c0_71 = arith.constant 0 : index
    %92 = vector.load %arg38[%c2_70, %c0_71] : memref<82x128xbf16, #tpu.memory_space<vmem>>, vector<64x128xbf16>
    %c6_i32 = arith.constant 6 : i32
    %93 = vector.broadcast %c6_i32 : i32 to vector<64x128xi32>
    %94 = arith.cmpi sle, %75, %93 : vector<64x128xi32>
    %c0_i32_72 = arith.constant 0 : i32
    %95 = arith.sitofp %c0_i32_72 : i32 to bf16
    %96 = vector.broadcast %95 : bf16 to vector<64x128xbf16>
    %97 = arith.select %94, %92, %96 : vector<64x128xi1>, vector<64x128xbf16>
    %c2_73 = arith.constant 2 : index
    %c0_74 = arith.constant 0 : index
    %c0_75 = arith.constant 0 : index
    %98 = vector.load %arg10[%c2_73, %c0_74, %c0_75] : memref<9x128x128xbf16, #tpu.memory_space<vmem>>, vector<1x128x128xbf16>
    %99 = vector.shape_cast %98 : vector<1x128x128xbf16> to vector<128x128xbf16>
    %cst_76 = arith.constant dense<0.000000e+00> : vector<64x128xf32>
    %100 = tpu.matmul %97, %99, %cst_76 {dimension_numbers = #tpu.dot_dimension_numbers<[1], [0], [0], [1], [0, 0, 1, 1], [], []>} : vector<64x128xbf16>, vector<128x128xbf16>, vector<64x128xf32> -> vector<64x128xf32>
    %101 = arith.addf %91, %100 : vector<64x128xf32>
    %c8_77 = arith.constant 8 : index
    %c0_78 = arith.constant 0 : index
    %102 = vector.load %arg38[%c8_77, %c0_78] : memref<82x128xbf16, #tpu.memory_space<vmem>>, vector<64x128xbf16>
    %c1_i32_79 = arith.constant 1 : i32
    %103 = vector.broadcast %c1_i32_79 : i32 to vector<64x128xi32>
    %104 = arith.cmpi sge, %75, %103 : vector<64x128xi32>
    %c0_i32_80 = arith.constant 0 : i32
    %105 = arith.sitofp %c0_i32_80 : i32 to bf16
    %106 = vector.broadcast %105 : bf16 to vector<64x128xbf16>
    %107 = arith.select %104, %102, %106 : vector<64x128xi1>, vector<64x128xbf16>
    %c3_81 = arith.constant 3 : index
    %c0_82 = arith.constant 0 : index
    %c0_83 = arith.constant 0 : index
    %108 = vector.load %arg10[%c3_81, %c0_82, %c0_83] : memref<9x128x128xbf16, #tpu.memory_space<vmem>>, vector<1x128x128xbf16>
    %109 = vector.shape_cast %108 : vector<1x128x128xbf16> to vector<128x128xbf16>
    %cst_84 = arith.constant dense<0.000000e+00> : vector<64x128xf32>
    %110 = tpu.matmul %107, %109, %cst_84 {dimension_numbers = #tpu.dot_dimension_numbers<[1], [0], [0], [1], [0, 0, 1, 1], [], []>} : vector<64x128xbf16>, vector<128x128xbf16>, vector<64x128xf32> -> vector<64x128xf32>
    %111 = arith.addf %101, %110 : vector<64x128xf32>
    %c9_85 = arith.constant 9 : index
    %c0_86 = arith.constant 0 : index
    %112 = vector.load %arg38[%c9_85, %c0_86] : memref<82x128xbf16, #tpu.memory_space<vmem>>, vector<64x128xbf16>
    %c4 = arith.constant 4 : index
    %c0_87 = arith.constant 0 : index
    %c0_88 = arith.constant 0 : index
    %113 = vector.load %arg10[%c4, %c0_87, %c0_88] : memref<9x128x128xbf16, #tpu.memory_space<vmem>>, vector<1x128x128xbf16>
    %114 = vector.shape_cast %113 : vector<1x128x128xbf16> to vector<128x128xbf16>
    %cst_89 = arith.constant dense<0.000000e+00> : vector<64x128xf32>
    %115 = tpu.matmul %112, %114, %cst_89 {dimension_numbers = #tpu.dot_dimension_numbers<[1], [0], [0], [1], [0, 0, 1, 1], [], []>} : vector<64x128xbf16>, vector<128x128xbf16>, vector<64x128xf32> -> vector<64x128xf32>
    %116 = arith.addf %111, %115 : vector<64x128xf32>
    %c10 = arith.constant 10 : index
    %c0_90 = arith.constant 0 : index
    %117 = vector.load %arg38[%c10, %c0_90] : memref<82x128xbf16, #tpu.memory_space<vmem>>, vector<64x128xbf16>
    %c6_i32_91 = arith.constant 6 : i32
    %118 = vector.broadcast %c6_i32_91 : i32 to vector<64x128xi32>
    %119 = arith.cmpi sle, %75, %118 : vector<64x128xi32>
    %c0_i32_92 = arith.constant 0 : i32
    %120 = arith.sitofp %c0_i32_92 : i32 to bf16
    %121 = vector.broadcast %120 : bf16 to vector<64x128xbf16>
    %122 = arith.select %119, %117, %121 : vector<64x128xi1>, vector<64x128xbf16>
    %c5 = arith.constant 5 : index
    %c0_93 = arith.constant 0 : index
    %c0_94 = arith.constant 0 : index
    %123 = vector.load %arg10[%c5, %c0_93, %c0_94] : memref<9x128x128xbf16, #tpu.memory_space<vmem>>, vector<1x128x128xbf16>
    %124 = vector.shape_cast %123 : vector<1x128x128xbf16> to vector<128x128xbf16>
    %cst_95 = arith.constant dense<0.000000e+00> : vector<64x128xf32>
    %125 = tpu.matmul %122, %124, %cst_95 {dimension_numbers = #tpu.dot_dimension_numbers<[1], [0], [0], [1], [0, 0, 1, 1], [], []>} : vector<64x128xbf16>, vector<128x128xbf16>, vector<64x128xf32> -> vector<64x128xf32>
    %126 = arith.addf %116, %125 : vector<64x128xf32>
    %c16_96 = arith.constant 16 : index
    %c0_97 = arith.constant 0 : index
    %127 = vector.load %arg38[%c16_96, %c0_97] : memref<82x128xbf16, #tpu.memory_space<vmem>>, vector<64x128xbf16>
    %c1_i32_98 = arith.constant 1 : i32
    %128 = vector.broadcast %c1_i32_98 : i32 to vector<64x128xi32>
    %129 = arith.cmpi sge, %75, %128 : vector<64x128xi32>
    %c0_i32_99 = arith.constant 0 : i32
    %130 = arith.sitofp %c0_i32_99 : i32 to bf16
    %131 = vector.broadcast %130 : bf16 to vector<64x128xbf16>
    %132 = arith.select %129, %127, %131 : vector<64x128xi1>, vector<64x128xbf16>
    %c6 = arith.constant 6 : index
    %c0_100 = arith.constant 0 : index
    %c0_101 = arith.constant 0 : index
    %133 = vector.load %arg10[%c6, %c0_100, %c0_101] : memref<9x128x128xbf16, #tpu.memory_space<vmem>>, vector<1x128x128xbf16>
    %134 = vector.shape_cast %133 : vector<1x128x128xbf16> to vector<128x128xbf16>
    %cst_102 = arith.constant dense<0.000000e+00> : vector<64x128xf32>
    %135 = tpu.matmul %132, %134, %cst_102 {dimension_numbers = #tpu.dot_dimension_numbers<[1], [0], [0], [1], [0, 0, 1, 1], [], []>} : vector<64x128xbf16>, vector<128x128xbf16>, vector<64x128xf32> -> vector<64x128xf32>
    %136 = arith.addf %126, %135 : vector<64x128xf32>
    %c17 = arith.constant 17 : index
    %c0_103 = arith.constant 0 : index
    %137 = vector.load %arg38[%c17, %c0_103] : memref<82x128xbf16, #tpu.memory_space<vmem>>, vector<64x128xbf16>
    %c7 = arith.constant 7 : index
    %c0_104 = arith.constant 0 : index
    %c0_105 = arith.constant 0 : index
    %138 = vector.load %arg10[%c7, %c0_104, %c0_105] : memref<9x128x128xbf16, #tpu.memory_space<vmem>>, vector<1x128x128xbf16>
    %139 = vector.shape_cast %138 : vector<1x128x128xbf16> to vector<128x128xbf16>
    %cst_106 = arith.constant dense<0.000000e+00> : vector<64x128xf32>
    %140 = tpu.matmul %137, %139, %cst_106 {dimension_numbers = #tpu.dot_dimension_numbers<[1], [0], [0], [1], [0, 0, 1, 1], [], []>} : vector<64x128xbf16>, vector<128x128xbf16>, vector<64x128xf32> -> vector<64x128xf32>
    %141 = arith.addf %136, %140 : vector<64x128xf32>
    %c18 = arith.constant 18 : index
    %c0_107 = arith.constant 0 : index
    %142 = vector.load %arg38[%c18, %c0_107] : memref<82x128xbf16, #tpu.memory_space<vmem>>, vector<64x128xbf16>
    %c6_i32_108 = arith.constant 6 : i32
    %143 = vector.broadcast %c6_i32_108 : i32 to vector<64x128xi32>
    %144 = arith.cmpi sle, %75, %143 : vector<64x128xi32>
    %c0_i32_109 = arith.constant 0 : i32
    %145 = arith.sitofp %c0_i32_109 : i32 to bf16
    %146 = vector.broadcast %145 : bf16 to vector<64x128xbf16>
    %147 = arith.select %144, %142, %146 : vector<64x128xi1>, vector<64x128xbf16>
    %c8_110 = arith.constant 8 : index
    %c0_111 = arith.constant 0 : index
    %c0_112 = arith.constant 0 : index
    %148 = vector.load %arg10[%c8_110, %c0_111, %c0_112] : memref<9x128x128xbf16, #tpu.memory_space<vmem>>, vector<1x128x128xbf16>
    %149 = vector.shape_cast %148 : vector<1x128x128xbf16> to vector<128x128xbf16>
    %cst_113 = arith.constant dense<0.000000e+00> : vector<64x128xf32>
    %150 = tpu.matmul %147, %149, %cst_113 {dimension_numbers = #tpu.dot_dimension_numbers<[1], [0], [0], [1], [0, 0, 1, 1], [], []>} : vector<64x128xbf16>, vector<128x128xbf16>, vector<64x128xf32> -> vector<64x128xf32>
    %151 = arith.addf %141, %150 : vector<64x128xf32>
    %c0_114 = arith.constant 0 : index
    %c0_115 = arith.constant 0 : index
    %152 = vector.load %arg11[%c0_114, %c0_115] : memref<1x128xf32, #tpu.memory_space<vmem>>, vector<1x128xf32>
    %153 = vector.broadcast %152 : vector<1x128xf32> to vector<64x128xf32>
    %154 = arith.mulf %151, %153 : vector<64x128xf32>
    %c0_116 = arith.constant 0 : index
    %c0_117 = arith.constant 0 : index
    %155 = vector.load %arg12[%c0_116, %c0_117] : memref<1x128xf32, #tpu.memory_space<vmem>>, vector<1x128xf32>
    %156 = vector.broadcast %155 : vector<1x128xf32> to vector<64x128xf32>
    %157 = arith.addf %154, %156 : vector<64x128xf32>
    %cst_118 = arith.constant 0.000000e+00 : f32
    %158 = vector.broadcast %cst_118 : f32 to vector<64x128xf32>
    %159 = arith.maximumf %157, %158 : vector<64x128xf32>
    %160 = arith.truncf %159 : vector<64x128xf32> to vector<64x128xbf16>
    %c0_119 = arith.constant 0 : index
    %c0_120 = arith.constant 0 : index
    %161 = vector.load %arg13[%c0_119, %c0_120] : memref<128x128xbf16, #tpu.memory_space<vmem>>, vector<128x128xbf16>
    %cst_121 = arith.constant dense<0.000000e+00> : vector<64x128xf32>
    %162 = tpu.matmul %160, %161, %cst_121 {dimension_numbers = #tpu.dot_dimension_numbers<[1], [0], [0], [1], [0, 0, 1, 1], [], []>} : vector<64x128xbf16>, vector<128x128xbf16>, vector<64x128xf32> -> vector<64x128xf32>
    %c0_122 = arith.constant 0 : index
    %c0_123 = arith.constant 0 : index
    %163 = vector.load %arg14[%c0_122, %c0_123] : memref<1x128xf32, #tpu.memory_space<vmem>>, vector<1x128xf32>
    %164 = vector.broadcast %163 : vector<1x128xf32> to vector<64x128xf32>
    %165 = arith.mulf %162, %164 : vector<64x128xf32>
    %c0_124 = arith.constant 0 : index
    %c0_125 = arith.constant 0 : index
    %166 = vector.load %arg15[%c0_124, %c0_125] : memref<1x128xf32, #tpu.memory_space<vmem>>, vector<1x128xf32>
    %167 = vector.broadcast %166 : vector<1x128xf32> to vector<64x128xf32>
    %168 = arith.addf %165, %167 : vector<64x128xf32>
    %cst_126 = arith.constant 0.000000e+00 : f32
    %169 = vector.broadcast %cst_126 : f32 to vector<64x128xf32>
    %170 = arith.maximumf %168, %169 : vector<64x128xf32>
    %c0_127 = arith.constant 0 : index
    %c0_128 = arith.constant 0 : index
    %171 = vector.load %arg40[%c0_127, %c0_128] : memref<64x256xf32, #tpu.memory_space<vmem>>, vector<64x128xf32>
    %172 = arith.addf %170, %171 : vector<64x128xf32>
    %c0_129 = arith.constant 0 : index
    %c0_130 = arith.constant 0 : index
    %173 = vector.load %arg39[%c0_129, %c0_130] : memref<80x128xf32, #tpu.memory_space<vmem>>, vector<64x128xf32>
    tpu.vector_store %arg39[%c0_129, %c0_130], %172 {strides = array<i32>} : memref<80x128xf32, #tpu.memory_space<vmem>>, vector<64x128xf32>,
    %c0_131 = arith.constant 0 : index
    %c0_132 = arith.constant 0 : index
    %174 = tpu.strided_load %arg39[%c0_131, %c0_132] {strides = array<i32: 2, 1>} : memref<80x128xf32, #tpu.memory_space<vmem>>, vector<4x128xf32>
    %c1_133 = arith.constant 1 : index
    %c0_134 = arith.constant 0 : index
    %175 = tpu.strided_load %arg39[%c1_133, %c0_134] {strides = array<i32: 2, 1>} : memref<80x128xf32, #tpu.memory_space<vmem>>, vector<4x128xf32>
    %c8_135 = arith.constant 8 : index
    %c0_136 = arith.constant 0 : index
    %176 = tpu.strided_load %arg39[%c8_135, %c0_136] {strides = array<i32: 2, 1>} : memref<80x128xf32, #tpu.memory_space<vmem>>, vector<4x128xf32>
    %c9_137 = arith.constant 9 : index
    %c0_138 = arith.constant 0 : index
    %177 = tpu.strided_load %arg39[%c9_137, %c0_138] {strides = array<i32: 2, 1>} : memref<80x128xf32, #tpu.memory_space<vmem>>, vector<4x128xf32>
    %178 = arith.maximumf %174, %175 : vector<4x128xf32>
    %179 = arith.maximumf %176, %177 : vector<4x128xf32>
    %180 = arith.maximumf %178, %179 : vector<4x128xf32>
    %c64 = arith.constant 64 : index
    %c0_139 = arith.constant 0 : index
    %181 = vector.load %arg39[%c64, %c0_139] : memref<80x128xf32, #tpu.memory_space<vmem>>, vector<4x128xf32>
    tpu.vector_store %arg39[%c64, %c0_139], %180 {strides = array<i32>} : memref<80x128xf32, #tpu.memory_space<vmem>>, vector<4x128xf32>,
    %c16_140 = arith.constant 16 : index
    %c0_141 = arith.constant 0 : index
    %182 = tpu.strided_load %arg39[%c16_140, %c0_141] {strides = array<i32: 2, 1>} : memref<80x128xf32, #tpu.memory_space<vmem>>, vector<4x128xf32>
    %c17_142 = arith.constant 17 : index
    %c0_143 = arith.constant 0 : index
    %183 = tpu.strided_load %arg39[%c17_142, %c0_143] {strides = array<i32: 2, 1>} : memref<80x128xf32, #tpu.memory_space<vmem>>, vector<4x128xf32>
    %c24_144 = arith.constant 24 : index
    %c0_145 = arith.constant 0 : index
    %184 = tpu.strided_load %arg39[%c24_144, %c0_145] {strides = array<i32: 2, 1>} : memref<80x128xf32, #tpu.memory_space<vmem>>, vector<4x128xf32>
    %c25 = arith.constant 25 : index
    %c0_146 = arith.constant 0 : index
    %185 = tpu.strided_load %arg39[%c25, %c0_146] {strides = array<i32: 2, 1>} : memref<80x128xf32, #tpu.memory_space<vmem>>, vector<4x128xf32>
    %186 = arith.maximumf %182, %183 : vector<4x128xf32>
    %187 = arith.maximumf %184, %185 : vector<4x128xf32>
    %188 = arith.maximumf %186, %187 : vector<4x128xf32>
    %c68 = arith.constant 68 : index
    %c0_147 = arith.constant 0 : index
    %189 = vector.load %arg39[%c68, %c0_147] : memref<80x128xf32, #tpu.memory_space<vmem>>, vector<4x128xf32>
    tpu.vector_store %arg39[%c68, %c0_147], %188 {strides = array<i32>} : memref<80x128xf32, #tpu.memory_space<vmem>>, vector<4x128xf32>,
    %c32 = arith.constant 32 : index
    %c0_148 = arith.constant 0 : index
    %190 = tpu.strided_load %arg39[%c32, %c0_148] {strides = array<i32: 2, 1>} : memref<80x128xf32, #tpu.memory_space<vmem>>, vector<4x128xf32>
    %c33 = arith.constant 33 : index
    %c0_149 = arith.constant 0 : index
    %191 = tpu.strided_load %arg39[%c33, %c0_149] {strides = array<i32: 2, 1>} : memref<80x128xf32, #tpu.memory_space<vmem>>, vector<4x128xf32>
    %c40 = arith.constant 40 : index
    %c0_150 = arith.constant 0 : index
    %192 = tpu.strided_load %arg39[%c40, %c0_150] {strides = array<i32: 2, 1>} : memref<80x128xf32, #tpu.memory_space<vmem>>, vector<4x128xf32>
    %c41 = arith.constant 41 : index
    %c0_151 = arith.constant 0 : index
    %193 = tpu.strided_load %arg39[%c41, %c0_151] {strides = array<i32: 2, 1>} : memref<80x128xf32, #tpu.memory_space<vmem>>, vector<4x128xf32>
    %194 = arith.maximumf %190, %191 : vector<4x128xf32>
    %195 = arith.maximumf %192, %193 : vector<4x128xf32>
    %196 = arith.maximumf %194, %195 : vector<4x128xf32>
    %c72 = arith.constant 72 : index
    %c0_152 = arith.constant 0 : index
    %197 = vector.load %arg39[%c72, %c0_152] : memref<80x128xf32, #tpu.memory_space<vmem>>, vector<4x128xf32>
    tpu.vector_store %arg39[%c72, %c0_152], %196 {strides = array<i32>} : memref<80x128xf32, #tpu.memory_space<vmem>>, vector<4x128xf32>,
    %c48 = arith.constant 48 : index
    %c0_153 = arith.constant 0 : index
    %198 = tpu.strided_load %arg39[%c48, %c0_153] {strides = array<i32: 2, 1>} : memref<80x128xf32, #tpu.memory_space<vmem>>, vector<4x128xf32>
    %c49 = arith.constant 49 : index
    %c0_154 = arith.constant 0 : index
    %199 = tpu.strided_load %arg39[%c49, %c0_154] {strides = array<i32: 2, 1>} : memref<80x128xf32, #tpu.memory_space<vmem>>, vector<4x128xf32>
    %c56 = arith.constant 56 : index
    %c0_155 = arith.constant 0 : index
    %200 = tpu.strided_load %arg39[%c56, %c0_155] {strides = array<i32: 2, 1>} : memref<80x128xf32, #tpu.memory_space<vmem>>, vector<4x128xf32>
    %c57 = arith.constant 57 : index
    %c0_156 = arith.constant 0 : index
    %201 = tpu.strided_load %arg39[%c57, %c0_156] {strides = array<i32: 2, 1>} : memref<80x128xf32, #tpu.memory_space<vmem>>, vector<4x128xf32>
    %202 = arith.maximumf %198, %199 : vector<4x128xf32>
    %203 = arith.maximumf %200, %201 : vector<4x128xf32>
    %204 = arith.maximumf %202, %203 : vector<4x128xf32>
    %c76 = arith.constant 76 : index
    %c0_157 = arith.constant 0 : index
    %205 = vector.load %arg39[%c76, %c0_157] : memref<80x128xf32, #tpu.memory_space<vmem>>, vector<4x128xf32>
    tpu.vector_store %arg39[%c76, %c0_157], %204 {strides = array<i32>} : memref<80x128xf32, #tpu.memory_space<vmem>>, vector<4x128xf32>,
    %c64_158 = arith.constant 64 : index
    %c0_159 = arith.constant 0 : index
    %206 = vector.load %arg39[%c64_158, %c0_159] : memref<80x128xf32, #tpu.memory_space<vmem>>, vector<16x128xf32>
    %c0_160 = arith.constant 0 : index
    %c0_161 = arith.constant 0 : index
    %207 = vector.load %arg40[%c0_160, %c0_161] : memref<64x256xf32, #tpu.memory_space<vmem>>, vector<16x128xf32>
    tpu.vector_store %arg40[%c0_160, %c0_161], %206 {strides = array<i32>} : memref<64x256xf32, #tpu.memory_space<vmem>>, vector<16x128xf32>,
    %208 = arith.truncf %206 : vector<16x128xf32> to vector<16x128xbf16>
    %c0_162 = arith.constant 0 : index
    %c0_163 = arith.constant 0 : index
    %209 = vector.load %arg16[%c0_162, %c0_163] : memref<128x128xbf16, #tpu.memory_space<vmem>>, vector<128x128xbf16>
    %cst_164 = arith.constant dense<0.000000e+00> : vector<16x128xf32>
    %210 = tpu.matmul %208, %209, %cst_164 {dimension_numbers = #tpu.dot_dimension_numbers<[1], [0], [0], [1], [0, 0, 1, 1], [], []>} : vector<16x128xbf16>, vector<128x128xbf16>, vector<16x128xf32> -> vector<16x128xf32>
    %c0_165 = arith.constant 0 : index
    %c0_166 = arith.constant 0 : index
    %211 = vector.load %arg17[%c0_165, %c0_166] : memref<1x128xf32, #tpu.memory_space<vmem>>, vector<1x128xf32>
    %212 = vector.broadcast %211 : vector<1x128xf32> to vector<16x128xf32>
    %213 = arith.mulf %210, %212 : vector<16x128xf32>
    %c0_167 = arith.constant 0 : index
    %c0_168 = arith.constant 0 : index
    %214 = vector.load %arg18[%c0_167, %c0_168] : memref<1x128xf32, #tpu.memory_space<vmem>>, vector<1x128xf32>
    %215 = vector.broadcast %214 : vector<1x128xf32> to vector<16x128xf32>
    %216 = arith.addf %213, %215 : vector<16x128xf32>
    %cst_169 = arith.constant 0.000000e+00 : f32
    %217 = vector.broadcast %cst_169 : f32 to vector<16x128xf32>
    %218 = arith.maximumf %216, %217 : vector<16x128xf32>
    %cst_170 = arith.constant 0.000000e+00 : bf16
    %219 = vector.broadcast %cst_170 : bf16 to vector<5x128xbf16>
    %c0_171 = arith.constant 0 : index
    %c0_172 = arith.constant 0 : index
    %220 = vector.load %arg38[%c0_171, %c0_172] : memref<82x128xbf16, #tpu.memory_space<vmem>>, vector<5x128xbf16>
    tpu.vector_store %arg38[%c0_171, %c0_172], %219 {strides = array<i32>} : memref<82x128xbf16, #tpu.memory_space<vmem>>, vector<5x128xbf16>,
    %221 = arith.truncf %218 : vector<16x128xf32> to vector<16x128xbf16>
    %c5_173 = arith.constant 5 : index
    %c0_174 = arith.constant 0 : index
    %222 = vector.load %arg38[%c5_173, %c0_174] : memref<82x128xbf16, #tpu.memory_space<vmem>>, vector<16x128xbf16>
    tpu.vector_store %arg38[%c5_173, %c0_174], %221 {strides = array<i32>} : memref<82x128xbf16, #tpu.memory_space<vmem>>, vector<16x128xbf16>,
    %cst_175 = arith.constant 0.000000e+00 : bf16
    %223 = vector.broadcast %cst_175 : bf16 to vector<5x128xbf16>
    %c21 = arith.constant 21 : index
    %c0_176 = arith.constant 0 : index
    %224 = vector.load %arg38[%c21, %c0_176] : memref<82x128xbf16, #tpu.memory_space<vmem>>, vector<5x128xbf16>
    tpu.vector_store %arg38[%c21, %c0_176], %223 {strides = array<i32>} : memref<82x128xbf16, #tpu.memory_space<vmem>>, vector<5x128xbf16>,
    %225 = tpu.iota {dimensions = array<i32: 0>} : vector<16x128xi32>
    %c4_i32 = arith.constant 4 : i32
    %c0_i32_177 = arith.constant 0 : i32
    %226 = arith.cmpi eq, %c4_i32, %c0_i32_177 : i32
    %c1_i32_178 = arith.constant 1 : i32
    %227 = arith.select %226, %c1_i32_178, %c4_i32 : i32
    %228 = vector.broadcast %227 : i32 to vector<16x128xi32>
    %229 = arith.remsi %225, %228 : vector<16x128xi32>
    %c0_i32_179 = arith.constant 0 : i32
    %230 = vector.broadcast %c0_i32_179 : i32 to vector<16x128xi32>
    %231 = arith.cmpi ne, %229, %230 : vector<16x128xi32>
    %c0_i32_180 = arith.constant 0 : i32
    %232 = vector.broadcast %c0_i32_180 : i32 to vector<16x128xi32>
    %233 = arith.cmpi slt, %229, %232 : vector<16x128xi32>
    %c0_i32_181 = arith.constant 0 : i32
    %234 = arith.cmpi slt, %227, %c0_i32_181 : i32
    %235 = vector.broadcast %234 : i1 to vector<16x128xi1>
    %236 = vector.broadcast %235 : vector<16x128xi1> to vector<16x128xi1>
    %237 = arith.xori %233, %236 : vector<16x128xi1>
    %238 = arith.andi %237, %231 : vector<16x128xi1>
    %239 = vector.broadcast %227 : i32 to vector<16x128xi32>
    %240 = arith.addi %229, %239 : vector<16x128xi32>
    %241 = arith.select %238, %240, %229 : vector<16x128xi1>, vector<16x128xi32>
    %cst_182 = arith.constant 0.000000e+00 : f32
    %242 = vector.broadcast %cst_182 : f32 to vector<16x128xf32>
    %c0_183 = arith.constant 0 : index
    %c0_184 = arith.constant 0 : index
    %243 = vector.load %arg38[%c0_183, %c0_184] : memref<82x128xbf16, #tpu.memory_space<vmem>>, vector<16x128xbf16>
    %c1_i32_185 = arith.constant 1 : i32
    %244 = vector.broadcast %c1_i32_185 : i32 to vector<16x128xi32>
    %245 = arith.cmpi sge, %241, %244 : vector<16x128xi32>
    %c0_i32_186 = arith.constant 0 : i32
    %246 = arith.sitofp %c0_i32_186 : i32 to bf16
    %247 = vector.broadcast %246 : bf16 to vector<16x128xbf16>
    %248 = arith.select %245, %243, %247 : vector<16x128xi1>, vector<16x128xbf16>
    %c0_187 = arith.constant 0 : index
    %c0_188 = arith.constant 0 : index
    %c0_189 = arith.constant 0 : index
    %249 = vector.load %arg19[%c0_187, %c0_188, %c0_189] : memref<9x128x128xbf16, #tpu.memory_space<vmem>>, vector<1x128x128xbf16>
    %250 = vector.shape_cast %249 : vector<1x128x128xbf16> to vector<128x128xbf16>
    %cst_190 = arith.constant dense<0.000000e+00> : vector<16x128xf32>
    %251 = tpu.matmul %248, %250, %cst_190 {dimension_numbers = #tpu.dot_dimension_numbers<[1], [0], [0], [1], [0, 0, 1, 1], [], []>} : vector<16x128xbf16>, vector<128x128xbf16>, vector<16x128xf32> -> vector<16x128xf32>
    %252 = arith.addf %242, %251 : vector<16x128xf32>
    %c1_191 = arith.constant 1 : index
    %c0_192 = arith.constant 0 : index
    %253 = vector.load %arg38[%c1_191, %c0_192] : memref<82x128xbf16, #tpu.memory_space<vmem>>, vector<16x128xbf16>
    %c1_193 = arith.constant 1 : index
    %c0_194 = arith.constant 0 : index
    %c0_195 = arith.constant 0 : index
    %254 = vector.load %arg19[%c1_193, %c0_194, %c0_195] : memref<9x128x128xbf16, #tpu.memory_space<vmem>>, vector<1x128x128xbf16>
    %255 = vector.shape_cast %254 : vector<1x128x128xbf16> to vector<128x128xbf16>
    %cst_196 = arith.constant dense<0.000000e+00> : vector<16x128xf32>
    %256 = tpu.matmul %253, %255, %cst_196 {dimension_numbers = #tpu.dot_dimension_numbers<[1], [0], [0], [1], [0, 0, 1, 1], [], []>} : vector<16x128xbf16>, vector<128x128xbf16>, vector<16x128xf32> -> vector<16x128xf32>
    %257 = arith.addf %252, %256 : vector<16x128xf32>
    %c2_197 = arith.constant 2 : index
    %c0_198 = arith.constant 0 : index
    %258 = vector.load %arg38[%c2_197, %c0_198] : memref<82x128xbf16, #tpu.memory_space<vmem>>, vector<16x128xbf16>
    %c2_i32 = arith.constant 2 : i32
    %259 = vector.broadcast %c2_i32 : i32 to vector<16x128xi32>
    %260 = arith.cmpi sle, %241, %259 : vector<16x128xi32>
    %c0_i32_199 = arith.constant 0 : i32
    %261 = arith.sitofp %c0_i32_199 : i32 to bf16
    %262 = vector.broadcast %261 : bf16 to vector<16x128xbf16>
    %263 = arith.select %260, %258, %262 : vector<16x128xi1>, vector<16x128xbf16>
    %c2_200 = arith.constant 2 : index
    %c0_201 = arith.constant 0 : index
    %c0_202 = arith.constant 0 : index
    %264 = vector.load %arg19[%c2_200, %c0_201, %c0_202] : memref<9x128x128xbf16, #tpu.memory_space<vmem>>, vector<1x128x128xbf16>
    %265 = vector.shape_cast %264 : vector<1x128x128xbf16> to vector<128x128xbf16>
    %cst_203 = arith.constant dense<0.000000e+00> : vector<16x128xf32>
    %266 = tpu.matmul %263, %265, %cst_203 {dimension_numbers = #tpu.dot_dimension_numbers<[1], [0], [0], [1], [0, 0, 1, 1], [], []>} : vector<16x128xbf16>, vector<128x128xbf16>, vector<16x128xf32> -> vector<16x128xf32>
    %267 = arith.addf %257, %266 : vector<16x128xf32>
    %c4_204 = arith.constant 4 : index
    %c0_205 = arith.constant 0 : index
    %268 = vector.load %arg38[%c4_204, %c0_205] : memref<82x128xbf16, #tpu.memory_space<vmem>>, vector<16x128xbf16>
    %c1_i32_206 = arith.constant 1 : i32
    %269 = vector.broadcast %c1_i32_206 : i32 to vector<16x128xi32>
    %270 = arith.cmpi sge, %241, %269 : vector<16x128xi32>
    %c0_i32_207 = arith.constant 0 : i32
    %271 = arith.sitofp %c0_i32_207 : i32 to bf16
    %272 = vector.broadcast %271 : bf16 to vector<16x128xbf16>
    %273 = arith.select %270, %268, %272 : vector<16x128xi1>, vector<16x128xbf16>
    %c3_208 = arith.constant 3 : index
    %c0_209 = arith.constant 0 : index
    %c0_210 = arith.constant 0 : index
    %274 = vector.load %arg19[%c3_208, %c0_209, %c0_210] : memref<9x128x128xbf16, #tpu.memory_space<vmem>>, vector<1x128x128xbf16>
    %275 = vector.shape_cast %274 : vector<1x128x128xbf16> to vector<128x128xbf16>
    %cst_211 = arith.constant dense<0.000000e+00> : vector<16x128xf32>
    %276 = tpu.matmul %273, %275, %cst_211 {dimension_numbers = #tpu.dot_dimension_numbers<[1], [0], [0], [1], [0, 0, 1, 1], [], []>} : vector<16x128xbf16>, vector<128x128xbf16>, vector<16x128xf32> -> vector<16x128xf32>
    %277 = arith.addf %267, %276 : vector<16x128xf32>
    %c5_212 = arith.constant 5 : index
    %c0_213 = arith.constant 0 : index
    %278 = vector.load %arg38[%c5_212, %c0_213] : memref<82x128xbf16, #tpu.memory_space<vmem>>, vector<16x128xbf16>
    %c4_214 = arith.constant 4 : index
    %c0_215 = arith.constant 0 : index
    %c0_216 = arith.constant 0 : index
    %279 = vector.load %arg19[%c4_214, %c0_215, %c0_216] : memref<9x128x128xbf16, #tpu.memory_space<vmem>>, vector<1x128x128xbf16>
    %280 = vector.shape_cast %279 : vector<1x128x128xbf16> to vector<128x128xbf16>
    %cst_217 = arith.constant dense<0.000000e+00> : vector<16x128xf32>
    %281 = tpu.matmul %278, %280, %cst_217 {dimension_numbers = #tpu.dot_dimension_numbers<[1], [0], [0], [1], [0, 0, 1, 1], [], []>} : vector<16x128xbf16>, vector<128x128xbf16>, vector<16x128xf32> -> vector<16x128xf32>
    %282 = arith.addf %277, %281 : vector<16x128xf32>
    %c6_218 = arith.constant 6 : index
    %c0_219 = arith.constant 0 : index
    %283 = vector.load %arg38[%c6_218, %c0_219] : memref<82x128xbf16, #tpu.memory_space<vmem>>, vector<16x128xbf16>
    %c2_i32_220 = arith.constant 2 : i32
    %284 = vector.broadcast %c2_i32_220 : i32 to vector<16x128xi32>
    %285 = arith.cmpi sle, %241, %284 : vector<16x128xi32>
    %c0_i32_221 = arith.constant 0 : i32
    %286 = arith.sitofp %c0_i32_221 : i32 to bf16
    %287 = vector.broadcast %286 : bf16 to vector<16x128xbf16>
    %288 = arith.select %285, %283, %287 : vector<16x128xi1>, vector<16x128xbf16>
    %c5_222 = arith.constant 5 : index
    %c0_223 = arith.constant 0 : index
    %c0_224 = arith.constant 0 : index
    %289 = vector.load %arg19[%c5_222, %c0_223, %c0_224] : memref<9x128x128xbf16, #tpu.memory_space<vmem>>, vector<1x128x128xbf16>
    %290 = vector.shape_cast %289 : vector<1x128x128xbf16> to vector<128x128xbf16>
    %cst_225 = arith.constant dense<0.000000e+00> : vector<16x128xf32>
    %291 = tpu.matmul %288, %290, %cst_225 {dimension_numbers = #tpu.dot_dimension_numbers<[1], [0], [0], [1], [0, 0, 1, 1], [], []>} : vector<16x128xbf16>, vector<128x128xbf16>, vector<16x128xf32> -> vector<16x128xf32>
    %292 = arith.addf %282, %291 : vector<16x128xf32>
    %c8_226 = arith.constant 8 : index
    %c0_227 = arith.constant 0 : index
    %293 = vector.load %arg38[%c8_226, %c0_227] : memref<82x128xbf16, #tpu.memory_space<vmem>>, vector<16x128xbf16>
    %c1_i32_228 = arith.constant 1 : i32
    %294 = vector.broadcast %c1_i32_228 : i32 to vector<16x128xi32>
    %295 = arith.cmpi sge, %241, %294 : vector<16x128xi32>
    %c0_i32_229 = arith.constant 0 : i32
    %296 = arith.sitofp %c0_i32_229 : i32 to bf16
    %297 = vector.broadcast %296 : bf16 to vector<16x128xbf16>
    %298 = arith.select %295, %293, %297 : vector<16x128xi1>, vector<16x128xbf16>
    %c6_230 = arith.constant 6 : index
    %c0_231 = arith.constant 0 : index
    %c0_232 = arith.constant 0 : index
    %299 = vector.load %arg19[%c6_230, %c0_231, %c0_232] : memref<9x128x128xbf16, #tpu.memory_space<vmem>>, vector<1x128x128xbf16>
    %300 = vector.shape_cast %299 : vector<1x128x128xbf16> to vector<128x128xbf16>
    %cst_233 = arith.constant dense<0.000000e+00> : vector<16x128xf32>
    %301 = tpu.matmul %298, %300, %cst_233 {dimension_numbers = #tpu.dot_dimension_numbers<[1], [0], [0], [1], [0, 0, 1, 1], [], []>} : vector<16x128xbf16>, vector<128x128xbf16>, vector<16x128xf32> -> vector<16x128xf32>
    %302 = arith.addf %292, %301 : vector<16x128xf32>
    %c9_234 = arith.constant 9 : index
    %c0_235 = arith.constant 0 : index
    %303 = vector.load %arg38[%c9_234, %c0_235] : memref<82x128xbf16, #tpu.memory_space<vmem>>, vector<16x128xbf16>
    %c7_236 = arith.constant 7 : index
    %c0_237 = arith.constant 0 : index
    %c0_238 = arith.constant 0 : index
    %304 = vector.load %arg19[%c7_236, %c0_237, %c0_238] : memref<9x128x128xbf16, #tpu.memory_space<vmem>>, vector<1x128x128xbf16>
    %305 = vector.shape_cast %304 : vector<1x128x128xbf16> to vector<128x128xbf16>
    %cst_239 = arith.constant dense<0.000000e+00> : vector<16x128xf32>
    %306 = tpu.matmul %303, %305, %cst_239 {dimension_numbers = #tpu.dot_dimension_numbers<[1], [0], [0], [1], [0, 0, 1, 1], [], []>} : vector<16x128xbf16>, vector<128x128xbf16>, vector<16x128xf32> -> vector<16x128xf32>
    %307 = arith.addf %302, %306 : vector<16x128xf32>
    %c10_240 = arith.constant 10 : index
    %c0_241 = arith.constant 0 : index
    %308 = vector.load %arg38[%c10_240, %c0_241] : memref<82x128xbf16, #tpu.memory_space<vmem>>, vector<16x128xbf16>
    %c2_i32_242 = arith.constant 2 : i32
    %309 = vector.broadcast %c2_i32_242 : i32 to vector<16x128xi32>
    %310 = arith.cmpi sle, %241, %309 : vector<16x128xi32>
    %c0_i32_243 = arith.constant 0 : i32
    %311 = arith.sitofp %c0_i32_243 : i32 to bf16
    %312 = vector.broadcast %311 : bf16 to vector<16x128xbf16>
    %313 = arith.select %310, %308, %312 : vector<16x128xi1>, vector<16x128xbf16>
    %c8_244 = arith.constant 8 : index
    %c0_245 = arith.constant 0 : index
    %c0_246 = arith.constant 0 : index
    %314 = vector.load %arg19[%c8_244, %c0_245, %c0_246] : memref<9x128x128xbf16, #tpu.memory_space<vmem>>, vector<1x128x128xbf16>
    %315 = vector.shape_cast %314 : vector<1x128x128xbf16> to vector<128x128xbf16>
    %cst_247 = arith.constant dense<0.000000e+00> : vector<16x128xf32>
    %316 = tpu.matmul %313, %315, %cst_247 {dimension_numbers = #tpu.dot_dimension_numbers<[1], [0], [0], [1], [0, 0, 1, 1], [], []>} : vector<16x128xbf16>, vector<128x128xbf16>, vector<16x128xf32> -> vector<16x128xf32>
    %317 = arith.addf %307, %316 : vector<16x128xf32>
    %c0_248 = arith.constant 0 : index
    %c0_249 = arith.constant 0 : index
    %318 = vector.load %arg20[%c0_248, %c0_249] : memref<1x128xf32, #tpu.memory_space<vmem>>, vector<1x128xf32>
    %319 = vector.broadcast %318 : vector<1x128xf32> to vector<16x128xf32>
    %320 = arith.mulf %317, %319 : vector<16x128xf32>
    %c0_250 = arith.constant 0 : index
    %c0_251 = arith.constant 0 : index
    %321 = vector.load %arg21[%c0_250, %c0_251] : memref<1x128xf32, #tpu.memory_space<vmem>>, vector<1x128xf32>
    %322 = vector.broadcast %321 : vector<1x128xf32> to vector<16x128xf32>
    %323 = arith.addf %320, %322 : vector<16x128xf32>
    %cst_252 = arith.constant 0.000000e+00 : f32
    %324 = vector.broadcast %cst_252 : f32 to vector<16x128xf32>
    %325 = arith.maximumf %323, %324 : vector<16x128xf32>
    %326 = arith.truncf %325 : vector<16x128xf32> to vector<16x128xbf16>
    %c0_253 = arith.constant 0 : index
    %c0_254 = arith.constant 0 : index
    %327 = vector.load %arg22[%c0_253, %c0_254] : memref<128x128xbf16, #tpu.memory_space<vmem>>, vector<128x128xbf16>
    %cst_255 = arith.constant dense<0.000000e+00> : vector<16x128xf32>
    %328 = tpu.matmul %326, %327, %cst_255 {dimension_numbers = #tpu.dot_dimension_numbers<[1], [0], [0], [1], [0, 0, 1, 1], [], []>} : vector<16x128xbf16>, vector<128x128xbf16>, vector<16x128xf32> -> vector<16x128xf32>
    %c0_256 = arith.constant 0 : index
    %c0_257 = arith.constant 0 : index
    %329 = vector.load %arg23[%c0_256, %c0_257] : memref<1x128xf32, #tpu.memory_space<vmem>>, vector<1x128xf32>
    %330 = vector.broadcast %329 : vector<1x128xf32> to vector<16x128xf32>
    %331 = arith.mulf %328, %330 : vector<16x128xf32>
    %c0_258 = arith.constant 0 : index
    %c0_259 = arith.constant 0 : index
    %332 = vector.load %arg24[%c0_258, %c0_259] : memref<1x128xf32, #tpu.memory_space<vmem>>, vector<1x128xf32>
    %333 = vector.broadcast %332 : vector<1x128xf32> to vector<16x128xf32>
    %334 = arith.addf %331, %333 : vector<16x128xf32>
    %cst_260 = arith.constant 0.000000e+00 : f32
    %335 = vector.broadcast %cst_260 : f32 to vector<16x128xf32>
    %336 = arith.maximumf %334, %335 : vector<16x128xf32>
    %c0_261 = arith.constant 0 : index
    %c0_262 = arith.constant 0 : index
    %337 = vector.load %arg40[%c0_261, %c0_262] : memref<64x256xf32, #tpu.memory_space<vmem>>, vector<16x128xf32>
    %338 = arith.addf %336, %337 : vector<16x128xf32>
    %339 = arith.truncf %338 : vector<16x128xf32> to vector<16x128xbf16>
    %c0_263 = arith.constant 0 : index
    %c0_264 = arith.constant 0 : index
    %340 = vector.load %arg25[%c0_263, %c0_264] : memref<128x256xbf16, #tpu.memory_space<vmem>>, vector<128x256xbf16>
    %cst_265 = arith.constant dense<0.000000e+00> : vector<16x256xf32>
    %341 = tpu.matmul %339, %340, %cst_265 {dimension_numbers = #tpu.dot_dimension_numbers<[1], [0], [0], [1], [0, 0, 1, 1], [], []>} : vector<16x128xbf16>, vector<128x256xbf16>, vector<16x256xf32> -> vector<16x256xf32>
    %c0_266 = arith.constant 0 : index
    %c0_267 = arith.constant 0 : index
    %342 = vector.load %arg26[%c0_266, %c0_267] : memref<1x256xf32, #tpu.memory_space<vmem>>, vector<1x256xf32>
    %343 = vector.broadcast %342 : vector<1x256xf32> to vector<16x256xf32>
    %344 = arith.addf %341, %343 : vector<16x256xf32>
    %c0_268 = arith.constant 0 : index
    %c0_269 = arith.constant 0 : index
    %345 = vector.load %arg40[%c0_268, %c0_269] : memref<64x256xf32, #tpu.memory_space<vmem>>, vector<16x256xf32>
    tpu.vector_store %arg40[%c0_268, %c0_269], %344 {strides = array<i32>} : memref<64x256xf32, #tpu.memory_space<vmem>>, vector<16x256xf32>,
    %346 = arith.truncf %344 : vector<16x256xf32> to vector<16x256xbf16>
    %c0_270 = arith.constant 0 : index
    %c0_271 = arith.constant 0 : index
    %347 = vector.load %arg27[%c0_270, %c0_271] : memref<256x128xbf16, #tpu.memory_space<vmem>>, vector<256x128xbf16>
    %cst_272 = arith.constant dense<0.000000e+00> : vector<16x128xf32>
    %348 = tpu.matmul %346, %347, %cst_272 {dimension_numbers = #tpu.dot_dimension_numbers<[1], [0], [0], [1], [0, 0, 1, 1], [], []>} : vector<16x256xbf16>, vector<256x128xbf16>, vector<16x128xf32> -> vector<16x128xf32>
    %c0_273 = arith.constant 0 : index
    %c0_274 = arith.constant 0 : index
    %349 = vector.load %arg28[%c0_273, %c0_274] : memref<1x128xf32, #tpu.memory_space<vmem>>, vector<1x128xf32>
    %350 = vector.broadcast %349 : vector<1x128xf32> to vector<16x128xf32>
    %351 = arith.mulf %348, %350 : vector<16x128xf32>
    %c0_275 = arith.constant 0 : index
    %c0_276 = arith.constant 0 : index
    %352 = vector.load %arg29[%c0_275, %c0_276] : memref<1x128xf32, #tpu.memory_space<vmem>>, vector<1x128xf32>
    %353 = vector.broadcast %352 : vector<1x128xf32> to vector<16x128xf32>
    %354 = arith.addf %351, %353 : vector<16x128xf32>
    %cst_277 = arith.constant 0.000000e+00 : f32
    %355 = vector.broadcast %cst_277 : f32 to vector<16x128xf32>
    %356 = arith.maximumf %354, %355 : vector<16x128xf32>
    %cst_278 = arith.constant 0.000000e+00 : bf16
    %357 = vector.broadcast %cst_278 : bf16 to vector<5x128xbf16>
    %c0_279 = arith.constant 0 : index
    %c0_280 = arith.constant 0 : index
    %358 = vector.load %arg38[%c0_279, %c0_280] : memref<82x128xbf16, #tpu.memory_space<vmem>>, vector<5x128xbf16>
    tpu.vector_store %arg38[%c0_279, %c0_280], %357 {strides = array<i32>} : memref<82x128xbf16, #tpu.memory_space<vmem>>, vector<5x128xbf16>,
    %359 = arith.truncf %356 : vector<16x128xf32> to vector<16x128xbf16>
    %c5_281 = arith.constant 5 : index
    %c0_282 = arith.constant 0 : index
    %360 = vector.load %arg38[%c5_281, %c0_282] : memref<82x128xbf16, #tpu.memory_space<vmem>>, vector<16x128xbf16>
    tpu.vector_store %arg38[%c5_281, %c0_282], %359 {strides = array<i32>} : memref<82x128xbf16, #tpu.memory_space<vmem>>, vector<16x128xbf16>,
    %cst_283 = arith.constant 0.000000e+00 : bf16
    %361 = vector.broadcast %cst_283 : bf16 to vector<5x128xbf16>
    %c21_284 = arith.constant 21 : index
    %c0_285 = arith.constant 0 : index
    %362 = vector.load %arg38[%c21_284, %c0_285] : memref<82x128xbf16, #tpu.memory_space<vmem>>, vector<5x128xbf16>
    tpu.vector_store %arg38[%c21_284, %c0_285], %361 {strides = array<i32>} : memref<82x128xbf16, #tpu.memory_space<vmem>>, vector<5x128xbf16>,
    %363 = tpu.iota {dimensions = array<i32: 0>} : vector<16x128xi32>
    %c4_i32_286 = arith.constant 4 : i32
    %c0_i32_287 = arith.constant 0 : i32
    %364 = arith.cmpi eq, %c4_i32_286, %c0_i32_287 : i32
    %c1_i32_288 = arith.constant 1 : i32
    %365 = arith.select %364, %c1_i32_288, %c4_i32_286 : i32
    %366 = vector.broadcast %365 : i32 to vector<16x128xi32>
    %367 = arith.remsi %363, %366 : vector<16x128xi32>
    %c0_i32_289 = arith.constant 0 : i32
    %368 = vector.broadcast %c0_i32_289 : i32 to vector<16x128xi32>
    %369 = arith.cmpi ne, %367, %368 : vector<16x128xi32>
    %c0_i32_290 = arith.constant 0 : i32
    %370 = vector.broadcast %c0_i32_290 : i32 to vector<16x128xi32>
    %371 = arith.cmpi slt, %367, %370 : vector<16x128xi32>
    %c0_i32_291 = arith.constant 0 : i32
    %372 = arith.cmpi slt, %365, %c0_i32_291 : i32
    %373 = vector.broadcast %372 : i1 to vector<16x128xi1>
    %374 = vector.broadcast %373 : vector<16x128xi1> to vector<16x128xi1>
    %375 = arith.xori %371, %374 : vector<16x128xi1>
    %376 = arith.andi %375, %369 : vector<16x128xi1>
    %377 = vector.broadcast %365 : i32 to vector<16x128xi32>
    %378 = arith.addi %367, %377 : vector<16x128xi32>
    %379 = arith.select %376, %378, %367 : vector<16x128xi1>, vector<16x128xi32>
    %cst_292 = arith.constant 0.000000e+00 : f32
    %380 = vector.broadcast %cst_292 : f32 to vector<16x128xf32>
    %c0_293 = arith.constant 0 : index
    %c0_294 = arith.constant 0 : index
    %381 = vector.load %arg38[%c0_293, %c0_294] : memref<82x128xbf16, #tpu.memory_space<vmem>>, vector<16x128xbf16>
    %c1_i32_295 = arith.constant 1 : i32
    %382 = vector.broadcast %c1_i32_295 : i32 to vector<16x128xi32>
    %383 = arith.cmpi sge, %379, %382 : vector<16x128xi32>
    %c0_i32_296 = arith.constant 0 : i32
    %384 = arith.sitofp %c0_i32_296 : i32 to bf16
    %385 = vector.broadcast %384 : bf16 to vector<16x128xbf16>
    %386 = arith.select %383, %381, %385 : vector<16x128xi1>, vector<16x128xbf16>
    %c0_297 = arith.constant 0 : index
    %c0_298 = arith.constant 0 : index
    %c0_299 = arith.constant 0 : index
    %387 = vector.load %arg30[%c0_297, %c0_298, %c0_299] : memref<9x128x128xbf16, #tpu.memory_space<vmem>>, vector<1x128x128xbf16>
    %388 = vector.shape_cast %387 : vector<1x128x128xbf16> to vector<128x128xbf16>
    %cst_300 = arith.constant dense<0.000000e+00> : vector<16x128xf32>
    %389 = tpu.matmul %386, %388, %cst_300 {dimension_numbers = #tpu.dot_dimension_numbers<[1], [0], [0], [1], [0, 0, 1, 1], [], []>} : vector<16x128xbf16>, vector<128x128xbf16>, vector<16x128xf32> -> vector<16x128xf32>
    %390 = arith.addf %380, %389 : vector<16x128xf32>
    %c1_301 = arith.constant 1 : index
    %c0_302 = arith.constant 0 : index
    %391 = vector.load %arg38[%c1_301, %c0_302] : memref<82x128xbf16, #tpu.memory_space<vmem>>, vector<16x128xbf16>
    %c1_303 = arith.constant 1 : index
    %c0_304 = arith.constant 0 : index
    %c0_305 = arith.constant 0 : index
    %392 = vector.load %arg30[%c1_303, %c0_304, %c0_305] : memref<9x128x128xbf16, #tpu.memory_space<vmem>>, vector<1x128x128xbf16>
    %393 = vector.shape_cast %392 : vector<1x128x128xbf16> to vector<128x128xbf16>
    %cst_306 = arith.constant dense<0.000000e+00> : vector<16x128xf32>
    %394 = tpu.matmul %391, %393, %cst_306 {dimension_numbers = #tpu.dot_dimension_numbers<[1], [0], [0], [1], [0, 0, 1, 1], [], []>} : vector<16x128xbf16>, vector<128x128xbf16>, vector<16x128xf32> -> vector<16x128xf32>
    %395 = arith.addf %390, %394 : vector<16x128xf32>
    %c2_307 = arith.constant 2 : index
    %c0_308 = arith.constant 0 : index
    %396 = vector.load %arg38[%c2_307, %c0_308] : memref<82x128xbf16, #tpu.memory_space<vmem>>, vector<16x128xbf16>
    %c2_i32_309 = arith.constant 2 : i32
    %397 = vector.broadcast %c2_i32_309 : i32 to vector<16x128xi32>
    %398 = arith.cmpi sle, %379, %397 : vector<16x128xi32>
    %c0_i32_310 = arith.constant 0 : i32
    %399 = arith.sitofp %c0_i32_310 : i32 to bf16
    %400 = vector.broadcast %399 : bf16 to vector<16x128xbf16>
    %401 = arith.select %398, %396, %400 : vector<16x128xi1>, vector<16x128xbf16>
    %c2_311 = arith.constant 2 : index
    %c0_312 = arith.constant 0 : index
    %c0_313 = arith.constant 0 : index
    %402 = vector.load %arg30[%c2_311, %c0_312, %c0_313] : memref<9x128x128xbf16, #tpu.memory_space<vmem>>, vector<1x128x128xbf16>
    %403 = vector.shape_cast %402 : vector<1x128x128xbf16> to vector<128x128xbf16>
    %cst_314 = arith.constant dense<0.000000e+00> : vector<16x128xf32>
    %404 = tpu.matmul %401, %403, %cst_314 {dimension_numbers = #tpu.dot_dimension_numbers<[1], [0], [0], [1], [0, 0, 1, 1], [], []>} : vector<16x128xbf16>, vector<128x128xbf16>, vector<16x128xf32> -> vector<16x128xf32>
    %405 = arith.addf %395, %404 : vector<16x128xf32>
    %c4_315 = arith.constant 4 : index
    %c0_316 = arith.constant 0 : index
    %406 = vector.load %arg38[%c4_315, %c0_316] : memref<82x128xbf16, #tpu.memory_space<vmem>>, vector<16x128xbf16>
    %c1_i32_317 = arith.constant 1 : i32
    %407 = vector.broadcast %c1_i32_317 : i32 to vector<16x128xi32>
    %408 = arith.cmpi sge, %379, %407 : vector<16x128xi32>
    %c0_i32_318 = arith.constant 0 : i32
    %409 = arith.sitofp %c0_i32_318 : i32 to bf16
    %410 = vector.broadcast %409 : bf16 to vector<16x128xbf16>
    %411 = arith.select %408, %406, %410 : vector<16x128xi1>, vector<16x128xbf16>
    %c3_319 = arith.constant 3 : index
    %c0_320 = arith.constant 0 : index
    %c0_321 = arith.constant 0 : index
    %412 = vector.load %arg30[%c3_319, %c0_320, %c0_321] : memref<9x128x128xbf16, #tpu.memory_space<vmem>>, vector<1x128x128xbf16>
    %413 = vector.shape_cast %412 : vector<1x128x128xbf16> to vector<128x128xbf16>
    %cst_322 = arith.constant dense<0.000000e+00> : vector<16x128xf32>
    %414 = tpu.matmul %411, %413, %cst_322 {dimension_numbers = #tpu.dot_dimension_numbers<[1], [0], [0], [1], [0, 0, 1, 1], [], []>} : vector<16x128xbf16>, vector<128x128xbf16>, vector<16x128xf32> -> vector<16x128xf32>
    %415 = arith.addf %405, %414 : vector<16x128xf32>
    %c5_323 = arith.constant 5 : index
    %c0_324 = arith.constant 0 : index
    %416 = vector.load %arg38[%c5_323, %c0_324] : memref<82x128xbf16, #tpu.memory_space<vmem>>, vector<16x128xbf16>
    %c4_325 = arith.constant 4 : index
    %c0_326 = arith.constant 0 : index
    %c0_327 = arith.constant 0 : index
    %417 = vector.load %arg30[%c4_325, %c0_326, %c0_327] : memref<9x128x128xbf16, #tpu.memory_space<vmem>>, vector<1x128x128xbf16>
    %418 = vector.shape_cast %417 : vector<1x128x128xbf16> to vector<128x128xbf16>
    %cst_328 = arith.constant dense<0.000000e+00> : vector<16x128xf32>
    %419 = tpu.matmul %416, %418, %cst_328 {dimension_numbers = #tpu.dot_dimension_numbers<[1], [0], [0], [1], [0, 0, 1, 1], [], []>} : vector<16x128xbf16>, vector<128x128xbf16>, vector<16x128xf32> -> vector<16x128xf32>
    %420 = arith.addf %415, %419 : vector<16x128xf32>
    %c6_329 = arith.constant 6 : index
    %c0_330 = arith.constant 0 : index
    %421 = vector.load %arg38[%c6_329, %c0_330] : memref<82x128xbf16, #tpu.memory_space<vmem>>, vector<16x128xbf16>
    %c2_i32_331 = arith.constant 2 : i32
    %422 = vector.broadcast %c2_i32_331 : i32 to vector<16x128xi32>
    %423 = arith.cmpi sle, %379, %422 : vector<16x128xi32>
    %c0_i32_332 = arith.constant 0 : i32
    %424 = arith.sitofp %c0_i32_332 : i32 to bf16
    %425 = vector.broadcast %424 : bf16 to vector<16x128xbf16>
    %426 = arith.select %423, %421, %425 : vector<16x128xi1>, vector<16x128xbf16>
    %c5_333 = arith.constant 5 : index
    %c0_334 = arith.constant 0 : index
    %c0_335 = arith.constant 0 : index
    %427 = vector.load %arg30[%c5_333, %c0_334, %c0_335] : memref<9x128x128xbf16, #tpu.memory_space<vmem>>, vector<1x128x128xbf16>
    %428 = vector.shape_cast %427 : vector<1x128x128xbf16> to vector<128x128xbf16>
    %cst_336 = arith.constant dense<0.000000e+00> : vector<16x128xf32>
    %429 = tpu.matmul %426, %428, %cst_336 {dimension_numbers = #tpu.dot_dimension_numbers<[1], [0], [0], [1], [0, 0, 1, 1], [], []>} : vector<16x128xbf16>, vector<128x128xbf16>, vector<16x128xf32> -> vector<16x128xf32>
    %430 = arith.addf %420, %429 : vector<16x128xf32>
    %c8_337 = arith.constant 8 : index
    %c0_338 = arith.constant 0 : index
    %431 = vector.load %arg38[%c8_337, %c0_338] : memref<82x128xbf16, #tpu.memory_space<vmem>>, vector<16x128xbf16>
    %c1_i32_339 = arith.constant 1 : i32
    %432 = vector.broadcast %c1_i32_339 : i32 to vector<16x128xi32>
    %433 = arith.cmpi sge, %379, %432 : vector<16x128xi32>
    %c0_i32_340 = arith.constant 0 : i32
    %434 = arith.sitofp %c0_i32_340 : i32 to bf16
    %435 = vector.broadcast %434 : bf16 to vector<16x128xbf16>
    %436 = arith.select %433, %431, %435 : vector<16x128xi1>, vector<16x128xbf16>
    %c6_341 = arith.constant 6 : index
    %c0_342 = arith.constant 0 : index
    %c0_343 = arith.constant 0 : index
    %437 = vector.load %arg30[%c6_341, %c0_342, %c0_343] : memref<9x128x128xbf16, #tpu.memory_space<vmem>>, vector<1x128x128xbf16>
    %438 = vector.shape_cast %437 : vector<1x128x128xbf16> to vector<128x128xbf16>
    %cst_344 = arith.constant dense<0.000000e+00> : vector<16x128xf32>
    %439 = tpu.matmul %436, %438, %cst_344 {dimension_numbers = #tpu.dot_dimension_numbers<[1], [0], [0], [1], [0, 0, 1, 1], [], []>} : vector<16x128xbf16>, vector<128x128xbf16>, vector<16x128xf32> -> vector<16x128xf32>
    %440 = arith.addf %430, %439 : vector<16x128xf32>
    %c9_345 = arith.constant 9 : index
    %c0_346 = arith.constant 0 : index
    %441 = vector.load %arg38[%c9_345, %c0_346] : memref<82x128xbf16, #tpu.memory_space<vmem>>, vector<16x128xbf16>
    %c7_347 = arith.constant 7 : index
    %c0_348 = arith.constant 0 : index
    %c0_349 = arith.constant 0 : index
    %442 = vector.load %arg30[%c7_347, %c0_348, %c0_349] : memref<9x128x128xbf16, #tpu.memory_space<vmem>>, vector<1x128x128xbf16>
    %443 = vector.shape_cast %442 : vector<1x128x128xbf16> to vector<128x128xbf16>
    %cst_350 = arith.constant dense<0.000000e+00> : vector<16x128xf32>
    %444 = tpu.matmul %441, %443, %cst_350 {dimension_numbers = #tpu.dot_dimension_numbers<[1], [0], [0], [1], [0, 0, 1, 1], [], []>} : vector<16x128xbf16>, vector<128x128xbf16>, vector<16x128xf32> -> vector<16x128xf32>
    %445 = arith.addf %440, %444 : vector<16x128xf32>
    %c10_351 = arith.constant 10 : index
    %c0_352 = arith.constant 0 : index
    %446 = vector.load %arg38[%c10_351, %c0_352] : memref<82x128xbf16, #tpu.memory_space<vmem>>, vector<16x128xbf16>
    %c2_i32_353 = arith.constant 2 : i32
    %447 = vector.broadcast %c2_i32_353 : i32 to vector<16x128xi32>
    %448 = arith.cmpi sle, %379, %447 : vector<16x128xi32>
    %c0_i32_354 = arith.constant 0 : i32
    %449 = arith.sitofp %c0_i32_354 : i32 to bf16
    %450 = vector.broadcast %449 : bf16 to vector<16x128xbf16>
    %451 = arith.select %448, %446, %450 : vector<16x128xi1>, vector<16x128xbf16>
    %c8_355 = arith.constant 8 : index
    %c0_356 = arith.constant 0 : index
    %c0_357 = arith.constant 0 : index
    %452 = vector.load %arg30[%c8_355, %c0_356, %c0_357] : memref<9x128x128xbf16, #tpu.memory_space<vmem>>, vector<1x128x128xbf16>
    %453 = vector.shape_cast %452 : vector<1x128x128xbf16> to vector<128x128xbf16>
    %cst_358 = arith.constant dense<0.000000e+00> : vector<16x128xf32>
    %454 = tpu.matmul %451, %453, %cst_358 {dimension_numbers = #tpu.dot_dimension_numbers<[1], [0], [0], [1], [0, 0, 1, 1], [], []>} : vector<16x128xbf16>, vector<128x128xbf16>, vector<16x128xf32> -> vector<16x128xf32>
    %455 = arith.addf %445, %454 : vector<16x128xf32>
    %c0_359 = arith.constant 0 : index
    %c0_360 = arith.constant 0 : index
    %456 = vector.load %arg31[%c0_359, %c0_360] : memref<1x128xf32, #tpu.memory_space<vmem>>, vector<1x128xf32>
    %457 = vector.broadcast %456 : vector<1x128xf32> to vector<16x128xf32>
    %458 = arith.mulf %455, %457 : vector<16x128xf32>
    %c0_361 = arith.constant 0 : index
    %c0_362 = arith.constant 0 : index
    %459 = vector.load %arg32[%c0_361, %c0_362] : memref<1x128xf32, #tpu.memory_space<vmem>>, vector<1x128xf32>
    %460 = vector.broadcast %459 : vector<1x128xf32> to vector<16x128xf32>
    %461 = arith.addf %458, %460 : vector<16x128xf32>
    %cst_363 = arith.constant 0.000000e+00 : f32
    %462 = vector.broadcast %cst_363 : f32 to vector<16x128xf32>
    %463 = arith.maximumf %461, %462 : vector<16x128xf32>
    %464 = arith.truncf %463 : vector<16x128xf32> to vector<16x128xbf16>
    %c0_364 = arith.constant 0 : index
    %c0_365 = arith.constant 0 : index
    %465 = vector.load %arg33[%c0_364, %c0_365] : memref<128x256xbf16, #tpu.memory_space<vmem>>, vector<128x256xbf16>
    %cst_366 = arith.constant dense<0.000000e+00> : vector<16x256xf32>
    %466 = tpu.matmul %464, %465, %cst_366 {dimension_numbers = #tpu.dot_dimension_numbers<[1], [0], [0], [1], [0, 0, 1, 1], [], []>} : vector<16x128xbf16>, vector<128x256xbf16>, vector<16x256xf32> -> vector<16x256xf32>
    %c0_367 = arith.constant 0 : index
    %c0_368 = arith.constant 0 : index
    %467 = vector.load %arg34[%c0_367, %c0_368] : memref<1x256xf32, #tpu.memory_space<vmem>>, vector<1x256xf32>
    %468 = vector.broadcast %467 : vector<1x256xf32> to vector<16x256xf32>
    %469 = arith.mulf %466, %468 : vector<16x256xf32>
    %c0_369 = arith.constant 0 : index
    %c0_370 = arith.constant 0 : index
    %470 = vector.load %arg35[%c0_369, %c0_370] : memref<1x256xf32, #tpu.memory_space<vmem>>, vector<1x256xf32>
    %471 = vector.broadcast %470 : vector<1x256xf32> to vector<16x256xf32>
    %472 = arith.addf %469, %471 : vector<16x256xf32>
    %cst_371 = arith.constant 0.000000e+00 : f32
    %473 = vector.broadcast %cst_371 : f32 to vector<16x256xf32>
    %474 = arith.maximumf %472, %473 : vector<16x256xf32>
    %c0_372 = arith.constant 0 : index
    %c0_373 = arith.constant 0 : index
    %475 = vector.load %arg40[%c0_372, %c0_373] : memref<64x256xf32, #tpu.memory_space<vmem>>, vector<16x256xf32>
    %476 = arith.addf %474, %475 : vector<16x256xf32>
    %c0_374 = arith.constant 0 : index
    %c0_375 = arith.constant 0 : index
    %477 = vector.load %arg36[%c0_374, %c0_375] : memref<16x256xf32, #tpu.memory_space<vmem>>, vector<16x256xf32>
    tpu.vector_store %arg36[%c0_374, %c0_375], %476 {strides = array<i32>} : memref<16x256xf32, #tpu.memory_space<vmem>>, vector<16x256xf32>,
    return
  }
  func.func @transform_0(%arg0: i32) -> (i32, i32) {
    %c0_i32 = arith.constant 0 : i32
    %c0_i32_0 = arith.constant 0 : i32
    return %arg0, %c0_i32 : i32, i32
  }
  func.func @transform_1(%arg0: i32) -> (i32, i32, i32) {
    %c0_i32 = arith.constant 0 : i32
    %c0_i32_0 = arith.constant 0 : i32
    %c0_i32_1 = arith.constant 0 : i32
    %c0_i32_2 = arith.constant 0 : i32
    return %c0_i32, %c0_i32_0, %c0_i32_1 : i32, i32, i32
  }
  func.func @transform_2(%arg0: i32) -> (i32, i32) {
    %c0_i32 = arith.constant 0 : i32
    %c0_i32_0 = arith.constant 0 : i32
    %c0_i32_1 = arith.constant 0 : i32
    return %c0_i32, %c0_i32_0 : i32, i32
  }
  func.func @transform_3(%arg0: i32) -> (i32, i32) {
    %c0_i32 = arith.constant 0 : i32
    %c0_i32_0 = arith.constant 0 : i32
    %c0_i32_1 = arith.constant 0 : i32
    return %c0_i32, %c0_i32_0 : i32, i32
  }
  func.func @transform_4(%arg0: i32) -> (i32, i32) {
    %c0_i32 = arith.constant 0 : i32
    %c0_i32_0 = arith.constant 0 : i32
    %c0_i32_1 = arith.constant 0 : i32
    return %c0_i32, %c0_i32_0 : i32, i32
  }
  func.func @transform_5(%arg0: i32) -> (i32, i32) {
    %c0_i32 = arith.constant 0 : i32
    %c0_i32_0 = arith.constant 0 : i32
    %c0_i32_1 = arith.constant 0 : i32
    return %c0_i32, %c0_i32_0 : i32, i32
  }
  func.func @transform_6(%arg0: i32) -> (i32, i32) {
    %c0_i32 = arith.constant 0 : i32
    %c0_i32_0 = arith.constant 0 : i32
    %c0_i32_1 = arith.constant 0 : i32
    return %c0_i32, %c0_i32_0 : i32, i32
  }
  func.func @transform_7(%arg0: i32) -> (i32, i32) {
    %c0_i32 = arith.constant 0 : i32
    %c0_i32_0 = arith.constant 0 : i32
    %c0_i32_1 = arith.constant 0 : i32
    return %c0_i32, %c0_i32_0 : i32, i32
  }
  func.func @transform_8(%arg0: i32) -> (i32, i32) {
    %c0_i32 = arith.constant 0 : i32
    %c0_i32_0 = arith.constant 0 : i32
    %c0_i32_1 = arith.constant 0 : i32
    return %c0_i32, %c0_i32_0 : i32, i32
  }
  func.func @transform_9(%arg0: i32) -> (i32, i32, i32) {
    %c0_i32 = arith.constant 0 : i32
    %c0_i32_0 = arith.constant 0 : i32
    %c0_i32_1 = arith.constant 0 : i32
    %c0_i32_2 = arith.constant 0 : i32
    return %c0_i32, %c0_i32_0, %c0_i32_1 : i32, i32, i32
  }
  func.func @transform_10(%arg0: i32) -> (i32, i32) {
    %c0_i32 = arith.constant 0 : i32
    %c0_i32_0 = arith.constant 0 : i32
    %c0_i32_1 = arith.constant 0 : i32
    return %c0_i32, %c0_i32_0 : i32, i32
  }
  func.func @transform_11(%arg0: i32) -> (i32, i32) {
    %c0_i32 = arith.constant 0 : i32
    %c0_i32_0 = arith.constant 0 : i32
    %c0_i32_1 = arith.constant 0 : i32
    return %c0_i32, %c0_i32_0 : i32, i32
  }
  func.func @transform_12(%arg0: i32) -> (i32, i32) {
    %c0_i32 = arith.constant 0 : i32
    %c0_i32_0 = arith.constant 0 : i32
    %c0_i32_1 = arith.constant 0 : i32
    return %c0_i32, %c0_i32_0 : i32, i32
  }
  func.func @transform_13(%arg0: i32) -> (i32, i32) {
    %c0_i32 = arith.constant 0 : i32
    %c0_i32_0 = arith.constant 0 : i32
    %c0_i32_1 = arith.constant 0 : i32
    return %c0_i32, %c0_i32_0 : i32, i32
  }
  func.func @transform_14(%arg0: i32) -> (i32, i32) {
    %c0_i32 = arith.constant 0 : i32
    %c0_i32_0 = arith.constant 0 : i32
    %c0_i32_1 = arith.constant 0 : i32
    return %c0_i32, %c0_i32_0 : i32, i32
  }
  func.func @transform_15(%arg0: i32) -> (i32, i32) {
    %c0_i32 = arith.constant 0 : i32
    %c0_i32_0 = arith.constant 0 : i32
    %c0_i32_1 = arith.constant 0 : i32
    return %c0_i32, %c0_i32_0 : i32, i32
  }
  func.func @transform_16(%arg0: i32) -> (i32, i32) {
    %c0_i32 = arith.constant 0 : i32
    %c0_i32_0 = arith.constant 0 : i32
    %c0_i32_1 = arith.constant 0 : i32
    return %c0_i32, %c0_i32_0 : i32, i32
  }
  func.func @transform_17(%arg0: i32) -> (i32, i32) {
    %c0_i32 = arith.constant 0 : i32
    %c0_i32_0 = arith.constant 0 : i32
    %c0_i32_1 = arith.constant 0 : i32
    return %c0_i32, %c0_i32_0 : i32, i32
  }
  func.func @transform_18(%arg0: i32) -> (i32, i32, i32) {
    %c0_i32 = arith.constant 0 : i32
    %c0_i32_0 = arith.constant 0 : i32
    %c0_i32_1 = arith.constant 0 : i32
    %c0_i32_2 = arith.constant 0 : i32
    return %c0_i32, %c0_i32_0, %c0_i32_1 : i32, i32, i32
  }
  func.func @transform_19(%arg0: i32) -> (i32, i32) {
    %c0_i32 = arith.constant 0 : i32
    %c0_i32_0 = arith.constant 0 : i32
    %c0_i32_1 = arith.constant 0 : i32
    return %c0_i32, %c0_i32_0 : i32, i32
  }
  func.func @transform_20(%arg0: i32) -> (i32, i32) {
    %c0_i32 = arith.constant 0 : i32
    %c0_i32_0 = arith.constant 0 : i32
    %c0_i32_1 = arith.constant 0 : i32
    return %c0_i32, %c0_i32_0 : i32, i32
  }
  func.func @transform_21(%arg0: i32) -> (i32, i32) {
    %c0_i32 = arith.constant 0 : i32
    %c0_i32_0 = arith.constant 0 : i32
    %c0_i32_1 = arith.constant 0 : i32
    return %c0_i32, %c0_i32_0 : i32, i32
  }
  func.func @transform_22(%arg0: i32) -> (i32, i32) {
    %c0_i32 = arith.constant 0 : i32
    %c0_i32_0 = arith.constant 0 : i32
    %c0_i32_1 = arith.constant 0 : i32
    return %c0_i32, %c0_i32_0 : i32, i32
  }
  func.func @transform_23(%arg0: i32) -> (i32, i32) {
    %c0_i32 = arith.constant 0 : i32
    %c0_i32_0 = arith.constant 0 : i32
    %c0_i32_1 = arith.constant 0 : i32
    return %c0_i32, %c0_i32_0 : i32, i32
  }
  func.func @transform_24(%arg0: i32) -> (i32, i32) {
    %c0_i32 = arith.constant 0 : i32
    %c0_i32_0 = arith.constant 0 : i32
    %c0_i32_1 = arith.constant 0 : i32
    return %c0_i32, %c0_i32_0 : i32, i32
  }
  func.func @transform_25(%arg0: i32) -> (i32, i32) {
    %c0_i32 = arith.constant 0 : i32
    %c0_i32_0 = arith.constant 0 : i32
    %c0_i32_1 = arith.constant 0 : i32
    return %c0_i32, %c0_i32_0 : i32, i32
  }
  func.func @transform_26(%arg0: i32) -> (i32, i32) {
    %c0_i32 = arith.constant 0 : i32
    %c0_i32_0 = arith.constant 0 : i32
    %c0_i32_1 = arith.constant 0 : i32
    return %c0_i32, %c0_i32_0 : i32, i32
  }
  func.func @transform_27(%arg0: i32) -> (i32, i32) {
    %c0_i32 = arith.constant 0 : i32
    %c0_i32_0 = arith.constant 0 : i32
    %c0_i32_1 = arith.constant 0 : i32
    return %c0_i32, %c0_i32_0 : i32, i32
  }
  func.func @transform_28(%arg0: i32) -> (i32, i32) {
    %c0_i32 = arith.constant 0 : i32
    %c0_i32_0 = arith.constant 0 : i32
    %c0_i32_1 = arith.constant 0 : i32
    return %c0_i32, %c0_i32_0 : i32, i32
  }
  func.func @transform_29(%arg0: i32) -> (i32, i32, i32) {
    %c0_i32 = arith.constant 0 : i32
    %c0_i32_0 = arith.constant 0 : i32
    %c0_i32_1 = arith.constant 0 : i32
    %c0_i32_2 = arith.constant 0 : i32
    return %c0_i32, %c0_i32_0, %c0_i32_1 : i32, i32, i32
  }
  func.func @transform_30(%arg0: i32) -> (i32, i32) {
    %c0_i32 = arith.constant 0 : i32
    %c0_i32_0 = arith.constant 0 : i32
    %c0_i32_1 = arith.constant 0 : i32
    return %c0_i32, %c0_i32_0 : i32, i32
  }
  func.func @transform_31(%arg0: i32) -> (i32, i32) {
    %c0_i32 = arith.constant 0 : i32
    %c0_i32_0 = arith.constant 0 : i32
    %c0_i32_1 = arith.constant 0 : i32
    return %c0_i32, %c0_i32_0 : i32, i32
  }
  func.func @transform_32(%arg0: i32) -> (i32, i32) {
    %c0_i32 = arith.constant 0 : i32
    %c0_i32_0 = arith.constant 0 : i32
    %c0_i32_1 = arith.constant 0 : i32
    return %c0_i32, %c0_i32_0 : i32, i32
  }
  func.func @transform_33(%arg0: i32) -> (i32, i32) {
    %c0_i32 = arith.constant 0 : i32
    %c0_i32_0 = arith.constant 0 : i32
    %c0_i32_1 = arith.constant 0 : i32
    return %c0_i32, %c0_i32_0 : i32, i32
  }
  func.func @transform_34(%arg0: i32) -> (i32, i32) {
    %c0_i32 = arith.constant 0 : i32
    %c0_i32_0 = arith.constant 0 : i32
    %c0_i32_1 = arith.constant 0 : i32
    return %c0_i32, %c0_i32_0 : i32, i32
  }
  func.func @transform_35(%arg0: i32) -> (i32, i32) {
    %c0_i32 = arith.constant 0 : i32
    %c0_i32_0 = arith.constant 0 : i32
    return %arg0, %c0_i32 : i32, i32
  }
}

</mosaic_0001>

<llo_original>
// kernel: front_module.1
$region0: #{front_module.1}
  #allocation0 [shape = 'u32[]', space=smem, size = 0x4, offset = 0x4, fixed_abs, tag = 'smem constant byte address 0x4 - core index']
  #allocation1 [shape = 'u32[144,128]{1,0:T(1,128)}', space=vmem, size = 0x12000, scoped, tag = 'internal scratch']
  #allocation2 [shape = 'bf16[88,128]{1,0:T(8,128)(2,1)}', space=vmem, size = 0x5800, scoped, tag = 'scratch operand']
  #allocation3 [shape = 'bf16[82,128]{1,0:T(8,128)(2,1)}', space=vmem, size = 0x5800, scoped, tag = 'scratch operand']
  #allocation4 [shape = 'f32[80,128]{1,0:T(8,128)}', space=vmem, size = 0xa000, scoped, tag = 'scratch operand']
  #allocation5 [shape = 'f32[64,256]{1,0:T(8,128)}', space=vmem, size = 0x10000, scoped, tag = 'scratch operand']
  %s0 = inlined_call_operand.smem [shape: u32[36], index: -1, kind: input, shape index: {}]
  %s1 = sld [smem:[%s0]]
  %s2 = scalar_lea.smem %s0, 1
  %s3 = sld [smem:[%s2]]
  %s4 = scalar_lea.smem %s0, 2
  %s5 = sld [smem:[%s4]]
  %s6 = scalar_lea.smem %s0, 3
  %s7 = sld [smem:[%s6]]
  %s8 = scalar_lea.smem %s0, 4
  %s9 = sld [smem:[%s8]]
  %s10 = scalar_lea.smem %s0, 5
  %s11 = sld [smem:[%s10]]
  %s12 = scalar_lea.smem %s0, 6
  %s13 = sld [smem:[%s12]]
  %s14 = scalar_lea.smem %s0, 7
  %s15 = sld [smem:[%s14]]
  %s16 = scalar_lea.smem %s0, 8
  %s17 = sld [smem:[%s16]]
  %s18 = scalar_lea.smem %s0, 9
  %s19 = sld [smem:[%s18]]
  %s20 = scalar_lea.smem %s0, 10
  %s21 = sld [smem:[%s20]]
  %s22 = scalar_lea.smem %s0, 11
  %s23 = sld [smem:[%s22]]
  %s24 = scalar_lea.smem %s0, 12
  %s25 = sld [smem:[%s24]]
  %s26 = scalar_lea.smem %s0, 13
  %s27 = sld [smem:[%s26]]
  %s28 = scalar_lea.smem %s0, 14
  %s29 = sld [smem:[%s28]]
  %s30 = scalar_lea.smem %s0, 15
  %s31 = sld [smem:[%s30]]
  %s32 = scalar_lea.smem %s0, 16
  %s33 = sld [smem:[%s32]]
  %s34 = scalar_lea.smem %s0, 17
  %s35 = sld [smem:[%s34]]
  %s36 = scalar_lea.smem %s0, 18
  %s37 = sld [smem:[%s36]]
  %s38 = scalar_lea.smem %s0, 19
  %s39 = sld [smem:[%s38]]
  %s40 = scalar_lea.smem %s0, 20
  %s41 = sld [smem:[%s40]]
  %s42 = scalar_lea.smem %s0, 21
  %s43 = sld [smem:[%s42]]
  %s44 = scalar_lea.smem %s0, 22
  %s45 = sld [smem:[%s44]]
  %s46 = scalar_lea.smem %s0, 23
  %s47 = sld [smem:[%s46]]
  %s48 = scalar_lea.smem %s0, 24
  %s49 = sld [smem:[%s48]]
  %s50 = scalar_lea.smem %s0, 25
  %s51 = sld [smem:[%s50]]
  %s52 = scalar_lea.smem %s0, 26
  %s53 = sld [smem:[%s52]]
  %s54 = scalar_lea.smem %s0, 27
  %s55 = sld [smem:[%s54]]
  %s56 = scalar_lea.smem %s0, 28
  %s57 = sld [smem:[%s56]]
  %s58 = scalar_lea.smem %s0, 29
  %s59 = sld [smem:[%s58]]
  %s60 = scalar_lea.smem %s0, 30
  %s61 = sld [smem:[%s60]]
  %s62 = scalar_lea.smem %s0, 31
  %s63 = sld [smem:[%s62]]
  %s64 = scalar_lea.smem %s0, 32
  %s65 = sld [smem:[%s64]]
  %s66 = scalar_lea.smem %s0, 33
  %s67 = sld [smem:[%s66]]
  %s68 = scalar_lea.smem %s0, 34
  %s69 = sld [smem:[%s68]]
  %s70 = scalar_lea.smem %s0, 35
  %s71 = sld [smem:[%s70]]
  %s72 = sld [smem:[#allocation0]]
  $region269: #{front_module.1} parent=0
    _
  %s74 = ssub.s32 1, %s72
  %s75 = scalar_select 0, %s74, %s72
  $region1: #{front_module.1} parent=0
    #allocation6 [shape = 'u8[32768]{0}', space=vmem, size = 0x8000, scoped, tag = 'input window, operand 4, single buffered']
    #allocation7 [shape = 's32[2]{0}', space=sflag, size = 0x8, scoped, tag = 'scoped memory for front_module.1']
    #allocation8 [shape = 'u8[512]{0}', space=vmem, size = 0x400, scoped, tag = 'input window, operand 5, single buffered']
    #allocation9 [shape = 's32[1]{0}', space=sflag, size = 0x4, scoped, tag = 'scoped memory for front_module.1']
    #allocation10 [shape = 'u8[32768]{0}', space=vmem, size = 0x8000, scoped, tag = 'input window, operand 6, single buffered']
    #allocation11 [shape = 'u8[512]{0}', space=vmem, size = 0x400, scoped, tag = 'input window, operand 7, single buffered']
    #allocation12 [shape = 's32[1]{0}', space=sflag, size = 0x4, scoped, tag = 'scoped memory for front_module.1']
    #allocation13 [shape = 'u8[512]{0}', space=vmem, size = 0x400, scoped, tag = 'input window, operand 8, single buffered']
    #allocation14 [shape = 'u8[512]{0}', space=vmem, size = 0x400, scoped, tag = 'input window, operand 10, single buffered']
    #allocation15 [shape = 's32[1]{0}', space=sflag, size = 0x4, scoped, tag = 'scoped memory for front_module.1']
    #allocation16 [shape = 'u8[512]{0}', space=vmem, size = 0x400, scoped, tag = 'input window, operand 11, single buffered']
    #allocation17 [shape = 'u8[32768]{0}', space=vmem, size = 0x8000, scoped, tag = 'input window, operand 12, single buffered']
    #allocation18 [shape = 's32[1]{0}', space=sflag, size = 0x4, scoped, tag = 'scoped memory for front_module.1']
    #allocation19 [shape = 'u8[512]{0}', space=vmem, size = 0x400, scoped, tag = 'input window, operand 13, single buffered']
    #allocation20 [shape = 'u8[512]{0}', space=vmem, size = 0x400, scoped, tag = 'input window, operand 14, single buffered']
    #allocation21 [shape = 's32[1]{0}', space=sflag, size = 0x4, scoped, tag = 'scoped memory for front_module.1']
    #allocation22 [shape = 'u8[32768]{0}', space=vmem, size = 0x8000, scoped, tag = 'input window, operand 15, single buffered']
    #allocation23 [shape = 'u8[512]{0}', space=vmem, size = 0x400, scoped, tag = 'input window, operand 16, single buffered']
    #allocation24 [shape = 's32[1]{0}', space=sflag, size = 0x4, scoped, tag = 'scoped memory for front_module.1']
    #allocation25 [shape = 'u8[512]{0}', space=vmem, size = 0x400, scoped, tag = 'input window, operand 17, single buffered']
    #allocation26 [shape = 'u8[512]{0}', space=vmem, size = 0x400, scoped, tag = 'input window, operand 19, single buffered']
    #allocation27 [shape = 's32[1]{0}', space=sflag, size = 0x4, scoped, tag = 'scoped memory for front_module.1']
    #allocation28 [shape = 'u8[512]{0}', space=vmem, size = 0x400, scoped, tag = 'input window, operand 20, single buffered']
    #allocation29 [shape = 'u8[32768]{0}', space=vmem, size = 0x8000, scoped, tag = 'input window, operand 21, single buffered']
    #allocation30 [shape = 's32[1]{0}', space=sflag, size = 0x4, scoped, tag = 'scoped memory for front_module.1']
    #allocation31 [shape = 'u8[512]{0}', space=vmem, size = 0x400, scoped, tag = 'input window, operand 22, single buffered']
    #allocation32 [shape = 'u8[512]{0}', space=vmem, size = 0x400, scoped, tag = 'input window, operand 23, single buffered']
    #allocation33 [shape = 's32[1]{0}', space=sflag, size = 0x4, scoped, tag = 'scoped memory for front_module.1']
    #allocation34 [shape = 'u8[65536]{0}', space=vmem, size = 0x10000, scoped, tag = 'input window, operand 24, single buffered']
    #allocation35 [shape = 'u8[65536]{0}', space=vmem, size = 0x10000, scoped, tag = 'input window, operand 26, single buffered']
    #allocation36 [shape = 's32[1]{0}', space=sflag, size = 0x4, scoped, tag = 'scoped memory for front_module.1']
    #allocation37 [shape = 'u8[512]{0}', space=vmem, size = 0x400, scoped, tag = 'input window, operand 27, single buffered']
    #allocation38 [shape = 'u8[512]{0}', space=vmem, size = 0x400, scoped, tag = 'input window, operand 28, single buffered']
    #allocation39 [shape = 's32[1]{0}', space=sflag, size = 0x4, scoped, tag = 'scoped memory for front_module.1']
    #allocation40 [shape = 'u8[512]{0}', space=vmem, size = 0x400, scoped, tag = 'input window, operand 30, single buffered']
    #allocation41 [shape = 'u8[512]{0}', space=vmem, size = 0x400, scoped, tag = 'input window, operand 31, single buffered']
    #allocation42 [shape = 's32[1]{0}', space=sflag, size = 0x4, scoped, tag = 'scoped memory for front_module.1']
    %76 = vsyncpa [#allocation7], 0
    %77 = vsyncpa [#allocation9], 0
    %78 = vsyncpa [#allocation12], 0
    %79 = vsyncpa [#allocation15], 0
    %80 = vsyncpa [#allocation18], 0
    %81 = vsyncpa [#allocation21], 0
    %82 = vsyncpa [#allocation24], 0
    %83 = vsyncpa [#allocation27], 0
    %84 = vsyncpa [#allocation30], 0
    %85 = vsyncpa [#allocation33], 0
    %86 = vsyncpa [#allocation36], 0
    %87 = vsyncpa [#allocation39], 0
    %88 = vsyncpa [#allocation42], 0
    loop: start=0, step=1, limit=4
    $region2: #{front_module.1} parent=1 // loop_pre_header
      _
    $region3: #{front_module.1} parent=1 // loop_header
      %s90 = sphi 0, %s94
      %p91 = scmp.ge.s32.totalorder %s90, 4
      %s100 = sphi 0, %s102
      %s103 = sphi 0, %s100
      %s104 = sphi 0, %s103
      %s120 = sphi 0, %s104
      %s124 = sphi 0, %s124
      %s126 = sphi 0, %s124
      %s127 = sphi 0, %s126
      %s141 = sphi 0, %s127
      %s145 = sphi 0, %s145
      %s147 = sphi 0, %s145
      %s148 = sphi 0, %s147
      %s162 = sphi 0, %s148
      %s166 = sphi 0, %s166
      %s168 = sphi 0, %s166
      %s169 = sphi 0, %s168
      %s183 = sphi 0, %s169
      %s187 = sphi 0, %s187
      %s189 = sphi 0, %s187
      %s190 = sphi 0, %s189
      %s204 = sphi 0, %s190
      %s208 = sphi 0, %s208
      %s210 = sphi 0, %s208
      %s211 = sphi 0, %s210
      %s225 = sphi 0, %s211
      %s229 = sphi 0, %s229
      %s231 = sphi 0, %s229
      %s232 = sphi 0, %s231
      %s246 = sphi 0, %s232
      %s250 = sphi 0, %s250
      %s252 = sphi 0, %s250
      %s253 = sphi 0, %s252
      %s267 = sphi 0, %s253
      %s271 = sphi 0, %s271
      %s273 = sphi 0, %s271
      %s274 = sphi 0, %s273
      %s288 = sphi 0, %s274
      %s292 = sphi 0, %s292
      %s294 = sphi 0, %s292
      %s295 = sphi 0, %s294
      %s309 = sphi 0, %s295
      %s313 = sphi 0, %s313
      %s315 = sphi 0, %s313
      %s316 = sphi 0, %s315
      %s330 = sphi 0, %s316
      %s334 = sphi 0, %s334
      %s336 = sphi 0, %s334
      %s337 = sphi 0, %s336
      %s351 = sphi 0, %s337
      %s355 = sphi 0, %s355
      %s357 = sphi 0, %s355
      %s358 = sphi 0, %s357
      %s372 = sphi 0, %s358
      %s376 = sphi 0, %s376
      %s378 = sphi 0, %s376
      %s379 = sphi 0, %s378
      %s393 = sphi 0, %s379
      %s397 = sphi 0, %s397
      %s399 = sphi 0, %s397
      %s400 = sphi 0, %s399
      %s414 = sphi 0, %s400
      %s418 = sphi 0, %s418
      %s420 = sphi 0, %s418
      %s421 = sphi 0, %s420
      %s435 = sphi 0, %s421
      %s439 = sphi 0, %s439
      %s441 = sphi 0, %s439
      %s442 = sphi 0, %s441
      %s456 = sphi 0, %s442
      %s460 = sphi 0, %s460
      %s462 = sphi 0, %s460
      %s463 = sphi 0, %s462
      %s477 = sphi 0, %s463
      %s481 = sphi 0, %s481
      %s483 = sphi 0, %s481
      %s484 = sphi 0, %s483
      %s498 = sphi 0, %s484
      %s502 = sphi 0, %s502
      %s504 = sphi 0, %s502
      %s505 = sphi 0, %s504
      %s519 = sphi 0, %s505
      %s523 = sphi 0, %s523
      %s525 = sphi 0, %s523
      %s526 = sphi 0, %s525
      %s540 = sphi 0, %s526
      %s544 = sphi 0, %s544
      %s546 = sphi 0, %s544
      %s547 = sphi 0, %s546
      %s561 = sphi 0, %s547
      %s565 = sphi 0, %s565
      %s567 = sphi 0, %s565
      %s568 = sphi 0, %s567
      %s582 = sphi 0, %s568
      %s586 = sphi 0, %s586
      %s588 = sphi 0, %s586
      %s589 = sphi 0, %s588
      %s603 = sphi 0, %s589
      %s607 = sphi 0, %s607
      %s609 = sphi 0, %s607
      %s610 = sphi 0, %s609
      %s624 = sphi 0, %s610
      %s628 = sphi 0, %s628
      %s630 = sphi 0, %s628
      %s631 = sphi 0, %s630
      %s645 = sphi 0, %s631
      %s649 = sphi 0, %s649
      %s651 = sphi 0, %s649
      %s652 = sphi 0, %s651
      %s666 = sphi 0, %s652
      %s670 = sphi 0, %s670
      %s672 = sphi 0, %s670
      %s673 = sphi 0, %s672
      %s687 = sphi 0, %s673
      %s691 = sphi 0, %s691
      %s693 = sphi 0, %s691
      %s694 = sphi 0, %s693
      %s708 = sphi 0, %s694
      %s712 = sphi 0, %s712
      %s714 = sphi 0, %s712
      %s715 = sphi 0, %s714
      %s729 = sphi 0, %s715
      %s733 = sphi 0, %s733
      %s735 = sphi 0, %s733
      %s736 = sphi 0, %s735
      %s750 = sphi 0, %s736
      %s754 = sphi 0, %s754
      %s756 = sphi 0, %s754
      %s757 = sphi 0, %s756
      %s771 = sphi 0, %s757
      %s775 = sphi 0, %s775
      %s777 = sphi 0, %s775
      %s778 = sphi 0, %s777
      %s792 = sphi 0, %s778
      %s796 = sphi 0, %s796
      %s798 = sphi 0, %s796
      %s799 = sphi 0, %s798
      %s813 = sphi 0, %s799
      %s817 = sphi 0, %s817
      %s819 = sphi 0, %s817
      %s820 = sphi 0, %s819
      %s834 = sphi 0, %s820
      %s840 = sphi 0, %s842
      %s843 = sphi 0, %s840
      %s844 = sphi 0, %s843
      %s860 = sphi 0, %s844
    $region4: #{front_module.1} parent=1 // loop_header_branch
      %93 = sbr.rel (%p91) target = $region8
    $region5: #{front_module.1} parent=1 // loop_body
      %s95 = ssub.s32 %s90, 1
      %s96 = ssub.s32 %s90, 2
      %s97 = sadd.s32 %s90, 1
      %s98 = ssub.s32 %s90, %s97
      %p99 = scmp.eq.s32.totalorder %s98, 0
      %s101 = sadd.s32 %s100, 1
      %s102 = scalar_select %p99, %s100, %s101
      %p105 = pneg %p99
      %p106 = scmp.eq.s32.totalorder %s90, 1
      %p107 = por %p105, %p106
      %p108 = scmp.ne.s32.totalorder %s100, %s103
      %p109 = scmp.eq.s32.totalorder %s90, 0
      %p110 = por %p108, %p109
      %p111 = scmp.ne.s32.totalorder %s100, %s103
      %p112 = scmp.eq.s32.totalorder %s95, 1
      %p113 = por %p111, %p112
      %p114 = scmp.ne.s32.totalorder %s103, %s104
      %p115 = scmp.eq.s32.totalorder %s95, 0
      %p116 = por %p114, %p115
      %p117 = scmp.ne.s32.totalorder %s103, %s104
      %p118 = scmp.eq.s32.totalorder %s96, 1
      %p119 = por %p117, %p118
      %p121 = scmp.ne.s32.totalorder %s104, %s120
      %p122 = scmp.eq.s32.totalorder %s96, 0
      %p123 = por %p121, %p122
      %s125 = sadd.s32 %s124, 1
      %p128 = scmp.eq.s32.totalorder %s90, 1
      %p129 = scmp.ne.s32.totalorder %s124, %s126
      %p130 = scmp.eq.s32.totalorder %s90, 0
      %p131 = por %p129, %p130
      %p132 = scmp.ne.s32.totalorder %s124, %s126
      %p133 = scmp.eq.s32.totalorder %s95, 1
      %p134 = por %p132, %p133
      %p135 = scmp.ne.s32.totalorder %s126, %s127
      %p136 = scmp.eq.s32.totalorder %s95, 0
      %p137 = por %p135, %p136
      %p138 = scmp.ne.s32.totalorder %s126, %s127
      %p139 = scmp.eq.s32.totalorder %s96, 1
      %p140 = por %p138, %p139
      %p142 = scmp.ne.s32.totalorder %s127, %s141
      %p143 = scmp.eq.s32.totalorder %s96, 0
      %p144 = por %p142, %p143
      %s146 = sadd.s32 %s145, 1
      %p149 = scmp.eq.s32.totalorder %s90, 1
      %p150 = scmp.ne.s32.totalorder %s145, %s147
      %p151 = scmp.eq.s32.totalorder %s90, 0
      %p152 = por %p150, %p151
      %p153 = scmp.ne.s32.totalorder %s145, %s147
      %p154 = scmp.eq.s32.totalorder %s95, 1
      %p155 = por %p153, %p154
      %p156 = scmp.ne.s32.totalorder %s147, %s148
      %p157 = scmp.eq.s32.totalorder %s95, 0
      %p158 = por %p156, %p157
      %p159 = scmp.ne.s32.totalorder %s147, %s148
      %p160 = scmp.eq.s32.totalorder %s96, 1
      %p161 = por %p159, %p160
      %p163 = scmp.ne.s32.totalorder %s148, %s162
      %p164 = scmp.eq.s32.totalorder %s96, 0
      %p165 = por %p163, %p164
      %s167 = sadd.s32 %s166, 1
      %p170 = scmp.eq.s32.totalorder %s90, 1
      %p171 = scmp.ne.s32.totalorder %s166, %s168
      %p172 = scmp.eq.s32.totalorder %s90, 0
      %p173 = por %p171, %p172
      %p174 = scmp.ne.s32.totalorder %s166, %s168
      %p175 = scmp.eq.s32.totalorder %s95, 1
      %p176 = por %p174, %p175
      %p177 = scmp.ne.s32.totalorder %s168, %s169
      %p178 = scmp.eq.s32.totalorder %s95, 0
      %p179 = por %p177, %p178
      %p180 = scmp.ne.s32.totalorder %s168, %s169
      %p181 = scmp.eq.s32.totalorder %s96, 1
      %p182 = por %p180, %p181
      %p184 = scmp.ne.s32.totalorder %s169, %s183
      %p185 = scmp.eq.s32.totalorder %s96, 0
      %p186 = por %p184, %p185
      %s188 = sadd.s32 %s187, 1
      %p191 = scmp.eq.s32.totalorder %s90, 1
      %p192 = scmp.ne.s32.totalorder %s187, %s189
      %p193 = scmp.eq.s32.totalorder %s90, 0
      %p194 = por %p192, %p193
      %p195 = scmp.ne.s32.totalorder %s187, %s189
      %p196 = scmp.eq.s32.totalorder %s95, 1
      %p197 = por %p195, %p196
      %p198 = scmp.ne.s32.totalorder %s189, %s190
      %p199 = scmp.eq.s32.totalorder %s95, 0
      %p200 = por %p198, %p199
      %p201 = scmp.ne.s32.totalorder %s189, %s190
      %p202 = scmp.eq.s32.totalorder %s96, 1
      %p203 = por %p201, %p202
      %p205 = scmp.ne.s32.totalorder %s190, %s204
      %p206 = scmp.eq.s32.totalorder %s96, 0
      %p207 = por %p205, %p206
      %s209 = sadd.s32 %s208, 1
      %p212 = scmp.eq.s32.totalorder %s90, 1
      %p213 = scmp.ne.s32.totalorder %s208, %s210
      %p214 = scmp.eq.s32.totalorder %s90, 0
      %p215 = por %p213, %p214
      %p216 = scmp.ne.s32.totalorder %s208, %s210
      %p217 = scmp.eq.s32.totalorder %s95, 1
      %p218 = por %p216, %p217
      %p219 = scmp.ne.s32.totalorder %s210, %s211
      %p220 = scmp.eq.s32.totalorder %s95, 0
      %p221 = por %p219, %p220
      %p222 = scmp.ne.s32.totalorder %s210, %s211
      %p223 = scmp.eq.s32.totalorder %s96, 1
      %p224 = por %p222, %p223
      %p226 = scmp.ne.s32.totalorder %s211, %s225
      %p227 = scmp.eq.s32.totalorder %s96, 0
      %p228 = por %p226, %p227
      %s230 = sadd.s32 %s229, 1
      %p233 = scmp.eq.s32.totalorder %s90, 1
      %p234 = scmp.ne.s32.totalorder %s229, %s231
      %p235 = scmp.eq.s32.totalorder %s90, 0
      %p236 = por %p234, %p235
      %p237 = scmp.ne.s32.totalorder %s229, %s231
      %p238 = scmp.eq.s32.totalorder %s95, 1
      %p239 = por %p237, %p238
      %p240 = scmp.ne.s32.totalorder %s231, %s232
      %p241 = scmp.eq.s32.totalorder %s95, 0
      %p242 = por %p240, %p241
      %p243 = scmp.ne.s32.totalorder %s231, %s232
      %p244 = scmp.eq.s32.totalorder %s96, 1
      %p245 = por %p243, %p244
      %p247 = scmp.ne.s32.totalorder %s232, %s246
      %p248 = scmp.eq.s32.totalorder %s96, 0
      %p249 = por %p247, %p248
      %s251 = sadd.s32 %s250, 1
      %p254 = scmp.eq.s32.totalorder %s90, 1
      %p255 = scmp.ne.s32.totalorder %s250, %s252
      %p256 = scmp.eq.s32.totalorder %s90, 0
      %p257 = por %p255, %p256
      %p258 = scmp.ne.s32.totalorder %s250, %s252
      %p259 = scmp.eq.s32.totalorder %s95, 1
      %p260 = por %p258, %p259
      %p261 = scmp.ne.s32.totalorder %s252, %s253
      %p262 = scmp.eq.s32.totalorder %s95, 0
      %p263 = por %p261, %p262
      %p264 = scmp.ne.s32.totalorder %s252, %s253
      %p265 = scmp.eq.s32.totalorder %s96, 1
      %p266 = por %p264, %p265
      %p268 = scmp.ne.s32.totalorder %s253, %s267
      %p269 = scmp.eq.s32.totalorder %s96, 0
      %p270 = por %p268, %p269
      %s272 = sadd.s32 %s271, 1
      %p275 = scmp.eq.s32.totalorder %s90, 1
      %p276 = scmp.ne.s32.totalorder %s271, %s273
      %p277 = scmp.eq.s32.totalorder %s90, 0
      %p278 = por %p276, %p277
      %p279 = scmp.ne.s32.totalorder %s271, %s273
      %p280 = scmp.eq.s32.totalorder %s95, 1
      %p281 = por %p279, %p280
      %p282 = scmp.ne.s32.totalorder %s273, %s274
      %p283 = scmp.eq.s32.totalorder %s95, 0
      %p284 = por %p282, %p283
      %p285 = scmp.ne.s32.totalorder %s273, %s274
      %p286 = scmp.eq.s32.totalorder %s96, 1
      %p287 = por %p285, %p286
      %p289 = scmp.ne.s32.totalorder %s274, %s288
      %p290 = scmp.eq.s32.totalorder %s96, 0
      %p291 = por %p289, %p290
      %s293 = sadd.s32 %s292, 1
      %p296 = scmp.eq.s32.totalorder %s90, 1
      %p297 = scmp.ne.s32.totalorder %s292, %s294
      %p298 = scmp.eq.s32.totalorder %s90, 0
      %p299 = por %p297, %p298
      %p300 = scmp.ne.s32.totalorder %s292, %s294
      %p301 = scmp.eq.s32.totalorder %s95, 1
      %p302 = por %p300, %p301
      %p303 = scmp.ne.s32.totalorder %s294, %s295
      %p304 = scmp.eq.s32.totalorder %s95, 0
      %p305 = por %p303, %p304
      %p306 = scmp.ne.s32.totalorder %s294, %s295
      %p307 = scmp.eq.s32.totalorder %s96, 1
      %p308 = por %p306, %p307
      %p310 = scmp.ne.s32.totalorder %s295, %s309
      %p311 = scmp.eq.s32.totalorder %s96, 0
      %p312 = por %p310, %p311
      %s314 = sadd.s32 %s313, 1
      %p317 = scmp.eq.s32.totalorder %s90, 1
      %p318 = scmp.ne.s32.totalorder %s313, %s315
      %p319 = scmp.eq.s32.totalorder %s90, 0
      %p320 = por %p318, %p319
      %p321 = scmp.ne.s32.totalorder %s313, %s315
      %p322 = scmp.eq.s32.totalorder %s95, 1
      %p323 = por %p321, %p322
      %p324 = scmp.ne.s32.totalorder %s315, %s316
      %p325 = scmp.eq.s32.totalorder %s95, 0
      %p326 = por %p324, %p325
      %p327 = scmp.ne.s32.totalorder %s315, %s316
      %p328 = scmp.eq.s32.totalorder %s96, 1
      %p329 = por %p327, %p328
      %p331 = scmp.ne.s32.totalorder %s316, %s330
      %p332 = scmp.eq.s32.totalorder %s96, 0
      %p333 = por %p331, %p332
      %s335 = sadd.s32 %s334, 1
      %p338 = scmp.eq.s32.totalorder %s90, 1
      %p339 = scmp.ne.s32.totalorder %s334, %s336
      %p340 = scmp.eq.s32.totalorder %s90, 0
      %p341 = por %p339, %p340
      %p342 = scmp.ne.s32.totalorder %s334, %s336
      %p343 = scmp.eq.s32.totalorder %s95, 1
      %p344 = por %p342, %p343
      %p345 = scmp.ne.s32.totalorder %s336, %s337
      %p346 = scmp.eq.s32.totalorder %s95, 0
      %p347 = por %p345, %p346
      %p348 = scmp.ne.s32.totalorder %s336, %s337
      %p349 = scmp.eq.s32.totalorder %s96, 1
      %p350 = por %p348, %p349
      %p352 = scmp.ne.s32.totalorder %s337, %s351
      %p353 = scmp.eq.s32.totalorder %s96, 0
      %p354 = por %p352, %p353
      %s356 = sadd.s32 %s355, 1
      %p359 = scmp.eq.s32.totalorder %s90, 1
      %p360 = scmp.ne.s32.totalorder %s355, %s357
      %p361 = scmp.eq.s32.totalorder %s90, 0
      %p362 = por %p360, %p361
      %p363 = scmp.ne.s32.totalorder %s355, %s357
      %p364 = scmp.eq.s32.totalorder %s95, 1
      %p365 = por %p363, %p364
      %p366 = scmp.ne.s32.totalorder %s357, %s358
      %p367 = scmp.eq.s32.totalorder %s95, 0
      %p368 = por %p366, %p367
      %p369 = scmp.ne.s32.totalorder %s357, %s358
      %p370 = scmp.eq.s32.totalorder %s96, 1
      %p371 = por %p369, %p370
      %p373 = scmp.ne.s32.totalorder %s358, %s372
      %p374 = scmp.eq.s32.totalorder %s96, 0
      %p375 = por %p373, %p374
      %s377 = sadd.s32 %s376, 1
      %p380 = scmp.eq.s32.totalorder %s90, 1
      %p381 = scmp.ne.s32.totalorder %s376, %s378
      %p382 = scmp.eq.s32.totalorder %s90, 0
      %p383 = por %p381, %p382
      %p384 = scmp.ne.s32.totalorder %s376, %s378
      %p385 = scmp.eq.s32.totalorder %s95, 1
      %p386 = por %p384, %p385
      %p387 = scmp.ne.s32.totalorder %s378, %s379
      %p388 = scmp.eq.s32.totalorder %s95, 0
      %p389 = por %p387, %p388
      %p390 = scmp.ne.s32.totalorder %s378, %s379
      %p391 = scmp.eq.s32.totalorder %s96, 1
      %p392 = por %p390, %p391
      %p394 = scmp.ne.s32.totalorder %s379, %s393
      %p395 = scmp.eq.s32.totalorder %s96, 0
      %p396 = por %p394, %p395
      %s398 = sadd.s32 %s397, 1
      %p401 = scmp.eq.s32.totalorder %s90, 1
      %p402 = scmp.ne.s32.totalorder %s397, %s399
      %p403 = scmp.eq.s32.totalorder %s90, 0
      %p404 = por %p402, %p403
      %p405 = scmp.ne.s32.totalorder %s397, %s399
      %p406 = scmp.eq.s32.totalorder %s95, 1
      %p407 = por %p405, %p406
      %p408 = scmp.ne.s32.totalorder %s399, %s400
      %p409 = scmp.eq.s32.totalorder %s95, 0
      %p410 = por %p408, %p409
      %p411 = scmp.ne.s32.totalorder %s399, %s400
      %p412 = scmp.eq.s32.totalorder %s96, 1
      %p413 = por %p411, %p412
      %p415 = scmp.ne.s32.totalorder %s400, %s414
      %p416 = scmp.eq.s32.totalorder %s96, 0
      %p417 = por %p415, %p416
      %s419 = sadd.s32 %s418, 1
      %p422 = scmp.eq.s32.totalorder %s90, 1
      %p423 = scmp.ne.s32.totalorder %s418, %s420
      %p424 = scmp.eq.s32.totalorder %s90, 0
      %p425 = por %p423, %p424
      %p426 = scmp.ne.s32.totalorder %s418, %s420
      %p427 = scmp.eq.s32.totalorder %s95, 1
      %p428 = por %p426, %p427
      %p429 = scmp.ne.s32.totalorder %s420, %s421
      %p430 = scmp.eq.s32.totalorder %s95, 0
      %p431 = por %p429, %p430
      %p432 = scmp.ne.s32.totalorder %s420, %s421
      %p433 = scmp.eq.s32.totalorder %s96, 1
      %p434 = por %p432, %p433
      %p436 = scmp.ne.s32.totalorder %s421, %s435
      %p437 = scmp.eq.s32.totalorder %s96, 0
      %p438 = por %p436, %p437
      %s440 = sadd.s32 %s439, 1
      %p443 = scmp.eq.s32.totalorder %s90, 1
      %p444 = scmp.ne.s32.totalorder %s439, %s441
      %p445 = scmp.eq.s32.totalorder %s90, 0
      %p446 = por %p444, %p445
      %p447 = scmp.ne.s32.totalorder %s439, %s441
      %p448 = scmp.eq.s32.totalorder %s95, 1
      %p449 = por %p447, %p448
      %p450 = scmp.ne.s32.totalorder %s441, %s442
      %p451 = scmp.eq.s32.totalorder %s95, 0
      %p452 = por %p450, %p451
      %p453 = scmp.ne.s32.totalorder %s441, %s442
      %p454 = scmp.eq.s32.totalorder %s96, 1
      %p455 = por %p453, %p454
      %p457 = scmp.ne.s32.totalorder %s442, %s456
      %p458 = scmp.eq.s32.totalorder %s96, 0
      %p459 = por %p457, %p458
      %s461 = sadd.s32 %s460, 1
      %p464 = scmp.eq.s32.totalorder %s90, 1
      %p465 = scmp.ne.s32.totalorder %s460, %s462
      %p466 = scmp.eq.s32.totalorder %s90, 0
      %p467 = por %p465, %p466
      %p468 = scmp.ne.s32.totalorder %s460, %s462
      %p469 = scmp.eq.s32.totalorder %s95, 1
      %p470 = por %p468, %p469
      %p471 = scmp.ne.s32.totalorder %s462, %s463
      %p472 = scmp.eq.s32.totalorder %s95, 0
      %p473 = por %p471, %p472
      %p474 = scmp.ne.s32.totalorder %s462, %s463
      %p475 = scmp.eq.s32.totalorder %s96, 1
      %p476 = por %p474, %p475
      %p478 = scmp.ne.s32.totalorder %s463, %s477
      %p479 = scmp.eq.s32.totalorder %s96, 0
      %p480 = por %p478, %p479
      %s482 = sadd.s32 %s481, 1
      %p485 = scmp.eq.s32.totalorder %s90, 1
      %p486 = scmp.ne.s32.totalorder %s481, %s483
      %p487 = scmp.eq.s32.totalorder %s90, 0
      %p488 = por %p486, %p487
      %p489 = scmp.ne.s32.totalorder %s481, %s483
      %p490 = scmp.eq.s32.totalorder %s95, 1
      %p491 = por %p489, %p490
      %p492 = scmp.ne.s32.totalorder %s483, %s484
      %p493 = scmp.eq.s32.totalorder %s95, 0
      %p494 = por %p492, %p493
      %p495 = scmp.ne.s32.totalorder %s483, %s484
      %p496 = scmp.eq.s32.totalorder %s96, 1
      %p497 = por %p495, %p496
      %p499 = scmp.ne.s32.totalorder %s484, %s498
      %p500 = scmp.eq.s32.totalorder %s96, 0
      %p501 = por %p499, %p500
      %s503 = sadd.s32 %s502, 1
      %p506 = scmp.eq.s32.totalorder %s90, 1
      %p507 = scmp.ne.s32.totalorder %s502, %s504
      %p508 = scmp.eq.s32.totalorder %s90, 0
      %p509 = por %p507, %p508
      %p510 = scmp.ne.s32.totalorder %s502, %s504
      %p511 = scmp.eq.s32.totalorder %s95, 1
      %p512 = por %p510, %p511
      %p513 = scmp.ne.s32.totalorder %s504, %s505
      %p514 = scmp.eq.s32.totalorder %s95, 0
      %p515 = por %p513, %p514
      %p516 = scmp.ne.s32.totalorder %s504, %s505
      %p517 = scmp.eq.s32.totalorder %s96, 1
      %p518 = por %p516, %p517
      %p520 = scmp.ne.s32.totalorder %s505, %s519
      %p521 = scmp.eq.s32.totalorder %s96, 0
      %p522 = por %p520, %p521
      %s524 = sadd.s32 %s523, 1
      %p527 = scmp.eq.s32.totalorder %s90, 1
      %p528 = scmp.ne.s32.totalorder %s523, %s525
      %p529 = scmp.eq.s32.totalorder %s90, 0
      %p530 = por %p528, %p529
      %p531 = scmp.ne.s32.totalorder %s523, %s525
      %p532 = scmp.eq.s32.totalorder %s95, 1
      %p533 = por %p531, %p532
      %p534 = scmp.ne.s32.totalorder %s525, %s526
      %p535 = scmp.eq.s32.totalorder %s95, 0
      %p536 = por %p534, %p535
      %p537 = scmp.ne.s32.totalorder %s525, %s526
      %p538 = scmp.eq.s32.totalorder %s96, 1
      %p539 = por %p537, %p538
      %p541 = scmp.ne.s32.totalorder %s526, %s540
      %p542 = scmp.eq.s32.totalorder %s96, 0
      %p543 = por %p541, %p542
      %s545 = sadd.s32 %s544, 1
      %p548 = scmp.eq.s32.totalorder %s90, 1
      %p549 = scmp.ne.s32.totalorder %s544, %s546
      %p550 = scmp.eq.s32.totalorder %s90, 0
      %p551 = por %p549, %p550
      %p552 = scmp.ne.s32.totalorder %s544, %s546
      %p553 = scmp.eq.s32.totalorder %s95, 1
      %p554 = por %p552, %p553
      %p555 = scmp.ne.s32.totalorder %s546, %s547
      %p556 = scmp.eq.s32.totalorder %s95, 0
      %p557 = por %p555, %p556
      %p558 = scmp.ne.s32.totalorder %s546, %s547
      %p559 = scmp.eq.s32.totalorder %s96, 1
      %p560 = por %p558, %p559
      %p562 = scmp.ne.s32.totalorder %s547, %s561
      %p563 = scmp.eq.s32.totalorder %s96, 0
      %p564 = por %p562, %p563
      %s566 = sadd.s32 %s565, 1
      %p569 = scmp.eq.s32.totalorder %s90, 1
      %p570 = scmp.ne.s32.totalorder %s565, %s567
      %p571 = scmp.eq.s32.totalorder %s90, 0
      %p572 = por %p570, %p571
      %p573 = scmp.ne.s32.totalorder %s565, %s567
      %p574 = scmp.eq.s32.totalorder %s95, 1
      %p575 = por %p573, %p574
      %p576 = scmp.ne.s32.totalorder %s567, %s568
      %p577 = scmp.eq.s32.totalorder %s95, 0
      %p578 = por %p576, %p577
      %p579 = scmp.ne.s32.totalorder %s567, %s568
      %p580 = scmp.eq.s32.totalorder %s96, 1
      %p581 = por %p579, %p580
      %p583 = scmp.ne.s32.totalorder %s568, %s582
      %p584 = scmp.eq.s32.totalorder %s96, 0
      %p585 = por %p583, %p584
      %s587 = sadd.s32 %s586, 1
      %p590 = scmp.eq.s32.totalorder %s90, 1
      %p591 = scmp.ne.s32.totalorder %s586, %s588
      %p592 = scmp.eq.s32.totalorder %s90, 0
      %p593 = por %p591, %p592
      %p594 = scmp.ne.s32.totalorder %s586, %s588
      %p595 = scmp.eq.s32.totalorder %s95, 1
      %p596 = por %p594, %p595
      %p597 = scmp.ne.s32.totalorder %s588, %s589
      %p598 = scmp.eq.s32.totalorder %s95, 0
      %p599 = por %p597, %p598
      %p600 = scmp.ne.s32.totalorder %s588, %s589
      %p601 = scmp.eq.s32.totalorder %s96, 1
      %p602 = por %p600, %p601
      %p604 = scmp.ne.s32.totalorder %s589, %s603
      %p605 = scmp.eq.s32.totalorder %s96, 0
      %p606 = por %p604, %p605
      %s608 = sadd.s32 %s607, 1
      %p611 = scmp.eq.s32.totalorder %s90, 1
      %p612 = scmp.ne.s32.totalorder %s607, %s609
      %p613 = scmp.eq.s32.totalorder %s90, 0
      %p614 = por %p612, %p613
      %p615 = scmp.ne.s32.totalorder %s607, %s609
      %p616 = scmp.eq.s32.totalorder %s95, 1
      %p617 = por %p615, %p616
      %p618 = scmp.ne.s32.totalorder %s609, %s610
      %p619 = scmp.eq.s32.totalorder %s95, 0
      %p620 = por %p618, %p619
      %p621 = scmp.ne.s32.totalorder %s609, %s610
      %p622 = scmp.eq.s32.totalorder %s96, 1
      %p623 = por %p621, %p622
      %p625 = scmp.ne.s32.totalorder %s610, %s624
      %p626 = scmp.eq.s32.totalorder %s96, 0
      %p627 = por %p625, %p626
      %s629 = sadd.s32 %s628, 1
      %p632 = scmp.eq.s32.totalorder %s90, 1
      %p633 = scmp.ne.s32.totalorder %s628, %s630
      %p634 = scmp.eq.s32.totalorder %s90, 0
      %p635 = por %p633, %p634
      %p636 = scmp.ne.s32.totalorder %s628, %s630
      %p637 = scmp.eq.s32.totalorder %s95, 1
      %p638 = por %p636, %p637
      %p639 = scmp.ne.s32.totalorder %s630, %s631
      %p640 = scmp.eq.s32.totalorder %s95, 0
      %p641 = por %p639, %p640
      %p642 = scmp.ne.s32.totalorder %s630, %s631
      %p643 = scmp.eq.s32.totalorder %s96, 1
      %p644 = por %p642, %p643
      %p646 = scmp.ne.s32.totalorder %s631, %s645
      %p647 = scmp.eq.s32.totalorder %s96, 0
      %p648 = por %p646, %p647
      %s650 = sadd.s32 %s649, 1
      %p653 = scmp.eq.s32.totalorder %s90, 1
      %p654 = scmp.ne.s32.totalorder %s649, %s651
      %p655 = scmp.eq.s32.totalorder %s90, 0
      %p656 = por %p654, %p655
      %p657 = scmp.ne.s32.totalorder %s649, %s651
      %p658 = scmp.eq.s32.totalorder %s95, 1
      %p659 = por %p657, %p658
      %p660 = scmp.ne.s32.totalorder %s651, %s652
      %p661 = scmp.eq.s32.totalorder %s95, 0
      %p662 = por %p660, %p661
      %p663 = scmp.ne.s32.totalorder %s651, %s652
      %p664 = scmp.eq.s32.totalorder %s96, 1
      %p665 = por %p663, %p664
      %p667 = scmp.ne.s32.totalorder %s652, %s666
      %p668 = scmp.eq.s32.totalorder %s96, 0
      %p669 = por %p667, %p668
      %s671 = sadd.s32 %s670, 1
      %p674 = scmp.eq.s32.totalorder %s90, 1
      %p675 = scmp.ne.s32.totalorder %s670, %s672
      %p676 = scmp.eq.s32.totalorder %s90, 0
      %p677 = por %p675, %p676
      %p678 = scmp.ne.s32.totalorder %s670, %s672
      %p679 = scmp.eq.s32.totalorder %s95, 1
      %p680 = por %p678, %p679
      %p681 = scmp.ne.s32.totalorder %s672, %s673
      %p682 = scmp.eq.s32.totalorder %s95, 0
      %p683 = por %p681, %p682
      %p684 = scmp.ne.s32.totalorder %s672, %s673
      %p685 = scmp.eq.s32.totalorder %s96, 1
      %p686 = por %p684, %p685
      %p688 = scmp.ne.s32.totalorder %s673, %s687
      %p689 = scmp.eq.s32.totalorder %s96, 0
      %p690 = por %p688, %p689
      %s692 = sadd.s32 %s691, 1
      %p695 = scmp.eq.s32.totalorder %s90, 1
      %p696 = scmp.ne.s32.totalorder %s691, %s693
      %p697 = scmp.eq.s32.totalorder %s90, 0
      %p698 = por %p696, %p697
      %p699 = scmp.ne.s32.totalorder %s691, %s693
      %p700 = scmp.eq.s32.totalorder %s95, 1
      %p701 = por %p699, %p700
      %p702 = scmp.ne.s32.totalorder %s693, %s694
      %p703 = scmp.eq.s32.totalorder %s95, 0
      %p704 = por %p702, %p703
      %p705 = scmp.ne.s32.totalorder %s693, %s694
      %p706 = scmp.eq.s32.totalorder %s96, 1
      %p707 = por %p705, %p706
      %p709 = scmp.ne.s32.totalorder %s694, %s708
      %p710 = scmp.eq.s32.totalorder %s96, 0
      %p711 = por %p709, %p710
      %s713 = sadd.s32 %s712, 1
      %p716 = scmp.eq.s32.totalorder %s90, 1
      %p717 = scmp.ne.s32.totalorder %s712, %s714
      %p718 = scmp.eq.s32.totalorder %s90, 0
      %p719 = por %p717, %p718
      %p720 = scmp.ne.s32.totalorder %s712, %s714
      %p721 = scmp.eq.s32.totalorder %s95, 1
      %p722 = por %p720, %p721
      %p723 = scmp.ne.s32.totalorder %s714, %s715
      %p724 = scmp.eq.s32.totalorder %s95, 0
      %p725 = por %p723, %p724
      %p726 = scmp.ne.s32.totalorder %s714, %s715
      %p727 = scmp.eq.s32.totalorder %s96, 1
      %p728 = por %p726, %p727
      %p730 = scmp.ne.s32.totalorder %s715, %s729
      %p731 = scmp.eq.s32.totalorder %s96, 0
      %p732 = por %p730, %p731
      %s734 = sadd.s32 %s733, 1
      %p737 = scmp.eq.s32.totalorder %s90, 1
      %p738 = scmp.ne.s32.totalorder %s733, %s735
      %p739 = scmp.eq.s32.totalorder %s90, 0
      %p740 = por %p738, %p739
      %p741 = scmp.ne.s32.totalorder %s733, %s735
      %p742 = scmp.eq.s32.totalorder %s95, 1
      %p743 = por %p741, %p742
      %p744 = scmp.ne.s32.totalorder %s735, %s736
      %p745 = scmp.eq.s32.totalorder %s95, 0
      %p746 = por %p744, %p745
      %p747 = scmp.ne.s32.totalorder %s735, %s736
      %p748 = scmp.eq.s32.totalorder %s96, 1
      %p749 = por %p747, %p748
      %p751 = scmp.ne.s32.totalorder %s736, %s750
      %p752 = scmp.eq.s32.totalorder %s96, 0
      %p753 = por %p751, %p752
      %s755 = sadd.s32 %s754, 1
      %p758 = scmp.eq.s32.totalorder %s90, 1
      %p759 = scmp.ne.s32.totalorder %s754, %s756
      %p760 = scmp.eq.s32.totalorder %s90, 0
      %p761 = por %p759, %p760
      %p762 = scmp.ne.s32.totalorder %s754, %s756
      %p763 = scmp.eq.s32.totalorder %s95, 1
      %p764 = por %p762, %p763
      %p765 = scmp.ne.s32.totalorder %s756, %s757
      %p766 = scmp.eq.s32.totalorder %s95, 0
      %p767 = por %p765, %p766
      %p768 = scmp.ne.s32.totalorder %s756, %s757
      %p769 = scmp.eq.s32.totalorder %s96, 1
      %p770 = por %p768, %p769
      %p772 = scmp.ne.s32.totalorder %s757, %s771
      %p773 = scmp.eq.s32.totalorder %s96, 0
      %p774 = por %p772, %p773
      %s776 = sadd.s32 %s775, 1
      %p779 = scmp.eq.s32.totalorder %s90, 1
      %p780 = scmp.ne.s32.totalorder %s775, %s777
      %p781 = scmp.eq.s32.totalorder %s90, 0
      %p782 = por %p780, %p781
      %p783 = scmp.ne.s32.totalorder %s775, %s777
      %p784 = scmp.eq.s32.totalorder %s95, 1
      %p785 = por %p783, %p784
      %p786 = scmp.ne.s32.totalorder %s777, %s778
      %p787 = scmp.eq.s32.totalorder %s95, 0
      %p788 = por %p786, %p787
      %p789 = scmp.ne.s32.totalorder %s777, %s778
      %p790 = scmp.eq.s32.totalorder %s96, 1
      %p791 = por %p789, %p790
      %p793 = scmp.ne.s32.totalorder %s778, %s792
      %p794 = scmp.eq.s32.totalorder %s96, 0
      %p795 = por %p793, %p794
      %s797 = sadd.s32 %s796, 1
      %p800 = scmp.eq.s32.totalorder %s90, 1
      %p801 = scmp.ne.s32.totalorder %s796, %s798
      %p802 = scmp.eq.s32.totalorder %s90, 0
      %p803 = por %p801, %p802
      %p804 = scmp.ne.s32.totalorder %s796, %s798
      %p805 = scmp.eq.s32.totalorder %s95, 1
      %p806 = por %p804, %p805
      %p807 = scmp.ne.s32.totalorder %s798, %s799
      %p808 = scmp.eq.s32.totalorder %s95, 0
      %p809 = por %p807, %p808
      %p810 = scmp.ne.s32.totalorder %s798, %s799
      %p811 = scmp.eq.s32.totalorder %s96, 1
      %p812 = por %p810, %p811
      %p814 = scmp.ne.s32.totalorder %s799, %s813
      %p815 = scmp.eq.s32.totalorder %s96, 0
      %p816 = por %p814, %p815
      %s818 = sadd.s32 %s817, 1
      %p821 = scmp.eq.s32.totalorder %s90, 1
      %p822 = scmp.ne.s32.totalorder %s817, %s819
      %p823 = scmp.eq.s32.totalorder %s90, 0
      %p824 = por %p822, %p823
      %p825 = scmp.ne.s32.totalorder %s817, %s819
      %p826 = scmp.eq.s32.totalorder %s95, 1
      %p827 = por %p825, %p826
      %p828 = scmp.ne.s32.totalorder %s819, %s820
      %p829 = scmp.eq.s32.totalorder %s95, 0
      %p830 = por %p828, %p829
      %p831 = scmp.ne.s32.totalorder %s819, %s820
      %p832 = scmp.eq.s32.totalorder %s96, 1
      %p833 = por %p831, %p832
      %p835 = scmp.ne.s32.totalorder %s820, %s834
      %p836 = scmp.eq.s32.totalorder %s96, 0
      %p837 = por %p835, %p836
      %s838 = ssub.s32 %s90, %s97
      %p839 = scmp.eq.s32.totalorder %s838, 0
      %s841 = sadd.s32 %s840, 1
      %s842 = scalar_select %p839, %s840, %s841
      %p845 = pneg %p839
      %p846 = scmp.eq.s32.totalorder %s90, 1
      %p847 = por %p845, %p846
      %p848 = scmp.ne.s32.totalorder %s840, %s843
      %p849 = scmp.eq.s32.totalorder %s90, 0
      %p850 = por %p848, %p849
      %p851 = scmp.ne.s32.totalorder %s840, %s843
      %p852 = scmp.eq.s32.totalorder %s95, 1
      %p853 = por %p851, %p852
      %p854 = scmp.ne.s32.totalorder %s843, %s844
      %p855 = scmp.eq.s32.totalorder %s95, 0
      %p856 = por %p854, %p855
      %p857 = scmp.ne.s32.totalorder %s843, %s844
      %p858 = scmp.eq.s32.totalorder %s96, 1
      %p859 = por %p857, %p858
      %p861 = scmp.ne.s32.totalorder %s844, %s860
      %p862 = scmp.eq.s32.totalorder %s96, 0
      %p863 = por %p861, %p862
      %p864 = scmp.le.s32.totalorder 1, %s90
      %p865 = scmp.lt.s32.totalorder %s90, 3
      %p866 = pnand %p864, %p865
      %p867 = pneg %p866
      // Predicated region
      $region9: #{front_module.1} parent=5 // pred_check
        _
      $region10: #{front_module.1} parent=5 // pred_check_branch
        %869 = sbr.rel (%p866) target = $region12
      $region11: #{front_module.1} parent=5 // pred_region
        %s870 = ssub.s32 %s90, 1
        // Predicated region
        $region13: #{front_module.1} parent=11 // pred_check
          %p871 = pneg %p137
        $region14: #{front_module.1} parent=11 // pred_check_branch
          %873 = sbr.rel (%p871) target = $region16
        $region15: #{front_module.1} parent=11 // pred_region
          _
        $region16: #{front_module.1} parent=11 // pred_fallthru
          _
        // Predicated region
        $region17: #{front_module.1} parent=11 // pred_check
          %p874 = pneg %p158
        $region18: #{front_module.1} parent=11 // pred_check_branch
          %876 = sbr.rel (%p874) target = $region20
        $region19: #{front_module.1} parent=11 // pred_region
          _
        $region20: #{front_module.1} parent=11 // pred_fallthru
          _
        // Predicated region
        $region21: #{front_module.1} parent=11 // pred_check
          %p877 = pneg %p179
        $region22: #{front_module.1} parent=11 // pred_check_branch
          %879 = sbr.rel (%p877) target = $region24
        $region23: #{front_module.1} parent=11 // pred_region
          _
        $region24: #{front_module.1} parent=11 // pred_fallthru
          _
        // Predicated region
        $region25: #{front_module.1} parent=11 // pred_check
          %p880 = pneg %p200
        $region26: #{front_module.1} parent=11 // pred_check_branch
          %882 = sbr.rel (%p880) target = $region28
        $region27: #{front_module.1} parent=11 // pred_region
          %s884 = ssub.s32 1024, 1024
          %885 = vsyncadd [#allocation7], %s884
          %s886 = sshll.u32 [#allocation6], 4
          %s887 = int_to_ptr.vmem [resolvable:$true] %s886
          %892 = dma.hbm_to_vmem [thread:$0]  %s9, 1024, %s887, [#allocation7], 64, 64, 4
        $region28: #{front_module.1} parent=11 // pred_fallthru
          _
        // Predicated region
        $region29: #{front_module.1} parent=11 // pred_check
          %p893 = pneg %p221
        $region30: #{front_module.1} parent=11 // pred_check_branch
          %895 = sbr.rel (%p893) target = $region32
        $region31: #{front_module.1} parent=11 // pred_region
          %s897 = ssub.s32 16, 16
          %898 = vsyncadd [#allocation9], %s897
          %s900 = sshll.u32 [#allocation8], 4
          %s901 = int_to_ptr.vmem [resolvable:$true] %s900
          %903 = dma.hbm_to_vmem [thread:$0]  %s11, 16, %s901, [#allocation9]
        $region32: #{front_module.1} parent=11 // pred_fallthru
          _
        // Predicated region
        $region33: #{front_module.1} parent=11 // pred_check
          %p904 = pneg %p242
        $region34: #{front_module.1} parent=11 // pred_check_branch
          %906 = sbr.rel (%p904) target = $region36
        $region35: #{front_module.1} parent=11 // pred_region
          %s908 = ssub.s32 1024, 1024
          %909 = vsyncadd [#allocation9], %s908
          %s910 = sshll.u32 [#allocation10], 4
          %s911 = int_to_ptr.vmem [resolvable:$true] %s910
          %916 = dma.hbm_to_vmem [thread:$0]  %s13, 1024, %s911, [#allocation9], 64, 64, 4
        $region36: #{front_module.1} parent=11 // pred_fallthru
          _
        // Predicated region
        $region37: #{front_module.1} parent=11 // pred_check
          %p917 = pneg %p263
        $region38: #{front_module.1} parent=11 // pred_check_branch
          %919 = sbr.rel (%p917) target = $region40
        $region39: #{front_module.1} parent=11 // pred_region
          %s921 = ssub.s32 16, 16
          %922 = vsyncadd [#allocation12], %s921
          %s924 = sshll.u32 [#allocation11], 4
          %s925 = int_to_ptr.vmem [resolvable:$true] %s924
          %927 = dma.hbm_to_vmem [thread:$0]  %s15, 16, %s925, [#allocation12]
        $region40: #{front_module.1} parent=11 // pred_fallthru
          _
        // Predicated region
        $region41: #{front_module.1} parent=11 // pred_check
          %p928 = pneg %p284
        $region42: #{front_module.1} parent=11 // pred_check_branch
          %930 = sbr.rel (%p928) target = $region44
        $region43: #{front_module.1} parent=11 // pred_region
          %s932 = ssub.s32 16, 16
          %933 = vsyncadd [#allocation12], %s932
          %s935 = sshll.u32 [#allocation13], 4
          %s936 = int_to_ptr.vmem [resolvable:$true] %s935
          %938 = dma.hbm_to_vmem [thread:$0]  %s17, 16, %s936, [#allocation12]
        $region44: #{front_module.1} parent=11 // pred_fallthru
          _
        // Predicated region
        $region45: #{front_module.1} parent=11 // pred_check
          %p939 = pneg %p305
        $region46: #{front_module.1} parent=11 // pred_check_branch
          %941 = sbr.rel (%p939) target = $region48
        $region47: #{front_module.1} parent=11 // pred_region
          _
        $region48: #{front_module.1} parent=11 // pred_fallthru
          _
        // Predicated region
        $region49: #{front_module.1} parent=11 // pred_check
          %p942 = pneg %p326
        $region50: #{front_module.1} parent=11 // pred_check_branch
          %944 = sbr.rel (%p942) target = $region52
        $region51: #{front_module.1} parent=11 // pred_region
          %s946 = ssub.s32 16, 16
          %947 = vsyncadd [#allocation15], %s946
          %s949 = sshll.u32 [#allocation14], 4
          %s950 = int_to_ptr.vmem [resolvable:$true] %s949
          %952 = dma.hbm_to_vmem [thread:$0]  %s21, 16, %s950, [#allocation15]
        $region52: #{front_module.1} parent=11 // pred_fallthru
          _
        // Predicated region
        $region53: #{front_module.1} parent=11 // pred_check
          %p953 = pneg %p347
        $region54: #{front_module.1} parent=11 // pred_check_branch
          %955 = sbr.rel (%p953) target = $region56
        $region55: #{front_module.1} parent=11 // pred_region
          %s957 = ssub.s32 16, 16
          %958 = vsyncadd [#allocation15], %s957
          %s960 = sshll.u32 [#allocation16], 4
          %s961 = int_to_ptr.vmem [resolvable:$true] %s960
          %963 = dma.hbm_to_vmem [thread:$0]  %s23, 16, %s961, [#allocation15]
        $region56: #{front_module.1} parent=11 // pred_fallthru
          _
        // Predicated region
        $region57: #{front_module.1} parent=11 // pred_check
          %p964 = pneg %p368
        $region58: #{front_module.1} parent=11 // pred_check_branch
          %966 = sbr.rel (%p964) target = $region60
        $region59: #{front_module.1} parent=11 // pred_region
          %s968 = ssub.s32 1024, 1024
          %969 = vsyncadd [#allocation18], %s968
          %s970 = sshll.u32 [#allocation17], 4
          %s971 = int_to_ptr.vmem [resolvable:$true] %s970
          %976 = dma.hbm_to_vmem [thread:$0]  %s25, 1024, %s971, [#allocation18], 64, 64, 4
        $region60: #{front_module.1} parent=11 // pred_fallthru
          _
        // Predicated region
        $region61: #{front_module.1} parent=11 // pred_check
          %p977 = pneg %p389
        $region62: #{front_module.1} parent=11 // pred_check_branch
          %979 = sbr.rel (%p977) target = $region64
        $region63: #{front_module.1} parent=11 // pred_region
          %s981 = ssub.s32 16, 16
          %982 = vsyncadd [#allocation18], %s981
          %s984 = sshll.u32 [#allocation19], 4
          %s985 = int_to_ptr.vmem [resolvable:$true] %s984
          %987 = dma.hbm_to_vmem [thread:$0]  %s27, 16, %s985, [#allocation18]
        $region64: #{front_module.1} parent=11 // pred_fallthru
          _
        // Predicated region
        $region65: #{front_module.1} parent=11 // pred_check
          %p988 = pneg %p410
        $region66: #{front_module.1} parent=11 // pred_check_branch
          %990 = sbr.rel (%p988) target = $region68
        $region67: #{front_module.1} parent=11 // pred_region
          %s992 = ssub.s32 16, 16
          %993 = vsyncadd [#allocation21], %s992
          %s995 = sshll.u32 [#allocation20], 4
          %s996 = int_to_ptr.vmem [resolvable:$true] %s995
          %998 = dma.hbm_to_vmem [thread:$0]  %s29, 16, %s996, [#allocation21]
        $region68: #{front_module.1} parent=11 // pred_fallthru
          _
        // Predicated region
        $region69: #{front_module.1} parent=11 // pred_check
          %p999 = pneg %p431
        $region70: #{front_module.1} parent=11 // pred_check_branch
          %1001 = sbr.rel (%p999) target = $region72
        $region71: #{front_module.1} parent=11 // pred_region
          %s1003 = ssub.s32 1024, 1024
          %1004 = vsyncadd [#allocation21], %s1003
          %s1005 = sshll.u32 [#allocation22], 4
          %s1006 = int_to_ptr.vmem [resolvable:$true] %s1005
          %1011 = dma.hbm_to_vmem [thread:$0]  %s31, 1024, %s1006, [#allocation21], 64, 64, 4
        $region72: #{front_module.1} parent=11 // pred_fallthru
          _
        // Predicated region
        $region73: #{front_module.1} parent=11 // pred_check
          %p1012 = pneg %p452
        $region74: #{front_module.1} parent=11 // pred_check_branch
          %1014 = sbr.rel (%p1012) target = $region76
        $region75: #{front_module.1} parent=11 // pred_region
          %s1016 = ssub.s32 16, 16
          %1017 = vsyncadd [#allocation24], %s1016
          %s1019 = sshll.u32 [#allocation23], 4
          %s1020 = int_to_ptr.vmem [resolvable:$true] %s1019
          %1022 = dma.hbm_to_vmem [thread:$0]  %s33, 16, %s1020, [#allocation24]
        $region76: #{front_module.1} parent=11 // pred_fallthru
          _
        // Predicated region
        $region77: #{front_module.1} parent=11 // pred_check
          %p1023 = pneg %p473
        $region78: #{front_module.1} parent=11 // pred_check_branch
          %1025 = sbr.rel (%p1023) target = $region80
        $region79: #{front_module.1} parent=11 // pred_region
          %s1027 = ssub.s32 16, 16
          %1028 = vsyncadd [#allocation24], %s1027
          %s1030 = sshll.u32 [#allocation25], 4
          %s1031 = int_to_ptr.vmem [resolvable:$true] %s1030
          %1033 = dma.hbm_to_vmem [thread:$0]  %s35, 16, %s1031, [#allocation24]
        $region80: #{front_module.1} parent=11 // pred_fallthru
          _
        // Predicated region
        $region81: #{front_module.1} parent=11 // pred_check
          %p1034 = pneg %p494
        $region82: #{front_module.1} parent=11 // pred_check_branch
          %1036 = sbr.rel (%p1034) target = $region84
        $region83: #{front_module.1} parent=11 // pred_region
          _
        $region84: #{front_module.1} parent=11 // pred_fallthru
          _
        // Predicated region
        $region85: #{front_module.1} parent=11 // pred_check
          %p1037 = pneg %p515
        $region86: #{front_module.1} parent=11 // pred_check_branch
          %1039 = sbr.rel (%p1037) target = $region88
        $region87: #{front_module.1} parent=11 // pred_region
          %s1041 = ssub.s32 16, 16
          %1042 = vsyncadd [#allocation27], %s1041
          %s1044 = sshll.u32 [#allocation26], 4
          %s1045 = int_to_ptr.vmem [resolvable:$true] %s1044
          %1047 = dma.hbm_to_vmem [thread:$0]  %s39, 16, %s1045, [#allocation27]
        $region88: #{front_module.1} parent=11 // pred_fallthru
          _
        // Predicated region
        $region89: #{front_module.1} parent=11 // pred_check
          %p1048 = pneg %p536
        $region90: #{front_module.1} parent=11 // pred_check_branch
          %1050 = sbr.rel (%p1048) target = $region92
        $region91: #{front_module.1} parent=11 // pred_region
          %s1052 = ssub.s32 16, 16
          %1053 = vsyncadd [#allocation27], %s1052
          %s1055 = sshll.u32 [#allocation28], 4
          %s1056 = int_to_ptr.vmem [resolvable:$true] %s1055
          %1058 = dma.hbm_to_vmem [thread:$0]  %s41, 16, %s1056, [#allocation27]
        $region92: #{front_module.1} parent=11 // pred_fallthru
          _
        // Predicated region
        $region93: #{front_module.1} parent=11 // pred_check
          %p1059 = pneg %p557
        $region94: #{front_module.1} parent=11 // pred_check_branch
          %1061 = sbr.rel (%p1059) target = $region96
        $region95: #{front_module.1} parent=11 // pred_region
          %s1063 = ssub.s32 1024, 1024
          %1064 = vsyncadd [#allocation30], %s1063
          %s1065 = sshll.u32 [#allocation29], 4
          %s1066 = int_to_ptr.vmem [resolvable:$true] %s1065
          %1071 = dma.hbm_to_vmem [thread:$0]  %s43, 1024, %s1066, [#allocation30], 64, 64, 4
        $region96: #{front_module.1} parent=11 // pred_fallthru
          _
        // Predicated region
        $region97: #{front_module.1} parent=11 // pred_check
          %p1072 = pneg %p578
        $region98: #{front_module.1} parent=11 // pred_check_branch
          %1074 = sbr.rel (%p1072) target = $region100
        $region99: #{front_module.1} parent=11 // pred_region
          %s1076 = ssub.s32 16, 16
          %1077 = vsyncadd [#allocation30], %s1076
          %s1079 = sshll.u32 [#allocation31], 4
          %s1080 = int_to_ptr.vmem [resolvable:$true] %s1079
          %1082 = dma.hbm_to_vmem [thread:$0]  %s45, 16, %s1080, [#allocation30]
        $region100: #{front_module.1} parent=11 // pred_fallthru
          _
        // Predicated region
        $region101: #{front_module.1} parent=11 // pred_check
          %p1083 = pneg %p599
        $region102: #{front_module.1} parent=11 // pred_check_branch
          %1085 = sbr.rel (%p1083) target = $region104
        $region103: #{front_module.1} parent=11 // pred_region
          %s1087 = ssub.s32 16, 16
          %1088 = vsyncadd [#allocation33], %s1087
          %s1090 = sshll.u32 [#allocation32], 4
          %s1091 = int_to_ptr.vmem [resolvable:$true] %s1090
          %1093 = dma.hbm_to_vmem [thread:$0]  %s47, 16, %s1091, [#allocation33]
        $region104: #{front_module.1} parent=11 // pred_fallthru
          _
        // Predicated region
        $region105: #{front_module.1} parent=11 // pred_check
          %p1094 = pneg %p620
        $region106: #{front_module.1} parent=11 // pred_check_branch
          %1096 = sbr.rel (%p1094) target = $region108
        $region107: #{front_module.1} parent=11 // pred_region
          %s1098 = ssub.s32 2048, 2048
          %1099 = vsyncadd [#allocation33], %s1098
          %s1100 = sshll.u32 [#allocation34], 4
          %s1101 = int_to_ptr.vmem [resolvable:$true] %s1100
          %1106 = dma.hbm_to_vmem [thread:$0]  %s49, 2048, %s1101, [#allocation33], 128, 128, 8
        $region108: #{front_module.1} parent=11 // pred_fallthru
          _
        // Predicated region
        $region109: #{front_module.1} parent=11 // pred_check
          %p1107 = pneg %p641
        $region110: #{front_module.1} parent=11 // pred_check_branch
          %1109 = sbr.rel (%p1107) target = $region112
        $region111: #{front_module.1} parent=11 // pred_region
          _
        $region112: #{front_module.1} parent=11 // pred_fallthru
          _
        // Predicated region
        $region113: #{front_module.1} parent=11 // pred_check
          %p1110 = pneg %p662
        $region114: #{front_module.1} parent=11 // pred_check_branch
          %1112 = sbr.rel (%p1110) target = $region116
        $region115: #{front_module.1} parent=11 // pred_region
          %s1114 = ssub.s32 2048, 2048
          %1115 = vsyncadd [#allocation36], %s1114
          %s1116 = sshll.u32 [#allocation35], 4
          %s1117 = int_to_ptr.vmem [resolvable:$true] %s1116
          %1122 = dma.hbm_to_vmem [thread:$0]  %s53, 2048, %s1117, [#allocation36], 64, 64, 4
        $region116: #{front_module.1} parent=11 // pred_fallthru
          _
        // Predicated region
        $region117: #{front_module.1} parent=11 // pred_check
          %p1123 = pneg %p683
        $region118: #{front_module.1} parent=11 // pred_check_branch
          %1125 = sbr.rel (%p1123) target = $region120
        $region119: #{front_module.1} parent=11 // pred_region
          %s1127 = ssub.s32 16, 16
          %1128 = vsyncadd [#allocation36], %s1127
          %s1130 = sshll.u32 [#allocation37], 4
          %s1131 = int_to_ptr.vmem [resolvable:$true] %s1130
          %1133 = dma.hbm_to_vmem [thread:$0]  %s55, 16, %s1131, [#allocation36]
        $region120: #{front_module.1} parent=11 // pred_fallthru
          _
        // Predicated region
        $region121: #{front_module.1} parent=11 // pred_check
          %p1134 = pneg %p704
        $region122: #{front_module.1} parent=11 // pred_check_branch
          %1136 = sbr.rel (%p1134) target = $region124
        $region123: #{front_module.1} parent=11 // pred_region
          %s1138 = ssub.s32 16, 16
          %1139 = vsyncadd [#allocation39], %s1138
          %s1141 = sshll.u32 [#allocation38], 4
          %s1142 = int_to_ptr.vmem [resolvable:$true] %s1141
          %1144 = dma.hbm_to_vmem [thread:$0]  %s57, 16, %s1142, [#allocation39]
        $region124: #{front_module.1} parent=11 // pred_fallthru
          _
        // Predicated region
        $region125: #{front_module.1} parent=11 // pred_check
          %p1145 = pneg %p725
        $region126: #{front_module.1} parent=11 // pred_check_branch
          %1147 = sbr.rel (%p1145) target = $region128
        $region127: #{front_module.1} parent=11 // pred_region
          _
        $region128: #{front_module.1} parent=11 // pred_fallthru
          _
        // Predicated region
        $region129: #{front_module.1} parent=11 // pred_check
          %p1148 = pneg %p746
        $region130: #{front_module.1} parent=11 // pred_check_branch
          %1150 = sbr.rel (%p1148) target = $region132
        $region131: #{front_module.1} parent=11 // pred_region
          %s1152 = ssub.s32 16, 16
          %1153 = vsyncadd [#allocation39], %s1152
          %s1155 = sshll.u32 [#allocation40], 4
          %s1156 = int_to_ptr.vmem [resolvable:$true] %s1155
          %1158 = dma.hbm_to_vmem [thread:$0]  %s61, 16, %s1156, [#allocation39]
        $region132: #{front_module.1} parent=11 // pred_fallthru
          _
        // Predicated region
        $region133: #{front_module.1} parent=11 // pred_check
          %p1159 = pneg %p767
        $region134: #{front_module.1} parent=11 // pred_check_branch
          %1161 = sbr.rel (%p1159) target = $region136
        $region135: #{front_module.1} parent=11 // pred_region
          %s1163 = ssub.s32 16, 16
          %1164 = vsyncadd [#allocation42], %s1163
          %s1166 = sshll.u32 [#allocation41], 4
          %s1167 = int_to_ptr.vmem [resolvable:$true] %s1166
          %1169 = dma.hbm_to_vmem [thread:$0]  %s63, 16, %s1167, [#allocation42]
        $region136: #{front_module.1} parent=11 // pred_fallthru
          _
        // Predicated region
        $region137: #{front_module.1} parent=11 // pred_check
          %p1170 = pneg %p788
        $region138: #{front_module.1} parent=11 // pred_check_branch
          %1172 = sbr.rel (%p1170) target = $region140
        $region139: #{front_module.1} parent=11 // pred_region
          _
        $region140: #{front_module.1} parent=11 // pred_fallthru
          _
        // Predicated region
        $region141: #{front_module.1} parent=11 // pred_check
          %p1173 = pneg %p809
        $region142: #{front_module.1} parent=11 // pred_check_branch
          %1175 = sbr.rel (%p1173) target = $region144
        $region143: #{front_module.1} parent=11 // pred_region
          _
        $region144: #{front_module.1} parent=11 // pred_fallthru
          _
        // Predicated region
        $region145: #{front_module.1} parent=11 // pred_check
          %p1176 = pneg %p830
        $region146: #{front_module.1} parent=11 // pred_check_branch
          %1178 = sbr.rel (%p1176) target = $region148
        $region147: #{front_module.1} parent=11 // pred_region
          _
        $region148: #{front_module.1} parent=11 // pred_fallthru
          _
      $region12: #{front_module.1} parent=5 // pred_fallthru
        _
      %p1179 = scmp.lt.s32.totalorder %s90, 2
      // Predicated region
      $region149: #{front_module.1} parent=5 // pred_check
        %p1180 = pneg %p1179
      $region150: #{front_module.1} parent=5 // pred_check_branch
        %1182 = sbr.rel (%p1180) target = $region152
      $region151: #{front_module.1} parent=5 // pred_region
        // Predicated region
        $region153: #{front_module.1} parent=151 // pred_check
          %p1183 = pneg %p110
        $region154: #{front_module.1} parent=151 // pred_check_branch
          %1185 = sbr.rel (%p1183) target = $region156
        $region155: #{front_module.1} parent=151 // pred_region
          %s1186 = smul.u32 8, %s90
          %p1187 = scmp.lt.s32.totalorder %s1186, 15
          %s1188 = scalar_select %p1187, %s1186, 15
          %s1189 = smul.addr %s1188, 4
          %s1190 = scalar_lea.vmem %s1, %s1189
          %s1191 = smul.u32 8, %s90
        $region156: #{front_module.1} parent=151 // pred_fallthru
          _
      $region152: #{front_module.1} parent=5 // pred_fallthru
        _
      %p1192 = scmp.le.s32.totalorder 1, %s90
      %p1193 = scmp.lt.s32.totalorder %s90, 3
      %p1194 = pnand %p1192, %p1193
      %p1195 = pneg %p1194
      // Predicated region
      $region157: #{front_module.1} parent=5 // pred_check
        _
      $region158: #{front_module.1} parent=5 // pred_check_branch
        %1197 = sbr.rel (%p1194) target = $region160
      $region159: #{front_module.1} parent=5 // pred_region
        %s1198 = ssub.s32 %s90, 1
        // Predicated region
        $region161: #{front_module.1} parent=159 // pred_check
          %p1199 = pneg %p200
        $region162: #{front_module.1} parent=159 // pred_check_branch
          %1201 = sbr.rel (%p1199) target = $region164
        $region163: #{front_module.1} parent=159 // pred_region
          %1202 = dma.done [#allocation7], 1024
        $region164: #{front_module.1} parent=159 // pred_fallthru
          _
        // Predicated region
        $region165: #{front_module.1} parent=159 // pred_check
          %p1203 = pneg %p221
        $region166: #{front_module.1} parent=159 // pred_check_branch
          %1205 = sbr.rel (%p1203) target = $region168
        $region167: #{front_module.1} parent=159 // pred_region
          %1206 = dma.done [#allocation9], 16
        $region168: #{front_module.1} parent=159 // pred_fallthru
          _
        // Predicated region
        $region169: #{front_module.1} parent=159 // pred_check
          %p1207 = pneg %p242
        $region170: #{front_module.1} parent=159 // pred_check_branch
          %1209 = sbr.rel (%p1207) target = $region172
        $region171: #{front_module.1} parent=159 // pred_region
          %1210 = dma.done [#allocation9], 1024
        $region172: #{front_module.1} parent=159 // pred_fallthru
          _
        // Predicated region
        $region173: #{front_module.1} parent=159 // pred_check
          %p1211 = pneg %p263
        $region174: #{front_module.1} parent=159 // pred_check_branch
          %1213 = sbr.rel (%p1211) target = $region176
        $region175: #{front_module.1} parent=159 // pred_region
          %1214 = dma.done [#allocation12], 16
        $region176: #{front_module.1} parent=159 // pred_fallthru
          _
        // Predicated region
        $region177: #{front_module.1} parent=159 // pred_check
          %p1215 = pneg %p284
        $region178: #{front_module.1} parent=159 // pred_check_branch
          %1217 = sbr.rel (%p1215) target = $region180
        $region179: #{front_module.1} parent=159 // pred_region
          %1218 = dma.done [#allocation12], 16
        $region180: #{front_module.1} parent=159 // pred_fallthru
          _
        // Predicated region
        $region181: #{front_module.1} parent=159 // pred_check
          %p1219 = pneg %p326
        $region182: #{front_module.1} parent=159 // pred_check_branch
          %1221 = sbr.rel (%p1219) target = $region184
        $region183: #{front_module.1} parent=159 // pred_region
          %1222 = dma.done [#allocation15], 16
        $region184: #{front_module.1} parent=159 // pred_fallthru
          _
        // Predicated region
        $region185: #{front_module.1} parent=159 // pred_check
          %p1223 = pneg %p347
        $region186: #{front_module.1} parent=159 // pred_check_branch
          %1225 = sbr.rel (%p1223) target = $region188
        $region187: #{front_module.1} parent=159 // pred_region
          %1226 = dma.done [#allocation15], 16
        $region188: #{front_module.1} parent=159 // pred_fallthru
          _
        // Predicated region
        $region189: #{front_module.1} parent=159 // pred_check
          %p1227 = pneg %p368
        $region190: #{front_module.1} parent=159 // pred_check_branch
          %1229 = sbr.rel (%p1227) target = $region192
        $region191: #{front_module.1} parent=159 // pred_region
          %1230 = dma.done [#allocation18], 1024
        $region192: #{front_module.1} parent=159 // pred_fallthru
          _
        // Predicated region
        $region193: #{front_module.1} parent=159 // pred_check
          %p1231 = pneg %p389
        $region194: #{front_module.1} parent=159 // pred_check_branch
          %1233 = sbr.rel (%p1231) target = $region196
        $region195: #{front_module.1} parent=159 // pred_region
          %1234 = dma.done [#allocation18], 16
        $region196: #{front_module.1} parent=159 // pred_fallthru
          _
        // Predicated region
        $region197: #{front_module.1} parent=159 // pred_check
          %p1235 = pneg %p410
        $region198: #{front_module.1} parent=159 // pred_check_branch
          %1237 = sbr.rel (%p1235) target = $region200
        $region199: #{front_module.1} parent=159 // pred_region
          %1238 = dma.done [#allocation21], 16
        $region200: #{front_module.1} parent=159 // pred_fallthru
          _
        // Predicated region
        $region201: #{front_module.1} parent=159 // pred_check
          %p1239 = pneg %p431
        $region202: #{front_module.1} parent=159 // pred_check_branch
          %1241 = sbr.rel (%p1239) target = $region204
        $region203: #{front_module.1} parent=159 // pred_region
          %1242 = dma.done [#allocation21], 1024
        $region204: #{front_module.1} parent=159 // pred_fallthru
          _
        // Predicated region
        $region205: #{front_module.1} parent=159 // pred_check
          %p1243 = pneg %p452
        $region206: #{front_module.1} parent=159 // pred_check_branch
          %1245 = sbr.rel (%p1243) target = $region208
        $region207: #{front_module.1} parent=159 // pred_region
          %1246 = dma.done [#allocation24], 16
        $region208: #{front_module.1} parent=159 // pred_fallthru
          _
        // Predicated region
        $region209: #{front_module.1} parent=159 // pred_check
          %p1247 = pneg %p473
        $region210: #{front_module.1} parent=159 // pred_check_branch
          %1249 = sbr.rel (%p1247) target = $region212
        $region211: #{front_module.1} parent=159 // pred_region
          %1250 = dma.done [#allocation24], 16
        $region212: #{front_module.1} parent=159 // pred_fallthru
          _
        // Predicated region
        $region213: #{front_module.1} parent=159 // pred_check
          %p1251 = pneg %p515
        $region214: #{front_module.1} parent=159 // pred_check_branch
          %1253 = sbr.rel (%p1251) target = $region216
        $region215: #{front_module.1} parent=159 // pred_region
          %1254 = dma.done [#allocation27], 16
        $region216: #{front_module.1} parent=159 // pred_fallthru
          _
        // Predicated region
        $region217: #{front_module.1} parent=159 // pred_check
          %p1255 = pneg %p536
        $region218: #{front_module.1} parent=159 // pred_check_branch
          %1257 = sbr.rel (%p1255) target = $region220
        $region219: #{front_module.1} parent=159 // pred_region
          %1258 = dma.done [#allocation27], 16
        $region220: #{front_module.1} parent=159 // pred_fallthru
          _
        // Predicated region
        $region221: #{front_module.1} parent=159 // pred_check
          %p1259 = pneg %p557
        $region222: #{front_module.1} parent=159 // pred_check_branch
          %1261 = sbr.rel (%p1259) target = $region224
        $region223: #{front_module.1} parent=159 // pred_region
          %1262 = dma.done [#allocation30], 1024
        $region224: #{front_module.1} parent=159 // pred_fallthru
          _
        // Predicated region
        $region225: #{front_module.1} parent=159 // pred_check
          %p1263 = pneg %p578
        $region226: #{front_module.1} parent=159 // pred_check_branch
          %1265 = sbr.rel (%p1263) target = $region228
        $region227: #{front_module.1} parent=159 // pred_region
          %1266 = dma.done [#allocation30], 16
        $region228: #{front_module.1} parent=159 // pred_fallthru
          _
        // Predicated region
        $region229: #{front_module.1} parent=159 // pred_check
          %p1267 = pneg %p599
        $region230: #{front_module.1} parent=159 // pred_check_branch
          %1269 = sbr.rel (%p1267) target = $region232
        $region231: #{front_module.1} parent=159 // pred_region
          %1270 = dma.done [#allocation33], 16
        $region232: #{front_module.1} parent=159 // pred_fallthru
          _
        // Predicated region
        $region233: #{front_module.1} parent=159 // pred_check
          %p1271 = pneg %p620
        $region234: #{front_module.1} parent=159 // pred_check_branch
          %1273 = sbr.rel (%p1271) target = $region236
        $region235: #{front_module.1} parent=159 // pred_region
          %1274 = dma.done [#allocation33], 2048
        $region236: #{front_module.1} parent=159 // pred_fallthru
          _
        // Predicated region
        $region237: #{front_module.1} parent=159 // pred_check
          %p1275 = pneg %p662
        $region238: #{front_module.1} parent=159 // pred_check_branch
          %1277 = sbr.rel (%p1275) target = $region240
        $region239: #{front_module.1} parent=159 // pred_region
          %1278 = dma.done [#allocation36], 2048
        $region240: #{front_module.1} parent=159 // pred_fallthru
          _
        // Predicated region
        $region241: #{front_module.1} parent=159 // pred_check
          %p1279 = pneg %p683
        $region242: #{front_module.1} parent=159 // pred_check_branch
          %1281 = sbr.rel (%p1279) target = $region244
        $region243: #{front_module.1} parent=159 // pred_region
          %1282 = dma.done [#allocation36], 16
        $region244: #{front_module.1} parent=159 // pred_fallthru
          _
        // Predicated region
        $region245: #{front_module.1} parent=159 // pred_check
          %p1283 = pneg %p704
        $region246: #{front_module.1} parent=159 // pred_check_branch
          %1285 = sbr.rel (%p1283) target = $region248
        $region247: #{front_module.1} parent=159 // pred_region
          %1286 = dma.done [#allocation39], 16
        $region248: #{front_module.1} parent=159 // pred_fallthru
          _
        // Predicated region
        $region249: #{front_module.1} parent=159 // pred_check
          %p1287 = pneg %p746
        $region250: #{front_module.1} parent=159 // pred_check_branch
          %1289 = sbr.rel (%p1287) target = $region252
        $region251: #{front_module.1} parent=159 // pred_region
          %1290 = dma.done [#allocation39], 16
        $region252: #{front_module.1} parent=159 // pred_fallthru
          _
        // Predicated region
        $region253: #{front_module.1} parent=159 // pred_check
          %p1291 = pneg %p767
        $region254: #{front_module.1} parent=159 // pred_check_branch
          %1293 = sbr.rel (%p1291) target = $region256
        $region255: #{front_module.1} parent=159 // pred_region
          %1294 = dma.done [#allocation42], 16
        $region256: #{front_module.1} parent=159 // pred_fallthru
          _
        %s1295 = smul.u32 8, %s95
        %p1296 = scmp.lt.s32.totalorder %s1295, 15
        %s1297 = scalar_select %p1296, %s1295, 15
        %s1298 = smul.addr %s1297, 4
        %s1299 = scalar_lea.vmem %s1, %s1298
        %p1300 = pneg %p116
        %p1301 = pneg %p113
        %p1302 = pneg %p137
        %p1303 = pneg %p134
        %p1304 = pneg %p158
        %p1305 = pneg %p155
        %p1306 = pneg %p179
        %p1307 = pneg %p176
        %p1308 = pneg %p200
        %p1309 = pneg %p197
        %p1310 = pneg %p221
        %p1311 = pneg %p218
        %p1312 = pneg %p242
        %p1313 = pneg %p239
        %p1314 = pneg %p263
        %p1315 = pneg %p260
        %p1316 = pneg %p284
        %p1317 = pneg %p281
        %p1318 = pneg %p305
        %p1319 = pneg %p302
        %p1320 = pneg %p326
        %p1321 = pneg %p323
        %p1322 = pneg %p347
        %p1323 = pneg %p344
        %p1324 = pneg %p368
        %p1325 = pneg %p365
        %p1326 = pneg %p389
        %p1327 = pneg %p386
        %p1328 = pneg %p410
        %p1329 = pneg %p407
        %p1330 = pneg %p431
        %p1331 = pneg %p428
        %p1332 = pneg %p452
        %p1333 = pneg %p449
        %p1334 = pneg %p473
        %p1335 = pneg %p470
        %p1336 = pneg %p494
        %p1337 = pneg %p491
        %p1338 = pneg %p515
        %p1339 = pneg %p512
        %p1340 = pneg %p536
        %p1341 = pneg %p533
        %p1342 = pneg %p557
        %p1343 = pneg %p554
        %p1344 = pneg %p578
        %p1345 = pneg %p575
        %p1346 = pneg %p599
        %p1347 = pneg %p596
        %p1348 = pneg %p620
        %p1349 = pneg %p617
        %p1350 = pneg %p641
        %p1351 = pneg %p638
        %p1352 = pneg %p662
        %p1353 = pneg %p659
        %p1354 = pneg %p683
        %p1355 = pneg %p680
        %p1356 = pneg %p704
        %p1357 = pneg %p701
        %p1358 = pneg %p725
        %p1359 = pneg %p722
        %p1360 = pneg %p746
        %p1361 = pneg %p743
        %p1362 = pneg %p767
        %p1363 = pneg %p764
        %p1364 = pneg %p788
        %p1365 = pneg %p785
        %p1366 = pneg %p809
        %p1367 = pneg %p806
        %p1368 = pneg %p830
        %p1369 = pneg %p827
        %p1370 = pneg %p856
        %p1371 = pneg %p853
        %s1372 = smul.u32 2, %s95
        %p1373 = scmp.lt.s32.totalorder %s1372, 3
        %s1374 = scalar_select %p1373, %s1372, 3
        %s1375 = smul.addr %s1374, 2
        %s1376 = smul.addr %s1375, 8
        %s1377 = scalar_lea.vmem %s71, %s1376
        %s1378 = smul.u32 8, %s95
        %p1379 = scmp.lt.s32.totalorder %s1378, 15
        %s1380 = scalar_select %p1379, %s1378, 15
        %s1381 = smul.addr %s1380, 4
        %s1382 = scalar_lea.vmem %s1, %s1381
        %s1383 = smul.u32 8, %s95
        %s1384 = smul.u32 2, %s95
        %p1385 = scmp.lt.s32.totalorder %s1384, 3
        %s1386 = scalar_select %p1385, %s1384, 3
        %s1387 = smul.addr %s1386, 2
        %s1388 = smul.addr %s1387, 8
        %s1389 = scalar_lea.vmem %s71, %s1388
        %s1390 = smul.u32 2, %s95
        %1394 = vst [vmem:[#allocation2] sm:$0xf] 0
        %1395 = vst [vmem:[#allocation2 + $0x4] sm:$0xf] 0
        %v1396 = vld [vmem:[%s1382] sm:$0xf]
        %v1397 = vld [vmem:[%s1382 + $0x4] sm:$0xf]
        %v1398 = vld [vmem:[%s1382 + $0x8] sm:$0xf]
        %v1399 = vld [vmem:[%s1382 + $0xc] sm:$0xf]
        %v1400 = vld [vmem:[%s1382 + $0x10] sm:$0xf]
        %v1401 = vld [vmem:[%s1382 + $0x14] sm:$0xf]
        %v1402 = vld [vmem:[%s1382 + $0x18] sm:$0xf]
        %v1403 = vld [vmem:[%s1382 + $0x1c] sm:$0xf]
        %1404 = vst [vmem:[#allocation2 + $0x8] sm:$0xf] %v1396
        %1405 = vst [vmem:[#allocation2 + $0xc] sm:$0xf] %v1397
        %1406 = vst [vmem:[#allocation2 + $0x10] sm:$0xf] %v1398
        %1407 = vst [vmem:[#allocation2 + $0x14] sm:$0xf] %v1399
        %1408 = vst [vmem:[#allocation2 + $0x18] sm:$0xf] %v1400
        %1409 = vst [vmem:[#allocation2 + $0x1c] sm:$0xf] %v1401
        %1410 = vst [vmem:[#allocation2 + $0x20] sm:$0xf] %v1402
        %1411 = vst [vmem:[#allocation2 + $0x24] sm:$0xf] %v1403
        %1412 = vst [vmem:[#allocation2 + $0x28] sm:$0xf] 0
        %v1413 = vld [vmem:[#allocation2] sm:$0xf]
        %v1414 = vld [vmem:[#allocation2 + $0x4] sm:$0xf]
        %v1415 = vld [vmem:[#allocation2 + $0x8] sm:$0xf]
        %v1416 = vld [vmem:[#allocation2 + $0xc] sm:$0xf]
        %v1417 = vld [vmem:[#allocation2 + $0x10] sm:$0xf]
        %v1418 = vld [vmem:[#allocation2 + $0x14] sm:$0xf]
        %v1419 = vld [vmem:[#allocation2 + $0x18] sm:$0xf]
        %v1420 = vld [vmem:[#allocation2 + $0x1c] sm:$0xf]
        %v1421 = vld [vmem:[%s3] sm:$0xf]
        %v1422 = vld [vmem:[%s3 + $0x4] sm:$0xf]
        %v1423 = vld [vmem:[%s3 + $0x8] sm:$0xf]
        %v1424 = vld [vmem:[%s3 + $0xc] sm:$0xf]
        %v1425 = vld [vmem:[%s3 + $0x10] sm:$0xf]
        %v1426 = vld [vmem:[%s3 + $0x14] sm:$0xf]
        %v1427 = vld [vmem:[%s3 + $0x18] sm:$0xf]
        %v1428 = vld [vmem:[%s3 + $0x1c] sm:$0xf]
        %v1429 = vld [vmem:[%s3 + $0x20] sm:$0xf]
        %v1430 = vld [vmem:[%s3 + $0x24] sm:$0xf]
        %v1431 = vld [vmem:[%s3 + $0x28] sm:$0xf]
        %v1432 = vld [vmem:[%s3 + $0x2c] sm:$0xf]
        %v1433 = vld [vmem:[%s3 + $0x30] sm:$0xf]
        %v1434 = vld [vmem:[%s3 + $0x34] sm:$0xf]
        %v1435 = vld [vmem:[%s3 + $0x38] sm:$0xf]
        %v1436 = vld [vmem:[%s3 + $0x3c] sm:$0xf]
        %v1437 = vld [vmem:[#allocation2 + $0x20] sm:$0xf]
        %s1438 = scalar_lea.vmem %s3, 64
        %v1439 = vld [vmem:[%s1438] sm:$0xf]
        %v1440 = vld [vmem:[%s1438 + $0x4] sm:$0xf]
        %v1441 = vld [vmem:[%s1438 + $0x8] sm:$0xf]
        %v1442 = vld [vmem:[%s1438 + $0xc] sm:$0xf]
        %v1443 = vld [vmem:[%s1438 + $0x10] sm:$0xf]
        %v1444 = vld [vmem:[%s1438 + $0x14] sm:$0xf]
        %v1445 = vld [vmem:[%s1438 + $0x18] sm:$0xf]
        %v1446 = vld [vmem:[%s1438 + $0x1c] sm:$0xf]
        %v1447 = vld [vmem:[%s1438 + $0x20] sm:$0xf]
        %v1448 = vld [vmem:[%s1438 + $0x24] sm:$0xf]
        %v1449 = vld [vmem:[%s1438 + $0x28] sm:$0xf]
        %v1450 = vld [vmem:[%s1438 + $0x2c] sm:$0xf]
        %v1451 = vld [vmem:[%s1438 + $0x30] sm:$0xf]
        %v1452 = vld [vmem:[%s1438 + $0x34] sm:$0xf]
        %v1453 = vld [vmem:[%s1438 + $0x38] sm:$0xf]
        %v1454 = vld [vmem:[%s1438 + $0x3c] sm:$0xf]
        %v1463 = vunpack.c.l.b16 %v1414
        %v1464 = vunpack.c.l.b16 %v1415
        %v1465 = vunpack.c.l.b16 %v1416
        %v1466 = vunpack.c.l.b16 %v1417
        %v1467 = vunpack.c.l.b16 %v1418
        %v1468 = vunpack.c.l.b16 %v1419
        %v1469 = vunpack.c.l.b16 %v1420
        %v1470 = vunpack.c.l.b16 %v1437
        %v1471 = vpack.c.b16 %v1464, %v1463
        %v1472 = vpack.c.b16 %v1466, %v1465
        %v1473 = vpack.c.b16 %v1468, %v1467
        %v1474 = vpack.c.b16 %v1470, %v1469
        %v1495 = vunpack.c.l.b16 %v1439
        %v1496 = vunpack.c.l.b16 %v1440
        %v1497 = vunpack.c.l.b16 %v1441
        %v1498 = vunpack.c.l.b16 %v1442
        %v1499 = vunpack.c.l.b16 %v1443
        %v1500 = vunpack.c.l.b16 %v1444
        %v1501 = vunpack.c.l.b16 %v1445
        %v1502 = vunpack.c.l.b16 %v1446
        %v1503 = vunpack.c.l.b16 %v1447
        %v1504 = vunpack.c.l.b16 %v1448
        %v1505 = vunpack.c.l.b16 %v1449
        %v1506 = vunpack.c.l.b16 %v1450
        %v1507 = vunpack.c.l.b16 %v1451
        %v1508 = vunpack.c.l.b16 %v1452
        %v1509 = vunpack.c.l.b16 %v1453
        %v1510 = vunpack.c.l.b16 %v1454
        %v1511 = vpack.c.b16 %v1496, %v1495
        %v1512 = vpack.c.b16 %v1498, %v1497
        %v1513 = vpack.c.b16 %v1500, %v1499
        %v1514 = vpack.c.b16 %v1502, %v1501
        %v1515 = vpack.c.b16 %v1504, %v1503
        %v1516 = vpack.c.b16 %v1506, %v1505
        %v1517 = vpack.c.b16 %v1508, %v1507
        %v1518 = vpack.c.b16 %v1510, %v1509
        %1527 = vmatprep.subr.bf16.mxu0 0
        %1528 = vmatpush1.bf16.msra.mxu0 %v1511
        %1529 = vmatprep.subr.bf16.mxu0 0
        %1530 = vmatpush1.bf16.msra.mxu0 %v1512
        %1531 = vmatprep.subr.bf16.mxu0 0
        %1532 = vmatpush1.bf16.msra.mxu0 %v1513
        %1533 = vmatprep.subr.bf16.mxu0 0
        %1534 = vmatpush1.bf16.msra.mxu0 %v1514
        %1535 = vmatprep.subr.bf16.mxu0 0
        %1536 = vmatpush1.bf16.msra.mxu0 %v1515
        %1537 = vmatprep.subr.bf16.mxu0 0
        %1538 = vmatpush1.bf16.msra.mxu0 %v1516
        %1539 = vmatprep.subr.bf16.mxu0 0
        %1540 = vmatpush1.bf16.msra.mxu0 %v1517
        %1541 = vmatprep.subr.bf16.mxu0 0
        %1542 = vmatpush1.bf16.msra.mxu0 %v1518
        %1543 = vmatprep.subr.bf16.mxu0 0
        %1544 = vmatpush1.bf16.msra.mxu0 0
        %1545 = vmatprep.subr.bf16.mxu0 0
        %1546 = vmatpush1.bf16.msra.mxu0 0
        %1547 = vmatprep.subr.bf16.mxu0 0
        %1548 = vmatpush1.bf16.msra.mxu0 0
        %1549 = vmatprep.subr.bf16.mxu0 0
        %1550 = vmatpush1.bf16.msra.mxu0 0
        %1551 = vmatprep.subr.bf16.mxu0 0
        %1552 = vmatpush1.bf16.msra.mxu0 0
        %1553 = vmatprep.subr.bf16.mxu0 0
        %1554 = vmatpush1.bf16.msra.mxu0 0
        %1555 = vmatprep.subr.bf16.mxu0 0
        %1556 = vmatpush1.bf16.msra.mxu0 0
        %1557 = vmatprep.subr.bf16.mxu0 0
        %1558 = vmatpush1.bf16.msra.mxu0 0
        %1559 = vmatprep.mubr.bf16.mxu0 0
        %1560 = vmatmul.mubr.bf16.gmra.mrb[0].mxu0 %v1471
        %v1561 = vpop.f32.mrb[0].mxu0
        %v1562 = vadd.f32 0.0, %v1561
        %v1563 = vpop.f32.mrb[0].mxu0
        %v1564 = vpop.f32.mrb[0].mxu0
        %v1565 = vadd.f32 0.0, %v1564
        %v1566 = vpop.f32.mrb[0].mxu0
        %1567 = vmatprep.mubr.bf16.mxu0 0
        %1568 = vmatmul.mubr.bf16.gmra.mrb[0].mxu0 %v1472
        %v1569 = vpop.f32.mrb[0].mxu0
        %v1570 = vadd.f32 0.0, %v1569
        %v1571 = vpop.f32.mrb[0].mxu0
        %v1572 = vpop.f32.mrb[0].mxu0
        %v1573 = vadd.f32 0.0, %v1572
        %v1574 = vpop.f32.mrb[0].mxu0
        %1575 = vmatprep.mubr.bf16.mxu0 0
        %1576 = vmatmul.mubr.bf16.gmra.mrb[0].mxu0 %v1473
        %v1577 = vpop.f32.mrb[0].mxu0
        %v1578 = vadd.f32 0.0, %v1577
        %v1579 = vpop.f32.mrb[0].mxu0
        %v1580 = vpop.f32.mrb[0].mxu0
        %v1581 = vadd.f32 0.0, %v1580
        %v1582 = vpop.f32.mrb[0].mxu0
        %1583 = vmatprep.mubr.bf16.mxu0 0
        %1584 = vmatmul.mubr.bf16.gmra.mrb[0].mxu0 %v1474
        %v1585 = vpop.f32.mrb[0].mxu0
        %v1586 = vadd.f32 0.0, %v1585
        %v1587 = vpop.f32.mrb[0].mxu0
        %v1588 = vpop.f32.mrb[0].mxu0
        %v1589 = vadd.f32 0.0, %v1588
        %v1590 = vpop.f32.mrb[0].mxu0
        %1591 = vdwg.mxu0
        %v1593 = vunpack.c.l.b16 %v1413
        %v1594 = vpack.c.b16 %v1463, %v1593
        %v1595 = vpack.c.b16 %v1465, %v1464
        %v1596 = vpack.c.b16 %v1467, %v1466
        %v1597 = vpack.c.b16 %v1469, %v1468
        %v1618 = vunpack.c.l.b16 %v1421
        %v1619 = vunpack.c.l.b16 %v1422
        %v1620 = vunpack.c.l.b16 %v1423
        %v1621 = vunpack.c.l.b16 %v1424
        %v1622 = vunpack.c.l.b16 %v1425
        %v1623 = vunpack.c.l.b16 %v1426
        %v1624 = vunpack.c.l.b16 %v1427
        %v1625 = vunpack.c.l.b16 %v1428
        %v1626 = vunpack.c.l.b16 %v1429
        %v1627 = vunpack.c.l.b16 %v1430
        %v1628 = vunpack.c.l.b16 %v1431
        %v1629 = vunpack.c.l.b16 %v1432
        %v1630 = vunpack.c.l.b16 %v1433
        %v1631 = vunpack.c.l.b16 %v1434
        %v1632 = vunpack.c.l.b16 %v1435
        %v1633 = vunpack.c.l.b16 %v1436
        %v1634 = vpack.c.b16 %v1619, %v1618
        %v1635 = vpack.c.b16 %v1621, %v1620
        %v1636 = vpack.c.b16 %v1623, %v1622
        %v1637 = vpack.c.b16 %v1625, %v1624
        %v1638 = vpack.c.b16 %v1627, %v1626
        %v1639 = vpack.c.b16 %v1629, %v1628
        %v1640 = vpack.c.b16 %v1631, %v1630
        %v1641 = vpack.c.b16 %v1633, %v1632
        %1650 = vmatprep.subr.bf16.mxu0 0
        %1651 = vmatpush1.bf16.msra.mxu0 %v1634
        %1652 = vmatprep.subr.bf16.mxu0 0
        %1653 = vmatpush1.bf16.msra.mxu0 %v1635
        %1654 = vmatprep.subr.bf16.mxu0 0
        %1655 = vmatpush1.bf16.msra.mxu0 %v1636
        %1656 = vmatprep.subr.bf16.mxu0 0
        %1657 = vmatpush1.bf16.msra.mxu0 %v1637
        %1658 = vmatprep.subr.bf16.mxu0 0
        %1659 = vmatpush1.bf16.msra.mxu0 %v1638
        %1660 = vmatprep.subr.bf16.mxu0 0
        %1661 = vmatpush1.bf16.msra.mxu0 %v1639
        %1662 = vmatprep.subr.bf16.mxu0 0
        %1663 = vmatpush1.bf16.msra.mxu0 %v1640
        %1664 = vmatprep.subr.bf16.mxu0 0
        %1665 = vmatpush1.bf16.msra.mxu0 %v1641
        %1666 = vmatprep.subr.bf16.mxu0 0
        %1667 = vmatpush1.bf16.msra.mxu0 0
        %1668 = vmatprep.subr.bf16.mxu0 0
        %1669 = vmatpush1.bf16.msra.mxu0 0
        %1670 = vmatprep.subr.bf16.mxu0 0
        %1671 = vmatpush1.bf16.msra.mxu0 0
        %1672 = vmatprep.subr.bf16.mxu0 0
        %1673 = vmatpush1.bf16.msra.mxu0 0
        %1674 = vmatprep.subr.bf16.mxu0 0
        %1675 = vmatpush1.bf16.msra.mxu0 0
        %1676 = vmatprep.subr.bf16.mxu0 0
        %1677 = vmatpush1.bf16.msra.mxu0 0
        %1678 = vmatprep.subr.bf16.mxu0 0
        %1679 = vmatpush1.bf16.msra.mxu0 0
        %1680 = vmatprep.subr.bf16.mxu0 0
        %1681 = vmatpush1.bf16.msra.mxu0 0
        %1682 = vmatprep.mubr.bf16.mxu0 0
        %1683 = vmatmul.mubr.bf16.gmra.mrb[0].mxu0 %v1594
        %v1684 = vpop.f32.mrb[0].mxu0
        %v1685 = vadd.f32 %v1562, %v1684
        %v1686 = vpop.f32.mrb[0].mxu0
        %v1687 = vpop.f32.mrb[0].mxu0
        %v1688 = vadd.f32 %v1565, %v1687
        %v1689 = vpop.f32.mrb[0].mxu0
        %1690 = vmatprep.mubr.bf16.mxu0 0
        %1691 = vmatmul.mubr.bf16.gmra.mrb[0].mxu0 %v1595
        %v1692 = vpop.f32.mrb[0].mxu0
        %v1693 = vadd.f32 %v1570, %v1692
        %v1694 = vpop.f32.mrb[0].mxu0
        %v1695 = vpop.f32.mrb[0].mxu0
        %v1696 = vadd.f32 %v1573, %v1695
        %v1697 = vpop.f32.mrb[0].mxu0
        %1698 = vmatprep.mubr.bf16.mxu0 0
        %1699 = vmatmul.mubr.bf16.gmra.mrb[0].mxu0 %v1596
        %v1700 = vpop.f32.mrb[0].mxu0
        %v1701 = vadd.f32 %v1578, %v1700
        %v1702 = vpop.f32.mrb[0].mxu0
        %v1703 = vpop.f32.mrb[0].mxu0
        %v1704 = vadd.f32 %v1581, %v1703
        %v1705 = vpop.f32.mrb[0].mxu0
        %1706 = vmatprep.mubr.bf16.mxu0 0
        %1707 = vmatmul.mubr.bf16.gmra.mrb[0].mxu0 %v1597
        %v1708 = vpop.f32.mrb[0].mxu0
        %v1709 = vadd.f32 %v1586, %v1708
        %v1710 = vpop.f32.mrb[0].mxu0
        %v1711 = vpop.f32.mrb[0].mxu0
        %v1712 = vadd.f32 %v1589, %v1711
        %v1713 = vpop.f32.mrb[0].mxu0
        %1714 = vdwg.mxu0
        %v1715 = vld [vmem:[#allocation2 + $0x8] sm:$0xf]
        %v1716 = vld [vmem:[#allocation2 + $0xc] sm:$0xf]
        %v1717 = vld [vmem:[#allocation2 + $0x10] sm:$0xf]
        %v1718 = vld [vmem:[#allocation2 + $0x14] sm:$0xf]
        %v1719 = vld [vmem:[#allocation2 + $0x18] sm:$0xf]
        %v1720 = vld [vmem:[#allocation2 + $0x1c] sm:$0xf]
        %v1721 = vld [vmem:[#allocation2 + $0x20] sm:$0xf]
        %v1722 = vld [vmem:[#allocation2 + $0x24] sm:$0xf]
        %s1723 = scalar_lea.vmem %s3, 128
        %v1724 = vld [vmem:[%s1723] sm:$0xf]
        %v1725 = vld [vmem:[%s1723 + $0x4] sm:$0xf]
        %v1726 = vld [vmem:[%s1723 + $0x8] sm:$0xf]
        %v1727 = vld [vmem:[%s1723 + $0xc] sm:$0xf]
        %v1728 = vld [vmem:[%s1723 + $0x10] sm:$0xf]
        %v1729 = vld [vmem:[%s1723 + $0x14] sm:$0xf]
        %v1730 = vld [vmem:[%s1723 + $0x18] sm:$0xf]
        %v1731 = vld [vmem:[%s1723 + $0x1c] sm:$0xf]
        %v1732 = vld [vmem:[%s1723 + $0x20] sm:$0xf]
        %v1733 = vld [vmem:[%s1723 + $0x24] sm:$0xf]
        %v1734 = vld [vmem:[%s1723 + $0x28] sm:$0xf]
        %v1735 = vld [vmem:[%s1723 + $0x2c] sm:$0xf]
        %v1736 = vld [vmem:[%s1723 + $0x30] sm:$0xf]
        %v1737 = vld [vmem:[%s1723 + $0x34] sm:$0xf]
        %v1738 = vld [vmem:[%s1723 + $0x38] sm:$0xf]
        %v1739 = vld [vmem:[%s1723 + $0x3c] sm:$0xf]
        %v1748 = vunpack.c.l.b16 %v1715
        %v1749 = vunpack.c.l.b16 %v1716
        %v1750 = vunpack.c.l.b16 %v1717
        %v1751 = vunpack.c.l.b16 %v1718
        %v1752 = vunpack.c.l.b16 %v1719
        %v1753 = vunpack.c.l.b16 %v1720
        %v1754 = vunpack.c.l.b16 %v1721
        %v1755 = vunpack.c.l.b16 %v1722
        %v1756 = vpack.c.b16 %v1749, %v1748
        %v1757 = vpack.c.b16 %v1751, %v1750
        %v1758 = vpack.c.b16 %v1753, %v1752
        %v1759 = vpack.c.b16 %v1755, %v1754
        %v1780 = vunpack.c.l.b16 %v1724
        %v1781 = vunpack.c.l.b16 %v1725
        %v1782 = vunpack.c.l.b16 %v1726
        %v1783 = vunpack.c.l.b16 %v1727
        %v1784 = vunpack.c.l.b16 %v1728
        %v1785 = vunpack.c.l.b16 %v1729
        %v1786 = vunpack.c.l.b16 %v1730
        %v1787 = vunpack.c.l.b16 %v1731
        %v1788 = vunpack.c.l.b16 %v1732
        %v1789 = vunpack.c.l.b16 %v1733
        %v1790 = vunpack.c.l.b16 %v1734
        %v1791 = vunpack.c.l.b16 %v1735
        %v1792 = vunpack.c.l.b16 %v1736
        %v1793 = vunpack.c.l.b16 %v1737
        %v1794 = vunpack.c.l.b16 %v1738
        %v1795 = vunpack.c.l.b16 %v1739
        %v1796 = vpack.c.b16 %v1781, %v1780
        %v1797 = vpack.c.b16 %v1783, %v1782
        %v1798 = vpack.c.b16 %v1785, %v1784
        %v1799 = vpack.c.b16 %v1787, %v1786
        %v1800 = vpack.c.b16 %v1789, %v1788
        %v1801 = vpack.c.b16 %v1791, %v1790
        %v1802 = vpack.c.b16 %v1793, %v1792
        %v1803 = vpack.c.b16 %v1795, %v1794
        %1812 = vmatprep.subr.bf16.mxu0 0
        %1813 = vmatpush1.bf16.msra.mxu0 %v1796
        %1814 = vmatprep.subr.bf16.mxu0 0
        %1815 = vmatpush1.bf16.msra.mxu0 %v1797
        %1816 = vmatprep.subr.bf16.mxu0 0
        %1817 = vmatpush1.bf16.msra.mxu0 %v1798
        %1818 = vmatprep.subr.bf16.mxu0 0
        %1819 = vmatpush1.bf16.msra.mxu0 %v1799
        %1820 = vmatprep.subr.bf16.mxu0 0
        %1821 = vmatpush1.bf16.msra.mxu0 %v1800
        %1822 = vmatprep.subr.bf16.mxu0 0
        %1823 = vmatpush1.bf16.msra.mxu0 %v1801
        %1824 = vmatprep.subr.bf16.mxu0 0
        %1825 = vmatpush1.bf16.msra.mxu0 %v1802
        %1826 = vmatprep.subr.bf16.mxu0 0
        %1827 = vmatpush1.bf16.msra.mxu0 %v1803
        %1828 = vmatprep.subr.bf16.mxu0 0
        %1829 = vmatpush1.bf16.msra.mxu0 0
        %1830 = vmatprep.subr.bf16.mxu0 0
        %1831 = vmatpush1.bf16.msra.mxu0 0
        %1832 = vmatprep.subr.bf16.mxu0 0
        %1833 = vmatpush1.bf16.msra.mxu0 0
        %1834 = vmatprep.subr.bf16.mxu0 0
        %1835 = vmatpush1.bf16.msra.mxu0 0
        %1836 = vmatprep.subr.bf16.mxu0 0
        %1837 = vmatpush1.bf16.msra.mxu0 0
        %1838 = vmatprep.subr.bf16.mxu0 0
        %1839 = vmatpush1.bf16.msra.mxu0 0
        %1840 = vmatprep.subr.bf16.mxu0 0
        %1841 = vmatpush1.bf16.msra.mxu0 0
        %1842 = vmatprep.subr.bf16.mxu0 0
        %1843 = vmatpush1.bf16.msra.mxu0 0
        %1844 = vmatprep.mubr.bf16.mxu0 0
        %1845 = vmatmul.mubr.bf16.gmra.mrb[0].mxu0 %v1756
        %v1846 = vpop.f32.mrb[0].mxu0
        %v1847 = vadd.f32 0.0, %v1846
        %v1848 = vpop.f32.mrb[0].mxu0
        %v1849 = vpop.f32.mrb[0].mxu0
        %v1850 = vadd.f32 0.0, %v1849
        %v1851 = vpop.f32.mrb[0].mxu0
        %1852 = vmatprep.mubr.bf16.mxu0 0
        %1853 = vmatmul.mubr.bf16.gmra.mrb[0].mxu0 %v1757
        %v1854 = vpop.f32.mrb[0].mxu0
        %v1855 = vadd.f32 0.0, %v1854
        %v1856 = vpop.f32.mrb[0].mxu0
        %v1857 = vpop.f32.mrb[0].mxu0
        %v1858 = vadd.f32 0.0, %v1857
        %v1859 = vpop.f32.mrb[0].mxu0
        %1860 = vmatprep.mubr.bf16.mxu0 0
        %1861 = vmatmul.mubr.bf16.gmra.mrb[0].mxu0 %v1758
        %v1862 = vpop.f32.mrb[0].mxu0
        %v1863 = vadd.f32 0.0, %v1862
        %v1864 = vpop.f32.mrb[0].mxu0
        %v1865 = vpop.f32.mrb[0].mxu0
        %v1866 = vadd.f32 0.0, %v1865
        %v1867 = vpop.f32.mrb[0].mxu0
        %1868 = vmatprep.mubr.bf16.mxu0 0
        %1869 = vmatmul.mubr.bf16.gmra.mrb[0].mxu0 %v1759
        %v1870 = vpop.f32.mrb[0].mxu0
        %v1871 = vadd.f32 0.0, %v1870
        %v1872 = vpop.f32.mrb[0].mxu0
        %v1873 = vpop.f32.mrb[0].mxu0
        %v1874 = vadd.f32 0.0, %v1873
        %v1875 = vpop.f32.mrb[0].mxu0
        %1876 = vdwg.mxu0
        %v1877 = vadd.f32 %v1685, %v1847
        %v1878 = vadd.f32 %v1688, %v1850
        %v1879 = vadd.f32 %v1693, %v1855
        %v1880 = vadd.f32 %v1696, %v1858
        %v1881 = vadd.f32 %v1701, %v1863
        %v1882 = vadd.f32 %v1704, %v1866
        %v1883 = vadd.f32 %v1709, %v1871
        %v1884 = vadd.f32 %v1712, %v1874
        %v1885 = vld [vmem:[#allocation2 + $0xc] sm:$0xf]
        %v1886 = vld [vmem:[#allocation2 + $0x10] sm:$0xf]
        %v1887 = vld [vmem:[#allocation2 + $0x14] sm:$0xf]
        %v1888 = vld [vmem:[#allocation2 + $0x18] sm:$0xf]
        %v1889 = vld [vmem:[#allocation2 + $0x1c] sm:$0xf]
        %v1890 = vld [vmem:[#allocation2 + $0x20] sm:$0xf]
        %v1891 = vld [vmem:[#allocation2 + $0x24] sm:$0xf]
        %v1892 = vld [vmem:[#allocation2 + $0x28] sm:$0xf]
        %s1893 = scalar_lea.vmem %s3, 192
        %v1894 = vld [vmem:[%s1893] sm:$0xf]
        %v1895 = vld [vmem:[%s1893 + $0x4] sm:$0xf]
        %v1896 = vld [vmem:[%s1893 + $0x8] sm:$0xf]
        %v1897 = vld [vmem:[%s1893 + $0xc] sm:$0xf]
        %v1898 = vld [vmem:[%s1893 + $0x10] sm:$0xf]
        %v1899 = vld [vmem:[%s1893 + $0x14] sm:$0xf]
        %v1900 = vld [vmem:[%s1893 + $0x18] sm:$0xf]
        %v1901 = vld [vmem:[%s1893 + $0x1c] sm:$0xf]
        %v1902 = vld [vmem:[%s1893 + $0x20] sm:$0xf]
        %v1903 = vld [vmem:[%s1893 + $0x24] sm:$0xf]
        %v1904 = vld [vmem:[%s1893 + $0x28] sm:$0xf]
        %v1905 = vld [vmem:[%s1893 + $0x2c] sm:$0xf]
        %v1906 = vld [vmem:[%s1893 + $0x30] sm:$0xf]
        %v1907 = vld [vmem:[%s1893 + $0x34] sm:$0xf]
        %v1908 = vld [vmem:[%s1893 + $0x38] sm:$0xf]
        %v1909 = vld [vmem:[%s1893 + $0x3c] sm:$0xf]
        %v1918 = vunpack.c.l.b16 %v1885
        %v1919 = vunpack.c.l.b16 %v1886
        %v1920 = vunpack.c.l.b16 %v1887
        %v1921 = vunpack.c.l.b16 %v1888
        %v1922 = vunpack.c.l.b16 %v1889
        %v1923 = vunpack.c.l.b16 %v1890
        %v1924 = vunpack.c.l.b16 %v1891
        %v1925 = vunpack.c.l.b16 %v1892
        %v1926 = vpack.c.b16 %v1919, %v1918
        %v1927 = vpack.c.b16 %v1921, %v1920
        %v1928 = vpack.c.b16 %v1923, %v1922
        %v1929 = vpack.c.b16 %v1925, %v1924
        %v1950 = vunpack.c.l.b16 %v1894
        %v1951 = vunpack.c.l.b16 %v1895
        %v1952 = vunpack.c.l.b16 %v1896
        %v1953 = vunpack.c.l.b16 %v1897
        %v1954 = vunpack.c.l.b16 %v1898
        %v1955 = vunpack.c.l.b16 %v1899
        %v1956 = vunpack.c.l.b16 %v1900
        %v1957 = vunpack.c.l.b16 %v1901
        %v1958 = vunpack.c.l.b16 %v1902
        %v1959 = vunpack.c.l.b16 %v1903
        %v1960 = vunpack.c.l.b16 %v1904
        %v1961 = vunpack.c.l.b16 %v1905
        %v1962 = vunpack.c.l.b16 %v1906
        %v1963 = vunpack.c.l.b16 %v1907
        %v1964 = vunpack.c.l.b16 %v1908
        %v1965 = vunpack.c.l.b16 %v1909
        %v1966 = vpack.c.b16 %v1951, %v1950
        %v1967 = vpack.c.b16 %v1953, %v1952
        %v1968 = vpack.c.b16 %v1955, %v1954
        %v1969 = vpack.c.b16 %v1957, %v1956
        %v1970 = vpack.c.b16 %v1959, %v1958
        %v1971 = vpack.c.b16 %v1961, %v1960
        %v1972 = vpack.c.b16 %v1963, %v1962
        %v1973 = vpack.c.b16 %v1965, %v1964
        %1982 = vmatprep.subr.bf16.mxu0 0
        %1983 = vmatpush1.bf16.msra.mxu0 %v1966
        %1984 = vmatprep.subr.bf16.mxu0 0
        %1985 = vmatpush1.bf16.msra.mxu0 %v1967
        %1986 = vmatprep.subr.bf16.mxu0 0
        %1987 = vmatpush1.bf16.msra.mxu0 %v1968
        %1988 = vmatprep.subr.bf16.mxu0 0
        %1989 = vmatpush1.bf16.msra.mxu0 %v1969
        %1990 = vmatprep.subr.bf16.mxu0 0
        %1991 = vmatpush1.bf16.msra.mxu0 %v1970
        %1992 = vmatprep.subr.bf16.mxu0 0
        %1993 = vmatpush1.bf16.msra.mxu0 %v1971
        %1994 = vmatprep.subr.bf16.mxu0 0
        %1995 = vmatpush1.bf16.msra.mxu0 %v1972
        %1996 = vmatprep.subr.bf16.mxu0 0
        %1997 = vmatpush1.bf16.msra.mxu0 %v1973
        %1998 = vmatprep.subr.bf16.mxu0 0
        %1999 = vmatpush1.bf16.msra.mxu0 0
        %2000 = vmatprep.subr.bf16.mxu0 0
        %2001 = vmatpush1.bf16.msra.mxu0 0
        %2002 = vmatprep.subr.bf16.mxu0 0
        %2003 = vmatpush1.bf16.msra.mxu0 0
        %2004 = vmatprep.subr.bf16.mxu0 0
        %2005 = vmatpush1.bf16.msra.mxu0 0
        %2006 = vmatprep.subr.bf16.mxu0 0
        %2007 = vmatpush1.bf16.msra.mxu0 0
        %2008 = vmatprep.subr.bf16.mxu0 0
        %2009 = vmatpush1.bf16.msra.mxu0 0
        %2010 = vmatprep.subr.bf16.mxu0 0
        %2011 = vmatpush1.bf16.msra.mxu0 0
        %2012 = vmatprep.subr.bf16.mxu0 0
        %2013 = vmatpush1.bf16.msra.mxu0 0
        %2014 = vmatprep.mubr.bf16.mxu0 0
        %2015 = vmatmul.mubr.bf16.gmra.mrb[0].mxu0 %v1926
        %v2016 = vpop.f32.mrb[0].mxu0
        %v2017 = vadd.f32 0.0, %v2016
        %v2018 = vpop.f32.mrb[0].mxu0
        %v2019 = vpop.f32.mrb[0].mxu0
        %v2020 = vadd.f32 0.0, %v2019
        %v2021 = vpop.f32.mrb[0].mxu0
        %2022 = vmatprep.mubr.bf16.mxu0 0
        %2023 = vmatmul.mubr.bf16.gmra.mrb[0].mxu0 %v1927
        %v2024 = vpop.f32.mrb[0].mxu0
        %v2025 = vadd.f32 0.0, %v2024
        %v2026 = vpop.f32.mrb[0].mxu0
        %v2027 = vpop.f32.mrb[0].mxu0
        %v2028 = vadd.f32 0.0, %v2027
        %v2029 = vpop.f32.mrb[0].mxu0
        %2030 = vmatprep.mubr.bf16.mxu0 0
        %2031 = vmatmul.mubr.bf16.gmra.mrb[0].mxu0 %v1928
        %v2032 = vpop.f32.mrb[0].mxu0
        %v2033 = vadd.f32 0.0, %v2032
        %v2034 = vpop.f32.mrb[0].mxu0
        %v2035 = vpop.f32.mrb[0].mxu0
        %v2036 = vadd.f32 0.0, %v2035
        %v2037 = vpop.f32.mrb[0].mxu0
        %2038 = vmatprep.mubr.bf16.mxu0 0
        %2039 = vmatmul.mubr.bf16.gmra.mrb[0].mxu0 %v1929
        %v2040 = vpop.f32.mrb[0].mxu0
        %v2041 = vadd.f32 0.0, %v2040
        %v2042 = vpop.f32.mrb[0].mxu0
        %v2043 = vpop.f32.mrb[0].mxu0
        %v2044 = vadd.f32 0.0, %v2043
        %v2045 = vpop.f32.mrb[0].mxu0
        %2046 = vdwg.mxu0
        %v2047 = vadd.f32 %v1877, %v2017
        %v2048 = vadd.f32 %v1878, %v2020
        %v2049 = vadd.f32 %v1879, %v2025
        %v2050 = vadd.f32 %v1880, %v2028
        %v2051 = vadd.f32 %v1881, %v2033
        %v2052 = vadd.f32 %v1882, %v2036
        %v2053 = vadd.f32 %v1883, %v2041
        %v2054 = vadd.f32 %v1884, %v2044
        %v2055 = vld [vmem:[%s5] sm:$0x1]
        %v2057 = vlaneseq
        %v2058 = vshrl.u32 %v2057, 7
        %v2059 = vsub.s32 0, %v2058
        %v2060 = vrot.slane %v2055, %v2059
        %v2062 = vmul.f32 %v2047, %v2060
        %v2063 = vmul.f32 %v2048, %v2060
        %v2064 = vmul.f32 %v2049, %v2060
        %v2065 = vmul.f32 %v2050, %v2060
        %v2066 = vmul.f32 %v2051, %v2060
        %v2067 = vmul.f32 %v2052, %v2060
        %v2068 = vmul.f32 %v2053, %v2060
        %v2069 = vmul.f32 %v2054, %v2060
        %v2070 = vld [vmem:[%s7] sm:$0x1]
        %v2072 = vlaneseq
        %v2073 = vshrl.u32 %v2072, 7
        %v2074 = vsub.s32 0, %v2073
        %v2075 = vrot.slane %v2070, %v2074
        %v2077 = vadd.f32 %v2062, %v2075
        %v2078 = vadd.f32 %v2063, %v2075
        %v2079 = vadd.f32 %v2064, %v2075
        %v2080 = vadd.f32 %v2065, %v2075
        %v2081 = vadd.f32 %v2066, %v2075
        %v2082 = vadd.f32 %v2067, %v2075
        %v2083 = vadd.f32 %v2068, %v2075
        %v2084 = vadd.f32 %v2069, %v2075
        %v2085 = vmax.f32 %v2077, 0.0
        %v2086 = vmax.f32 %v2078, 0.0
        %v2087 = vmax.f32 %v2079, 0.0
        %v2088 = vmax.f32 %v2080, 0.0
        %v2089 = vmax.f32 %v2081, 0.0
        %v2090 = vmax.f32 %v2082, 0.0
        %v2091 = vmax.f32 %v2083, 0.0
        %v2092 = vmax.f32 %v2084, 0.0
        %v2093 = vpack.c.bf16 %v2086, %v2085
        %v2094 = vpack.c.bf16 %v2088, %v2087
        %v2095 = vpack.c.bf16 %v2090, %v2089
        %v2096 = vpack.c.bf16 %v2092, %v2091
        %v2097 = vld [vmem:[#allocation6] sm:$0xf]
        %v2098 = vld [vmem:[#allocation6 + $0x4] sm:$0xf]
        %v2099 = vld [vmem:[#allocation6 + $0x8] sm:$0xf]
        %v2100 = vld [vmem:[#allocation6 + $0xc] sm:$0xf]
        %v2101 = vld [vmem:[#allocation6 + $0x10] sm:$0xf]
        %v2102 = vld [vmem:[#allocation6 + $0x14] sm:$0xf]
        %v2103 = vld [vmem:[#allocation6 + $0x18] sm:$0xf]
        %v2104 = vld [vmem:[#allocation6 + $0x1c] sm:$0xf]
        %v2105 = vld [vmem:[#allocation6 + $0x20] sm:$0xf]
        %v2106 = vld [vmem:[#allocation6 + $0x24] sm:$0xf]
        %v2107 = vld [vmem:[#allocation6 + $0x28] sm:$0xf]
        %v2108 = vld [vmem:[#allocation6 + $0x2c] sm:$0xf]
        %v2109 = vld [vmem:[#allocation6 + $0x30] sm:$0xf]
        %v2110 = vld [vmem:[#allocation6 + $0x34] sm:$0xf]
        %v2111 = vld [vmem:[#allocation6 + $0x38] sm:$0xf]
        %v2112 = vld [vmem:[#allocation6 + $0x3c] sm:$0xf]
        %v2113 = vld [vmem:[#allocation8] sm:$0x1]
        %v2115 = vlaneseq
        %v2116 = vshrl.u32 %v2115, 7
        %v2117 = vsub.s32 0, %v2116
        %v2118 = vrot.slane %v2113, %v2117
        %v2136 = vunpack.c.l.b16 %v2097
        %v2137 = vunpack.c.l.b16 %v2098
        %v2138 = vunpack.c.l.b16 %v2099
        %v2139 = vunpack.c.l.b16 %v2100
        %v2140 = vunpack.c.l.b16 %v2101
        %v2141 = vunpack.c.l.b16 %v2102
        %v2142 = vunpack.c.l.b16 %v2103
        %v2143 = vunpack.c.l.b16 %v2104
        %v2144 = vunpack.c.l.b16 %v2105
        %v2145 = vunpack.c.l.b16 %v2106
        %v2146 = vunpack.c.l.b16 %v2107
        %v2147 = vunpack.c.l.b16 %v2108
        %v2148 = vunpack.c.l.b16 %v2109
        %v2149 = vunpack.c.l.b16 %v2110
        %v2150 = vunpack.c.l.b16 %v2111
        %v2151 = vunpack.c.l.b16 %v2112
        %v2152 = vpack.c.b16 %v2137, %v2136
        %v2153 = vpack.c.b16 %v2139, %v2138
        %v2154 = vpack.c.b16 %v2141, %v2140
        %v2155 = vpack.c.b16 %v2143, %v2142
        %v2156 = vpack.c.b16 %v2145, %v2144
        %v2157 = vpack.c.b16 %v2147, %v2146
        %v2158 = vpack.c.b16 %v2149, %v2148
        %v2159 = vpack.c.b16 %v2151, %v2150
        %2168 = vmatprep.subr.bf16.mxu0 0
        %2169 = vmatpush1.bf16.msra.mxu0 %v2152
        %2170 = vmatprep.subr.bf16.mxu0 0
        %2171 = vmatpush1.bf16.msra.mxu0 %v2153
        %2172 = vmatprep.subr.bf16.mxu0 0
        %2173 = vmatpush1.bf16.msra.mxu0 %v2154
        %2174 = vmatprep.subr.bf16.mxu0 0
        %2175 = vmatpush1.bf16.msra.mxu0 %v2155
        %2176 = vmatprep.subr.bf16.mxu0 0
        %2177 = vmatpush1.bf16.msra.mxu0 %v2156
        %2178 = vmatprep.subr.bf16.mxu0 0
        %2179 = vmatpush1.bf16.msra.mxu0 %v2157
        %2180 = vmatprep.subr.bf16.mxu0 0
        %2181 = vmatpush1.bf16.msra.mxu0 %v2158
        %2182 = vmatprep.subr.bf16.mxu0 0
        %2183 = vmatpush1.bf16.msra.mxu0 %v2159
        %2184 = vmatprep.subr.bf16.mxu0 0
        %2185 = vmatpush1.bf16.msra.mxu0 0
        %2186 = vmatprep.subr.bf16.mxu0 0
        %2187 = vmatpush1.bf16.msra.mxu0 0
        %2188 = vmatprep.subr.bf16.mxu0 0
        %2189 = vmatpush1.bf16.msra.mxu0 0
        %2190 = vmatprep.subr.bf16.mxu0 0
        %2191 = vmatpush1.bf16.msra.mxu0 0
        %2192 = vmatprep.subr.bf16.mxu0 0
        %2193 = vmatpush1.bf16.msra.mxu0 0
        %2194 = vmatprep.subr.bf16.mxu0 0
        %2195 = vmatpush1.bf16.msra.mxu0 0
        %2196 = vmatprep.subr.bf16.mxu0 0
        %2197 = vmatpush1.bf16.msra.mxu0 0
        %2198 = vmatprep.subr.bf16.mxu0 0
        %2199 = vmatpush1.bf16.msra.mxu0 0
        %2200 = vmatprep.mubr.bf16.mxu0 0
        %2201 = vmatmul.mubr.bf16.gmra.mrb[0].mxu0 %v2093
        %v2202 = vpop.f32.mrb[0].mxu0
        %v2203 = vadd.f32 %v2118, %v2202
        %v2204 = vpop.f32.mrb[0].mxu0
        %v2205 = vpop.f32.mrb[0].mxu0
        %v2206 = vadd.f32 %v2118, %v2205
        %v2207 = vpop.f32.mrb[0].mxu0
        %2208 = vmatprep.mubr.bf16.mxu0 0
        %2209 = vmatmul.mubr.bf16.gmra.mrb[0].mxu0 %v2094
        %v2210 = vpop.f32.mrb[0].mxu0
        %v2211 = vadd.f32 %v2118, %v2210
        %v2212 = vpop.f32.mrb[0].mxu0
        %v2213 = vpop.f32.mrb[0].mxu0
        %v2214 = vadd.f32 %v2118, %v2213
        %v2215 = vpop.f32.mrb[0].mxu0
        %2216 = vmatprep.mubr.bf16.mxu0 0
        %2217 = vmatmul.mubr.bf16.gmra.mrb[0].mxu0 %v2095
        %v2218 = vpop.f32.mrb[0].mxu0
        %v2219 = vadd.f32 %v2118, %v2218
        %v2220 = vpop.f32.mrb[0].mxu0
        %v2221 = vpop.f32.mrb[0].mxu0
        %v2222 = vadd.f32 %v2118, %v2221
        %v2223 = vpop.f32.mrb[0].mxu0
        %2224 = vmatprep.mubr.bf16.mxu0 0
        %2225 = vmatmul.mubr.bf16.gmra.mrb[0].mxu0 %v2096
        %v2226 = vpop.f32.mrb[0].mxu0
        %v2227 = vadd.f32 %v2118, %v2226
        %v2228 = vpop.f32.mrb[0].mxu0
        %v2229 = vpop.f32.mrb[0].mxu0
        %v2230 = vadd.f32 %v2118, %v2229
        %v2231 = vpop.f32.mrb[0].mxu0
        %2232 = vdwg.mxu0
        %2233 = vst [vmem:[#allocation5] sm:$0xff] %v2203
        %2234 = vst [vmem:[#allocation5 + $0x10] sm:$0xff] %v2206
        %2235 = vst [vmem:[#allocation5 + $0x20] sm:$0xff] %v2211
        %2236 = vst [vmem:[#allocation5 + $0x30] sm:$0xff] %v2214
        %2237 = vst [vmem:[#allocation5 + $0x40] sm:$0xff] %v2219
        %2238 = vst [vmem:[#allocation5 + $0x50] sm:$0xff] %v2222
        %2239 = vst [vmem:[#allocation5 + $0x60] sm:$0xff] %v2227
        %2240 = vst [vmem:[#allocation5 + $0x70] sm:$0xff] %v2230
        %v2241 = vpack.c.bf16 %v2206, %v2203
        %v2242 = vpack.c.bf16 %v2214, %v2211
        %v2243 = vpack.c.bf16 %v2222, %v2219
        %v2244 = vpack.c.bf16 %v2230, %v2227
        %v2245 = vld [vmem:[#allocation10] sm:$0xf]
        %v2246 = vld [vmem:[#allocation10 + $0x4] sm:$0xf]
        %v2247 = vld [vmem:[#allocation10 + $0x8] sm:$0xf]
        %v2248 = vld [vmem:[#allocation10 + $0xc] sm:$0xf]
        %v2249 = vld [vmem:[#allocation10 + $0x10] sm:$0xf]
        %v2250 = vld [vmem:[#allocation10 + $0x14] sm:$0xf]
        %v2251 = vld [vmem:[#allocation10 + $0x18] sm:$0xf]
        %v2252 = vld [vmem:[#allocation10 + $0x1c] sm:$0xf]
        %v2253 = vld [vmem:[#allocation10 + $0x20] sm:$0xf]
        %v2254 = vld [vmem:[#allocation10 + $0x24] sm:$0xf]
        %v2255 = vld [vmem:[#allocation10 + $0x28] sm:$0xf]
        %v2256 = vld [vmem:[#allocation10 + $0x2c] sm:$0xf]
        %v2257 = vld [vmem:[#allocation10 + $0x30] sm:$0xf]
        %v2258 = vld [vmem:[#allocation10 + $0x34] sm:$0xf]
        %v2259 = vld [vmem:[#allocation10 + $0x38] sm:$0xf]
        %v2260 = vld [vmem:[#allocation10 + $0x3c] sm:$0xf]
        %v2277 = vunpack.c.l.b16 %v2245
        %v2278 = vunpack.c.l.b16 %v2246
        %v2279 = vunpack.c.l.b16 %v2247
        %v2280 = vunpack.c.l.b16 %v2248
        %v2281 = vunpack.c.l.b16 %v2249
        %v2282 = vunpack.c.l.b16 %v2250
        %v2283 = vunpack.c.l.b16 %v2251
        %v2284 = vunpack.c.l.b16 %v2252
        %v2285 = vunpack.c.l.b16 %v2253
        %v2286 = vunpack.c.l.b16 %v2254
        %v2287 = vunpack.c.l.b16 %v2255
        %v2288 = vunpack.c.l.b16 %v2256
        %v2289 = vunpack.c.l.b16 %v2257
        %v2290 = vunpack.c.l.b16 %v2258
        %v2291 = vunpack.c.l.b16 %v2259
        %v2292 = vunpack.c.l.b16 %v2260
        %v2293 = vpack.c.b16 %v2278, %v2277
        %v2294 = vpack.c.b16 %v2280, %v2279
        %v2295 = vpack.c.b16 %v2282, %v2281
        %v2296 = vpack.c.b16 %v2284, %v2283
        %v2297 = vpack.c.b16 %v2286, %v2285
        %v2298 = vpack.c.b16 %v2288, %v2287
        %v2299 = vpack.c.b16 %v2290, %v2289
        %v2300 = vpack.c.b16 %v2292, %v2291
        %2309 = vmatprep.subr.bf16.mxu0 0
        %2310 = vmatpush1.bf16.msra.mxu0 %v2293
        %2311 = vmatprep.subr.bf16.mxu0 0
        %2312 = vmatpush1.bf16.msra.mxu0 %v2294
        %2313 = vmatprep.subr.bf16.mxu0 0
        %2314 = vmatpush1.bf16.msra.mxu0 %v2295
        %2315 = vmatprep.subr.bf16.mxu0 0
        %2316 = vmatpush1.bf16.msra.mxu0 %v2296
        %2317 = vmatprep.subr.bf16.mxu0 0
        %2318 = vmatpush1.bf16.msra.mxu0 %v2297
        %2319 = vmatprep.subr.bf16.mxu0 0
        %2320 = vmatpush1.bf16.msra.mxu0 %v2298
        %2321 = vmatprep.subr.bf16.mxu0 0
        %2322 = vmatpush1.bf16.msra.mxu0 %v2299
        %2323 = vmatprep.subr.bf16.mxu0 0
        %2324 = vmatpush1.bf16.msra.mxu0 %v2300
        %2325 = vmatprep.subr.bf16.mxu0 0
        %2326 = vmatpush1.bf16.msra.mxu0 0
        %2327 = vmatprep.subr.bf16.mxu0 0
        %2328 = vmatpush1.bf16.msra.mxu0 0
        %2329 = vmatprep.subr.bf16.mxu0 0
        %2330 = vmatpush1.bf16.msra.mxu0 0
        %2331 = vmatprep.subr.bf16.mxu0 0
        %2332 = vmatpush1.bf16.msra.mxu0 0
        %2333 = vmatprep.subr.bf16.mxu0 0
        %2334 = vmatpush1.bf16.msra.mxu0 0
        %2335 = vmatprep.subr.bf16.mxu0 0
        %2336 = vmatpush1.bf16.msra.mxu0 0
        %2337 = vmatprep.subr.bf16.mxu0 0
        %2338 = vmatpush1.bf16.msra.mxu0 0
        %2339 = vmatprep.subr.bf16.mxu0 0
        %2340 = vmatpush1.bf16.msra.mxu0 0
        %2341 = vmatprep.mubr.bf16.mxu0 0
        %2342 = vmatmul.mubr.bf16.gmra.mrb[0].mxu0 %v2241
        %v2343 = vpop.f32.mrb[0].mxu0
        %v2344 = vadd.f32 0.0, %v2343
        %v2345 = vpop.f32.mrb[0].mxu0
        %v2346 = vpop.f32.mrb[0].mxu0
        %v2347 = vadd.f32 0.0, %v2346
        %v2348 = vpop.f32.mrb[0].mxu0
        %2349 = vmatprep.mubr.bf16.mxu0 0
        %2350 = vmatmul.mubr.bf16.gmra.mrb[0].mxu0 %v2242
        %v2351 = vpop.f32.mrb[0].mxu0
        %v2352 = vadd.f32 0.0, %v2351
        %v2353 = vpop.f32.mrb[0].mxu0
        %v2354 = vpop.f32.mrb[0].mxu0
        %v2355 = vadd.f32 0.0, %v2354
        %v2356 = vpop.f32.mrb[0].mxu0
        %2357 = vmatprep.mubr.bf16.mxu0 0
        %2358 = vmatmul.mubr.bf16.gmra.mrb[0].mxu0 %v2243
        %v2359 = vpop.f32.mrb[0].mxu0
        %v2360 = vadd.f32 0.0, %v2359
        %v2361 = vpop.f32.mrb[0].mxu0
        %v2362 = vpop.f32.mrb[0].mxu0
        %v2363 = vadd.f32 0.0, %v2362
        %v2364 = vpop.f32.mrb[0].mxu0
        %2365 = vmatprep.mubr.bf16.mxu0 0
        %2366 = vmatmul.mubr.bf16.gmra.mrb[0].mxu0 %v2244
        %v2367 = vpop.f32.mrb[0].mxu0
        %v2368 = vadd.f32 0.0, %v2367
        %v2369 = vpop.f32.mrb[0].mxu0
        %v2370 = vpop.f32.mrb[0].mxu0
        %v2371 = vadd.f32 0.0, %v2370
        %v2372 = vpop.f32.mrb[0].mxu0
        %2373 = vdwg.mxu0
        %v2374 = vld [vmem:[#allocation11] sm:$0x1]
        %v2376 = vlaneseq
        %v2377 = vshrl.u32 %v2376, 7
        %v2378 = vsub.s32 0, %v2377
        %v2379 = vrot.slane %v2374, %v2378
        %v2381 = vmul.f32 %v2344, %v2379
        %v2382 = vmul.f32 %v2347, %v2379
        %v2383 = vmul.f32 %v2352, %v2379
        %v2384 = vmul.f32 %v2355, %v2379
        %v2385 = vmul.f32 %v2360, %v2379
        %v2386 = vmul.f32 %v2363, %v2379
        %v2387 = vmul.f32 %v2368, %v2379
        %v2388 = vmul.f32 %v2371, %v2379
        %v2389 = vld [vmem:[#allocation13] sm:$0x1]
        %v2391 = vlaneseq
        %v2392 = vshrl.u32 %v2391, 7
        %v2393 = vsub.s32 0, %v2392
        %v2394 = vrot.slane %v2389, %v2393
        %v2396 = vadd.f32 %v2381, %v2394
        %v2397 = vadd.f32 %v2382, %v2394
        %v2398 = vadd.f32 %v2383, %v2394
        %v2399 = vadd.f32 %v2384, %v2394
        %v2400 = vadd.f32 %v2385, %v2394
        %v2401 = vadd.f32 %v2386, %v2394
        %v2402 = vadd.f32 %v2387, %v2394
        %v2403 = vadd.f32 %v2388, %v2394
        %v2404 = vmax.f32 %v2396, 0.0
        %v2405 = vmax.f32 %v2397, 0.0
        %v2406 = vmax.f32 %v2398, 0.0
        %v2407 = vmax.f32 %v2399, 0.0
        %v2408 = vmax.f32 %v2400, 0.0
        %v2409 = vmax.f32 %v2401, 0.0
        %v2410 = vmax.f32 %v2402, 0.0
        %v2411 = vmax.f32 %v2403, 0.0
        %2412 = vst [vmem:[#allocation3] sm:$0xf] 0
        %vm2413 = vcmask 1040384
        %vm2414 = vsmask.f32 256
        %vm2415 = vmand %vm2413, %vm2414
        %v2416 = vld [vmem:[#allocation3 + $0x4] sm:$0x1]
        %v2417 = vsel %vm2415, 0, %v2416
        %2418 = vst [vmem:[#allocation3 + $0x4] sm:$0x1] %v2417
        %v2419 = vpack.c.bf16 %v2405, %v2404
        %v2420 = vpack.c.bf16 %v2407, %v2406
        %v2421 = vpack.c.bf16 %v2409, %v2408
        %v2422 = vpack.c.bf16 %v2411, %v2410
        %v2427 = vunpack.c.l.b16 %v2419
        %v2428 = vunpack.c.h.b16 %v2419
        %v2429 = vunpack.c.l.b16 %v2420
        %v2430 = vunpack.c.h.b16 %v2420
        %v2431 = vunpack.c.l.b16 %v2421
        %v2432 = vunpack.c.h.b16 %v2421
        %v2433 = vunpack.c.l.b16 %v2422
        %v2434 = vunpack.c.h.b16 %v2422
        %v2435 = vpack.c.b16 %v2427, %v2427
        %v2436 = vpack.c.b16 %v2428, %v2428
        %v2437 = vpack.c.b16 %v2429, %v2429
        %v2438 = vpack.c.b16 %v2430, %v2430
        %v2439 = vpack.c.b16 %v2431, %v2431
        %v2440 = vpack.c.b16 %v2432, %v2432
        %v2441 = vpack.c.b16 %v2433, %v2433
        %v2442 = vpack.c.b16 %v2434, %v2434
        %vm2443 = vsmask.f32 4368
        %vm2444 = vmor %vm2414, %vm2443
        %v2446 = vshrl.u32 %v2435, 16
        %v2448 = vrot.slane %v2446, 7
        %v2449 = vshll.u32 %v2435, 16
        %v2451 = vor.u32 %v2448, %v2449
        %v2452 = vrot.slane %v2448, 4
        %v2454 = vshrl.u32 %v2436, 16
        %v2456 = vrot.slane %v2454, 7
        %v2457 = vshll.u32 %v2436, 16
        %v2459 = vor.u32 %v2456, %v2457
        %v2460 = vsel %vm2444, %v2452, %v2459
        %v2461 = vrot.slane %v2456, 4
        %v2463 = vshrl.u32 %v2437, 16
        %v2465 = vrot.slane %v2463, 7
        %v2466 = vshll.u32 %v2437, 16
        %v2468 = vor.u32 %v2465, %v2466
        %v2469 = vsel %vm2444, %v2461, %v2468
        %v2470 = vrot.slane %v2465, 4
        %v2472 = vshrl.u32 %v2438, 16
        %v2474 = vrot.slane %v2472, 7
        %v2475 = vshll.u32 %v2438, 16
        %v2477 = vor.u32 %v2474, %v2475
        %v2478 = vsel %vm2444, %v2470, %v2477
        %v2479 = vrot.slane %v2474, 4
        %v2481 = vshrl.u32 %v2439, 16
        %v2483 = vrot.slane %v2481, 7
        %v2484 = vshll.u32 %v2439, 16
        %v2486 = vor.u32 %v2483, %v2484
        %v2487 = vsel %vm2444, %v2479, %v2486
        %v2488 = vrot.slane %v2483, 4
        %v2490 = vshrl.u32 %v2440, 16
        %v2492 = vrot.slane %v2490, 7
        %v2493 = vshll.u32 %v2440, 16
        %v2495 = vor.u32 %v2492, %v2493
        %v2496 = vsel %vm2444, %v2488, %v2495
        %v2497 = vrot.slane %v2492, 4
        %v2499 = vshrl.u32 %v2441, 16
        %v2501 = vrot.slane %v2499, 7
        %v2502 = vshll.u32 %v2441, 16
        %v2504 = vor.u32 %v2501, %v2502
        %v2505 = vsel %vm2444, %v2497, %v2504
        %v2506 = vrot.slane %v2501, 4
        %v2508 = vshrl.u32 %v2442, 16
        %v2510 = vrot.slane %v2508, 7
        %v2511 = vshll.u32 %v2442, 16
        %v2513 = vor.u32 %v2510, %v2511
        %v2514 = vsel %vm2444, %v2506, %v2513
        %v2515 = vrot.slane %v2510, 4
        %vm2525 = vcmask 1043456
        %vm2526 = vsmask.f32 7938
        %vm2527 = vmand %vm2525, %vm2526
        %v2528 = vld [vmem:[#allocation3 + $0x4] sm:$0xf]
        %v2529 = vsel %vm2527, %v2451, %v2528
        %2530 = vst [vmem:[#allocation3 + $0x4] sm:$0xf] %v2529
        %2531 = vst [vmem:[#allocation3 + $0x8] sm:$0xf] %v2460
        %2532 = vst [vmem:[#allocation3 + $0xc] sm:$0xf] %v2469
        %2533 = vst [vmem:[#allocation3 + $0x10] sm:$0xf] %v2478
        %2534 = vst [vmem:[#allocation3 + $0x14] sm:$0xf] %v2487
        %2535 = vst [vmem:[#allocation3 + $0x18] sm:$0xf] %v2496
        %2536 = vst [vmem:[#allocation3 + $0x1c] sm:$0xf] %v2505
        %2537 = vst [vmem:[#allocation3 + $0x20] sm:$0xf] %v2514
        %v2538 = vld [vmem:[#allocation3 + $0x24] sm:$0x1]
        %v2539 = vsel %vm2415, %v2515, %v2538
        %2540 = vst [vmem:[#allocation3 + $0x24] sm:$0x1] %v2539
        %v2541 = vld [vmem:[#allocation3 + $0x24] sm:$0xf]
        %v2542 = vsel %vm2527, 0, %v2541
        %2543 = vst [vmem:[#allocation3 + $0x24] sm:$0xf] %v2542
        %2544 = vst [vmem:[#allocation3 + $0x28] sm:$0x1] 0
        %v2545 = vlaneseq
        %v2546 = vshrl.u32 %v2545, 7
        %v2547 = vadd.s32 %v2546, 8
        %v2548 = vadd.s32 %v2546, 16
        %v2549 = vadd.s32 %v2546, 24
        %v2550 = vadd.s32 %v2546, 32
        %v2551 = vadd.s32 %v2546, 40
        %v2552 = vadd.s32 %v2546, 48
        %v2553 = vadd.s32 %v2546, 56
        %vm2554 = vcmp.lt.s32.totalorder %v2546, 0
        %v2555 = vsub.s32 0, %v2546
        %v2556 = vsel %vm2554, %v2555, %v2546
        %v2557 = vshrl.u32 %v2556, 3
        %v2558 = vand.u32 %v2556, 7
        %v2559 = vsub.s32 0, %v2558
        %v2560 = vsel %vm2554, %v2559, %v2558
        %vm2561 = vcmp.lt.s32.totalorder %v2547, 0
        %v2562 = vsub.s32 0, %v2547
        %v2563 = vsel %vm2561, %v2562, %v2547
        %v2564 = vshrl.u32 %v2563, 3
        %v2565 = vand.u32 %v2563, 7
        %v2566 = vsub.s32 0, %v2565
        %v2567 = vsel %vm2561, %v2566, %v2565
        %vm2568 = vcmp.lt.s32.totalorder %v2548, 0
        %v2569 = vsub.s32 0, %v2548
        %v2570 = vsel %vm2568, %v2569, %v2548
        %v2571 = vshrl.u32 %v2570, 3
        %v2572 = vand.u32 %v2570, 7
        %v2573 = vsub.s32 0, %v2572
        %v2574 = vsel %vm2568, %v2573, %v2572
        %vm2575 = vcmp.lt.s32.totalorder %v2549, 0
        %v2576 = vsub.s32 0, %v2549
        %v2577 = vsel %vm2575, %v2576, %v2549
        %v2578 = vshrl.u32 %v2577, 3
        %v2579 = vand.u32 %v2577, 7
        %v2580 = vsub.s32 0, %v2579
        %v2581 = vsel %vm2575, %v2580, %v2579
        %vm2582 = vcmp.lt.s32.totalorder %v2550, 0
        %v2583 = vsub.s32 0, %v2550
        %v2584 = vsel %vm2582, %v2583, %v2550
        %v2585 = vshrl.u32 %v2584, 3
        %v2586 = vand.u32 %v2584, 7
        %v2587 = vsub.s32 0, %v2586
        %v2588 = vsel %vm2582, %v2587, %v2586
        %vm2589 = vcmp.lt.s32.totalorder %v2551, 0
        %v2590 = vsub.s32 0, %v2551
        %v2591 = vsel %vm2589, %v2590, %v2551
        %v2592 = vshrl.u32 %v2591, 3
        %v2593 = vand.u32 %v2591, 7
        %v2594 = vsub.s32 0, %v2593
        %v2595 = vsel %vm2589, %v2594, %v2593
        %vm2596 = vcmp.lt.s32.totalorder %v2552, 0
        %v2597 = vsub.s32 0, %v2552
        %v2598 = vsel %vm2596, %v2597, %v2552
        %v2599 = vshrl.u32 %v2598, 3
        %v2600 = vand.u32 %v2598, 7
        %v2601 = vsub.s32 0, %v2600
        %v2602 = vsel %vm2596, %v2601, %v2600
        %vm2603 = vcmp.lt.s32.totalorder %v2553, 0
        %v2604 = vsub.s32 0, %v2553
        %v2605 = vsel %vm2603, %v2604, %v2553
        %v2606 = vshrl.u32 %v2605, 3
        %v2607 = vand.u32 %v2605, 7
        %v2608 = vsub.s32 0, %v2607
        %v2609 = vsel %vm2603, %v2608, %v2607
        %vm2610 = vcmp.ne.s32.totalorder %v2560, 0
        %vm2611 = vcmp.ne.s32.totalorder %v2567, 0
        %vm2612 = vcmp.ne.s32.totalorder %v2574, 0
        %vm2613 = vcmp.ne.s32.totalorder %v2581, 0
        %vm2614 = vcmp.ne.s32.totalorder %v2588, 0
        %vm2615 = vcmp.ne.s32.totalorder %v2595, 0
        %vm2616 = vcmp.ne.s32.totalorder %v2602, 0
        %vm2617 = vcmp.ne.s32.totalorder %v2609, 0
        %vm2618 = vcmp.lt.s32.totalorder %v2560, 0
        %vm2619 = vcmp.lt.s32.totalorder %v2567, 0
        %vm2620 = vcmp.lt.s32.totalorder %v2574, 0
        %vm2621 = vcmp.lt.s32.totalorder %v2581, 0
        %vm2622 = vcmp.lt.s32.totalorder %v2588, 0
        %vm2623 = vcmp.lt.s32.totalorder %v2595, 0
        %vm2624 = vcmp.lt.s32.totalorder %v2602, 0
        %vm2625 = vcmp.lt.s32.totalorder %v2609, 0
        %vm2626 = vmand %vm2618, %vm2610
        %vm2627 = vmand %vm2619, %vm2611
        %vm2628 = vmand %vm2620, %vm2612
        %vm2629 = vmand %vm2621, %vm2613
        %vm2630 = vmand %vm2622, %vm2614
        %vm2631 = vmand %vm2623, %vm2615
        %vm2632 = vmand %vm2624, %vm2616
        %vm2633 = vmand %vm2625, %vm2617
        %v2634 = vadd.s32 %v2560, 8
        %v2635 = vadd.s32 %v2567, 8
        %v2636 = vadd.s32 %v2574, 8
        %v2637 = vadd.s32 %v2581, 8
        %v2638 = vadd.s32 %v2588, 8
        %v2639 = vadd.s32 %v2595, 8
        %v2640 = vadd.s32 %v2602, 8
        %v2641 = vadd.s32 %v2609, 8
        %v2642 = vsel %vm2626, %v2634, %v2560
        %v2643 = vsel %vm2627, %v2635, %v2567
        %v2644 = vsel %vm2628, %v2636, %v2574
        %v2645 = vsel %vm2629, %v2637, %v2581
        %v2646 = vsel %vm2630, %v2638, %v2588
        %v2647 = vsel %vm2631, %v2639, %v2595
        %v2648 = vsel %vm2632, %v2640, %v2602
        %v2649 = vsel %vm2633, %v2641, %v2609
        %v2650 = vld [vmem:[#allocation3] sm:$0xf]
        %v2651 = vld [vmem:[#allocation3 + $0x4] sm:$0xf]
        %v2652 = vld [vmem:[#allocation3 + $0x8] sm:$0xf]
        %v2653 = vld [vmem:[#allocation3 + $0xc] sm:$0xf]
        %v2654 = vld [vmem:[#allocation3 + $0x10] sm:$0xf]
        %v2655 = vld [vmem:[#allocation3 + $0x14] sm:$0xf]
        %v2656 = vld [vmem:[#allocation3 + $0x18] sm:$0xf]
        %v2657 = vld [vmem:[#allocation3 + $0x1c] sm:$0xf]
        %vm2658 = vcmp.ge.s32.totalorder %v2642, 1
        %vm2659 = vcmp.ge.s32.totalorder %v2643, 1
        %vm2660 = vcmp.ge.s32.totalorder %v2644, 1
        %vm2661 = vcmp.ge.s32.totalorder %v2645, 1
        %vm2662 = vcmp.ge.s32.totalorder %v2646, 1
        %vm2663 = vcmp.ge.s32.totalorder %v2647, 1
        %vm2664 = vcmp.ge.s32.totalorder %v2648, 1
        %vm2665 = vcmp.ge.s32.totalorder %v2649, 1
        %vm2666 = vmpackc.low %vm2658, %vm2658
        %vm2667 = vmpackc.low %vm2659, %vm2659
        %vm2668 = vmpackc.low %vm2660, %vm2660
        %vm2669 = vmpackc.low %vm2661, %vm2661
        %vm2670 = vmpackc.low %vm2662, %vm2662
        %vm2671 = vmpackc.low %vm2663, %vm2663
        %vm2672 = vmpackc.low %vm2664, %vm2664
        %vm2673 = vmpackc.low %vm2665, %vm2665
        %v2674 = vsel %vm2666, %v2650, 0
        %v2675 = vsel %vm2667, %v2651, 0
        %v2676 = vsel %vm2668, %v2652, 0
        %v2677 = vsel %vm2669, %v2653, 0
        %v2678 = vsel %vm2670, %v2654, 0
        %v2679 = vsel %vm2671, %v2655, 0
        %v2680 = vsel %vm2672, %v2656, 0
        %v2681 = vsel %vm2673, %v2657, 0
        %v2682 = vld [vmem:[%s19] sm:$0xf]
        %v2683 = vld [vmem:[%s19 + $0x4] sm:$0xf]
        %v2684 = vld [vmem:[%s19 + $0x8] sm:$0xf]
        %v2685 = vld [vmem:[%s19 + $0xc] sm:$0xf]
        %v2686 = vld [vmem:[%s19 + $0x10] sm:$0xf]
        %v2687 = vld [vmem:[%s19 + $0x14] sm:$0xf]
        %v2688 = vld [vmem:[%s19 + $0x18] sm:$0xf]
        %v2689 = vld [vmem:[%s19 + $0x1c] sm:$0xf]
        %v2690 = vld [vmem:[%s19 + $0x20] sm:$0xf]
        %v2691 = vld [vmem:[%s19 + $0x24] sm:$0xf]
        %v2692 = vld [vmem:[%s19 + $0x28] sm:$0xf]
        %v2693 = vld [vmem:[%s19 + $0x2c] sm:$0xf]
        %v2694 = vld [vmem:[%s19 + $0x30] sm:$0xf]
        %v2695 = vld [vmem:[%s19 + $0x34] sm:$0xf]
        %v2696 = vld [vmem:[%s19 + $0x38] sm:$0xf]
        %v2697 = vld [vmem:[%s19 + $0x3c] sm:$0xf]
        %v2698 = vld [vmem:[#allocation3 + $0x20] sm:$0x1]
        %s2699 = scalar_lea.vmem %s19, 64
        %v2700 = vld [vmem:[%s2699] sm:$0xf]
        %v2701 = vld [vmem:[%s2699 + $0x4] sm:$0xf]
        %v2702 = vld [vmem:[%s2699 + $0x8] sm:$0xf]
        %v2703 = vld [vmem:[%s2699 + $0xc] sm:$0xf]
        %v2704 = vld [vmem:[%s2699 + $0x10] sm:$0xf]
        %v2705 = vld [vmem:[%s2699 + $0x14] sm:$0xf]
        %v2706 = vld [vmem:[%s2699 + $0x18] sm:$0xf]
        %v2707 = vld [vmem:[%s2699 + $0x1c] sm:$0xf]
        %v2708 = vld [vmem:[%s2699 + $0x20] sm:$0xf]
        %v2709 = vld [vmem:[%s2699 + $0x24] sm:$0xf]
        %v2710 = vld [vmem:[%s2699 + $0x28] sm:$0xf]
        %v2711 = vld [vmem:[%s2699 + $0x2c] sm:$0xf]
        %v2712 = vld [vmem:[%s2699 + $0x30] sm:$0xf]
        %v2713 = vld [vmem:[%s2699 + $0x34] sm:$0xf]
        %v2714 = vld [vmem:[%s2699 + $0x38] sm:$0xf]
        %v2715 = vld [vmem:[%s2699 + $0x3c] sm:$0xf]
        %v2725 = vunpack.c.l.b16 %v2650
        %v2726 = vunpack.c.l.b16 %v2651
        %v2727 = vunpack.c.l.b16 %v2652
        %v2728 = vunpack.c.l.b16 %v2653
        %v2729 = vunpack.c.l.b16 %v2654
        %v2730 = vunpack.c.l.b16 %v2655
        %v2731 = vunpack.c.l.b16 %v2656
        %v2732 = vunpack.c.l.b16 %v2657
        %v2733 = vunpack.c.l.b16 %v2698
        %v2734 = vpack.c.b16 %v2726, %v2725
        %v2735 = vpack.c.b16 %v2728, %v2727
        %v2736 = vpack.c.b16 %v2730, %v2729
        %v2737 = vpack.c.b16 %v2732, %v2731
        %v2738 = vpack.c.b16 %v2733, %v2733
        %vm2739 = vsmask.f32 7424
        %v2741 = vshrl.u32 %v2734, 16
        %v2743 = vshll.u32 %v2734, 16
        %v2745 = vrot.slane %v2743, 1
        %v2746 = vor.u32 %v2741, %v2745
        %v2748 = vshll.u32 %v2735, 16
        %v2750 = vrot.slane %v2748, 1
        %v2751 = vsel %vm2739, %v2746, %v2750
        %v2752 = vshrl.u32 %v2735, 16
        %v2754 = vor.u32 %v2752, %v2750
        %v2756 = vshll.u32 %v2736, 16
        %v2758 = vrot.slane %v2756, 1
        %v2759 = vsel %vm2739, %v2754, %v2758
        %v2760 = vshrl.u32 %v2736, 16
        %v2762 = vor.u32 %v2760, %v2758
        %v2764 = vshll.u32 %v2737, 16
        %v2766 = vrot.slane %v2764, 1
        %v2767 = vsel %vm2739, %v2762, %v2766
        %v2768 = vshrl.u32 %v2737, 16
        %v2770 = vor.u32 %v2768, %v2766
        %v2772 = vshll.u32 %v2738, 16
        %v2774 = vrot.slane %v2772, 1
        %v2775 = vsel %vm2739, %v2770, %v2774
        %v2796 = vunpack.c.l.b16 %v2700
        %v2797 = vunpack.c.l.b16 %v2701
        %v2798 = vunpack.c.l.b16 %v2702
        %v2799 = vunpack.c.l.b16 %v2703
        %v2800 = vunpack.c.l.b16 %v2704
        %v2801 = vunpack.c.l.b16 %v2705
        %v2802 = vunpack.c.l.b16 %v2706
        %v2803 = vunpack.c.l.b16 %v2707
        %v2804 = vunpack.c.l.b16 %v2708
        %v2805 = vunpack.c.l.b16 %v2709
        %v2806 = vunpack.c.l.b16 %v2710
        %v2807 = vunpack.c.l.b16 %v2711
        %v2808 = vunpack.c.l.b16 %v2712
        %v2809 = vunpack.c.l.b16 %v2713
        %v2810 = vunpack.c.l.b16 %v2714
        %v2811 = vunpack.c.l.b16 %v2715
        %v2812 = vpack.c.b16 %v2797, %v2796
        %v2813 = vpack.c.b16 %v2799, %v2798
        %v2814 = vpack.c.b16 %v2801, %v2800
        %v2815 = vpack.c.b16 %v2803, %v2802
        %v2816 = vpack.c.b16 %v2805, %v2804
        %v2817 = vpack.c.b16 %v2807, %v2806
        %v2818 = vpack.c.b16 %v2809, %v2808
        %v2819 = vpack.c.b16 %v2811, %v2810
        %2828 = vmatprep.subr.bf16.mxu0 0
        %2829 = vmatpush1.bf16.msra.mxu0 %v2812
        %2830 = vmatprep.subr.bf16.mxu0 0
        %2831 = vmatpush1.bf16.msra.mxu0 %v2813
        %2832 = vmatprep.subr.bf16.mxu0 0
        %2833 = vmatpush1.bf16.msra.mxu0 %v2814
        %2834 = vmatprep.subr.bf16.mxu0 0
        %2835 = vmatpush1.bf16.msra.mxu0 %v2815
        %2836 = vmatprep.subr.bf16.mxu0 0
        %2837 = vmatpush1.bf16.msra.mxu0 %v2816
        %2838 = vmatprep.subr.bf16.mxu0 0
        %2839 = vmatpush1.bf16.msra.mxu0 %v2817
        %2840 = vmatprep.subr.bf16.mxu0 0
        %2841 = vmatpush1.bf16.msra.mxu0 %v2818
        %2842 = vmatprep.subr.bf16.mxu0 0
        %2843 = vmatpush1.bf16.msra.mxu0 %v2819
        %2844 = vmatprep.subr.bf16.mxu0 0
        %2845 = vmatpush1.bf16.msra.mxu0 0
        %2846 = vmatprep.subr.bf16.mxu0 0
        %2847 = vmatpush1.bf16.msra.mxu0 0
        %2848 = vmatprep.subr.bf16.mxu0 0
        %2849 = vmatpush1.bf16.msra.mxu0 0
        %2850 = vmatprep.subr.bf16.mxu0 0
        %2851 = vmatpush1.bf16.msra.mxu0 0
        %2852 = vmatprep.subr.bf16.mxu0 0
        %2853 = vmatpush1.bf16.msra.mxu0 0
        %2854 = vmatprep.subr.bf16.mxu0 0
        %2855 = vmatpush1.bf16.msra.mxu0 0
        %2856 = vmatprep.subr.bf16.mxu0 0
        %2857 = vmatpush1.bf16.msra.mxu0 0
        %2858 = vmatprep.subr.bf16.mxu0 0
        %2859 = vmatpush1.bf16.msra.mxu0 0
        %2860 = vmatprep.mubr.bf16.mxu0 0
        %2861 = vmatmul.mubr.bf16.gmra.mrb[0].mxu0 %v2751
        %v2862 = vpop.f32.mrb[0].mxu0
        %v2863 = vadd.f32 0.0, %v2862
        %v2864 = vpop.f32.mrb[0].mxu0
        %v2865 = vpop.f32.mrb[0].mxu0
        %v2866 = vadd.f32 0.0, %v2865
        %v2867 = vpop.f32.mrb[0].mxu0
        %2868 = vmatprep.mubr.bf16.mxu0 0
        %2869 = vmatmul.mubr.bf16.gmra.mrb[0].mxu0 %v2759
        %v2870 = vpop.f32.mrb[0].mxu0
        %v2871 = vadd.f32 0.0, %v2870
        %v2872 = vpop.f32.mrb[0].mxu0
        %v2873 = vpop.f32.mrb[0].mxu0
        %v2874 = vadd.f32 0.0, %v2873
        %v2875 = vpop.f32.mrb[0].mxu0
        %2876 = vmatprep.mubr.bf16.mxu0 0
        %2877 = vmatmul.mubr.bf16.gmra.mrb[0].mxu0 %v2767
        %v2878 = vpop.f32.mrb[0].mxu0
        %v2879 = vadd.f32 0.0, %v2878
        %v2880 = vpop.f32.mrb[0].mxu0
        %v2881 = vpop.f32.mrb[0].mxu0
        %v2882 = vadd.f32 0.0, %v2881
        %v2883 = vpop.f32.mrb[0].mxu0
        %2884 = vmatprep.mubr.bf16.mxu0 0
        %2885 = vmatmul.mubr.bf16.gmra.mrb[0].mxu0 %v2775
        %v2886 = vpop.f32.mrb[0].mxu0
        %v2887 = vadd.f32 0.0, %v2886
        %v2888 = vpop.f32.mrb[0].mxu0
        %v2889 = vpop.f32.mrb[0].mxu0
        %v2890 = vadd.f32 0.0, %v2889
        %v2891 = vpop.f32.mrb[0].mxu0
        %2892 = vdwg.mxu0
        %v2901 = vunpack.c.l.b16 %v2674
        %v2902 = vunpack.c.l.b16 %v2675
        %v2903 = vunpack.c.l.b16 %v2676
        %v2904 = vunpack.c.l.b16 %v2677
        %v2905 = vunpack.c.l.b16 %v2678
        %v2906 = vunpack.c.l.b16 %v2679
        %v2907 = vunpack.c.l.b16 %v2680
        %v2908 = vunpack.c.l.b16 %v2681
        %v2909 = vpack.c.b16 %v2902, %v2901
        %v2910 = vpack.c.b16 %v2904, %v2903
        %v2911 = vpack.c.b16 %v2906, %v2905
        %v2912 = vpack.c.b16 %v2908, %v2907
        %v2933 = vunpack.c.l.b16 %v2682
        %v2934 = vunpack.c.l.b16 %v2683
        %v2935 = vunpack.c.l.b16 %v2684
        %v2936 = vunpack.c.l.b16 %v2685
        %v2937 = vunpack.c.l.b16 %v2686
        %v2938 = vunpack.c.l.b16 %v2687
        %v2939 = vunpack.c.l.b16 %v2688
        %v2940 = vunpack.c.l.b16 %v2689
        %v2941 = vunpack.c.l.b16 %v2690
        %v2942 = vunpack.c.l.b16 %v2691
        %v2943 = vunpack.c.l.b16 %v2692
        %v2944 = vunpack.c.l.b16 %v2693
        %v2945 = vunpack.c.l.b16 %v2694
        %v2946 = vunpack.c.l.b16 %v2695
        %v2947 = vunpack.c.l.b16 %v2696
        %v2948 = vunpack.c.l.b16 %v2697
        %v2949 = vpack.c.b16 %v2934, %v2933
        %v2950 = vpack.c.b16 %v2936, %v2935
        %v2951 = vpack.c.b16 %v2938, %v2937
        %v2952 = vpack.c.b16 %v2940, %v2939
        %v2953 = vpack.c.b16 %v2942, %v2941
        %v2954 = vpack.c.b16 %v2944, %v2943
        %v2955 = vpack.c.b16 %v2946, %v2945
        %v2956 = vpack.c.b16 %v2948, %v2947
        %2965 = vmatprep.subr.bf16.mxu0 0
        %2966 = vmatpush1.bf16.msra.mxu0 %v2949
        %2967 = vmatprep.subr.bf16.mxu0 0
        %2968 = vmatpush1.bf16.msra.mxu0 %v2950
        %2969 = vmatprep.subr.bf16.mxu0 0
        %2970 = vmatpush1.bf16.msra.mxu0 %v2951
        %2971 = vmatprep.subr.bf16.mxu0 0
        %2972 = vmatpush1.bf16.msra.mxu0 %v2952
        %2973 = vmatprep.subr.bf16.mxu0 0
        %2974 = vmatpush1.bf16.msra.mxu0 %v2953
        %2975 = vmatprep.subr.bf16.mxu0 0
        %2976 = vmatpush1.bf16.msra.mxu0 %v2954
        %2977 = vmatprep.subr.bf16.mxu0 0
        %2978 = vmatpush1.bf16.msra.mxu0 %v2955
        %2979 = vmatprep.subr.bf16.mxu0 0
        %2980 = vmatpush1.bf16.msra.mxu0 %v2956
        %2981 = vmatprep.subr.bf16.mxu0 0
        %2982 = vmatpush1.bf16.msra.mxu0 0
        %2983 = vmatprep.subr.bf16.mxu0 0
        %2984 = vmatpush1.bf16.msra.mxu0 0
        %2985 = vmatprep.subr.bf16.mxu0 0
        %2986 = vmatpush1.bf16.msra.mxu0 0
        %2987 = vmatprep.subr.bf16.mxu0 0
        %2988 = vmatpush1.bf16.msra.mxu0 0
        %2989 = vmatprep.subr.bf16.mxu0 0
        %2990 = vmatpush1.bf16.msra.mxu0 0
        %2991 = vmatprep.subr.bf16.mxu0 0
        %2992 = vmatpush1.bf16.msra.mxu0 0
        %2993 = vmatprep.subr.bf16.mxu0 0
        %2994 = vmatpush1.bf16.msra.mxu0 0
        %2995 = vmatprep.subr.bf16.mxu0 0
        %2996 = vmatpush1.bf16.msra.mxu0 0
        %2997 = vmatprep.mubr.bf16.mxu0 0
        %2998 = vmatmul.mubr.bf16.gmra.mrb[0].mxu0 %v2909
        %v2999 = vpop.f32.mrb[0].mxu0
        %v3000 = vadd.f32 %v2863, %v2999
        %v3001 = vpop.f32.mrb[0].mxu0
        %v3002 = vpop.f32.mrb[0].mxu0
        %v3003 = vadd.f32 %v2866, %v3002
        %v3004 = vpop.f32.mrb[0].mxu0
        %3005 = vmatprep.mubr.bf16.mxu0 0
        %3006 = vmatmul.mubr.bf16.gmra.mrb[0].mxu0 %v2910
        %v3007 = vpop.f32.mrb[0].mxu0
        %v3008 = vadd.f32 %v2871, %v3007
        %v3009 = vpop.f32.mrb[0].mxu0
        %v3010 = vpop.f32.mrb[0].mxu0
        %v3011 = vadd.f32 %v2874, %v3010
        %v3012 = vpop.f32.mrb[0].mxu0
        %3013 = vmatprep.mubr.bf16.mxu0 0
        %3014 = vmatmul.mubr.bf16.gmra.mrb[0].mxu0 %v2911
        %v3015 = vpop.f32.mrb[0].mxu0
        %v3016 = vadd.f32 %v2879, %v3015
        %v3017 = vpop.f32.mrb[0].mxu0
        %v3018 = vpop.f32.mrb[0].mxu0
        %v3019 = vadd.f32 %v2882, %v3018
        %v3020 = vpop.f32.mrb[0].mxu0
        %3021 = vmatprep.mubr.bf16.mxu0 0
        %3022 = vmatmul.mubr.bf16.gmra.mrb[0].mxu0 %v2912
        %v3023 = vpop.f32.mrb[0].mxu0
        %v3024 = vadd.f32 %v2887, %v3023
        %v3025 = vpop.f32.mrb[0].mxu0
        %v3026 = vpop.f32.mrb[0].mxu0
        %v3027 = vadd.f32 %v2890, %v3026
        %v3028 = vpop.f32.mrb[0].mxu0
        %3029 = vdwg.mxu0
        %v3030 = vld [vmem:[#allocation3] sm:$0xe]
        %vm3031 = vcmp.le.s32.totalorder %v2642, 6
        %vm3032 = vcmp.le.s32.totalorder %v2643, 6
        %vm3033 = vcmp.le.s32.totalorder %v2644, 6
        %vm3034 = vcmp.le.s32.totalorder %v2645, 6
        %vm3035 = vcmp.le.s32.totalorder %v2646, 6
        %vm3036 = vcmp.le.s32.totalorder %v2647, 6
        %vm3037 = vcmp.le.s32.totalorder %v2648, 6
        %vm3038 = vcmp.le.s32.totalorder %v2649, 6
        %vm3039 = vmpackc.low %vm3031, %vm3031
        %vm3040 = vmpackc.low %vm3032, %vm3032
        %vm3041 = vmpackc.low %vm3033, %vm3033
        %vm3042 = vmpackc.low %vm3034, %vm3034
        %vm3043 = vmpackc.low %vm3035, %vm3035
        %vm3044 = vmpackc.low %vm3036, %vm3036
        %vm3045 = vmpackc.low %vm3037, %vm3037
        %vm3046 = vmpackc.low %vm3038, %vm3038
        %v3047 = vsel %vm3039, 65537, 0
        %v3048 = vsel %vm3040, 65537, 0
        %v3049 = vsel %vm3041, 65537, 0
        %v3050 = vsel %vm3042, 65537, 0
        %v3051 = vsel %vm3043, 65537, 0
        %v3052 = vsel %vm3044, 65537, 0
        %v3053 = vsel %vm3045, 65537, 0
        %v3054 = vsel %vm3046, 65537, 0
        %vm3055 = vcmask 1044484
        %vm3056 = vmor %vm2413, %vm3055
        %v3057 = vrot.slane %v3047, 7
        %v3058 = vrot.slane %v3057, 4
        %v3059 = vrot.slane %v3048, 7
        %v3060 = vsel %vm3056, %v3058, %v3059
        %v3061 = vrot.slane %v3059, 4
        %v3062 = vrot.slane %v3049, 7
        %v3063 = vsel %vm3056, %v3061, %v3062
        %v3064 = vrot.slane %v3062, 4
        %v3065 = vrot.slane %v3050, 7
        %v3066 = vsel %vm3056, %v3064, %v3065
        %v3067 = vrot.slane %v3065, 4
        %v3068 = vrot.slane %v3051, 7
        %v3069 = vsel %vm3056, %v3067, %v3068
        %v3070 = vrot.slane %v3068, 4
        %v3071 = vrot.slane %v3052, 7
        %v3072 = vsel %vm3056, %v3070, %v3071
        %v3073 = vrot.slane %v3071, 4
        %v3074 = vrot.slane %v3053, 7
        %v3075 = vsel %vm3056, %v3073, %v3074
        %v3076 = vrot.slane %v3074, 4
        %v3077 = vrot.slane %v3054, 7
        %v3078 = vsel %vm3056, %v3076, %v3077
        %v3079 = vrot.slane %v3077, 4
        %vm3080 = vcmp.ne.s16.totalorder %v3057, 0
        %vm3081 = vcmp.ne.s16.totalorder %v3060, 0
        %vm3082 = vcmp.ne.s16.totalorder %v3063, 0
        %vm3083 = vcmp.ne.s16.totalorder %v3066, 0
        %vm3084 = vcmp.ne.s16.totalorder %v3069, 0
        %vm3085 = vcmp.ne.s16.totalorder %v3072, 0
        %vm3086 = vcmp.ne.s16.totalorder %v3075, 0
        %vm3087 = vcmp.ne.s16.totalorder %v3078, 0
        %vm3088 = vcmp.ne.s16.totalorder %v3079, 0
        %v3089 = vsel %vm3080, %v3030, 0
        %v3090 = vsel %vm3081, %v2651, 0
        %v3091 = vsel %vm3082, %v2652, 0
        %v3092 = vsel %vm3083, %v2653, 0
        %v3093 = vsel %vm3084, %v2654, 0
        %v3094 = vsel %vm3085, %v2655, 0
        %v3095 = vsel %vm3086, %v2656, 0
        %v3096 = vsel %vm3087, %v2657, 0
        %v3097 = vsel %vm3088, %v2698, 0
        %s3098 = scalar_lea.vmem %s19, 128
        %v3099 = vld [vmem:[%s3098] sm:$0xf]
        %v3100 = vld [vmem:[%s3098 + $0x4] sm:$0xf]
        %v3101 = vld [vmem:[%s3098 + $0x8] sm:$0xf]
        %v3102 = vld [vmem:[%s3098 + $0xc] sm:$0xf]
        %v3103 = vld [vmem:[%s3098 + $0x10] sm:$0xf]
        %v3104 = vld [vmem:[%s3098 + $0x14] sm:$0xf]
        %v3105 = vld [vmem:[%s3098 + $0x18] sm:$0xf]
        %v3106 = vld [vmem:[%s3098 + $0x1c] sm:$0xf]
        %v3107 = vld [vmem:[%s3098 + $0x20] sm:$0xf]
        %v3108 = vld [vmem:[%s3098 + $0x24] sm:$0xf]
        %v3109 = vld [vmem:[%s3098 + $0x28] sm:$0xf]
        %v3110 = vld [vmem:[%s3098 + $0x2c] sm:$0xf]
        %v3111 = vld [vmem:[%s3098 + $0x30] sm:$0xf]
        %v3112 = vld [vmem:[%s3098 + $0x34] sm:$0xf]
        %v3113 = vld [vmem:[%s3098 + $0x38] sm:$0xf]
        %v3114 = vld [vmem:[%s3098 + $0x3c] sm:$0xf]
        %v3124 = vunpack.c.l.b16 %v3089
        %v3125 = vunpack.c.l.b16 %v3090
        %v3126 = vunpack.c.l.b16 %v3091
        %v3127 = vunpack.c.l.b16 %v3092
        %v3128 = vunpack.c.l.b16 %v3093
        %v3129 = vunpack.c.l.b16 %v3094
        %v3130 = vunpack.c.l.b16 %v3095
        %v3131 = vunpack.c.l.b16 %v3096
        %v3132 = vunpack.c.l.b16 %v3097
        %v3133 = vpack.c.b16 %v3125, %v3124
        %v3134 = vpack.c.b16 %v3127, %v3126
        %v3135 = vpack.c.b16 %v3129, %v3128
        %v3136 = vpack.c.b16 %v3131, %v3130
        %v3137 = vpack.c.b16 %v3132, %v3132
        %vm3138 = vcmask 1046528
        %v3139 = vrot.slane %v3133, 1
        %v3140 = vrot.slane %v3134, 1
        %v3141 = vsel %vm3138, %v3139, %v3140
        %v3142 = vrot.slane %v3135, 1
        %v3143 = vsel %vm3138, %v3140, %v3142
        %v3144 = vrot.slane %v3136, 1
        %v3145 = vsel %vm3138, %v3142, %v3144
        %v3146 = vrot.slane %v3137, 1
        %v3147 = vsel %vm3138, %v3144, %v3146
        %v3168 = vunpack.c.l.b16 %v3099
        %v3169 = vunpack.c.l.b16 %v3100
        %v3170 = vunpack.c.l.b16 %v3101
        %v3171 = vunpack.c.l.b16 %v3102
        %v3172 = vunpack.c.l.b16 %v3103
        %v3173 = vunpack.c.l.b16 %v3104
        %v3174 = vunpack.c.l.b16 %v3105
        %v3175 = vunpack.c.l.b16 %v3106
        %v3176 = vunpack.c.l.b16 %v3107
        %v3177 = vunpack.c.l.b16 %v3108
        %v3178 = vunpack.c.l.b16 %v3109
        %v3179 = vunpack.c.l.b16 %v3110
        %v3180 = vunpack.c.l.b16 %v3111
        %v3181 = vunpack.c.l.b16 %v3112
        %v3182 = vunpack.c.l.b16 %v3113
        %v3183 = vunpack.c.l.b16 %v3114
        %v3184 = vpack.c.b16 %v3169, %v3168
        %v3185 = vpack.c.b16 %v3171, %v3170
        %v3186 = vpack.c.b16 %v3173, %v3172
        %v3187 = vpack.c.b16 %v3175, %v3174
        %v3188 = vpack.c.b16 %v3177, %v3176
        %v3189 = vpack.c.b16 %v3179, %v3178
        %v3190 = vpack.c.b16 %v3181, %v3180
        %v3191 = vpack.c.b16 %v3183, %v3182
        %3200 = vmatprep.subr.bf16.mxu0 0
        %3201 = vmatpush1.bf16.msra.mxu0 %v3184
        %3202 = vmatprep.subr.bf16.mxu0 0
        %3203 = vmatpush1.bf16.msra.mxu0 %v3185
        %3204 = vmatprep.subr.bf16.mxu0 0
        %3205 = vmatpush1.bf16.msra.mxu0 %v3186
        %3206 = vmatprep.subr.bf16.mxu0 0
        %3207 = vmatpush1.bf16.msra.mxu0 %v3187
        %3208 = vmatprep.subr.bf16.mxu0 0
        %3209 = vmatpush1.bf16.msra.mxu0 %v3188
        %3210 = vmatprep.subr.bf16.mxu0 0
        %3211 = vmatpush1.bf16.msra.mxu0 %v3189
        %3212 = vmatprep.subr.bf16.mxu0 0
        %3213 = vmatpush1.bf16.msra.mxu0 %v3190
        %3214 = vmatprep.subr.bf16.mxu0 0
        %3215 = vmatpush1.bf16.msra.mxu0 %v3191
        %3216 = vmatprep.subr.bf16.mxu0 0
        %3217 = vmatpush1.bf16.msra.mxu0 0
        %3218 = vmatprep.subr.bf16.mxu0 0
        %3219 = vmatpush1.bf16.msra.mxu0 0
        %3220 = vmatprep.subr.bf16.mxu0 0
        %3221 = vmatpush1.bf16.msra.mxu0 0
        %3222 = vmatprep.subr.bf16.mxu0 0
        %3223 = vmatpush1.bf16.msra.mxu0 0
        %3224 = vmatprep.subr.bf16.mxu0 0
        %3225 = vmatpush1.bf16.msra.mxu0 0
        %3226 = vmatprep.subr.bf16.mxu0 0
        %3227 = vmatpush1.bf16.msra.mxu0 0
        %3228 = vmatprep.subr.bf16.mxu0 0
        %3229 = vmatpush1.bf16.msra.mxu0 0
        %3230 = vmatprep.subr.bf16.mxu0 0
        %3231 = vmatpush1.bf16.msra.mxu0 0
        %3232 = vmatprep.mubr.bf16.mxu0 0
        %3233 = vmatmul.mubr.bf16.gmra.mrb[0].mxu0 %v3141
        %v3234 = vpop.f32.mrb[0].mxu0
        %v3235 = vadd.f32 0.0, %v3234
        %v3236 = vpop.f32.mrb[0].mxu0
        %v3237 = vpop.f32.mrb[0].mxu0
        %v3238 = vadd.f32 0.0, %v3237
        %v3239 = vpop.f32.mrb[0].mxu0
        %3240 = vmatprep.mubr.bf16.mxu0 0
        %3241 = vmatmul.mubr.bf16.gmra.mrb[0].mxu0 %v3143
        %v3242 = vpop.f32.mrb[0].mxu0
        %v3243 = vadd.f32 0.0, %v3242
        %v3244 = vpop.f32.mrb[0].mxu0
        %v3245 = vpop.f32.mrb[0].mxu0
        %v3246 = vadd.f32 0.0, %v3245
        %v3247 = vpop.f32.mrb[0].mxu0
        %3248 = vmatprep.mubr.bf16.mxu0 0
        %3249 = vmatmul.mubr.bf16.gmra.mrb[0].mxu0 %v3145
        %v3250 = vpop.f32.mrb[0].mxu0
        %v3251 = vadd.f32 0.0, %v3250
        %v3252 = vpop.f32.mrb[0].mxu0
        %v3253 = vpop.f32.mrb[0].mxu0
        %v3254 = vadd.f32 0.0, %v3253
        %v3255 = vpop.f32.mrb[0].mxu0
        %3256 = vmatprep.mubr.bf16.mxu0 0
        %3257 = vmatmul.mubr.bf16.gmra.mrb[0].mxu0 %v3147
        %v3258 = vpop.f32.mrb[0].mxu0
        %v3259 = vadd.f32 0.0, %v3258
        %v3260 = vpop.f32.mrb[0].mxu0
        %v3261 = vpop.f32.mrb[0].mxu0
        %v3262 = vadd.f32 0.0, %v3261
        %v3263 = vpop.f32.mrb[0].mxu0
        %3264 = vdwg.mxu0
        %v3265 = vadd.f32 %v3000, %v3235
        %v3266 = vadd.f32 %v3003, %v3238
        %v3267 = vadd.f32 %v3008, %v3243
        %v3268 = vadd.f32 %v3011, %v3246
        %v3269 = vadd.f32 %v3016, %v3251
        %v3270 = vadd.f32 %v3019, %v3254
        %v3271 = vadd.f32 %v3024, %v3259
        %v3272 = vadd.f32 %v3027, %v3262
        %v3273 = vld [vmem:[#allocation3 + $0x20] sm:$0xf]
        %v3274 = vsel %vm2666, %v2651, 0
        %v3275 = vsel %vm2667, %v2652, 0
        %v3276 = vsel %vm2668, %v2653, 0
        %v3277 = vsel %vm2669, %v2654, 0
        %v3278 = vsel %vm2670, %v2655, 0
        %v3279 = vsel %vm2671, %v2656, 0
        %v3280 = vsel %vm2672, %v2657, 0
        %v3281 = vsel %vm2673, %v3273, 0
        %s3282 = scalar_lea.vmem %s19, 192
        %v3283 = vld [vmem:[%s3282] sm:$0xf]
        %v3284 = vld [vmem:[%s3282 + $0x4] sm:$0xf]
        %v3285 = vld [vmem:[%s3282 + $0x8] sm:$0xf]
        %v3286 = vld [vmem:[%s3282 + $0xc] sm:$0xf]
        %v3287 = vld [vmem:[%s3282 + $0x10] sm:$0xf]
        %v3288 = vld [vmem:[%s3282 + $0x14] sm:$0xf]
        %v3289 = vld [vmem:[%s3282 + $0x18] sm:$0xf]
        %v3290 = vld [vmem:[%s3282 + $0x1c] sm:$0xf]
        %v3291 = vld [vmem:[%s3282 + $0x20] sm:$0xf]
        %v3292 = vld [vmem:[%s3282 + $0x24] sm:$0xf]
        %v3293 = vld [vmem:[%s3282 + $0x28] sm:$0xf]
        %v3294 = vld [vmem:[%s3282 + $0x2c] sm:$0xf]
        %v3295 = vld [vmem:[%s3282 + $0x30] sm:$0xf]
        %v3296 = vld [vmem:[%s3282 + $0x34] sm:$0xf]
        %v3297 = vld [vmem:[%s3282 + $0x38] sm:$0xf]
        %v3298 = vld [vmem:[%s3282 + $0x3c] sm:$0xf]
        %v3307 = vunpack.c.l.b16 %v3274
        %v3308 = vunpack.c.l.b16 %v3275
        %v3309 = vunpack.c.l.b16 %v3276
        %v3310 = vunpack.c.l.b16 %v3277
        %v3311 = vunpack.c.l.b16 %v3278
        %v3312 = vunpack.c.l.b16 %v3279
        %v3313 = vunpack.c.l.b16 %v3280
        %v3314 = vunpack.c.l.b16 %v3281
        %v3315 = vpack.c.b16 %v3308, %v3307
        %v3316 = vpack.c.b16 %v3310, %v3309
        %v3317 = vpack.c.b16 %v3312, %v3311
        %v3318 = vpack.c.b16 %v3314, %v3313
        %v3339 = vunpack.c.l.b16 %v3283
        %v3340 = vunpack.c.l.b16 %v3284
        %v3341 = vunpack.c.l.b16 %v3285
        %v3342 = vunpack.c.l.b16 %v3286
        %v3343 = vunpack.c.l.b16 %v3287
        %v3344 = vunpack.c.l.b16 %v3288
        %v3345 = vunpack.c.l.b16 %v3289
        %v3346 = vunpack.c.l.b16 %v3290
        %v3347 = vunpack.c.l.b16 %v3291
        %v3348 = vunpack.c.l.b16 %v3292
        %v3349 = vunpack.c.l.b16 %v3293
        %v3350 = vunpack.c.l.b16 %v3294
        %v3351 = vunpack.c.l.b16 %v3295
        %v3352 = vunpack.c.l.b16 %v3296
        %v3353 = vunpack.c.l.b16 %v3297
        %v3354 = vunpack.c.l.b16 %v3298
        %v3355 = vpack.c.b16 %v3340, %v3339
        %v3356 = vpack.c.b16 %v3342, %v3341
        %v3357 = vpack.c.b16 %v3344, %v3343
        %v3358 = vpack.c.b16 %v3346, %v3345
        %v3359 = vpack.c.b16 %v3348, %v3347
        %v3360 = vpack.c.b16 %v3350, %v3349
        %v3361 = vpack.c.b16 %v3352, %v3351
        %v3362 = vpack.c.b16 %v3354, %v3353
        %3371 = vmatprep.subr.bf16.mxu0 0
        %3372 = vmatpush1.bf16.msra.mxu0 %v3355
        %3373 = vmatprep.subr.bf16.mxu0 0
        %3374 = vmatpush1.bf16.msra.mxu0 %v3356
        %3375 = vmatprep.subr.bf16.mxu0 0
        %3376 = vmatpush1.bf16.msra.mxu0 %v3357
        %3377 = vmatprep.subr.bf16.mxu0 0
        %3378 = vmatpush1.bf16.msra.mxu0 %v3358
        %3379 = vmatprep.subr.bf16.mxu0 0
        %3380 = vmatpush1.bf16.msra.mxu0 %v3359
        %3381 = vmatprep.subr.bf16.mxu0 0
        %3382 = vmatpush1.bf16.msra.mxu0 %v3360
        %3383 = vmatprep.subr.bf16.mxu0 0
        %3384 = vmatpush1.bf16.msra.mxu0 %v3361
        %3385 = vmatprep.subr.bf16.mxu0 0
        %3386 = vmatpush1.bf16.msra.mxu0 %v3362
        %3387 = vmatprep.subr.bf16.mxu0 0
        %3388 = vmatpush1.bf16.msra.mxu0 0
        %3389 = vmatprep.subr.bf16.mxu0 0
        %3390 = vmatpush1.bf16.msra.mxu0 0
        %3391 = vmatprep.subr.bf16.mxu0 0
        %3392 = vmatpush1.bf16.msra.mxu0 0
        %3393 = vmatprep.subr.bf16.mxu0 0
        %3394 = vmatpush1.bf16.msra.mxu0 0
        %3395 = vmatprep.subr.bf16.mxu0 0
        %3396 = vmatpush1.bf16.msra.mxu0 0
        %3397 = vmatprep.subr.bf16.mxu0 0
        %3398 = vmatpush1.bf16.msra.mxu0 0
        %3399 = vmatprep.subr.bf16.mxu0 0
        %3400 = vmatpush1.bf16.msra.mxu0 0
        %3401 = vmatprep.subr.bf16.mxu0 0
        %3402 = vmatpush1.bf16.msra.mxu0 0
        %3403 = vmatprep.mubr.bf16.mxu0 0
        %3404 = vmatmul.mubr.bf16.gmra.mrb[0].mxu0 %v3315
        %v3405 = vpop.f32.mrb[0].mxu0
        %v3406 = vadd.f32 0.0, %v3405
        %v3407 = vpop.f32.mrb[0].mxu0
        %v3408 = vpop.f32.mrb[0].mxu0
        %v3409 = vadd.f32 0.0, %v3408
        %v3410 = vpop.f32.mrb[0].mxu0
        %3411 = vmatprep.mubr.bf16.mxu0 0
        %3412 = vmatmul.mubr.bf16.gmra.mrb[0].mxu0 %v3316
        %v3413 = vpop.f32.mrb[0].mxu0
        %v3414 = vadd.f32 0.0, %v3413
        %v3415 = vpop.f32.mrb[0].mxu0
        %v3416 = vpop.f32.mrb[0].mxu0
        %v3417 = vadd.f32 0.0, %v3416
        %v3418 = vpop.f32.mrb[0].mxu0
        %3419 = vmatprep.mubr.bf16.mxu0 0
        %3420 = vmatmul.mubr.bf16.gmra.mrb[0].mxu0 %v3317
        %v3421 = vpop.f32.mrb[0].mxu0
        %v3422 = vadd.f32 0.0, %v3421
        %v3423 = vpop.f32.mrb[0].mxu0
        %v3424 = vpop.f32.mrb[0].mxu0
        %v3425 = vadd.f32 0.0, %v3424
        %v3426 = vpop.f32.mrb[0].mxu0
        %3427 = vmatprep.mubr.bf16.mxu0 0
        %3428 = vmatmul.mubr.bf16.gmra.mrb[0].mxu0 %v3318
        %v3429 = vpop.f32.mrb[0].mxu0
        %v3430 = vadd.f32 0.0, %v3429
        %v3431 = vpop.f32.mrb[0].mxu0
        %v3432 = vpop.f32.mrb[0].mxu0
        %v3433 = vadd.f32 0.0, %v3432
        %v3434 = vpop.f32.mrb[0].mxu0
        %3435 = vdwg.mxu0
        %v3436 = vadd.f32 %v3265, %v3406
        %v3437 = vadd.f32 %v3266, %v3409
        %v3438 = vadd.f32 %v3267, %v3414
        %v3439 = vadd.f32 %v3268, %v3417
        %v3440 = vadd.f32 %v3269, %v3422
        %v3441 = vadd.f32 %v3270, %v3425
        %v3442 = vadd.f32 %v3271, %v3430
        %v3443 = vadd.f32 %v3272, %v3433
        %v3444 = vld [vmem:[#allocation3 + $0x4] sm:$0xf]
        %v3445 = vld [vmem:[#allocation3 + $0x8] sm:$0xf]
        %v3446 = vld [vmem:[#allocation3 + $0xc] sm:$0xf]
        %v3447 = vld [vmem:[#allocation3 + $0x10] sm:$0xf]
        %v3448 = vld [vmem:[#allocation3 + $0x14] sm:$0xf]
        %v3449 = vld [vmem:[#allocation3 + $0x18] sm:$0xf]
        %v3450 = vld [vmem:[#allocation3 + $0x1c] sm:$0xf]
        %v3451 = vld [vmem:[#allocation3 + $0x20] sm:$0xf]
        %v3452 = vld [vmem:[#allocation3 + $0x24] sm:$0x1]
        %s3453 = scalar_lea.vmem %s19, 256
        %v3454 = vld [vmem:[%s3453] sm:$0xf]
        %v3455 = vld [vmem:[%s3453 + $0x4] sm:$0xf]
        %v3456 = vld [vmem:[%s3453 + $0x8] sm:$0xf]
        %v3457 = vld [vmem:[%s3453 + $0xc] sm:$0xf]
        %v3458 = vld [vmem:[%s3453 + $0x10] sm:$0xf]
        %v3459 = vld [vmem:[%s3453 + $0x14] sm:$0xf]
        %v3460 = vld [vmem:[%s3453 + $0x18] sm:$0xf]
        %v3461 = vld [vmem:[%s3453 + $0x1c] sm:$0xf]
        %v3462 = vld [vmem:[%s3453 + $0x20] sm:$0xf]
        %v3463 = vld [vmem:[%s3453 + $0x24] sm:$0xf]
        %v3464 = vld [vmem:[%s3453 + $0x28] sm:$0xf]
        %v3465 = vld [vmem:[%s3453 + $0x2c] sm:$0xf]
        %v3466 = vld [vmem:[%s3453 + $0x30] sm:$0xf]
        %v3467 = vld [vmem:[%s3453 + $0x34] sm:$0xf]
        %v3468 = vld [vmem:[%s3453 + $0x38] sm:$0xf]
        %v3469 = vld [vmem:[%s3453 + $0x3c] sm:$0xf]
        %v3479 = vunpack.c.l.b16 %v3444
        %v3480 = vunpack.c.l.b16 %v3445
        %v3481 = vunpack.c.l.b16 %v3446
        %v3482 = vunpack.c.l.b16 %v3447
        %v3483 = vunpack.c.l.b16 %v3448
        %v3484 = vunpack.c.l.b16 %v3449
        %v3485 = vunpack.c.l.b16 %v3450
        %v3486 = vunpack.c.l.b16 %v3451
        %v3487 = vunpack.c.l.b16 %v3452
        %v3488 = vpack.c.b16 %v3480, %v3479
        %v3489 = vpack.c.b16 %v3482, %v3481
        %v3490 = vpack.c.b16 %v3484, %v3483
        %v3491 = vpack.c.b16 %v3486, %v3485
        %v3492 = vpack.c.b16 %v3487, %v3487
        %v3494 = vshrl.u32 %v3488, 16
        %v3496 = vshll.u32 %v3488, 16
        %v3498 = vrot.slane %v3496, 1
        %v3499 = vor.u32 %v3494, %v3498
        %v3501 = vshll.u32 %v3489, 16
        %v3503 = vrot.slane %v3501, 1
        %v3504 = vsel %vm2739, %v3499, %v3503
        %v3505 = vshrl.u32 %v3489, 16
        %v3507 = vor.u32 %v3505, %v3503
        %v3509 = vshll.u32 %v3490, 16
        %v3511 = vrot.slane %v3509, 1
        %v3512 = vsel %vm2739, %v3507, %v3511
        %v3513 = vshrl.u32 %v3490, 16
        %v3515 = vor.u32 %v3513, %v3511
        %v3517 = vshll.u32 %v3491, 16
        %v3519 = vrot.slane %v3517, 1
        %v3520 = vsel %vm2739, %v3515, %v3519
        %v3521 = vshrl.u32 %v3491, 16
        %v3523 = vor.u32 %v3521, %v3519
        %v3525 = vshll.u32 %v3492, 16
        %v3527 = vrot.slane %v3525, 1
        %v3528 = vsel %vm2739, %v3523, %v3527
        %v3549 = vunpack.c.l.b16 %v3454
        %v3550 = vunpack.c.l.b16 %v3455
        %v3551 = vunpack.c.l.b16 %v3456
        %v3552 = vunpack.c.l.b16 %v3457
        %v3553 = vunpack.c.l.b16 %v3458
        %v3554 = vunpack.c.l.b16 %v3459
        %v3555 = vunpack.c.l.b16 %v3460
        %v3556 = vunpack.c.l.b16 %v3461
        %v3557 = vunpack.c.l.b16 %v3462
        %v3558 = vunpack.c.l.b16 %v3463
        %v3559 = vunpack.c.l.b16 %v3464
        %v3560 = vunpack.c.l.b16 %v3465
        %v3561 = vunpack.c.l.b16 %v3466
        %v3562 = vunpack.c.l.b16 %v3467
        %v3563 = vunpack.c.l.b16 %v3468
        %v3564 = vunpack.c.l.b16 %v3469
        %v3565 = vpack.c.b16 %v3550, %v3549
        %v3566 = vpack.c.b16 %v3552, %v3551
        %v3567 = vpack.c.b16 %v3554, %v3553
        %v3568 = vpack.c.b16 %v3556, %v3555
        %v3569 = vpack.c.b16 %v3558, %v3557
        %v3570 = vpack.c.b16 %v3560, %v3559
        %v3571 = vpack.c.b16 %v3562, %v3561
        %v3572 = vpack.c.b16 %v3564, %v3563
        %3581 = vmatprep.subr.bf16.mxu0 0
        %3582 = vmatpush1.bf16.msra.mxu0 %v3565
        %3583 = vmatprep.subr.bf16.mxu0 0
        %3584 = vmatpush1.bf16.msra.mxu0 %v3566
        %3585 = vmatprep.subr.bf16.mxu0 0
        %3586 = vmatpush1.bf16.msra.mxu0 %v3567
        %3587 = vmatprep.subr.bf16.mxu0 0
        %3588 = vmatpush1.bf16.msra.mxu0 %v3568
        %3589 = vmatprep.subr.bf16.mxu0 0
        %3590 = vmatpush1.bf16.msra.mxu0 %v3569
        %3591 = vmatprep.subr.bf16.mxu0 0
        %3592 = vmatpush1.bf16.msra.mxu0 %v3570
        %3593 = vmatprep.subr.bf16.mxu0 0
        %3594 = vmatpush1.bf16.msra.mxu0 %v3571
        %3595 = vmatprep.subr.bf16.mxu0 0
        %3596 = vmatpush1.bf16.msra.mxu0 %v3572
        %3597 = vmatprep.subr.bf16.mxu0 0
        %3598 = vmatpush1.bf16.msra.mxu0 0
        %3599 = vmatprep.subr.bf16.mxu0 0
        %3600 = vmatpush1.bf16.msra.mxu0 0
        %3601 = vmatprep.subr.bf16.mxu0 0
        %3602 = vmatpush1.bf16.msra.mxu0 0
        %3603 = vmatprep.subr.bf16.mxu0 0
        %3604 = vmatpush1.bf16.msra.mxu0 0
        %3605 = vmatprep.subr.bf16.mxu0 0
        %3606 = vmatpush1.bf16.msra.mxu0 0
        %3607 = vmatprep.subr.bf16.mxu0 0
        %3608 = vmatpush1.bf16.msra.mxu0 0
        %3609 = vmatprep.subr.bf16.mxu0 0
        %3610 = vmatpush1.bf16.msra.mxu0 0
        %3611 = vmatprep.subr.bf16.mxu0 0
        %3612 = vmatpush1.bf16.msra.mxu0 0
        %3613 = vmatprep.mubr.bf16.mxu0 0
        %3614 = vmatmul.mubr.bf16.gmra.mrb[0].mxu0 %v3504
        %v3615 = vpop.f32.mrb[0].mxu0
        %v3616 = vadd.f32 0.0, %v3615
        %v3617 = vpop.f32.mrb[0].mxu0
        %v3618 = vpop.f32.mrb[0].mxu0
        %v3619 = vadd.f32 0.0, %v3618
        %v3620 = vpop.f32.mrb[0].mxu0
        %3621 = vmatprep.mubr.bf16.mxu0 0
        %3622 = vmatmul.mubr.bf16.gmra.mrb[0].mxu0 %v3512
        %v3623 = vpop.f32.mrb[0].mxu0
        %v3624 = vadd.f32 0.0, %v3623
        %v3625 = vpop.f32.mrb[0].mxu0
        %v3626 = vpop.f32.mrb[0].mxu0
        %v3627 = vadd.f32 0.0, %v3626
        %v3628 = vpop.f32.mrb[0].mxu0
        %3629 = vmatprep.mubr.bf16.mxu0 0
        %3630 = vmatmul.mubr.bf16.gmra.mrb[0].mxu0 %v3520
        %v3631 = vpop.f32.mrb[0].mxu0
        %v3632 = vadd.f32 0.0, %v3631
        %v3633 = vpop.f32.mrb[0].mxu0
        %v3634 = vpop.f32.mrb[0].mxu0
        %v3635 = vadd.f32 0.0, %v3634
        %v3636 = vpop.f32.mrb[0].mxu0
        %3637 = vmatprep.mubr.bf16.mxu0 0
        %3638 = vmatmul.mubr.bf16.gmra.mrb[0].mxu0 %v3528
        %v3639 = vpop.f32.mrb[0].mxu0
        %v3640 = vadd.f32 0.0, %v3639
        %v3641 = vpop.f32.mrb[0].mxu0
        %v3642 = vpop.f32.mrb[0].mxu0
        %v3643 = vadd.f32 0.0, %v3642
        %v3644 = vpop.f32.mrb[0].mxu0
        %3645 = vdwg.mxu0
        %v3646 = vadd.f32 %v3436, %v3616
        %v3647 = vadd.f32 %v3437, %v3619
        %v3648 = vadd.f32 %v3438, %v3624
        %v3649 = vadd.f32 %v3439, %v3627
        %v3650 = vadd.f32 %v3440, %v3632
        %v3651 = vadd.f32 %v3441, %v3635
        %v3652 = vadd.f32 %v3442, %v3640
        %v3653 = vadd.f32 %v3443, %v3643
        %v3654 = vld [vmem:[#allocation3 + $0x4] sm:$0xe]
        %v3655 = vsel %vm3080, %v3654, 0
        %v3656 = vsel %vm3081, %v3445, 0
        %v3657 = vsel %vm3082, %v3446, 0
        %v3658 = vsel %vm3083, %v3447, 0
        %v3659 = vsel %vm3084, %v3448, 0
        %v3660 = vsel %vm3085, %v3449, 0
        %v3661 = vsel %vm3086, %v3450, 0
        %v3662 = vsel %vm3087, %v3451, 0
        %v3663 = vsel %vm3088, %v3452, 0
        %s3664 = scalar_lea.vmem %s19, 320
        %v3665 = vld [vmem:[%s3664] sm:$0xf]
        %v3666 = vld [vmem:[%s3664 + $0x4] sm:$0xf]
        %v3667 = vld [vmem:[%s3664 + $0x8] sm:$0xf]
        %v3668 = vld [vmem:[%s3664 + $0xc] sm:$0xf]
        %v3669 = vld [vmem:[%s3664 + $0x10] sm:$0xf]
        %v3670 = vld [vmem:[%s3664 + $0x14] sm:$0xf]
        %v3671 = vld [vmem:[%s3664 + $0x18] sm:$0xf]
        %v3672 = vld [vmem:[%s3664 + $0x1c] sm:$0xf]
        %v3673 = vld [vmem:[%s3664 + $0x20] sm:$0xf]
        %v3674 = vld [vmem:[%s3664 + $0x24] sm:$0xf]
        %v3675 = vld [vmem:[%s3664 + $0x28] sm:$0xf]
        %v3676 = vld [vmem:[%s3664 + $0x2c] sm:$0xf]
        %v3677 = vld [vmem:[%s3664 + $0x30] sm:$0xf]
        %v3678 = vld [vmem:[%s3664 + $0x34] sm:$0xf]
        %v3679 = vld [vmem:[%s3664 + $0x38] sm:$0xf]
        %v3680 = vld [vmem:[%s3664 + $0x3c] sm:$0xf]
        %v3690 = vunpack.c.l.b16 %v3655
        %v3691 = vunpack.c.l.b16 %v3656
        %v3692 = vunpack.c.l.b16 %v3657
        %v3693 = vunpack.c.l.b16 %v3658
        %v3694 = vunpack.c.l.b16 %v3659
        %v3695 = vunpack.c.l.b16 %v3660
        %v3696 = vunpack.c.l.b16 %v3661
        %v3697 = vunpack.c.l.b16 %v3662
        %v3698 = vunpack.c.l.b16 %v3663
        %v3699 = vpack.c.b16 %v3691, %v3690
        %v3700 = vpack.c.b16 %v3693, %v3692
        %v3701 = vpack.c.b16 %v3695, %v3694
        %v3702 = vpack.c.b16 %v3697, %v3696
        %v3703 = vpack.c.b16 %v3698, %v3698
        %v3704 = vrot.slane %v3699, 1
        %v3705 = vrot.slane %v3700, 1
        %v3706 = vsel %vm3138, %v3704, %v3705
        %v3707 = vrot.slane %v3701, 1
        %v3708 = vsel %vm3138, %v3705, %v3707
        %v3709 = vrot.slane %v3702, 1
        %v3710 = vsel %vm3138, %v3707, %v3709
        %v3711 = vrot.slane %v3703, 1
        %v3712 = vsel %vm3138, %v3709, %v3711
        %v3733 = vunpack.c.l.b16 %v3665
        %v3734 = vunpack.c.l.b16 %v3666
        %v3735 = vunpack.c.l.b16 %v3667
        %v3736 = vunpack.c.l.b16 %v3668
        %v3737 = vunpack.c.l.b16 %v3669
        %v3738 = vunpack.c.l.b16 %v3670
        %v3739 = vunpack.c.l.b16 %v3671
        %v3740 = vunpack.c.l.b16 %v3672
        %v3741 = vunpack.c.l.b16 %v3673
        %v3742 = vunpack.c.l.b16 %v3674
        %v3743 = vunpack.c.l.b16 %v3675
        %v3744 = vunpack.c.l.b16 %v3676
        %v3745 = vunpack.c.l.b16 %v3677
        %v3746 = vunpack.c.l.b16 %v3678
        %v3747 = vunpack.c.l.b16 %v3679
        %v3748 = vunpack.c.l.b16 %v3680
        %v3749 = vpack.c.b16 %v3734, %v3733
        %v3750 = vpack.c.b16 %v3736, %v3735
        %v3751 = vpack.c.b16 %v3738, %v3737
        %v3752 = vpack.c.b16 %v3740, %v3739
        %v3753 = vpack.c.b16 %v3742, %v3741
        %v3754 = vpack.c.b16 %v3744, %v3743
        %v3755 = vpack.c.b16 %v3746, %v3745
        %v3756 = vpack.c.b16 %v3748, %v3747
        %3765 = vmatprep.subr.bf16.mxu0 0
        %3766 = vmatpush1.bf16.msra.mxu0 %v3749
        %3767 = vmatprep.subr.bf16.mxu0 0
        %3768 = vmatpush1.bf16.msra.mxu0 %v3750
        %3769 = vmatprep.subr.bf16.mxu0 0
        %3770 = vmatpush1.bf16.msra.mxu0 %v3751
        %3771 = vmatprep.subr.bf16.mxu0 0
        %3772 = vmatpush1.bf16.msra.mxu0 %v3752
        %3773 = vmatprep.subr.bf16.mxu0 0
        %3774 = vmatpush1.bf16.msra.mxu0 %v3753
        %3775 = vmatprep.subr.bf16.mxu0 0
        %3776 = vmatpush1.bf16.msra.mxu0 %v3754
        %3777 = vmatprep.subr.bf16.mxu0 0
        %3778 = vmatpush1.bf16.msra.mxu0 %v3755
        %3779 = vmatprep.subr.bf16.mxu0 0
        %3780 = vmatpush1.bf16.msra.mxu0 %v3756
        %3781 = vmatprep.subr.bf16.mxu0 0
        %3782 = vmatpush1.bf16.msra.mxu0 0
        %3783 = vmatprep.subr.bf16.mxu0 0
        %3784 = vmatpush1.bf16.msra.mxu0 0
        %3785 = vmatprep.subr.bf16.mxu0 0
        %3786 = vmatpush1.bf16.msra.mxu0 0
        %3787 = vmatprep.subr.bf16.mxu0 0
        %3788 = vmatpush1.bf16.msra.mxu0 0
        %3789 = vmatprep.subr.bf16.mxu0 0
        %3790 = vmatpush1.bf16.msra.mxu0 0
        %3791 = vmatprep.subr.bf16.mxu0 0
        %3792 = vmatpush1.bf16.msra.mxu0 0
        %3793 = vmatprep.subr.bf16.mxu0 0
        %3794 = vmatpush1.bf16.msra.mxu0 0
        %3795 = vmatprep.subr.bf16.mxu0 0
        %3796 = vmatpush1.bf16.msra.mxu0 0
        %3797 = vmatprep.mubr.bf16.mxu0 0
        %3798 = vmatmul.mubr.bf16.gmra.mrb[0].mxu0 %v3706
        %v3799 = vpop.f32.mrb[0].mxu0
        %v3800 = vadd.f32 0.0, %v3799
        %v3801 = vpop.f32.mrb[0].mxu0
        %v3802 = vpop.f32.mrb[0].mxu0
        %v3803 = vadd.f32 0.0, %v3802
        %v3804 = vpop.f32.mrb[0].mxu0
        %3805 = vmatprep.mubr.bf16.mxu0 0
        %3806 = vmatmul.mubr.bf16.gmra.mrb[0].mxu0 %v3708
        %v3807 = vpop.f32.mrb[0].mxu0
        %v3808 = vadd.f32 0.0, %v3807
        %v3809 = vpop.f32.mrb[0].mxu0
        %v3810 = vpop.f32.mrb[0].mxu0
        %v3811 = vadd.f32 0.0, %v3810
        %v3812 = vpop.f32.mrb[0].mxu0
        %3813 = vmatprep.mubr.bf16.mxu0 0
        %3814 = vmatmul.mubr.bf16.gmra.mrb[0].mxu0 %v3710
        %v3815 = vpop.f32.mrb[0].mxu0
        %v3816 = vadd.f32 0.0, %v3815
        %v3817 = vpop.f32.mrb[0].mxu0
        %v3818 = vpop.f32.mrb[0].mxu0
        %v3819 = vadd.f32 0.0, %v3818
        %v3820 = vpop.f32.mrb[0].mxu0
        %3821 = vmatprep.mubr.bf16.mxu0 0
        %3822 = vmatmul.mubr.bf16.gmra.mrb[0].mxu0 %v3712
        %v3823 = vpop.f32.mrb[0].mxu0
        %v3824 = vadd.f32 0.0, %v3823
        %v3825 = vpop.f32.mrb[0].mxu0
        %v3826 = vpop.f32.mrb[0].mxu0
        %v3827 = vadd.f32 0.0, %v3826
        %v3828 = vpop.f32.mrb[0].mxu0
        %3829 = vdwg.mxu0
        %v3830 = vadd.f32 %v3646, %v3800
        %v3831 = vadd.f32 %v3647, %v3803
        %v3832 = vadd.f32 %v3648, %v3808
        %v3833 = vadd.f32 %v3649, %v3811
        %v3834 = vadd.f32 %v3650, %v3816
        %v3835 = vadd.f32 %v3651, %v3819
        %v3836 = vadd.f32 %v3652, %v3824
        %v3837 = vadd.f32 %v3653, %v3827
        %v3838 = vld [vmem:[#allocation3 + $0x24] sm:$0xf]
        %v3839 = vsel %vm2666, %v3445, 0
        %v3840 = vsel %vm2667, %v3446, 0
        %v3841 = vsel %vm2668, %v3447, 0
        %v3842 = vsel %vm2669, %v3448, 0
        %v3843 = vsel %vm2670, %v3449, 0
        %v3844 = vsel %vm2671, %v3450, 0
        %v3845 = vsel %vm2672, %v3451, 0
        %v3846 = vsel %vm2673, %v3838, 0
        %s3847 = scalar_lea.vmem %s19, 384
        %v3848 = vld [vmem:[%s3847] sm:$0xf]
        %v3849 = vld [vmem:[%s3847 + $0x4] sm:$0xf]
        %v3850 = vld [vmem:[%s3847 + $0x8] sm:$0xf]
        %v3851 = vld [vmem:[%s3847 + $0xc] sm:$0xf]
        %v3852 = vld [vmem:[%s3847 + $0x10] sm:$0xf]
        %v3853 = vld [vmem:[%s3847 + $0x14] sm:$0xf]
        %v3854 = vld [vmem:[%s3847 + $0x18] sm:$0xf]
        %v3855 = vld [vmem:[%s3847 + $0x1c] sm:$0xf]
        %v3856 = vld [vmem:[%s3847 + $0x20] sm:$0xf]
        %v3857 = vld [vmem:[%s3847 + $0x24] sm:$0xf]
        %v3858 = vld [vmem:[%s3847 + $0x28] sm:$0xf]
        %v3859 = vld [vmem:[%s3847 + $0x2c] sm:$0xf]
        %v3860 = vld [vmem:[%s3847 + $0x30] sm:$0xf]
        %v3861 = vld [vmem:[%s3847 + $0x34] sm:$0xf]
        %v3862 = vld [vmem:[%s3847 + $0x38] sm:$0xf]
        %v3863 = vld [vmem:[%s3847 + $0x3c] sm:$0xf]
        %v3872 = vunpack.c.l.b16 %v3839
        %v3873 = vunpack.c.l.b16 %v3840
        %v3874 = vunpack.c.l.b16 %v3841
        %v3875 = vunpack.c.l.b16 %v3842
        %v3876 = vunpack.c.l.b16 %v3843
        %v3877 = vunpack.c.l.b16 %v3844
        %v3878 = vunpack.c.l.b16 %v3845
        %v3879 = vunpack.c.l.b16 %v3846
        %v3880 = vpack.c.b16 %v3873, %v3872
        %v3881 = vpack.c.b16 %v3875, %v3874
        %v3882 = vpack.c.b16 %v3877, %v3876
        %v3883 = vpack.c.b16 %v3879, %v3878
        %v3904 = vunpack.c.l.b16 %v3848
        %v3905 = vunpack.c.l.b16 %v3849
        %v3906 = vunpack.c.l.b16 %v3850
        %v3907 = vunpack.c.l.b16 %v3851
        %v3908 = vunpack.c.l.b16 %v3852
        %v3909 = vunpack.c.l.b16 %v3853
        %v3910 = vunpack.c.l.b16 %v3854
        %v3911 = vunpack.c.l.b16 %v3855
        %v3912 = vunpack.c.l.b16 %v3856
        %v3913 = vunpack.c.l.b16 %v3857
        %v3914 = vunpack.c.l.b16 %v3858
        %v3915 = vunpack.c.l.b16 %v3859
        %v3916 = vunpack.c.l.b16 %v3860
        %v3917 = vunpack.c.l.b16 %v3861
        %v3918 = vunpack.c.l.b16 %v3862
        %v3919 = vunpack.c.l.b16 %v3863
        %v3920 = vpack.c.b16 %v3905, %v3904
        %v3921 = vpack.c.b16 %v3907, %v3906
        %v3922 = vpack.c.b16 %v3909, %v3908
        %v3923 = vpack.c.b16 %v3911, %v3910
        %v3924 = vpack.c.b16 %v3913, %v3912
        %v3925 = vpack.c.b16 %v3915, %v3914
        %v3926 = vpack.c.b16 %v3917, %v3916
        %v3927 = vpack.c.b16 %v3919, %v3918
        %3936 = vmatprep.subr.bf16.mxu0 0
        %3937 = vmatpush1.bf16.msra.mxu0 %v3920
        %3938 = vmatprep.subr.bf16.mxu0 0
        %3939 = vmatpush1.bf16.msra.mxu0 %v3921
        %3940 = vmatprep.subr.bf16.mxu0 0
        %3941 = vmatpush1.bf16.msra.mxu0 %v3922
        %3942 = vmatprep.subr.bf16.mxu0 0
        %3943 = vmatpush1.bf16.msra.mxu0 %v3923
        %3944 = vmatprep.subr.bf16.mxu0 0
        %3945 = vmatpush1.bf16.msra.mxu0 %v3924
        %3946 = vmatprep.subr.bf16.mxu0 0
        %3947 = vmatpush1.bf16.msra.mxu0 %v3925
        %3948 = vmatprep.subr.bf16.mxu0 0
        %3949 = vmatpush1.bf16.msra.mxu0 %v3926
        %3950 = vmatprep.subr.bf16.mxu0 0
        %3951 = vmatpush1.bf16.msra.mxu0 %v3927
        %3952 = vmatprep.subr.bf16.mxu0 0
        %3953 = vmatpush1.bf16.msra.mxu0 0
        %3954 = vmatprep.subr.bf16.mxu0 0
        %3955 = vmatpush1.bf16.msra.mxu0 0
        %3956 = vmatprep.subr.bf16.mxu0 0
        %3957 = vmatpush1.bf16.msra.mxu0 0
        %3958 = vmatprep.subr.bf16.mxu0 0
        %3959 = vmatpush1.bf16.msra.mxu0 0
        %3960 = vmatprep.subr.bf16.mxu0 0
        %3961 = vmatpush1.bf16.msra.mxu0 0
        %3962 = vmatprep.subr.bf16.mxu0 0
        %3963 = vmatpush1.bf16.msra.mxu0 0
        %3964 = vmatprep.subr.bf16.mxu0 0
        %3965 = vmatpush1.bf16.msra.mxu0 0
        %3966 = vmatprep.subr.bf16.mxu0 0
        %3967 = vmatpush1.bf16.msra.mxu0 0
        %3968 = vmatprep.mubr.bf16.mxu0 0
        %3969 = vmatmul.mubr.bf16.gmra.mrb[0].mxu0 %v3880
        %v3970 = vpop.f32.mrb[0].mxu0
        %v3971 = vadd.f32 0.0, %v3970
        %v3972 = vpop.f32.mrb[0].mxu0
        %v3973 = vpop.f32.mrb[0].mxu0
        %v3974 = vadd.f32 0.0, %v3973
        %v3975 = vpop.f32.mrb[0].mxu0
        %3976 = vmatprep.mubr.bf16.mxu0 0
        %3977 = vmatmul.mubr.bf16.gmra.mrb[0].mxu0 %v3881
        %v3978 = vpop.f32.mrb[0].mxu0
        %v3979 = vadd.f32 0.0, %v3978
        %v3980 = vpop.f32.mrb[0].mxu0
        %v3981 = vpop.f32.mrb[0].mxu0
        %v3982 = vadd.f32 0.0, %v3981
        %v3983 = vpop.f32.mrb[0].mxu0
        %3984 = vmatprep.mubr.bf16.mxu0 0
        %3985 = vmatmul.mubr.bf16.gmra.mrb[0].mxu0 %v3882
        %v3986 = vpop.f32.mrb[0].mxu0
        %v3987 = vadd.f32 0.0, %v3986
        %v3988 = vpop.f32.mrb[0].mxu0
        %v3989 = vpop.f32.mrb[0].mxu0
        %v3990 = vadd.f32 0.0, %v3989
        %v3991 = vpop.f32.mrb[0].mxu0
        %3992 = vmatprep.mubr.bf16.mxu0 0
        %3993 = vmatmul.mubr.bf16.gmra.mrb[0].mxu0 %v3883
        %v3994 = vpop.f32.mrb[0].mxu0
        %v3995 = vadd.f32 0.0, %v3994
        %v3996 = vpop.f32.mrb[0].mxu0
        %v3997 = vpop.f32.mrb[0].mxu0
        %v3998 = vadd.f32 0.0, %v3997
        %v3999 = vpop.f32.mrb[0].mxu0
        %4000 = vdwg.mxu0
        %v4001 = vadd.f32 %v3830, %v3971
        %v4002 = vadd.f32 %v3831, %v3974
        %v4003 = vadd.f32 %v3832, %v3979
        %v4004 = vadd.f32 %v3833, %v3982
        %v4005 = vadd.f32 %v3834, %v3987
        %v4006 = vadd.f32 %v3835, %v3990
        %v4007 = vadd.f32 %v3836, %v3995
        %v4008 = vadd.f32 %v3837, %v3998
        %v4009 = vld [vmem:[#allocation3 + $0x8] sm:$0xf]
        %v4010 = vld [vmem:[#allocation3 + $0xc] sm:$0xf]
        %v4011 = vld [vmem:[#allocation3 + $0x10] sm:$0xf]
        %v4012 = vld [vmem:[#allocation3 + $0x14] sm:$0xf]
        %v4013 = vld [vmem:[#allocation3 + $0x18] sm:$0xf]
        %v4014 = vld [vmem:[#allocation3 + $0x1c] sm:$0xf]
        %v4015 = vld [vmem:[#allocation3 + $0x20] sm:$0xf]
        %v4016 = vld [vmem:[#allocation3 + $0x24] sm:$0xf]
        %v4017 = vld [vmem:[#allocation3 + $0x28] sm:$0x1]
        %s4018 = scalar_lea.vmem %s19, 448
        %v4019 = vld [vmem:[%s4018] sm:$0xf]
        %v4020 = vld [vmem:[%s4018 + $0x4] sm:$0xf]
        %v4021 = vld [vmem:[%s4018 + $0x8] sm:$0xf]
        %v4022 = vld [vmem:[%s4018 + $0xc] sm:$0xf]
        %v4023 = vld [vmem:[%s4018 + $0x10] sm:$0xf]
        %v4024 = vld [vmem:[%s4018 + $0x14] sm:$0xf]
        %v4025 = vld [vmem:[%s4018 + $0x18] sm:$0xf]
        %v4026 = vld [vmem:[%s4018 + $0x1c] sm:$0xf]
        %v4027 = vld [vmem:[%s4018 + $0x20] sm:$0xf]
        %v4028 = vld [vmem:[%s4018 + $0x24] sm:$0xf]
        %v4029 = vld [vmem:[%s4018 + $0x28] sm:$0xf]
        %v4030 = vld [vmem:[%s4018 + $0x2c] sm:$0xf]
        %v4031 = vld [vmem:[%s4018 + $0x30] sm:$0xf]
        %v4032 = vld [vmem:[%s4018 + $0x34] sm:$0xf]
        %v4033 = vld [vmem:[%s4018 + $0x38] sm:$0xf]
        %v4034 = vld [vmem:[%s4018 + $0x3c] sm:$0xf]
        %v4044 = vunpack.c.l.b16 %v4009
        %v4045 = vunpack.c.l.b16 %v4010
        %v4046 = vunpack.c.l.b16 %v4011
        %v4047 = vunpack.c.l.b16 %v4012
        %v4048 = vunpack.c.l.b16 %v4013
        %v4049 = vunpack.c.l.b16 %v4014
        %v4050 = vunpack.c.l.b16 %v4015
        %v4051 = vunpack.c.l.b16 %v4016
        %v4052 = vunpack.c.l.b16 %v4017
        %v4053 = vpack.c.b16 %v4045, %v4044
        %v4054 = vpack.c.b16 %v4047, %v4046
        %v4055 = vpack.c.b16 %v4049, %v4048
        %v4056 = vpack.c.b16 %v4051, %v4050
        %v4057 = vpack.c.b16 %v4052, %v4052
        %v4059 = vshrl.u32 %v4053, 16
        %v4061 = vshll.u32 %v4053, 16
        %v4063 = vrot.slane %v4061, 1
        %v4064 = vor.u32 %v4059, %v4063
        %v4066 = vshll.u32 %v4054, 16
        %v4068 = vrot.slane %v4066, 1
        %v4069 = vsel %vm2739, %v4064, %v4068
        %v4070 = vshrl.u32 %v4054, 16
        %v4072 = vor.u32 %v4070, %v4068
        %v4074 = vshll.u32 %v4055, 16
        %v4076 = vrot.slane %v4074, 1
        %v4077 = vsel %vm2739, %v4072, %v4076
        %v4078 = vshrl.u32 %v4055, 16
        %v4080 = vor.u32 %v4078, %v4076
        %v4082 = vshll.u32 %v4056, 16
        %v4084 = vrot.slane %v4082, 1
        %v4085 = vsel %vm2739, %v4080, %v4084
        %v4086 = vshrl.u32 %v4056, 16
        %v4088 = vor.u32 %v4086, %v4084
        %v4090 = vshll.u32 %v4057, 16
        %v4092 = vrot.slane %v4090, 1
        %v4093 = vsel %vm2739, %v4088, %v4092
        %v4114 = vunpack.c.l.b16 %v4019
        %v4115 = vunpack.c.l.b16 %v4020
        %v4116 = vunpack.c.l.b16 %v4021
        %v4117 = vunpack.c.l.b16 %v4022
        %v4118 = vunpack.c.l.b16 %v4023
        %v4119 = vunpack.c.l.b16 %v4024
        %v4120 = vunpack.c.l.b16 %v4025
        %v4121 = vunpack.c.l.b16 %v4026
        %v4122 = vunpack.c.l.b16 %v4027
        %v4123 = vunpack.c.l.b16 %v4028
        %v4124 = vunpack.c.l.b16 %v4029
        %v4125 = vunpack.c.l.b16 %v4030
        %v4126 = vunpack.c.l.b16 %v4031
        %v4127 = vunpack.c.l.b16 %v4032
        %v4128 = vunpack.c.l.b16 %v4033
        %v4129 = vunpack.c.l.b16 %v4034
        %v4130 = vpack.c.b16 %v4115, %v4114
        %v4131 = vpack.c.b16 %v4117, %v4116
        %v4132 = vpack.c.b16 %v4119, %v4118
        %v4133 = vpack.c.b16 %v4121, %v4120
        %v4134 = vpack.c.b16 %v4123, %v4122
        %v4135 = vpack.c.b16 %v4125, %v4124
        %v4136 = vpack.c.b16 %v4127, %v4126
        %v4137 = vpack.c.b16 %v4129, %v4128
        %4146 = vmatprep.subr.bf16.mxu0 0
        %4147 = vmatpush1.bf16.msra.mxu0 %v4130
        %4148 = vmatprep.subr.bf16.mxu0 0
        %4149 = vmatpush1.bf16.msra.mxu0 %v4131
        %4150 = vmatprep.subr.bf16.mxu0 0
        %4151 = vmatpush1.bf16.msra.mxu0 %v4132
        %4152 = vmatprep.subr.bf16.mxu0 0
        %4153 = vmatpush1.bf16.msra.mxu0 %v4133
        %4154 = vmatprep.subr.bf16.mxu0 0
        %4155 = vmatpush1.bf16.msra.mxu0 %v4134
        %4156 = vmatprep.subr.bf16.mxu0 0
        %4157 = vmatpush1.bf16.msra.mxu0 %v4135
        %4158 = vmatprep.subr.bf16.mxu0 0
        %4159 = vmatpush1.bf16.msra.mxu0 %v4136
        %4160 = vmatprep.subr.bf16.mxu0 0
        %4161 = vmatpush1.bf16.msra.mxu0 %v4137
        %4162 = vmatprep.subr.bf16.mxu0 0
        %4163 = vmatpush1.bf16.msra.mxu0 0
        %4164 = vmatprep.subr.bf16.mxu0 0
        %4165 = vmatpush1.bf16.msra.mxu0 0
        %4166 = vmatprep.subr.bf16.mxu0 0
        %4167 = vmatpush1.bf16.msra.mxu0 0
        %4168 = vmatprep.subr.bf16.mxu0 0
        %4169 = vmatpush1.bf16.msra.mxu0 0
        %4170 = vmatprep.subr.bf16.mxu0 0
        %4171 = vmatpush1.bf16.msra.mxu0 0
        %4172 = vmatprep.subr.bf16.mxu0 0
        %4173 = vmatpush1.bf16.msra.mxu0 0
        %4174 = vmatprep.subr.bf16.mxu0 0
        %4175 = vmatpush1.bf16.msra.mxu0 0
        %4176 = vmatprep.subr.bf16.mxu0 0
        %4177 = vmatpush1.bf16.msra.mxu0 0
        %4178 = vmatprep.mubr.bf16.mxu0 0
        %4179 = vmatmul.mubr.bf16.gmra.mrb[0].mxu0 %v4069
        %v4180 = vpop.f32.mrb[0].mxu0
        %v4181 = vadd.f32 0.0, %v4180
        %v4182 = vpop.f32.mrb[0].mxu0
        %v4183 = vpop.f32.mrb[0].mxu0
        %v4184 = vadd.f32 0.0, %v4183
        %v4185 = vpop.f32.mrb[0].mxu0
        %4186 = vmatprep.mubr.bf16.mxu0 0
        %4187 = vmatmul.mubr.bf16.gmra.mrb[0].mxu0 %v4077
        %v4188 = vpop.f32.mrb[0].mxu0
        %v4189 = vadd.f32 0.0, %v4188
        %v4190 = vpop.f32.mrb[0].mxu0
        %v4191 = vpop.f32.mrb[0].mxu0
        %v4192 = vadd.f32 0.0, %v4191
        %v4193 = vpop.f32.mrb[0].mxu0
        %4194 = vmatprep.mubr.bf16.mxu0 0
        %4195 = vmatmul.mubr.bf16.gmra.mrb[0].mxu0 %v4085
        %v4196 = vpop.f32.mrb[0].mxu0
        %v4197 = vadd.f32 0.0, %v4196
        %v4198 = vpop.f32.mrb[0].mxu0
        %v4199 = vpop.f32.mrb[0].mxu0
        %v4200 = vadd.f32 0.0, %v4199
        %v4201 = vpop.f32.mrb[0].mxu0
        %4202 = vmatprep.mubr.bf16.mxu0 0
        %4203 = vmatmul.mubr.bf16.gmra.mrb[0].mxu0 %v4093
        %v4204 = vpop.f32.mrb[0].mxu0
        %v4205 = vadd.f32 0.0, %v4204
        %v4206 = vpop.f32.mrb[0].mxu0
        %v4207 = vpop.f32.mrb[0].mxu0
        %v4208 = vadd.f32 0.0, %v4207
        %v4209 = vpop.f32.mrb[0].mxu0
        %4210 = vdwg.mxu0
        %v4211 = vadd.f32 %v4001, %v4181
        %v4212 = vadd.f32 %v4002, %v4184
        %v4213 = vadd.f32 %v4003, %v4189
        %v4214 = vadd.f32 %v4004, %v4192
        %v4215 = vadd.f32 %v4005, %v4197
        %v4216 = vadd.f32 %v4006, %v4200
        %v4217 = vadd.f32 %v4007, %v4205
        %v4218 = vadd.f32 %v4008, %v4208
        %v4219 = vld [vmem:[#allocation3 + $0x8] sm:$0xe]
        %v4220 = vsel %vm3080, %v4219, 0
        %v4221 = vsel %vm3081, %v4010, 0
        %v4222 = vsel %vm3082, %v4011, 0
        %v4223 = vsel %vm3083, %v4012, 0
        %v4224 = vsel %vm3084, %v4013, 0
        %v4225 = vsel %vm3085, %v4014, 0
        %v4226 = vsel %vm3086, %v4015, 0
        %v4227 = vsel %vm3087, %v4016, 0
        %v4228 = vsel %vm3088, %v4017, 0
        %s4229 = scalar_lea.vmem %s19, 512
        %v4230 = vld [vmem:[%s4229] sm:$0xf]
        %v4231 = vld [vmem:[%s4229 + $0x4] sm:$0xf]
        %v4232 = vld [vmem:[%s4229 + $0x8] sm:$0xf]
        %v4233 = vld [vmem:[%s4229 + $0xc] sm:$0xf]
        %v4234 = vld [vmem:[%s4229 + $0x10] sm:$0xf]
        %v4235 = vld [vmem:[%s4229 + $0x14] sm:$0xf]
        %v4236 = vld [vmem:[%s4229 + $0x18] sm:$0xf]
        %v4237 = vld [vmem:[%s4229 + $0x1c] sm:$0xf]
        %v4238 = vld [vmem:[%s4229 + $0x20] sm:$0xf]
        %v4239 = vld [vmem:[%s4229 + $0x24] sm:$0xf]
        %v4240 = vld [vmem:[%s4229 + $0x28] sm:$0xf]
        %v4241 = vld [vmem:[%s4229 + $0x2c] sm:$0xf]
        %v4242 = vld [vmem:[%s4229 + $0x30] sm:$0xf]
        %v4243 = vld [vmem:[%s4229 + $0x34] sm:$0xf]
        %v4244 = vld [vmem:[%s4229 + $0x38] sm:$0xf]
        %v4245 = vld [vmem:[%s4229 + $0x3c] sm:$0xf]
        %v4255 = vunpack.c.l.b16 %v4220
        %v4256 = vunpack.c.l.b16 %v4221
        %v4257 = vunpack.c.l.b16 %v4222
        %v4258 = vunpack.c.l.b16 %v4223
        %v4259 = vunpack.c.l.b16 %v4224
        %v4260 = vunpack.c.l.b16 %v4225
        %v4261 = vunpack.c.l.b16 %v4226
        %v4262 = vunpack.c.l.b16 %v4227
        %v4263 = vunpack.c.l.b16 %v4228
        %v4264 = vpack.c.b16 %v4256, %v4255
        %v4265 = vpack.c.b16 %v4258, %v4257
        %v4266 = vpack.c.b16 %v4260, %v4259
        %v4267 = vpack.c.b16 %v4262, %v4261
        %v4268 = vpack.c.b16 %v4263, %v4263
        %v4269 = vrot.slane %v4264, 1
        %v4270 = vrot.slane %v4265, 1
        %v4271 = vsel %vm3138, %v4269, %v4270
        %v4272 = vrot.slane %v4266, 1
        %v4273 = vsel %vm3138, %v4270, %v4272
        %v4274 = vrot.slane %v4267, 1
        %v4275 = vsel %vm3138, %v4272, %v4274
        %v4276 = vrot.slane %v4268, 1
        %v4277 = vsel %vm3138, %v4274, %v4276
        %v4298 = vunpack.c.l.b16 %v4230
        %v4299 = vunpack.c.l.b16 %v4231
        %v4300 = vunpack.c.l.b16 %v4232
        %v4301 = vunpack.c.l.b16 %v4233
        %v4302 = vunpack.c.l.b16 %v4234
        %v4303 = vunpack.c.l.b16 %v4235
        %v4304 = vunpack.c.l.b16 %v4236
        %v4305 = vunpack.c.l.b16 %v4237
        %v4306 = vunpack.c.l.b16 %v4238
        %v4307 = vunpack.c.l.b16 %v4239
        %v4308 = vunpack.c.l.b16 %v4240
        %v4309 = vunpack.c.l.b16 %v4241
        %v4310 = vunpack.c.l.b16 %v4242
        %v4311 = vunpack.c.l.b16 %v4243
        %v4312 = vunpack.c.l.b16 %v4244
        %v4313 = vunpack.c.l.b16 %v4245
        %v4314 = vpack.c.b16 %v4299, %v4298
        %v4315 = vpack.c.b16 %v4301, %v4300
        %v4316 = vpack.c.b16 %v4303, %v4302
        %v4317 = vpack.c.b16 %v4305, %v4304
        %v4318 = vpack.c.b16 %v4307, %v4306
        %v4319 = vpack.c.b16 %v4309, %v4308
        %v4320 = vpack.c.b16 %v4311, %v4310
        %v4321 = vpack.c.b16 %v4313, %v4312
        %4330 = vmatprep.subr.bf16.mxu0 0
        %4331 = vmatpush1.bf16.msra.mxu0 %v4314
        %4332 = vmatprep.subr.bf16.mxu0 0
        %4333 = vmatpush1.bf16.msra.mxu0 %v4315
        %4334 = vmatprep.subr.bf16.mxu0 0
        %4335 = vmatpush1.bf16.msra.mxu0 %v4316
        %4336 = vmatprep.subr.bf16.mxu0 0
        %4337 = vmatpush1.bf16.msra.mxu0 %v4317
        %4338 = vmatprep.subr.bf16.mxu0 0
        %4339 = vmatpush1.bf16.msra.mxu0 %v4318
        %4340 = vmatprep.subr.bf16.mxu0 0
        %4341 = vmatpush1.bf16.msra.mxu0 %v4319
        %4342 = vmatprep.subr.bf16.mxu0 0
        %4343 = vmatpush1.bf16.msra.mxu0 %v4320
        %4344 = vmatprep.subr.bf16.mxu0 0
        %4345 = vmatpush1.bf16.msra.mxu0 %v4321
        %4346 = vmatprep.subr.bf16.mxu0 0
        %4347 = vmatpush1.bf16.msra.mxu0 0
        %4348 = vmatprep.subr.bf16.mxu0 0
        %4349 = vmatpush1.bf16.msra.mxu0 0
        %4350 = vmatprep.subr.bf16.mxu0 0
        %4351 = vmatpush1.bf16.msra.mxu0 0
        %4352 = vmatprep.subr.bf16.mxu0 0
        %4353 = vmatpush1.bf16.msra.mxu0 0
        %4354 = vmatprep.subr.bf16.mxu0 0
        %4355 = vmatpush1.bf16.msra.mxu0 0
        %4356 = vmatprep.subr.bf16.mxu0 0
        %4357 = vmatpush1.bf16.msra.mxu0 0
        %4358 = vmatprep.subr.bf16.mxu0 0
        %4359 = vmatpush1.bf16.msra.mxu0 0
        %4360 = vmatprep.subr.bf16.mxu0 0
        %4361 = vmatpush1.bf16.msra.mxu0 0
        %4362 = vmatprep.mubr.bf16.mxu0 0
        %4363 = vmatmul.mubr.bf16.gmra.mrb[0].mxu0 %v4271
        %v4364 = vpop.f32.mrb[0].mxu0
        %v4365 = vadd.f32 0.0, %v4364
        %v4366 = vpop.f32.mrb[0].mxu0
        %v4367 = vpop.f32.mrb[0].mxu0
        %v4368 = vadd.f32 0.0, %v4367
        %v4369 = vpop.f32.mrb[0].mxu0
        %4370 = vmatprep.mubr.bf16.mxu0 0
        %4371 = vmatmul.mubr.bf16.gmra.mrb[0].mxu0 %v4273
        %v4372 = vpop.f32.mrb[0].mxu0
        %v4373 = vadd.f32 0.0, %v4372
        %v4374 = vpop.f32.mrb[0].mxu0
        %v4375 = vpop.f32.mrb[0].mxu0
        %v4376 = vadd.f32 0.0, %v4375
        %v4377 = vpop.f32.mrb[0].mxu0
        %4378 = vmatprep.mubr.bf16.mxu0 0
        %4379 = vmatmul.mubr.bf16.gmra.mrb[0].mxu0 %v4275
        %v4380 = vpop.f32.mrb[0].mxu0
        %v4381 = vadd.f32 0.0, %v4380
        %v4382 = vpop.f32.mrb[0].mxu0
        %v4383 = vpop.f32.mrb[0].mxu0
        %v4384 = vadd.f32 0.0, %v4383
        %v4385 = vpop.f32.mrb[0].mxu0
        %4386 = vmatprep.mubr.bf16.mxu0 0
        %4387 = vmatmul.mubr.bf16.gmra.mrb[0].mxu0 %v4277
        %v4388 = vpop.f32.mrb[0].mxu0
        %v4389 = vadd.f32 0.0, %v4388
        %v4390 = vpop.f32.mrb[0].mxu0
        %v4391 = vpop.f32.mrb[0].mxu0
        %v4392 = vadd.f32 0.0, %v4391
        %v4393 = vpop.f32.mrb[0].mxu0
        %4394 = vdwg.mxu0
        %v4395 = vadd.f32 %v4211, %v4365
        %v4396 = vadd.f32 %v4212, %v4368
        %v4397 = vadd.f32 %v4213, %v4373
        %v4398 = vadd.f32 %v4214, %v4376
        %v4399 = vadd.f32 %v4215, %v4381
        %v4400 = vadd.f32 %v4216, %v4384
        %v4401 = vadd.f32 %v4217, %v4389
        %v4402 = vadd.f32 %v4218, %v4392
        %v4403 = vld [vmem:[#allocation14] sm:$0x1]
        %v4405 = vlaneseq
        %v4406 = vshrl.u32 %v4405, 7
        %v4407 = vsub.s32 0, %v4406
        %v4408 = vrot.slane %v4403, %v4407
        %v4410 = vmul.f32 %v4395, %v4408
        %v4411 = vmul.f32 %v4396, %v4408
        %v4412 = vmul.f32 %v4397, %v4408
        %v4413 = vmul.f32 %v4398, %v4408
        %v4414 = vmul.f32 %v4399, %v4408
        %v4415 = vmul.f32 %v4400, %v4408
        %v4416 = vmul.f32 %v4401, %v4408
        %v4417 = vmul.f32 %v4402, %v4408
        %v4418 = vld [vmem:[#allocation16] sm:$0x1]
        %v4420 = vlaneseq
        %v4421 = vshrl.u32 %v4420, 7
        %v4422 = vsub.s32 0, %v4421
        %v4423 = vrot.slane %v4418, %v4422
        %v4425 = vadd.f32 %v4410, %v4423
        %v4426 = vadd.f32 %v4411, %v4423
        %v4427 = vadd.f32 %v4412, %v4423
        %v4428 = vadd.f32 %v4413, %v4423
        %v4429 = vadd.f32 %v4414, %v4423
        %v4430 = vadd.f32 %v4415, %v4423
        %v4431 = vadd.f32 %v4416, %v4423
        %v4432 = vadd.f32 %v4417, %v4423
        %v4433 = vmax.f32 %v4425, 0.0
        %v4434 = vmax.f32 %v4426, 0.0
        %v4435 = vmax.f32 %v4427, 0.0
        %v4436 = vmax.f32 %v4428, 0.0
        %v4437 = vmax.f32 %v4429, 0.0
        %v4438 = vmax.f32 %v4430, 0.0
        %v4439 = vmax.f32 %v4431, 0.0
        %v4440 = vmax.f32 %v4432, 0.0
        %v4441 = vpack.c.bf16 %v4434, %v4433
        %v4442 = vpack.c.bf16 %v4436, %v4435
        %v4443 = vpack.c.bf16 %v4438, %v4437
        %v4444 = vpack.c.bf16 %v4440, %v4439
        %v4445 = vld [vmem:[#allocation17] sm:$0xf]
        %v4446 = vld [vmem:[#allocation17 + $0x4] sm:$0xf]
        %v4447 = vld [vmem:[#allocation17 + $0x8] sm:$0xf]
        %v4448 = vld [vmem:[#allocation17 + $0xc] sm:$0xf]
        %v4449 = vld [vmem:[#allocation17 + $0x10] sm:$0xf]
        %v4450 = vld [vmem:[#allocation17 + $0x14] sm:$0xf]
        %v4451 = vld [vmem:[#allocation17 + $0x18] sm:$0xf]
        %v4452 = vld [vmem:[#allocation17 + $0x1c] sm:$0xf]
        %v4453 = vld [vmem:[#allocation17 + $0x20] sm:$0xf]
        %v4454 = vld [vmem:[#allocation17 + $0x24] sm:$0xf]
        %v4455 = vld [vmem:[#allocation17 + $0x28] sm:$0xf]
        %v4456 = vld [vmem:[#allocation17 + $0x2c] sm:$0xf]
        %v4457 = vld [vmem:[#allocation17 + $0x30] sm:$0xf]
        %v4458 = vld [vmem:[#allocation17 + $0x34] sm:$0xf]
        %v4459 = vld [vmem:[#allocation17 + $0x38] sm:$0xf]
        %v4460 = vld [vmem:[#allocation17 + $0x3c] sm:$0xf]
        %v4477 = vunpack.c.l.b16 %v4445
        %v4478 = vunpack.c.l.b16 %v4446
        %v4479 = vunpack.c.l.b16 %v4447
        %v4480 = vunpack.c.l.b16 %v4448
        %v4481 = vunpack.c.l.b16 %v4449
        %v4482 = vunpack.c.l.b16 %v4450
        %v4483 = vunpack.c.l.b16 %v4451
        %v4484 = vunpack.c.l.b16 %v4452
        %v4485 = vunpack.c.l.b16 %v4453
        %v4486 = vunpack.c.l.b16 %v4454
        %v4487 = vunpack.c.l.b16 %v4455
        %v4488 = vunpack.c.l.b16 %v4456
        %v4489 = vunpack.c.l.b16 %v4457
        %v4490 = vunpack.c.l.b16 %v4458
        %v4491 = vunpack.c.l.b16 %v4459
        %v4492 = vunpack.c.l.b16 %v4460
        %v4493 = vpack.c.b16 %v4478, %v4477
        %v4494 = vpack.c.b16 %v4480, %v4479
        %v4495 = vpack.c.b16 %v4482, %v4481
        %v4496 = vpack.c.b16 %v4484, %v4483
        %v4497 = vpack.c.b16 %v4486, %v4485
        %v4498 = vpack.c.b16 %v4488, %v4487
        %v4499 = vpack.c.b16 %v4490, %v4489
        %v4500 = vpack.c.b16 %v4492, %v4491
        %4509 = vmatprep.subr.bf16.mxu0 0
        %4510 = vmatpush1.bf16.msra.mxu0 %v4493
        %4511 = vmatprep.subr.bf16.mxu0 0
        %4512 = vmatpush1.bf16.msra.mxu0 %v4494
        %4513 = vmatprep.subr.bf16.mxu0 0
        %4514 = vmatpush1.bf16.msra.mxu0 %v4495
        %4515 = vmatprep.subr.bf16.mxu0 0
        %4516 = vmatpush1.bf16.msra.mxu0 %v4496
        %4517 = vmatprep.subr.bf16.mxu0 0
        %4518 = vmatpush1.bf16.msra.mxu0 %v4497
        %4519 = vmatprep.subr.bf16.mxu0 0
        %4520 = vmatpush1.bf16.msra.mxu0 %v4498
        %4521 = vmatprep.subr.bf16.mxu0 0
        %4522 = vmatpush1.bf16.msra.mxu0 %v4499
        %4523 = vmatprep.subr.bf16.mxu0 0
        %4524 = vmatpush1.bf16.msra.mxu0 %v4500
        %4525 = vmatprep.subr.bf16.mxu0 0
        %4526 = vmatpush1.bf16.msra.mxu0 0
        %4527 = vmatprep.subr.bf16.mxu0 0
        %4528 = vmatpush1.bf16.msra.mxu0 0
        %4529 = vmatprep.subr.bf16.mxu0 0
        %4530 = vmatpush1.bf16.msra.mxu0 0
        %4531 = vmatprep.subr.bf16.mxu0 0
        %4532 = vmatpush1.bf16.msra.mxu0 0
        %4533 = vmatprep.subr.bf16.mxu0 0
        %4534 = vmatpush1.bf16.msra.mxu0 0
        %4535 = vmatprep.subr.bf16.mxu0 0
        %4536 = vmatpush1.bf16.msra.mxu0 0
        %4537 = vmatprep.subr.bf16.mxu0 0
        %4538 = vmatpush1.bf16.msra.mxu0 0
        %4539 = vmatprep.subr.bf16.mxu0 0
        %4540 = vmatpush1.bf16.msra.mxu0 0
        %4541 = vmatprep.mubr.bf16.mxu0 0
        %4542 = vmatmul.mubr.bf16.gmra.mrb[0].mxu0 %v4441
        %v4543 = vpop.f32.mrb[0].mxu0
        %v4544 = vadd.f32 0.0, %v4543
        %v4545 = vpop.f32.mrb[0].mxu0
        %v4546 = vpop.f32.mrb[0].mxu0
        %v4547 = vadd.f32 0.0, %v4546
        %v4548 = vpop.f32.mrb[0].mxu0
        %4549 = vmatprep.mubr.bf16.mxu0 0
        %4550 = vmatmul.mubr.bf16.gmra.mrb[0].mxu0 %v4442
        %v4551 = vpop.f32.mrb[0].mxu0
        %v4552 = vadd.f32 0.0, %v4551
        %v4553 = vpop.f32.mrb[0].mxu0
        %v4554 = vpop.f32.mrb[0].mxu0
        %v4555 = vadd.f32 0.0, %v4554
        %v4556 = vpop.f32.mrb[0].mxu0
        %4557 = vmatprep.mubr.bf16.mxu0 0
        %4558 = vmatmul.mubr.bf16.gmra.mrb[0].mxu0 %v4443
        %v4559 = vpop.f32.mrb[0].mxu0
        %v4560 = vadd.f32 0.0, %v4559
        %v4561 = vpop.f32.mrb[0].mxu0
        %v4562 = vpop.f32.mrb[0].mxu0
        %v4563 = vadd.f32 0.0, %v4562
        %v4564 = vpop.f32.mrb[0].mxu0
        %4565 = vmatprep.mubr.bf16.mxu0 0
        %4566 = vmatmul.mubr.bf16.gmra.mrb[0].mxu0 %v4444
        %v4567 = vpop.f32.mrb[0].mxu0
        %v4568 = vadd.f32 0.0, %v4567
        %v4569 = vpop.f32.mrb[0].mxu0
        %v4570 = vpop.f32.mrb[0].mxu0
        %v4571 = vadd.f32 0.0, %v4570
        %v4572 = vpop.f32.mrb[0].mxu0
        %4573 = vdwg.mxu0
        %v4574 = vld [vmem:[#allocation19] sm:$0x1]
        %v4576 = vlaneseq
        %v4577 = vshrl.u32 %v4576, 7
        %v4578 = vsub.s32 0, %v4577
        %v4579 = vrot.slane %v4574, %v4578
        %v4581 = vmul.f32 %v4544, %v4579
        %v4582 = vmul.f32 %v4547, %v4579
        %v4583 = vmul.f32 %v4552, %v4579
        %v4584 = vmul.f32 %v4555, %v4579
        %v4585 = vmul.f32 %v4560, %v4579
        %v4586 = vmul.f32 %v4563, %v4579
        %v4587 = vmul.f32 %v4568, %v4579
        %v4588 = vmul.f32 %v4571, %v4579
        %v4589 = vld [vmem:[#allocation20] sm:$0x1]
        %v4591 = vlaneseq
        %v4592 = vshrl.u32 %v4591, 7
        %v4593 = vsub.s32 0, %v4592
        %v4594 = vrot.slane %v4589, %v4593
        %v4596 = vadd.f32 %v4581, %v4594
        %v4597 = vadd.f32 %v4582, %v4594
        %v4598 = vadd.f32 %v4583, %v4594
        %v4599 = vadd.f32 %v4584, %v4594
        %v4600 = vadd.f32 %v4585, %v4594
        %v4601 = vadd.f32 %v4586, %v4594
        %v4602 = vadd.f32 %v4587, %v4594
        %v4603 = vadd.f32 %v4588, %v4594
        %v4604 = vmax.f32 %v4596, 0.0
        %v4605 = vmax.f32 %v4597, 0.0
        %v4606 = vmax.f32 %v4598, 0.0
        %v4607 = vmax.f32 %v4599, 0.0
        %v4608 = vmax.f32 %v4600, 0.0
        %v4609 = vmax.f32 %v4601, 0.0
        %v4610 = vmax.f32 %v4602, 0.0
        %v4611 = vmax.f32 %v4603, 0.0
        %v4612 = vld [vmem:[#allocation5] sm:$0xff]
        %v4613 = vld [vmem:[#allocation5 + $0x10] sm:$0xff]
        %v4614 = vld [vmem:[#allocation5 + $0x20] sm:$0xff]
        %v4615 = vld [vmem:[#allocation5 + $0x30] sm:$0xff]
        %v4616 = vld [vmem:[#allocation5 + $0x40] sm:$0xff]
        %v4617 = vld [vmem:[#allocation5 + $0x50] sm:$0xff]
        %v4618 = vld [vmem:[#allocation5 + $0x60] sm:$0xff]
        %v4619 = vld [vmem:[#allocation5 + $0x70] sm:$0xff]
        %v4620 = vadd.f32 %v4604, %v4612
        %v4621 = vadd.f32 %v4605, %v4613
        %v4622 = vadd.f32 %v4606, %v4614
        %v4623 = vadd.f32 %v4607, %v4615
        %v4624 = vadd.f32 %v4608, %v4616
        %v4625 = vadd.f32 %v4609, %v4617
        %v4626 = vadd.f32 %v4610, %v4618
        %v4627 = vadd.f32 %v4611, %v4619
        %4628 = vst [vmem:[#allocation4] sm:$0xff] %v4620
        %4629 = vst [vmem:[#allocation4 + $0x8] sm:$0xff] %v4621
        %4630 = vst [vmem:[#allocation4 + $0x10] sm:$0xff] %v4622
        %4631 = vst [vmem:[#allocation4 + $0x18] sm:$0xff] %v4623
        %4632 = vst [vmem:[#allocation4 + $0x20] sm:$0xff] %v4624
        %4633 = vst [vmem:[#allocation4 + $0x28] sm:$0xff] %v4625
        %4634 = vst [vmem:[#allocation4 + $0x30] sm:$0xff] %v4626
        %4635 = vst [vmem:[#allocation4 + $0x38] sm:$0xff] %v4627
        %v4636 = vld [vmem:[#allocation4] ss:$2 sm:$0xf]
        %s4637 = scalar_lea.vmem [#allocation4], 1
        %v4638 = vld [vmem:[%s4637] ss:$2 sm:$0xf]
        %s4639 = scalar_lea.vmem [#allocation4], 8
        %v4640 = vld [vmem:[%s4639] ss:$2 sm:$0xf]
        %s4641 = scalar_lea.vmem [#allocation4], 9
        %v4642 = vld [vmem:[%s4641] ss:$2 sm:$0xf]
        %v4643 = vmax.f32 %v4636, %v4638
        %v4644 = vmax.f32 %v4640, %v4642
        %v4645 = vmax.f32 %v4643, %v4644
        %4646 = vst [vmem:[#allocation4 + $0x40] sm:$0xf] %v4645
        %s4647 = scalar_lea.vmem [#allocation4], 16
        %v4648 = vld [vmem:[%s4647] ss:$2 sm:$0xf]
        %s4649 = scalar_lea.vmem [#allocation4], 17
        %v4650 = vld [vmem:[%s4649] ss:$2 sm:$0xf]
        %s4651 = scalar_lea.vmem [#allocation4], 24
        %v4652 = vld [vmem:[%s4651] ss:$2 sm:$0xf]
        %s4653 = scalar_lea.vmem [#allocation4], 25
        %v4654 = vld [vmem:[%s4653] ss:$2 sm:$0xf]
        %v4655 = vmax.f32 %v4648, %v4650
        %v4656 = vmax.f32 %v4652, %v4654
        %v4657 = vmax.f32 %v4655, %v4656
        %4658 = vst [vmem:[#allocation4 + $0x44] sm:$0xf] %v4657
        %s4659 = scalar_lea.vmem [#allocation4], 32
        %v4660 = vld [vmem:[%s4659] ss:$2 sm:$0xf]
        %s4661 = scalar_lea.vmem [#allocation4], 33
        %v4662 = vld [vmem:[%s4661] ss:$2 sm:$0xf]
        %s4663 = scalar_lea.vmem [#allocation4], 40
        %v4664 = vld [vmem:[%s4663] ss:$2 sm:$0xf]
        %s4665 = scalar_lea.vmem [#allocation4], 41
        %v4666 = vld [vmem:[%s4665] ss:$2 sm:$0xf]
        %v4667 = vmax.f32 %v4660, %v4662
        %v4668 = vmax.f32 %v4664, %v4666
        %v4669 = vmax.f32 %v4667, %v4668
        %4670 = vst [vmem:[#allocation4 + $0x48] sm:$0xf] %v4669
        %s4671 = scalar_lea.vmem [#allocation4], 48
        %v4672 = vld [vmem:[%s4671] ss:$2 sm:$0xf]
        %s4673 = scalar_lea.vmem [#allocation4], 49
        %v4674 = vld [vmem:[%s4673] ss:$2 sm:$0xf]
        %s4675 = scalar_lea.vmem [#allocation4], 56
        %v4676 = vld [vmem:[%s4675] ss:$2 sm:$0xf]
        %s4677 = scalar_lea.vmem [#allocation4], 57
        %v4678 = vld [vmem:[%s4677] ss:$2 sm:$0xf]
        %v4679 = vmax.f32 %v4672, %v4674
        %v4680 = vmax.f32 %v4676, %v4678
        %v4681 = vmax.f32 %v4679, %v4680
        %4682 = vst [vmem:[#allocation4 + $0x4c] sm:$0xf] %v4681
        %v4683 = vld [vmem:[#allocation4 + $0x40] sm:$0xff]
        %v4684 = vld [vmem:[#allocation4 + $0x48] sm:$0xff]
        %4685 = vst [vmem:[#allocation5] sm:$0xff] %v4683
        %4686 = vst [vmem:[#allocation5 + $0x10] sm:$0xff] %v4684
        %v4687 = vpack.c.bf16 %v4684, %v4683
        %v4688 = vld [vmem:[#allocation22] sm:$0xf]
        %v4689 = vld [vmem:[#allocation22 + $0x4] sm:$0xf]
        %v4690 = vld [vmem:[#allocation22 + $0x8] sm:$0xf]
        %v4691 = vld [vmem:[#allocation22 + $0xc] sm:$0xf]
        %v4692 = vld [vmem:[#allocation22 + $0x10] sm:$0xf]
        %v4693 = vld [vmem:[#allocation22 + $0x14] sm:$0xf]
        %v4694 = vld [vmem:[#allocation22 + $0x18] sm:$0xf]
        %v4695 = vld [vmem:[#allocation22 + $0x1c] sm:$0xf]
        %v4696 = vld [vmem:[#allocation22 + $0x20] sm:$0xf]
        %v4697 = vld [vmem:[#allocation22 + $0x24] sm:$0xf]
        %v4698 = vld [vmem:[#allocation22 + $0x28] sm:$0xf]
        %v4699 = vld [vmem:[#allocation22 + $0x2c] sm:$0xf]
        %v4700 = vld [vmem:[#allocation22 + $0x30] sm:$0xf]
        %v4701 = vld [vmem:[#allocation22 + $0x34] sm:$0xf]
        %v4702 = vld [vmem:[#allocation22 + $0x38] sm:$0xf]
        %v4703 = vld [vmem:[#allocation22 + $0x3c] sm:$0xf]
        %v4720 = vunpack.c.l.b16 %v4688
        %v4721 = vunpack.c.l.b16 %v4689
        %v4722 = vunpack.c.l.b16 %v4690
        %v4723 = vunpack.c.l.b16 %v4691
        %v4724 = vunpack.c.l.b16 %v4692
        %v4725 = vunpack.c.l.b16 %v4693
        %v4726 = vunpack.c.l.b16 %v4694
        %v4727 = vunpack.c.l.b16 %v4695
        %v4728 = vunpack.c.l.b16 %v4696
        %v4729 = vunpack.c.l.b16 %v4697
        %v4730 = vunpack.c.l.b16 %v4698
        %v4731 = vunpack.c.l.b16 %v4699
        %v4732 = vunpack.c.l.b16 %v4700
        %v4733 = vunpack.c.l.b16 %v4701
        %v4734 = vunpack.c.l.b16 %v4702
        %v4735 = vunpack.c.l.b16 %v4703
        %v4736 = vpack.c.b16 %v4721, %v4720
        %v4737 = vpack.c.b16 %v4723, %v4722
        %v4738 = vpack.c.b16 %v4725, %v4724
        %v4739 = vpack.c.b16 %v4727, %v4726
        %v4740 = vpack.c.b16 %v4729, %v4728
        %v4741 = vpack.c.b16 %v4731, %v4730
        %v4742 = vpack.c.b16 %v4733, %v4732
        %v4743 = vpack.c.b16 %v4735, %v4734
        %4752 = vmatprep.subr.bf16.mxu0 0
        %4753 = vmatpush1.bf16.msra.mxu0 %v4736
        %4754 = vmatprep.subr.bf16.mxu0 0
        %4755 = vmatpush1.bf16.msra.mxu0 %v4737
        %4756 = vmatprep.subr.bf16.mxu0 0
        %4757 = vmatpush1.bf16.msra.mxu0 %v4738
        %4758 = vmatprep.subr.bf16.mxu0 0
        %4759 = vmatpush1.bf16.msra.mxu0 %v4739
        %4760 = vmatprep.subr.bf16.mxu0 0
        %4761 = vmatpush1.bf16.msra.mxu0 %v4740
        %4762 = vmatprep.subr.bf16.mxu0 0
        %4763 = vmatpush1.bf16.msra.mxu0 %v4741
        %4764 = vmatprep.subr.bf16.mxu0 0
        %4765 = vmatpush1.bf16.msra.mxu0 %v4742
        %4766 = vmatprep.subr.bf16.mxu0 0
        %4767 = vmatpush1.bf16.msra.mxu0 %v4743
        %4768 = vmatprep.subr.bf16.mxu0 0
        %4769 = vmatpush1.bf16.msra.mxu0 0
        %4770 = vmatprep.subr.bf16.mxu0 0
        %4771 = vmatpush1.bf16.msra.mxu0 0
        %4772 = vmatprep.subr.bf16.mxu0 0
        %4773 = vmatpush1.bf16.msra.mxu0 0
        %4774 = vmatprep.subr.bf16.mxu0 0
        %4775 = vmatpush1.bf16.msra.mxu0 0
        %4776 = vmatprep.subr.bf16.mxu0 0
        %4777 = vmatpush1.bf16.msra.mxu0 0
        %4778 = vmatprep.subr.bf16.mxu0 0
        %4779 = vmatpush1.bf16.msra.mxu0 0
        %4780 = vmatprep.subr.bf16.mxu0 0
        %4781 = vmatpush1.bf16.msra.mxu0 0
        %4782 = vmatprep.subr.bf16.mxu0 0
        %4783 = vmatpush1.bf16.msra.mxu0 0
        %4784 = vmatprep.mubr.bf16.mxu0 0
        %4785 = vmatmul.mubr.bf16.gmra.mrb[0].mxu0 %v4687
        %v4786 = vpop.f32.mrb[0].mxu0
        %v4787 = vadd.f32 0.0, %v4786
        %v4788 = vpop.f32.mrb[0].mxu0
        %v4789 = vpop.f32.mrb[0].mxu0
        %v4790 = vadd.f32 0.0, %v4789
        %v4791 = vpop.f32.mrb[0].mxu0
        %4792 = vdwg.mxu0
        %v4793 = vld [vmem:[#allocation23] sm:$0x1]
        %v4795 = vlaneseq
        %v4796 = vshrl.u32 %v4795, 7
        %v4797 = vsub.s32 0, %v4796
        %v4798 = vrot.slane %v4793, %v4797
        %v4800 = vmul.f32 %v4787, %v4798
        %v4801 = vmul.f32 %v4790, %v4798
        %v4802 = vld [vmem:[#allocation25] sm:$0x1]
        %v4804 = vlaneseq
        %v4805 = vshrl.u32 %v4804, 7
        %v4806 = vsub.s32 0, %v4805
        %v4807 = vrot.slane %v4802, %v4806
        %v4809 = vadd.f32 %v4800, %v4807
        %v4810 = vadd.f32 %v4801, %v4807
        %v4811 = vmax.f32 %v4809, 0.0
        %v4812 = vmax.f32 %v4810, 0.0
        %vm4813 = vcmask 1042432
        %vm4814 = vsmask.f32 2304
        %vm4815 = vmand %vm4813, %vm4814
        %v4816 = vld [vmem:[#allocation3] sm:$0x7]
        %v4817 = vsel %vm4815, 0, %v4816
        %4818 = vst [vmem:[#allocation3] sm:$0x7] %v4817
        %v4819 = vpack.c.bf16 %v4812, %v4811
        %v4821 = vunpack.c.l.b16 %v4819
        %v4822 = vunpack.c.h.b16 %v4819
        %v4823 = vpack.c.b16 %v4821, %v4821
        %v4824 = vpack.c.b16 %v4822, %v4822
        %vm4825 = vsmask.f32 6416
        %vm4826 = vmor %vm4814, %vm4825
        %v4828 = vshrl.u32 %v4823, 16
        %v4830 = vrot.slane %v4828, 5
        %v4831 = vshll.u32 %v4823, 16
        %v4833 = vrot.slane %v4831, 6
        %v4834 = vor.u32 %v4830, %v4833
        %v4835 = vrot.slane %v4834, 4
        %v4837 = vshrl.u32 %v4824, 16
        %v4839 = vrot.slane %v4837, 5
        %v4840 = vshll.u32 %v4824, 16
        %v4842 = vrot.slane %v4840, 6
        %v4843 = vor.u32 %v4839, %v4842
        %v4844 = vsel %vm4826, %v4835, %v4843
        %v4845 = vrot.slane %v4843, 4
        %vm4849 = vcmask 1043458
        %vm4850 = vsmask.f32 7946
        %vm4851 = vmand %vm4849, %vm4850
        %v4852 = vld [vmem:[#allocation3] sm:$0xc]
        %v4853 = vsel %vm4851, %v4834, %v4852
        %4854 = vst [vmem:[#allocation3] sm:$0xc] %v4853
        %4855 = vst [vmem:[#allocation3 + $0x4] sm:$0xf] %v4844
        %v4856 = vld [vmem:[#allocation3 + $0x8] sm:$0x7]
        %v4857 = vsel %vm4815, %v4845, %v4856
        %4858 = vst [vmem:[#allocation3 + $0x8] sm:$0x7] %v4857
        %v4859 = vld [vmem:[#allocation3 + $0x8] sm:$0xc]
        %v4860 = vsel %vm4851, 0, %v4859
        %4861 = vst [vmem:[#allocation3 + $0x8] sm:$0xc] %v4860
        %4862 = vst [vmem:[#allocation3 + $0xc] sm:$0x1] 0
        %vm4863 = vcmp.lt.s32.totalorder %v2546, 0
        %v4864 = vsub.s32 0, %v2546
        %v4865 = vsel %vm4863, %v4864, %v2546
        %v4866 = vshrl.u32 %v4865, 2
        %v4867 = vand.u32 %v4865, 3
        %v4868 = vsub.s32 0, %v4867
        %v4869 = vsel %vm4863, %v4868, %v4867
        %vm4870 = vcmp.lt.s32.totalorder %v2547, 0
        %v4871 = vsub.s32 0, %v2547
        %v4872 = vsel %vm4870, %v4871, %v2547
        %v4873 = vshrl.u32 %v4872, 2
        %v4874 = vand.u32 %v4872, 3
        %v4875 = vsub.s32 0, %v4874
        %v4876 = vsel %vm4870, %v4875, %v4874
        %vm4877 = vcmp.ne.s32.totalorder %v4869, 0
        %vm4878 = vcmp.ne.s32.totalorder %v4876, 0
        %vm4879 = vcmp.lt.s32.totalorder %v4869, 0
        %vm4880 = vcmp.lt.s32.totalorder %v4876, 0
        %vm4881 = vmand %vm4879, %vm4877
        %vm4882 = vmand %vm4880, %vm4878
        %v4883 = vadd.s32 %v4869, 4
        %v4884 = vadd.s32 %v4876, 4
        %v4885 = vsel %vm4881, %v4883, %v4869
        %v4886 = vsel %vm4882, %v4884, %v4876
        %v4887 = vld [vmem:[#allocation3] sm:$0xf]
        %v4888 = vld [vmem:[#allocation3 + $0x4] sm:$0xf]
        %vm4889 = vcmp.ge.s32.totalorder %v4885, 1
        %vm4890 = vcmp.ge.s32.totalorder %v4886, 1
        %vm4891 = vmpackc.low %vm4889, %vm4889
        %vm4892 = vmpackc.low %vm4890, %vm4890
        %v4893 = vsel %vm4891, %v4887, 0
        %v4894 = vsel %vm4892, %v4888, 0
        %v4895 = vld [vmem:[%s37] sm:$0xf]
        %v4896 = vld [vmem:[%s37 + $0x4] sm:$0xf]
        %v4897 = vld [vmem:[%s37 + $0x8] sm:$0xf]
        %v4898 = vld [vmem:[%s37 + $0xc] sm:$0xf]
        %v4899 = vld [vmem:[%s37 + $0x10] sm:$0xf]
        %v4900 = vld [vmem:[%s37 + $0x14] sm:$0xf]
        %v4901 = vld [vmem:[%s37 + $0x18] sm:$0xf]
        %v4902 = vld [vmem:[%s37 + $0x1c] sm:$0xf]
        %v4903 = vld [vmem:[%s37 + $0x20] sm:$0xf]
        %v4904 = vld [vmem:[%s37 + $0x24] sm:$0xf]
        %v4905 = vld [vmem:[%s37 + $0x28] sm:$0xf]
        %v4906 = vld [vmem:[%s37 + $0x2c] sm:$0xf]
        %v4907 = vld [vmem:[%s37 + $0x30] sm:$0xf]
        %v4908 = vld [vmem:[%s37 + $0x34] sm:$0xf]
        %v4909 = vld [vmem:[%s37 + $0x38] sm:$0xf]
        %v4910 = vld [vmem:[%s37 + $0x3c] sm:$0xf]
        %v4911 = vld [vmem:[#allocation3 + $0x8] sm:$0x1]
        %s4912 = scalar_lea.vmem %s37, 64
        %v4913 = vld [vmem:[%s4912] sm:$0xf]
        %v4914 = vld [vmem:[%s4912 + $0x4] sm:$0xf]
        %v4915 = vld [vmem:[%s4912 + $0x8] sm:$0xf]
        %v4916 = vld [vmem:[%s4912 + $0xc] sm:$0xf]
        %v4917 = vld [vmem:[%s4912 + $0x10] sm:$0xf]
        %v4918 = vld [vmem:[%s4912 + $0x14] sm:$0xf]
        %v4919 = vld [vmem:[%s4912 + $0x18] sm:$0xf]
        %v4920 = vld [vmem:[%s4912 + $0x1c] sm:$0xf]
        %v4921 = vld [vmem:[%s4912 + $0x20] sm:$0xf]
        %v4922 = vld [vmem:[%s4912 + $0x24] sm:$0xf]
        %v4923 = vld [vmem:[%s4912 + $0x28] sm:$0xf]
        %v4924 = vld [vmem:[%s4912 + $0x2c] sm:$0xf]
        %v4925 = vld [vmem:[%s4912 + $0x30] sm:$0xf]
        %v4926 = vld [vmem:[%s4912 + $0x34] sm:$0xf]
        %v4927 = vld [vmem:[%s4912 + $0x38] sm:$0xf]
        %v4928 = vld [vmem:[%s4912 + $0x3c] sm:$0xf]
        %v4932 = vunpack.c.l.b16 %v4887
        %v4933 = vunpack.c.l.b16 %v4888
        %v4934 = vunpack.c.l.b16 %v4911
        %v4935 = vpack.c.b16 %v4933, %v4932
        %v4936 = vpack.c.b16 %v4934, %v4934
        %v4938 = vshrl.u32 %v4935, 16
        %v4940 = vshll.u32 %v4935, 16
        %v4942 = vrot.slane %v4940, 1
        %v4943 = vor.u32 %v4938, %v4942
        %v4945 = vshll.u32 %v4936, 16
        %v4947 = vrot.slane %v4945, 1
        %v4948 = vsel %vm2739, %v4943, %v4947
        %v4966 = vunpack.c.l.b16 %v4913
        %v4967 = vunpack.c.l.b16 %v4914
        %v4968 = vunpack.c.l.b16 %v4915
        %v4969 = vunpack.c.l.b16 %v4916
        %v4970 = vunpack.c.l.b16 %v4917
        %v4971 = vunpack.c.l.b16 %v4918
        %v4972 = vunpack.c.l.b16 %v4919
        %v4973 = vunpack.c.l.b16 %v4920
        %v4974 = vunpack.c.l.b16 %v4921
        %v4975 = vunpack.c.l.b16 %v4922
        %v4976 = vunpack.c.l.b16 %v4923
        %v4977 = vunpack.c.l.b16 %v4924
        %v4978 = vunpack.c.l.b16 %v4925
        %v4979 = vunpack.c.l.b16 %v4926
        %v4980 = vunpack.c.l.b16 %v4927
        %v4981 = vunpack.c.l.b16 %v4928
        %v4982 = vpack.c.b16 %v4967, %v4966
        %v4983 = vpack.c.b16 %v4969, %v4968
        %v4984 = vpack.c.b16 %v4971, %v4970
        %v4985 = vpack.c.b16 %v4973, %v4972
        %v4986 = vpack.c.b16 %v4975, %v4974
        %v4987 = vpack.c.b16 %v4977, %v4976
        %v4988 = vpack.c.b16 %v4979, %v4978
        %v4989 = vpack.c.b16 %v4981, %v4980
        %4998 = vmatprep.subr.bf16.mxu0 0
        %4999 = vmatpush1.bf16.msra.mxu0 %v4982
        %5000 = vmatprep.subr.bf16.mxu0 0
        %5001 = vmatpush1.bf16.msra.mxu0 %v4983
        %5002 = vmatprep.subr.bf16.mxu0 0
        %5003 = vmatpush1.bf16.msra.mxu0 %v4984
        %5004 = vmatprep.subr.bf16.mxu0 0
        %5005 = vmatpush1.bf16.msra.mxu0 %v4985
        %5006 = vmatprep.subr.bf16.mxu0 0
        %5007 = vmatpush1.bf16.msra.mxu0 %v4986
        %5008 = vmatprep.subr.bf16.mxu0 0
        %5009 = vmatpush1.bf16.msra.mxu0 %v4987
        %5010 = vmatprep.subr.bf16.mxu0 0
        %5011 = vmatpush1.bf16.msra.mxu0 %v4988
        %5012 = vmatprep.subr.bf16.mxu0 0
        %5013 = vmatpush1.bf16.msra.mxu0 %v4989
        %5014 = vmatprep.subr.bf16.mxu0 0
        %5015 = vmatpush1.bf16.msra.mxu0 0
        %5016 = vmatprep.subr.bf16.mxu0 0
        %5017 = vmatpush1.bf16.msra.mxu0 0
        %5018 = vmatprep.subr.bf16.mxu0 0
        %5019 = vmatpush1.bf16.msra.mxu0 0
        %5020 = vmatprep.subr.bf16.mxu0 0
        %5021 = vmatpush1.bf16.msra.mxu0 0
        %5022 = vmatprep.subr.bf16.mxu0 0
        %5023 = vmatpush1.bf16.msra.mxu0 0
        %5024 = vmatprep.subr.bf16.mxu0 0
        %5025 = vmatpush1.bf16.msra.mxu0 0
        %5026 = vmatprep.subr.bf16.mxu0 0
        %5027 = vmatpush1.bf16.msra.mxu0 0
        %5028 = vmatprep.subr.bf16.mxu0 0
        %5029 = vmatpush1.bf16.msra.mxu0 0
        %5030 = vmatprep.mubr.bf16.mxu0 0
        %5031 = vmatmul.mubr.bf16.gmra.mrb[0].mxu0 %v4948
        %v5032 = vpop.f32.mrb[0].mxu0
        %v5033 = vadd.f32 0.0, %v5032
        %v5034 = vpop.f32.mrb[0].mxu0
        %v5035 = vpop.f32.mrb[0].mxu0
        %v5036 = vadd.f32 0.0, %v5035
        %v5037 = vpop.f32.mrb[0].mxu0
        %5038 = vdwg.mxu0
        %v5041 = vunpack.c.l.b16 %v4893
        %v5042 = vunpack.c.l.b16 %v4894
        %v5043 = vpack.c.b16 %v5042, %v5041
        %v5061 = vunpack.c.l.b16 %v4895
        %v5062 = vunpack.c.l.b16 %v4896
        %v5063 = vunpack.c.l.b16 %v4897
        %v5064 = vunpack.c.l.b16 %v4898
        %v5065 = vunpack.c.l.b16 %v4899
        %v5066 = vunpack.c.l.b16 %v4900
        %v5067 = vunpack.c.l.b16 %v4901
        %v5068 = vunpack.c.l.b16 %v4902
        %v5069 = vunpack.c.l.b16 %v4903
        %v5070 = vunpack.c.l.b16 %v4904
        %v5071 = vunpack.c.l.b16 %v4905
        %v5072 = vunpack.c.l.b16 %v4906
        %v5073 = vunpack.c.l.b16 %v4907
        %v5074 = vunpack.c.l.b16 %v4908
        %v5075 = vunpack.c.l.b16 %v4909
        %v5076 = vunpack.c.l.b16 %v4910
        %v5077 = vpack.c.b16 %v5062, %v5061
        %v5078 = vpack.c.b16 %v5064, %v5063
        %v5079 = vpack.c.b16 %v5066, %v5065
        %v5080 = vpack.c.b16 %v5068, %v5067
        %v5081 = vpack.c.b16 %v5070, %v5069
        %v5082 = vpack.c.b16 %v5072, %v5071
        %v5083 = vpack.c.b16 %v5074, %v5073
        %v5084 = vpack.c.b16 %v5076, %v5075
        %5093 = vmatprep.subr.bf16.mxu0 0
        %5094 = vmatpush1.bf16.msra.mxu0 %v5077
        %5095 = vmatprep.subr.bf16.mxu0 0
        %5096 = vmatpush1.bf16.msra.mxu0 %v5078
        %5097 = vmatprep.subr.bf16.mxu0 0
        %5098 = vmatpush1.bf16.msra.mxu0 %v5079
        %5099 = vmatprep.subr.bf16.mxu0 0
        %5100 = vmatpush1.bf16.msra.mxu0 %v5080
        %5101 = vmatprep.subr.bf16.mxu0 0
        %5102 = vmatpush1.bf16.msra.mxu0 %v5081
        %5103 = vmatprep.subr.bf16.mxu0 0
        %5104 = vmatpush1.bf16.msra.mxu0 %v5082
        %5105 = vmatprep.subr.bf16.mxu0 0
        %5106 = vmatpush1.bf16.msra.mxu0 %v5083
        %5107 = vmatprep.subr.bf16.mxu0 0
        %5108 = vmatpush1.bf16.msra.mxu0 %v5084
        %5109 = vmatprep.subr.bf16.mxu0 0
        %5110 = vmatpush1.bf16.msra.mxu0 0
        %5111 = vmatprep.subr.bf16.mxu0 0
        %5112 = vmatpush1.bf16.msra.mxu0 0
        %5113 = vmatprep.subr.bf16.mxu0 0
        %5114 = vmatpush1.bf16.msra.mxu0 0
        %5115 = vmatprep.subr.bf16.mxu0 0
        %5116 = vmatpush1.bf16.msra.mxu0 0
        %5117 = vmatprep.subr.bf16.mxu0 0
        %5118 = vmatpush1.bf16.msra.mxu0 0
        %5119 = vmatprep.subr.bf16.mxu0 0
        %5120 = vmatpush1.bf16.msra.mxu0 0
        %5121 = vmatprep.subr.bf16.mxu0 0
        %5122 = vmatpush1.bf16.msra.mxu0 0
        %5123 = vmatprep.subr.bf16.mxu0 0
        %5124 = vmatpush1.bf16.msra.mxu0 0
        %5125 = vmatprep.mubr.bf16.mxu0 0
        %5126 = vmatmul.mubr.bf16.gmra.mrb[0].mxu0 %v5043
        %v5127 = vpop.f32.mrb[0].mxu0
        %v5128 = vadd.f32 %v5033, %v5127
        %v5129 = vpop.f32.mrb[0].mxu0
        %v5130 = vpop.f32.mrb[0].mxu0
        %v5131 = vadd.f32 %v5036, %v5130
        %v5132 = vpop.f32.mrb[0].mxu0
        %5133 = vdwg.mxu0
        %v5134 = vld [vmem:[#allocation3] sm:$0xe]
        %vm5135 = vcmp.le.s32.totalorder %v4885, 2
        %vm5136 = vcmp.le.s32.totalorder %v4886, 2
        %vm5137 = vmpackc.low %vm5135, %vm5135
        %vm5138 = vmpackc.low %vm5136, %vm5136
        %v5139 = vsel %vm5137, 65537, 0
        %v5140 = vsel %vm5138, 65537, 0
        %v5141 = vrot.slane %v5139, 7
        %v5142 = vrot.slane %v5141, 4
        %v5143 = vrot.slane %v5140, 7
        %v5144 = vsel %vm3056, %v5142, %v5143
        %v5145 = vrot.slane %v5143, 4
        %vm5146 = vcmp.ne.s16.totalorder %v5141, 0
        %vm5147 = vcmp.ne.s16.totalorder %v5144, 0
        %vm5148 = vcmp.ne.s16.totalorder %v5145, 0
        %v5149 = vsel %vm5146, %v5134, 0
        %v5150 = vsel %vm5147, %v4888, 0
        %v5151 = vsel %vm5148, %v4911, 0
        %s5152 = scalar_lea.vmem %s37, 128
        %v5153 = vld [vmem:[%s5152] sm:$0xf]
        %v5154 = vld [vmem:[%s5152 + $0x4] sm:$0xf]
        %v5155 = vld [vmem:[%s5152 + $0x8] sm:$0xf]
        %v5156 = vld [vmem:[%s5152 + $0xc] sm:$0xf]
        %v5157 = vld [vmem:[%s5152 + $0x10] sm:$0xf]
        %v5158 = vld [vmem:[%s5152 + $0x14] sm:$0xf]
        %v5159 = vld [vmem:[%s5152 + $0x18] sm:$0xf]
        %v5160 = vld [vmem:[%s5152 + $0x1c] sm:$0xf]
        %v5161 = vld [vmem:[%s5152 + $0x20] sm:$0xf]
        %v5162 = vld [vmem:[%s5152 + $0x24] sm:$0xf]
        %v5163 = vld [vmem:[%s5152 + $0x28] sm:$0xf]
        %v5164 = vld [vmem:[%s5152 + $0x2c] sm:$0xf]
        %v5165 = vld [vmem:[%s5152 + $0x30] sm:$0xf]
        %v5166 = vld [vmem:[%s5152 + $0x34] sm:$0xf]
        %v5167 = vld [vmem:[%s5152 + $0x38] sm:$0xf]
        %v5168 = vld [vmem:[%s5152 + $0x3c] sm:$0xf]
        %v5172 = vunpack.c.l.b16 %v5149
        %v5173 = vunpack.c.l.b16 %v5150
        %v5174 = vunpack.c.l.b16 %v5151
        %v5175 = vpack.c.b16 %v5173, %v5172
        %v5176 = vpack.c.b16 %v5174, %v5174
        %v5177 = vrot.slane %v5175, 1
        %v5178 = vrot.slane %v5176, 1
        %v5179 = vsel %vm3138, %v5177, %v5178
        %v5197 = vunpack.c.l.b16 %v5153
        %v5198 = vunpack.c.l.b16 %v5154
        %v5199 = vunpack.c.l.b16 %v5155
        %v5200 = vunpack.c.l.b16 %v5156
        %v5201 = vunpack.c.l.b16 %v5157
        %v5202 = vunpack.c.l.b16 %v5158
        %v5203 = vunpack.c.l.b16 %v5159
        %v5204 = vunpack.c.l.b16 %v5160
        %v5205 = vunpack.c.l.b16 %v5161
        %v5206 = vunpack.c.l.b16 %v5162
        %v5207 = vunpack.c.l.b16 %v5163
        %v5208 = vunpack.c.l.b16 %v5164
        %v5209 = vunpack.c.l.b16 %v5165
        %v5210 = vunpack.c.l.b16 %v5166
        %v5211 = vunpack.c.l.b16 %v5167
        %v5212 = vunpack.c.l.b16 %v5168
        %v5213 = vpack.c.b16 %v5198, %v5197
        %v5214 = vpack.c.b16 %v5200, %v5199
        %v5215 = vpack.c.b16 %v5202, %v5201
        %v5216 = vpack.c.b16 %v5204, %v5203
        %v5217 = vpack.c.b16 %v5206, %v5205
        %v5218 = vpack.c.b16 %v5208, %v5207
        %v5219 = vpack.c.b16 %v5210, %v5209
        %v5220 = vpack.c.b16 %v5212, %v5211
        %5229 = vmatprep.subr.bf16.mxu0 0
        %5230 = vmatpush1.bf16.msra.mxu0 %v5213
        %5231 = vmatprep.subr.bf16.mxu0 0
        %5232 = vmatpush1.bf16.msra.mxu0 %v5214
        %5233 = vmatprep.subr.bf16.mxu0 0
        %5234 = vmatpush1.bf16.msra.mxu0 %v5215
        %5235 = vmatprep.subr.bf16.mxu0 0
        %5236 = vmatpush1.bf16.msra.mxu0 %v5216
        %5237 = vmatprep.subr.bf16.mxu0 0
        %5238 = vmatpush1.bf16.msra.mxu0 %v5217
        %5239 = vmatprep.subr.bf16.mxu0 0
        %5240 = vmatpush1.bf16.msra.mxu0 %v5218
        %5241 = vmatprep.subr.bf16.mxu0 0
        %5242 = vmatpush1.bf16.msra.mxu0 %v5219
        %5243 = vmatprep.subr.bf16.mxu0 0
        %5244 = vmatpush1.bf16.msra.mxu0 %v5220
        %5245 = vmatprep.subr.bf16.mxu0 0
        %5246 = vmatpush1.bf16.msra.mxu0 0
        %5247 = vmatprep.subr.bf16.mxu0 0
        %5248 = vmatpush1.bf16.msra.mxu0 0
        %5249 = vmatprep.subr.bf16.mxu0 0
        %5250 = vmatpush1.bf16.msra.mxu0 0
        %5251 = vmatprep.subr.bf16.mxu0 0
        %5252 = vmatpush1.bf16.msra.mxu0 0
        %5253 = vmatprep.subr.bf16.mxu0 0
        %5254 = vmatpush1.bf16.msra.mxu0 0
        %5255 = vmatprep.subr.bf16.mxu0 0
        %5256 = vmatpush1.bf16.msra.mxu0 0
        %5257 = vmatprep.subr.bf16.mxu0 0
        %5258 = vmatpush1.bf16.msra.mxu0 0
        %5259 = vmatprep.subr.bf16.mxu0 0
        %5260 = vmatpush1.bf16.msra.mxu0 0
        %5261 = vmatprep.mubr.bf16.mxu0 0
        %5262 = vmatmul.mubr.bf16.gmra.mrb[0].mxu0 %v5179
        %v5263 = vpop.f32.mrb[0].mxu0
        %v5264 = vadd.f32 0.0, %v5263
        %v5265 = vpop.f32.mrb[0].mxu0
        %v5266 = vpop.f32.mrb[0].mxu0
        %v5267 = vadd.f32 0.0, %v5266
        %v5268 = vpop.f32.mrb[0].mxu0
        %5269 = vdwg.mxu0
        %v5270 = vadd.f32 %v5128, %v5264
        %v5271 = vadd.f32 %v5131, %v5267
        %v5272 = vld [vmem:[#allocation3] sm:$0xc]
        %v5273 = vld [vmem:[#allocation3 + $0x8] sm:$0x3]
        %v5274 = vsel %vm4891, 65537, 0
        %v5275 = vsel %vm4892, 65537, 0
        %vm5276 = vcmask 1041408
        %vm5277 = vcmask 1045508
        %vm5278 = vmor %vm5276, %vm5277
        %v5279 = vrot.slane %v5274, 6
        %v5280 = vrot.slane %v5279, 4
        %v5281 = vrot.slane %v5275, 6
        %v5282 = vsel %vm5278, %v5280, %v5281
        %v5283 = vrot.slane %v5281, 4
        %vm5284 = vcmp.ne.s16.totalorder %v5279, 0
        %vm5285 = vcmp.ne.s16.totalorder %v5282, 0
        %vm5286 = vcmp.ne.s16.totalorder %v5283, 0
        %v5287 = vsel %vm5284, %v5272, 0
        %v5288 = vsel %vm5285, %v4888, 0
        %v5289 = vsel %vm5286, %v5273, 0
        %s5290 = scalar_lea.vmem %s37, 192
        %v5291 = vld [vmem:[%s5290] sm:$0xf]
        %v5292 = vld [vmem:[%s5290 + $0x4] sm:$0xf]
        %v5293 = vld [vmem:[%s5290 + $0x8] sm:$0xf]
        %v5294 = vld [vmem:[%s5290 + $0xc] sm:$0xf]
        %v5295 = vld [vmem:[%s5290 + $0x10] sm:$0xf]
        %v5296 = vld [vmem:[%s5290 + $0x14] sm:$0xf]
        %v5297 = vld [vmem:[%s5290 + $0x18] sm:$0xf]
        %v5298 = vld [vmem:[%s5290 + $0x1c] sm:$0xf]
        %v5299 = vld [vmem:[%s5290 + $0x20] sm:$0xf]
        %v5300 = vld [vmem:[%s5290 + $0x24] sm:$0xf]
        %v5301 = vld [vmem:[%s5290 + $0x28] sm:$0xf]
        %v5302 = vld [vmem:[%s5290 + $0x2c] sm:$0xf]
        %v5303 = vld [vmem:[%s5290 + $0x30] sm:$0xf]
        %v5304 = vld [vmem:[%s5290 + $0x34] sm:$0xf]
        %v5305 = vld [vmem:[%s5290 + $0x38] sm:$0xf]
        %v5306 = vld [vmem:[%s5290 + $0x3c] sm:$0xf]
        %v5310 = vunpack.c.l.b16 %v5287
        %v5311 = vunpack.c.l.b16 %v5288
        %v5312 = vunpack.c.l.b16 %v5289
        %v5313 = vpack.c.b16 %v5311, %v5310
        %v5314 = vpack.c.b16 %v5312, %v5312
        %vm5315 = vcmask 1045504
        %v5316 = vrot.slane %v5313, 2
        %v5317 = vrot.slane %v5314, 2
        %v5318 = vsel %vm5315, %v5316, %v5317
        %v5336 = vunpack.c.l.b16 %v5291
        %v5337 = vunpack.c.l.b16 %v5292
        %v5338 = vunpack.c.l.b16 %v5293
        %v5339 = vunpack.c.l.b16 %v5294
        %v5340 = vunpack.c.l.b16 %v5295
        %v5341 = vunpack.c.l.b16 %v5296
        %v5342 = vunpack.c.l.b16 %v5297
        %v5343 = vunpack.c.l.b16 %v5298
        %v5344 = vunpack.c.l.b16 %v5299
        %v5345 = vunpack.c.l.b16 %v5300
        %v5346 = vunpack.c.l.b16 %v5301
        %v5347 = vunpack.c.l.b16 %v5302
        %v5348 = vunpack.c.l.b16 %v5303
        %v5349 = vunpack.c.l.b16 %v5304
        %v5350 = vunpack.c.l.b16 %v5305
        %v5351 = vunpack.c.l.b16 %v5306
        %v5352 = vpack.c.b16 %v5337, %v5336
        %v5353 = vpack.c.b16 %v5339, %v5338
        %v5354 = vpack.c.b16 %v5341, %v5340
        %v5355 = vpack.c.b16 %v5343, %v5342
        %v5356 = vpack.c.b16 %v5345, %v5344
        %v5357 = vpack.c.b16 %v5347, %v5346
        %v5358 = vpack.c.b16 %v5349, %v5348
        %v5359 = vpack.c.b16 %v5351, %v5350
        %5368 = vmatprep.subr.bf16.mxu0 0
        %5369 = vmatpush1.bf16.msra.mxu0 %v5352
        %5370 = vmatprep.subr.bf16.mxu0 0
        %5371 = vmatpush1.bf16.msra.mxu0 %v5353
        %5372 = vmatprep.subr.bf16.mxu0 0
        %5373 = vmatpush1.bf16.msra.mxu0 %v5354
        %5374 = vmatprep.subr.bf16.mxu0 0
        %5375 = vmatpush1.bf16.msra.mxu0 %v5355
        %5376 = vmatprep.subr.bf16.mxu0 0
        %5377 = vmatpush1.bf16.msra.mxu0 %v5356
        %5378 = vmatprep.subr.bf16.mxu0 0
        %5379 = vmatpush1.bf16.msra.mxu0 %v5357
        %5380 = vmatprep.subr.bf16.mxu0 0
        %5381 = vmatpush1.bf16.msra.mxu0 %v5358
        %5382 = vmatprep.subr.bf16.mxu0 0
        %5383 = vmatpush1.bf16.msra.mxu0 %v5359
        %5384 = vmatprep.subr.bf16.mxu0 0
        %5385 = vmatpush1.bf16.msra.mxu0 0
        %5386 = vmatprep.subr.bf16.mxu0 0
        %5387 = vmatpush1.bf16.msra.mxu0 0
        %5388 = vmatprep.subr.bf16.mxu0 0
        %5389 = vmatpush1.bf16.msra.mxu0 0
        %5390 = vmatprep.subr.bf16.mxu0 0
        %5391 = vmatpush1.bf16.msra.mxu0 0
        %5392 = vmatprep.subr.bf16.mxu0 0
        %5393 = vmatpush1.bf16.msra.mxu0 0
        %5394 = vmatprep.subr.bf16.mxu0 0
        %5395 = vmatpush1.bf16.msra.mxu0 0
        %5396 = vmatprep.subr.bf16.mxu0 0
        %5397 = vmatpush1.bf16.msra.mxu0 0
        %5398 = vmatprep.subr.bf16.mxu0 0
        %5399 = vmatpush1.bf16.msra.mxu0 0
        %5400 = vmatprep.mubr.bf16.mxu0 0
        %5401 = vmatmul.mubr.bf16.gmra.mrb[0].mxu0 %v5318
        %v5402 = vpop.f32.mrb[0].mxu0
        %v5403 = vadd.f32 0.0, %v5402
        %v5404 = vpop.f32.mrb[0].mxu0
        %v5405 = vpop.f32.mrb[0].mxu0
        %v5406 = vadd.f32 0.0, %v5405
        %v5407 = vpop.f32.mrb[0].mxu0
        %5408 = vdwg.mxu0
        %v5409 = vadd.f32 %v5270, %v5403
        %v5410 = vadd.f32 %v5271, %v5406
        %v5411 = vld [vmem:[#allocation3 + $0x8] sm:$0x7]
        %s5412 = scalar_lea.vmem %s37, 256
        %v5413 = vld [vmem:[%s5412] sm:$0xf]
        %v5414 = vld [vmem:[%s5412 + $0x4] sm:$0xf]
        %v5415 = vld [vmem:[%s5412 + $0x8] sm:$0xf]
        %v5416 = vld [vmem:[%s5412 + $0xc] sm:$0xf]
        %v5417 = vld [vmem:[%s5412 + $0x10] sm:$0xf]
        %v5418 = vld [vmem:[%s5412 + $0x14] sm:$0xf]
        %v5419 = vld [vmem:[%s5412 + $0x18] sm:$0xf]
        %v5420 = vld [vmem:[%s5412 + $0x1c] sm:$0xf]
        %v5421 = vld [vmem:[%s5412 + $0x20] sm:$0xf]
        %v5422 = vld [vmem:[%s5412 + $0x24] sm:$0xf]
        %v5423 = vld [vmem:[%s5412 + $0x28] sm:$0xf]
        %v5424 = vld [vmem:[%s5412 + $0x2c] sm:$0xf]
        %v5425 = vld [vmem:[%s5412 + $0x30] sm:$0xf]
        %v5426 = vld [vmem:[%s5412 + $0x34] sm:$0xf]
        %v5427 = vld [vmem:[%s5412 + $0x38] sm:$0xf]
        %v5428 = vld [vmem:[%s5412 + $0x3c] sm:$0xf]
        %v5431 = vunpack.c.l.b16 %v5272
        %v5432 = vunpack.c.l.b16 %v5411
        %v5433 = vpack.c.b16 %v4933, %v5431
        %v5434 = vpack.c.b16 %v5432, %v5432
        %vm5435 = vsmask.f32 5376
        %v5437 = vshrl.u32 %v5433, 16
        %v5439 = vrot.slane %v5437, 2
        %v5440 = vshll.u32 %v5433, 16
        %v5442 = vrot.slane %v5440, 3
        %v5443 = vor.u32 %v5439, %v5442
        %v5445 = vshrl.u32 %v5434, 16
        %v5447 = vrot.slane %v5445, 2
        %v5448 = vshll.u32 %v5434, 16
        %v5450 = vrot.slane %v5448, 3
        %v5451 = vor.u32 %v5447, %v5450
        %v5452 = vsel %vm5435, %v5443, %v5451
        %v5470 = vunpack.c.l.b16 %v5413
        %v5471 = vunpack.c.l.b16 %v5414
        %v5472 = vunpack.c.l.b16 %v5415
        %v5473 = vunpack.c.l.b16 %v5416
        %v5474 = vunpack.c.l.b16 %v5417
        %v5475 = vunpack.c.l.b16 %v5418
        %v5476 = vunpack.c.l.b16 %v5419
        %v5477 = vunpack.c.l.b16 %v5420
        %v5478 = vunpack.c.l.b16 %v5421
        %v5479 = vunpack.c.l.b16 %v5422
        %v5480 = vunpack.c.l.b16 %v5423
        %v5481 = vunpack.c.l.b16 %v5424
        %v5482 = vunpack.c.l.b16 %v5425
        %v5483 = vunpack.c.l.b16 %v5426
        %v5484 = vunpack.c.l.b16 %v5427
        %v5485 = vunpack.c.l.b16 %v5428
        %v5486 = vpack.c.b16 %v5471, %v5470
        %v5487 = vpack.c.b16 %v5473, %v5472
        %v5488 = vpack.c.b16 %v5475, %v5474
        %v5489 = vpack.c.b16 %v5477, %v5476
        %v5490 = vpack.c.b16 %v5479, %v5478
        %v5491 = vpack.c.b16 %v5481, %v5480
        %v5492 = vpack.c.b16 %v5483, %v5482
        %v5493 = vpack.c.b16 %v5485, %v5484
        %5502 = vmatprep.subr.bf16.mxu0 0
        %5503 = vmatpush1.bf16.msra.mxu0 %v5486
        %5504 = vmatprep.subr.bf16.mxu0 0
        %5505 = vmatpush1.bf16.msra.mxu0 %v5487
        %5506 = vmatprep.subr.bf16.mxu0 0
        %5507 = vmatpush1.bf16.msra.mxu0 %v5488
        %5508 = vmatprep.subr.bf16.mxu0 0
        %5509 = vmatpush1.bf16.msra.mxu0 %v5489
        %5510 = vmatprep.subr.bf16.mxu0 0
        %5511 = vmatpush1.bf16.msra.mxu0 %v5490
        %5512 = vmatprep.subr.bf16.mxu0 0
        %5513 = vmatpush1.bf16.msra.mxu0 %v5491
        %5514 = vmatprep.subr.bf16.mxu0 0
        %5515 = vmatpush1.bf16.msra.mxu0 %v5492
        %5516 = vmatprep.subr.bf16.mxu0 0
        %5517 = vmatpush1.bf16.msra.mxu0 %v5493
        %5518 = vmatprep.subr.bf16.mxu0 0
        %5519 = vmatpush1.bf16.msra.mxu0 0
        %5520 = vmatprep.subr.bf16.mxu0 0
        %5521 = vmatpush1.bf16.msra.mxu0 0
        %5522 = vmatprep.subr.bf16.mxu0 0
        %5523 = vmatpush1.bf16.msra.mxu0 0
        %5524 = vmatprep.subr.bf16.mxu0 0
        %5525 = vmatpush1.bf16.msra.mxu0 0
        %5526 = vmatprep.subr.bf16.mxu0 0
        %5527 = vmatpush1.bf16.msra.mxu0 0
        %5528 = vmatprep.subr.bf16.mxu0 0
        %5529 = vmatpush1.bf16.msra.mxu0 0
        %5530 = vmatprep.subr.bf16.mxu0 0
        %5531 = vmatpush1.bf16.msra.mxu0 0
        %5532 = vmatprep.subr.bf16.mxu0 0
        %5533 = vmatpush1.bf16.msra.mxu0 0
        %5534 = vmatprep.mubr.bf16.mxu0 0
        %5535 = vmatmul.mubr.bf16.gmra.mrb[0].mxu0 %v5452
        %v5536 = vpop.f32.mrb[0].mxu0
        %v5537 = vadd.f32 0.0, %v5536
        %v5538 = vpop.f32.mrb[0].mxu0
        %v5539 = vpop.f32.mrb[0].mxu0
        %v5540 = vadd.f32 0.0, %v5539
        %v5541 = vpop.f32.mrb[0].mxu0
        %5542 = vdwg.mxu0
        %v5543 = vadd.f32 %v5409, %v5537
        %v5544 = vadd.f32 %v5410, %v5540
        %v5545 = vld [vmem:[#allocation3] sm:$0x8]
        %vm5546 = vcmask 1046532
        %vm5547 = vmor %vm4813, %vm5546
        %v5548 = vrot.slane %v5139, 5
        %v5549 = vrot.slane %v5548, 4
        %v5550 = vrot.slane %v5140, 5
        %v5551 = vsel %vm5547, %v5549, %v5550
        %v5552 = vrot.slane %v5550, 4
        %vm5553 = vcmp.ne.s16.totalorder %v5548, 0
        %vm5554 = vcmp.ne.s16.totalorder %v5551, 0
        %vm5555 = vcmp.ne.s16.totalorder %v5552, 0
        %v5556 = vsel %vm5553, %v5545, 0
        %v5557 = vsel %vm5554, %v4888, 0
        %v5558 = vsel %vm5555, %v5411, 0
        %s5559 = scalar_lea.vmem %s37, 320
        %v5560 = vld [vmem:[%s5559] sm:$0xf]
        %v5561 = vld [vmem:[%s5559 + $0x4] sm:$0xf]
        %v5562 = vld [vmem:[%s5559 + $0x8] sm:$0xf]
        %v5563 = vld [vmem:[%s5559 + $0xc] sm:$0xf]
        %v5564 = vld [vmem:[%s5559 + $0x10] sm:$0xf]
        %v5565 = vld [vmem:[%s5559 + $0x14] sm:$0xf]
        %v5566 = vld [vmem:[%s5559 + $0x18] sm:$0xf]
        %v5567 = vld [vmem:[%s5559 + $0x1c] sm:$0xf]
        %v5568 = vld [vmem:[%s5559 + $0x20] sm:$0xf]
        %v5569 = vld [vmem:[%s5559 + $0x24] sm:$0xf]
        %v5570 = vld [vmem:[%s5559 + $0x28] sm:$0xf]
        %v5571 = vld [vmem:[%s5559 + $0x2c] sm:$0xf]
        %v5572 = vld [vmem:[%s5559 + $0x30] sm:$0xf]
        %v5573 = vld [vmem:[%s5559 + $0x34] sm:$0xf]
        %v5574 = vld [vmem:[%s5559 + $0x38] sm:$0xf]
        %v5575 = vld [vmem:[%s5559 + $0x3c] sm:$0xf]
        %v5579 = vunpack.c.l.b16 %v5556
        %v5580 = vunpack.c.l.b16 %v5557
        %v5581 = vunpack.c.l.b16 %v5558
        %v5582 = vpack.c.b16 %v5580, %v5579
        %v5583 = vpack.c.b16 %v5581, %v5581
        %vm5584 = vcmask 1044480
        %v5585 = vrot.slane %v5582, 3
        %v5586 = vrot.slane %v5583, 3
        %v5587 = vsel %vm5584, %v5585, %v5586
        %v5605 = vunpack.c.l.b16 %v5560
        %v5606 = vunpack.c.l.b16 %v5561
        %v5607 = vunpack.c.l.b16 %v5562
        %v5608 = vunpack.c.l.b16 %v5563
        %v5609 = vunpack.c.l.b16 %v5564
        %v5610 = vunpack.c.l.b16 %v5565
        %v5611 = vunpack.c.l.b16 %v5566
        %v5612 = vunpack.c.l.b16 %v5567
        %v5613 = vunpack.c.l.b16 %v5568
        %v5614 = vunpack.c.l.b16 %v5569
        %v5615 = vunpack.c.l.b16 %v5570
        %v5616 = vunpack.c.l.b16 %v5571
        %v5617 = vunpack.c.l.b16 %v5572
        %v5618 = vunpack.c.l.b16 %v5573
        %v5619 = vunpack.c.l.b16 %v5574
        %v5620 = vunpack.c.l.b16 %v5575
        %v5621 = vpack.c.b16 %v5606, %v5605
        %v5622 = vpack.c.b16 %v5608, %v5607
        %v5623 = vpack.c.b16 %v5610, %v5609
        %v5624 = vpack.c.b16 %v5612, %v5611
        %v5625 = vpack.c.b16 %v5614, %v5613
        %v5626 = vpack.c.b16 %v5616, %v5615
        %v5627 = vpack.c.b16 %v5618, %v5617
        %v5628 = vpack.c.b16 %v5620, %v5619
        %5637 = vmatprep.subr.bf16.mxu0 0
        %5638 = vmatpush1.bf16.msra.mxu0 %v5621
        %5639 = vmatprep.subr.bf16.mxu0 0
        %5640 = vmatpush1.bf16.msra.mxu0 %v5622
        %5641 = vmatprep.subr.bf16.mxu0 0
        %5642 = vmatpush1.bf16.msra.mxu0 %v5623
        %5643 = vmatprep.subr.bf16.mxu0 0
        %5644 = vmatpush1.bf16.msra.mxu0 %v5624
        %5645 = vmatprep.subr.bf16.mxu0 0
        %5646 = vmatpush1.bf16.msra.mxu0 %v5625
        %5647 = vmatprep.subr.bf16.mxu0 0
        %5648 = vmatpush1.bf16.msra.mxu0 %v5626
        %5649 = vmatprep.subr.bf16.mxu0 0
        %5650 = vmatpush1.bf16.msra.mxu0 %v5627
        %5651 = vmatprep.subr.bf16.mxu0 0
        %5652 = vmatpush1.bf16.msra.mxu0 %v5628
        %5653 = vmatprep.subr.bf16.mxu0 0
        %5654 = vmatpush1.bf16.msra.mxu0 0
        %5655 = vmatprep.subr.bf16.mxu0 0
        %5656 = vmatpush1.bf16.msra.mxu0 0
        %5657 = vmatprep.subr.bf16.mxu0 0
        %5658 = vmatpush1.bf16.msra.mxu0 0
        %5659 = vmatprep.subr.bf16.mxu0 0
        %5660 = vmatpush1.bf16.msra.mxu0 0
        %5661 = vmatprep.subr.bf16.mxu0 0
        %5662 = vmatpush1.bf16.msra.mxu0 0
        %5663 = vmatprep.subr.bf16.mxu0 0
        %5664 = vmatpush1.bf16.msra.mxu0 0
        %5665 = vmatprep.subr.bf16.mxu0 0
        %5666 = vmatpush1.bf16.msra.mxu0 0
        %5667 = vmatprep.subr.bf16.mxu0 0
        %5668 = vmatpush1.bf16.msra.mxu0 0
        %5669 = vmatprep.mubr.bf16.mxu0 0
        %5670 = vmatmul.mubr.bf16.gmra.mrb[0].mxu0 %v5587
        %v5671 = vpop.f32.mrb[0].mxu0
        %v5672 = vadd.f32 0.0, %v5671
        %v5673 = vpop.f32.mrb[0].mxu0
        %v5674 = vpop.f32.mrb[0].mxu0
        %v5675 = vadd.f32 0.0, %v5674
        %v5676 = vpop.f32.mrb[0].mxu0
        %5677 = vdwg.mxu0
        %v5678 = vadd.f32 %v5543, %v5672
        %v5679 = vadd.f32 %v5544, %v5675
        %v5680 = vld [vmem:[#allocation3 + $0x8] sm:$0xf]
        %v5681 = vsel %vm4891, %v4888, 0
        %v5682 = vsel %vm4892, %v5680, 0
        %s5683 = scalar_lea.vmem %s37, 384
        %v5684 = vld [vmem:[%s5683] sm:$0xf]
        %v5685 = vld [vmem:[%s5683 + $0x4] sm:$0xf]
        %v5686 = vld [vmem:[%s5683 + $0x8] sm:$0xf]
        %v5687 = vld [vmem:[%s5683 + $0xc] sm:$0xf]
        %v5688 = vld [vmem:[%s5683 + $0x10] sm:$0xf]
        %v5689 = vld [vmem:[%s5683 + $0x14] sm:$0xf]
        %v5690 = vld [vmem:[%s5683 + $0x18] sm:$0xf]
        %v5691 = vld [vmem:[%s5683 + $0x1c] sm:$0xf]
        %v5692 = vld [vmem:[%s5683 + $0x20] sm:$0xf]
        %v5693 = vld [vmem:[%s5683 + $0x24] sm:$0xf]
        %v5694 = vld [vmem:[%s5683 + $0x28] sm:$0xf]
        %v5695 = vld [vmem:[%s5683 + $0x2c] sm:$0xf]
        %v5696 = vld [vmem:[%s5683 + $0x30] sm:$0xf]
        %v5697 = vld [vmem:[%s5683 + $0x34] sm:$0xf]
        %v5698 = vld [vmem:[%s5683 + $0x38] sm:$0xf]
        %v5699 = vld [vmem:[%s5683 + $0x3c] sm:$0xf]
        %v5702 = vunpack.c.l.b16 %v5681
        %v5703 = vunpack.c.l.b16 %v5682
        %v5704 = vpack.c.b16 %v5703, %v5702
        %v5722 = vunpack.c.l.b16 %v5684
        %v5723 = vunpack.c.l.b16 %v5685
        %v5724 = vunpack.c.l.b16 %v5686
        %v5725 = vunpack.c.l.b16 %v5687
        %v5726 = vunpack.c.l.b16 %v5688
        %v5727 = vunpack.c.l.b16 %v5689
        %v5728 = vunpack.c.l.b16 %v5690
        %v5729 = vunpack.c.l.b16 %v5691
        %v5730 = vunpack.c.l.b16 %v5692
        %v5731 = vunpack.c.l.b16 %v5693
        %v5732 = vunpack.c.l.b16 %v5694
        %v5733 = vunpack.c.l.b16 %v5695
        %v5734 = vunpack.c.l.b16 %v5696
        %v5735 = vunpack.c.l.b16 %v5697
        %v5736 = vunpack.c.l.b16 %v5698
        %v5737 = vunpack.c.l.b16 %v5699
        %v5738 = vpack.c.b16 %v5723, %v5722
        %v5739 = vpack.c.b16 %v5725, %v5724
        %v5740 = vpack.c.b16 %v5727, %v5726
        %v5741 = vpack.c.b16 %v5729, %v5728
        %v5742 = vpack.c.b16 %v5731, %v5730
        %v5743 = vpack.c.b16 %v5733, %v5732
        %v5744 = vpack.c.b16 %v5735, %v5734
        %v5745 = vpack.c.b16 %v5737, %v5736
        %5754 = vmatprep.subr.bf16.mxu0 0
        %5755 = vmatpush1.bf16.msra.mxu0 %v5738
        %5756 = vmatprep.subr.bf16.mxu0 0
        %5757 = vmatpush1.bf16.msra.mxu0 %v5739
        %5758 = vmatprep.subr.bf16.mxu0 0
        %5759 = vmatpush1.bf16.msra.mxu0 %v5740
        %5760 = vmatprep.subr.bf16.mxu0 0
        %5761 = vmatpush1.bf16.msra.mxu0 %v5741
        %5762 = vmatprep.subr.bf16.mxu0 0
        %5763 = vmatpush1.bf16.msra.mxu0 %v5742
        %5764 = vmatprep.subr.bf16.mxu0 0
        %5765 = vmatpush1.bf16.msra.mxu0 %v5743
        %5766 = vmatprep.subr.bf16.mxu0 0
        %5767 = vmatpush1.bf16.msra.mxu0 %v5744
        %5768 = vmatprep.subr.bf16.mxu0 0
        %5769 = vmatpush1.bf16.msra.mxu0 %v5745
        %5770 = vmatprep.subr.bf16.mxu0 0
        %5771 = vmatpush1.bf16.msra.mxu0 0
        %5772 = vmatprep.subr.bf16.mxu0 0
        %5773 = vmatpush1.bf16.msra.mxu0 0
        %5774 = vmatprep.subr.bf16.mxu0 0
        %5775 = vmatpush1.bf16.msra.mxu0 0
        %5776 = vmatprep.subr.bf16.mxu0 0
        %5777 = vmatpush1.bf16.msra.mxu0 0
        %5778 = vmatprep.subr.bf16.mxu0 0
        %5779 = vmatpush1.bf16.msra.mxu0 0
        %5780 = vmatprep.subr.bf16.mxu0 0
        %5781 = vmatpush1.bf16.msra.mxu0 0
        %5782 = vmatprep.subr.bf16.mxu0 0
        %5783 = vmatpush1.bf16.msra.mxu0 0
        %5784 = vmatprep.subr.bf16.mxu0 0
        %5785 = vmatpush1.bf16.msra.mxu0 0
        %5786 = vmatprep.mubr.bf16.mxu0 0
        %5787 = vmatmul.mubr.bf16.gmra.mrb[0].mxu0 %v5704
        %v5788 = vpop.f32.mrb[0].mxu0
        %v5789 = vadd.f32 0.0, %v5788
        %v5790 = vpop.f32.mrb[0].mxu0
        %v5791 = vpop.f32.mrb[0].mxu0
        %v5792 = vadd.f32 0.0, %v5791
        %v5793 = vpop.f32.mrb[0].mxu0
        %5794 = vdwg.mxu0
        %v5795 = vadd.f32 %v5678, %v5789
        %v5796 = vadd.f32 %v5679, %v5792
        %v5797 = vld [vmem:[#allocation3 + $0x4] sm:$0xf]
        %v5798 = vld [vmem:[#allocation3 + $0x8] sm:$0xf]
        %v5799 = vld [vmem:[#allocation3 + $0xc] sm:$0x1]
        %s5800 = scalar_lea.vmem %s37, 448
        %v5801 = vld [vmem:[%s5800] sm:$0xf]
        %v5802 = vld [vmem:[%s5800 + $0x4] sm:$0xf]
        %v5803 = vld [vmem:[%s5800 + $0x8] sm:$0xf]
        %v5804 = vld [vmem:[%s5800 + $0xc] sm:$0xf]
        %v5805 = vld [vmem:[%s5800 + $0x10] sm:$0xf]
        %v5806 = vld [vmem:[%s5800 + $0x14] sm:$0xf]
        %v5807 = vld [vmem:[%s5800 + $0x18] sm:$0xf]
        %v5808 = vld [vmem:[%s5800 + $0x1c] sm:$0xf]
        %v5809 = vld [vmem:[%s5800 + $0x20] sm:$0xf]
        %v5810 = vld [vmem:[%s5800 + $0x24] sm:$0xf]
        %v5811 = vld [vmem:[%s5800 + $0x28] sm:$0xf]
        %v5812 = vld [vmem:[%s5800 + $0x2c] sm:$0xf]
        %v5813 = vld [vmem:[%s5800 + $0x30] sm:$0xf]
        %v5814 = vld [vmem:[%s5800 + $0x34] sm:$0xf]
        %v5815 = vld [vmem:[%s5800 + $0x38] sm:$0xf]
        %v5816 = vld [vmem:[%s5800 + $0x3c] sm:$0xf]
        %v5820 = vunpack.c.l.b16 %v5797
        %v5821 = vunpack.c.l.b16 %v5798
        %v5822 = vunpack.c.l.b16 %v5799
        %v5823 = vpack.c.b16 %v5821, %v5820
        %v5824 = vpack.c.b16 %v5822, %v5822
        %v5826 = vshrl.u32 %v5823, 16
        %v5828 = vshll.u32 %v5823, 16
        %v5830 = vrot.slane %v5828, 1
        %v5831 = vor.u32 %v5826, %v5830
        %v5833 = vshll.u32 %v5824, 16
        %v5835 = vrot.slane %v5833, 1
        %v5836 = vsel %vm2739, %v5831, %v5835
        %v5854 = vunpack.c.l.b16 %v5801
        %v5855 = vunpack.c.l.b16 %v5802
        %v5856 = vunpack.c.l.b16 %v5803
        %v5857 = vunpack.c.l.b16 %v5804
        %v5858 = vunpack.c.l.b16 %v5805
        %v5859 = vunpack.c.l.b16 %v5806
        %v5860 = vunpack.c.l.b16 %v5807
        %v5861 = vunpack.c.l.b16 %v5808
        %v5862 = vunpack.c.l.b16 %v5809
        %v5863 = vunpack.c.l.b16 %v5810
        %v5864 = vunpack.c.l.b16 %v5811
        %v5865 = vunpack.c.l.b16 %v5812
        %v5866 = vunpack.c.l.b16 %v5813
        %v5867 = vunpack.c.l.b16 %v5814
        %v5868 = vunpack.c.l.b16 %v5815
        %v5869 = vunpack.c.l.b16 %v5816
        %v5870 = vpack.c.b16 %v5855, %v5854
        %v5871 = vpack.c.b16 %v5857, %v5856
        %v5872 = vpack.c.b16 %v5859, %v5858
        %v5873 = vpack.c.b16 %v5861, %v5860
        %v5874 = vpack.c.b16 %v5863, %v5862
        %v5875 = vpack.c.b16 %v5865, %v5864
        %v5876 = vpack.c.b16 %v5867, %v5866
        %v5877 = vpack.c.b16 %v5869, %v5868
        %5886 = vmatprep.subr.bf16.mxu0 0
        %5887 = vmatpush1.bf16.msra.mxu0 %v5870
        %5888 = vmatprep.subr.bf16.mxu0 0
        %5889 = vmatpush1.bf16.msra.mxu0 %v5871
        %5890 = vmatprep.subr.bf16.mxu0 0
        %5891 = vmatpush1.bf16.msra.mxu0 %v5872
        %5892 = vmatprep.subr.bf16.mxu0 0
        %5893 = vmatpush1.bf16.msra.mxu0 %v5873
        %5894 = vmatprep.subr.bf16.mxu0 0
        %5895 = vmatpush1.bf16.msra.mxu0 %v5874
        %5896 = vmatprep.subr.bf16.mxu0 0
        %5897 = vmatpush1.bf16.msra.mxu0 %v5875
        %5898 = vmatprep.subr.bf16.mxu0 0
        %5899 = vmatpush1.bf16.msra.mxu0 %v5876
        %5900 = vmatprep.subr.bf16.mxu0 0
        %5901 = vmatpush1.bf16.msra.mxu0 %v5877
        %5902 = vmatprep.subr.bf16.mxu0 0
        %5903 = vmatpush1.bf16.msra.mxu0 0
        %5904 = vmatprep.subr.bf16.mxu0 0
        %5905 = vmatpush1.bf16.msra.mxu0 0
        %5906 = vmatprep.subr.bf16.mxu0 0
        %5907 = vmatpush1.bf16.msra.mxu0 0
        %5908 = vmatprep.subr.bf16.mxu0 0
        %5909 = vmatpush1.bf16.msra.mxu0 0
        %5910 = vmatprep.subr.bf16.mxu0 0
        %5911 = vmatpush1.bf16.msra.mxu0 0
        %5912 = vmatprep.subr.bf16.mxu0 0
        %5913 = vmatpush1.bf16.msra.mxu0 0
        %5914 = vmatprep.subr.bf16.mxu0 0
        %5915 = vmatpush1.bf16.msra.mxu0 0
        %5916 = vmatprep.subr.bf16.mxu0 0
        %5917 = vmatpush1.bf16.msra.mxu0 0
        %5918 = vmatprep.mubr.bf16.mxu0 0
        %5919 = vmatmul.mubr.bf16.gmra.mrb[0].mxu0 %v5836
        %v5920 = vpop.f32.mrb[0].mxu0
        %v5921 = vadd.f32 0.0, %v5920
        %v5922 = vpop.f32.mrb[0].mxu0
        %v5923 = vpop.f32.mrb[0].mxu0
        %v5924 = vadd.f32 0.0, %v5923
        %v5925 = vpop.f32.mrb[0].mxu0
        %5926 = vdwg.mxu0
        %v5927 = vadd.f32 %v5795, %v5921
        %v5928 = vadd.f32 %v5796, %v5924
        %v5929 = vld [vmem:[#allocation3 + $0x4] sm:$0xe]
        %v5930 = vsel %vm5146, %v5929, 0
        %v5931 = vsel %vm5147, %v5798, 0
        %v5932 = vsel %vm5148, %v5799, 0
        %s5933 = scalar_lea.vmem %s37, 512
        %v5934 = vld [vmem:[%s5933] sm:$0xf]
        %v5935 = vld [vmem:[%s5933 + $0x4] sm:$0xf]
        %v5936 = vld [vmem:[%s5933 + $0x8] sm:$0xf]
        %v5937 = vld [vmem:[%s5933 + $0xc] sm:$0xf]
        %v5938 = vld [vmem:[%s5933 + $0x10] sm:$0xf]
        %v5939 = vld [vmem:[%s5933 + $0x14] sm:$0xf]
        %v5940 = vld [vmem:[%s5933 + $0x18] sm:$0xf]
        %v5941 = vld [vmem:[%s5933 + $0x1c] sm:$0xf]
        %v5942 = vld [vmem:[%s5933 + $0x20] sm:$0xf]
        %v5943 = vld [vmem:[%s5933 + $0x24] sm:$0xf]
        %v5944 = vld [vmem:[%s5933 + $0x28] sm:$0xf]
        %v5945 = vld [vmem:[%s5933 + $0x2c] sm:$0xf]
        %v5946 = vld [vmem:[%s5933 + $0x30] sm:$0xf]
        %v5947 = vld [vmem:[%s5933 + $0x34] sm:$0xf]
        %v5948 = vld [vmem:[%s5933 + $0x38] sm:$0xf]
        %v5949 = vld [vmem:[%s5933 + $0x3c] sm:$0xf]
        %v5953 = vunpack.c.l.b16 %v5930
        %v5954 = vunpack.c.l.b16 %v5931
        %v5955 = vunpack.c.l.b16 %v5932
        %v5956 = vpack.c.b16 %v5954, %v5953
        %v5957 = vpack.c.b16 %v5955, %v5955
        %v5958 = vrot.slane %v5956, 1
        %v5959 = vrot.slane %v5957, 1
        %v5960 = vsel %vm3138, %v5958, %v5959
        %v5978 = vunpack.c.l.b16 %v5934
        %v5979 = vunpack.c.l.b16 %v5935
        %v5980 = vunpack.c.l.b16 %v5936
        %v5981 = vunpack.c.l.b16 %v5937
        %v5982 = vunpack.c.l.b16 %v5938
        %v5983 = vunpack.c.l.b16 %v5939
        %v5984 = vunpack.c.l.b16 %v5940
        %v5985 = vunpack.c.l.b16 %v5941
        %v5986 = vunpack.c.l.b16 %v5942
        %v5987 = vunpack.c.l.b16 %v5943
        %v5988 = vunpack.c.l.b16 %v5944
        %v5989 = vunpack.c.l.b16 %v5945
        %v5990 = vunpack.c.l.b16 %v5946
        %v5991 = vunpack.c.l.b16 %v5947
        %v5992 = vunpack.c.l.b16 %v5948
        %v5993 = vunpack.c.l.b16 %v5949
        %v5994 = vpack.c.b16 %v5979, %v5978
        %v5995 = vpack.c.b16 %v5981, %v5980
        %v5996 = vpack.c.b16 %v5983, %v5982
        %v5997 = vpack.c.b16 %v5985, %v5984
        %v5998 = vpack.c.b16 %v5987, %v5986
        %v5999 = vpack.c.b16 %v5989, %v5988
        %v6000 = vpack.c.b16 %v5991, %v5990
        %v6001 = vpack.c.b16 %v5993, %v5992
        %6010 = vmatprep.subr.bf16.mxu0 0
        %6011 = vmatpush1.bf16.msra.mxu0 %v5994
        %6012 = vmatprep.subr.bf16.mxu0 0
        %6013 = vmatpush1.bf16.msra.mxu0 %v5995
        %6014 = vmatprep.subr.bf16.mxu0 0
        %6015 = vmatpush1.bf16.msra.mxu0 %v5996
        %6016 = vmatprep.subr.bf16.mxu0 0
        %6017 = vmatpush1.bf16.msra.mxu0 %v5997
        %6018 = vmatprep.subr.bf16.mxu0 0
        %6019 = vmatpush1.bf16.msra.mxu0 %v5998
        %6020 = vmatprep.subr.bf16.mxu0 0
        %6021 = vmatpush1.bf16.msra.mxu0 %v5999
        %6022 = vmatprep.subr.bf16.mxu0 0
        %6023 = vmatpush1.bf16.msra.mxu0 %v6000
        %6024 = vmatprep.subr.bf16.mxu0 0
        %6025 = vmatpush1.bf16.msra.mxu0 %v6001
        %6026 = vmatprep.subr.bf16.mxu0 0
        %6027 = vmatpush1.bf16.msra.mxu0 0
        %6028 = vmatprep.subr.bf16.mxu0 0
        %6029 = vmatpush1.bf16.msra.mxu0 0
        %6030 = vmatprep.subr.bf16.mxu0 0
        %6031 = vmatpush1.bf16.msra.mxu0 0
        %6032 = vmatprep.subr.bf16.mxu0 0
        %6033 = vmatpush1.bf16.msra.mxu0 0
        %6034 = vmatprep.subr.bf16.mxu0 0
        %6035 = vmatpush1.bf16.msra.mxu0 0
        %6036 = vmatprep.subr.bf16.mxu0 0
        %6037 = vmatpush1.bf16.msra.mxu0 0
        %6038 = vmatprep.subr.bf16.mxu0 0
        %6039 = vmatpush1.bf16.msra.mxu0 0
        %6040 = vmatprep.subr.bf16.mxu0 0
        %6041 = vmatpush1.bf16.msra.mxu0 0
        %6042 = vmatprep.mubr.bf16.mxu0 0
        %6043 = vmatmul.mubr.bf16.gmra.mrb[0].mxu0 %v5960
        %v6044 = vpop.f32.mrb[0].mxu0
        %v6045 = vadd.f32 0.0, %v6044
        %v6046 = vpop.f32.mrb[0].mxu0
        %v6047 = vpop.f32.mrb[0].mxu0
        %v6048 = vadd.f32 0.0, %v6047
        %v6049 = vpop.f32.mrb[0].mxu0
        %6050 = vdwg.mxu0
        %v6051 = vadd.f32 %v5927, %v6045
        %v6052 = vadd.f32 %v5928, %v6048
        %v6053 = vld [vmem:[#allocation26] sm:$0x1]
        %v6055 = vlaneseq
        %v6056 = vshrl.u32 %v6055, 7
        %v6057 = vsub.s32 0, %v6056
        %v6058 = vrot.slane %v6053, %v6057
        %v6060 = vmul.f32 %v6051, %v6058
        %v6061 = vmul.f32 %v6052, %v6058
        %v6062 = vld [vmem:[#allocation28] sm:$0x1]
        %v6064 = vlaneseq
        %v6065 = vshrl.u32 %v6064, 7
        %v6066 = vsub.s32 0, %v6065
        %v6067 = vrot.slane %v6062, %v6066
        %v6069 = vadd.f32 %v6060, %v6067
        %v6070 = vadd.f32 %v6061, %v6067
        %v6071 = vmax.f32 %v6069, 0.0
        %v6072 = vmax.f32 %v6070, 0.0
        %v6073 = vpack.c.bf16 %v6072, %v6071
        %v6074 = vld [vmem:[#allocation29] sm:$0xf]
        %v6075 = vld [vmem:[#allocation29 + $0x4] sm:$0xf]
        %v6076 = vld [vmem:[#allocation29 + $0x8] sm:$0xf]
        %v6077 = vld [vmem:[#allocation29 + $0xc] sm:$0xf]
        %v6078 = vld [vmem:[#allocation29 + $0x10] sm:$0xf]
        %v6079 = vld [vmem:[#allocation29 + $0x14] sm:$0xf]
        %v6080 = vld [vmem:[#allocation29 + $0x18] sm:$0xf]
        %v6081 = vld [vmem:[#allocation29 + $0x1c] sm:$0xf]
        %v6082 = vld [vmem:[#allocation29 + $0x20] sm:$0xf]
        %v6083 = vld [vmem:[#allocation29 + $0x24] sm:$0xf]
        %v6084 = vld [vmem:[#allocation29 + $0x28] sm:$0xf]
        %v6085 = vld [vmem:[#allocation29 + $0x2c] sm:$0xf]
        %v6086 = vld [vmem:[#allocation29 + $0x30] sm:$0xf]
        %v6087 = vld [vmem:[#allocation29 + $0x34] sm:$0xf]
        %v6088 = vld [vmem:[#allocation29 + $0x38] sm:$0xf]
        %v6089 = vld [vmem:[#allocation29 + $0x3c] sm:$0xf]
        %v6106 = vunpack.c.l.b16 %v6074
        %v6107 = vunpack.c.l.b16 %v6075
        %v6108 = vunpack.c.l.b16 %v6076
        %v6109 = vunpack.c.l.b16 %v6077
        %v6110 = vunpack.c.l.b16 %v6078
        %v6111 = vunpack.c.l.b16 %v6079
        %v6112 = vunpack.c.l.b16 %v6080
        %v6113 = vunpack.c.l.b16 %v6081
        %v6114 = vunpack.c.l.b16 %v6082
        %v6115 = vunpack.c.l.b16 %v6083
        %v6116 = vunpack.c.l.b16 %v6084
        %v6117 = vunpack.c.l.b16 %v6085
        %v6118 = vunpack.c.l.b16 %v6086
        %v6119 = vunpack.c.l.b16 %v6087
        %v6120 = vunpack.c.l.b16 %v6088
        %v6121 = vunpack.c.l.b16 %v6089
        %v6122 = vpack.c.b16 %v6107, %v6106
        %v6123 = vpack.c.b16 %v6109, %v6108
        %v6124 = vpack.c.b16 %v6111, %v6110
        %v6125 = vpack.c.b16 %v6113, %v6112
        %v6126 = vpack.c.b16 %v6115, %v6114
        %v6127 = vpack.c.b16 %v6117, %v6116
        %v6128 = vpack.c.b16 %v6119, %v6118
        %v6129 = vpack.c.b16 %v6121, %v6120
        %6138 = vmatprep.subr.bf16.mxu0 0
        %6139 = vmatpush1.bf16.msra.mxu0 %v6122
        %6140 = vmatprep.subr.bf16.mxu0 0
        %6141 = vmatpush1.bf16.msra.mxu0 %v6123
        %6142 = vmatprep.subr.bf16.mxu0 0
        %6143 = vmatpush1.bf16.msra.mxu0 %v6124
        %6144 = vmatprep.subr.bf16.mxu0 0
        %6145 = vmatpush1.bf16.msra.mxu0 %v6125
        %6146 = vmatprep.subr.bf16.mxu0 0
        %6147 = vmatpush1.bf16.msra.mxu0 %v6126
        %6148 = vmatprep.subr.bf16.mxu0 0
        %6149 = vmatpush1.bf16.msra.mxu0 %v6127
        %6150 = vmatprep.subr.bf16.mxu0 0
        %6151 = vmatpush1.bf16.msra.mxu0 %v6128
        %6152 = vmatprep.subr.bf16.mxu0 0
        %6153 = vmatpush1.bf16.msra.mxu0 %v6129
        %6154 = vmatprep.subr.bf16.mxu0 0
        %6155 = vmatpush1.bf16.msra.mxu0 0
        %6156 = vmatprep.subr.bf16.mxu0 0
        %6157 = vmatpush1.bf16.msra.mxu0 0
        %6158 = vmatprep.subr.bf16.mxu0 0
        %6159 = vmatpush1.bf16.msra.mxu0 0
        %6160 = vmatprep.subr.bf16.mxu0 0
        %6161 = vmatpush1.bf16.msra.mxu0 0
        %6162 = vmatprep.subr.bf16.mxu0 0
        %6163 = vmatpush1.bf16.msra.mxu0 0
        %6164 = vmatprep.subr.bf16.mxu0 0
        %6165 = vmatpush1.bf16.msra.mxu0 0
        %6166 = vmatprep.subr.bf16.mxu0 0
        %6167 = vmatpush1.bf16.msra.mxu0 0
        %6168 = vmatprep.subr.bf16.mxu0 0
        %6169 = vmatpush1.bf16.msra.mxu0 0
        %6170 = vmatprep.mubr.bf16.mxu0 0
        %6171 = vmatmul.mubr.bf16.gmra.mrb[0].mxu0 %v6073
        %v6172 = vpop.f32.mrb[0].mxu0
        %v6173 = vadd.f32 0.0, %v6172
        %v6174 = vpop.f32.mrb[0].mxu0
        %v6175 = vpop.f32.mrb[0].mxu0
        %v6176 = vadd.f32 0.0, %v6175
        %v6177 = vpop.f32.mrb[0].mxu0
        %6178 = vdwg.mxu0
        %v6179 = vld [vmem:[#allocation31] sm:$0x1]
        %v6181 = vlaneseq
        %v6182 = vshrl.u32 %v6181, 7
        %v6183 = vsub.s32 0, %v6182
        %v6184 = vrot.slane %v6179, %v6183
        %v6186 = vmul.f32 %v6173, %v6184
        %v6187 = vmul.f32 %v6176, %v6184
        %v6188 = vld [vmem:[#allocation32] sm:$0x1]
        %v6190 = vlaneseq
        %v6191 = vshrl.u32 %v6190, 7
        %v6192 = vsub.s32 0, %v6191
        %v6193 = vrot.slane %v6188, %v6192
        %v6195 = vadd.f32 %v6186, %v6193
        %v6196 = vadd.f32 %v6187, %v6193
        %v6197 = vmax.f32 %v6195, 0.0
        %v6198 = vmax.f32 %v6196, 0.0
        %v6199 = vld [vmem:[#allocation5] sm:$0xff]
        %v6200 = vld [vmem:[#allocation5 + $0x10] sm:$0xff]
        %v6201 = vadd.f32 %v6197, %v6199
        %v6202 = vadd.f32 %v6198, %v6200
        %v6203 = vpack.c.bf16 %v6202, %v6201
        %v6204 = vld [vmem:[#allocation34] sm:$0xff]
        %v6205 = vld [vmem:[#allocation34 + $0x8] sm:$0xff]
        %v6206 = vld [vmem:[#allocation34 + $0x10] sm:$0xff]
        %v6207 = vld [vmem:[#allocation34 + $0x18] sm:$0xff]
        %v6208 = vld [vmem:[#allocation34 + $0x20] sm:$0xff]
        %v6209 = vld [vmem:[#allocation34 + $0x28] sm:$0xff]
        %v6210 = vld [vmem:[#allocation34 + $0x30] sm:$0xff]
        %v6211 = vld [vmem:[#allocation34 + $0x38] sm:$0xff]
        %v6212 = vld [vmem:[#allocation34 + $0x40] sm:$0xff]
        %v6213 = vld [vmem:[#allocation34 + $0x48] sm:$0xff]
        %v6214 = vld [vmem:[#allocation34 + $0x50] sm:$0xff]
        %v6215 = vld [vmem:[#allocation34 + $0x58] sm:$0xff]
        %v6216 = vld [vmem:[#allocation34 + $0x60] sm:$0xff]
        %v6217 = vld [vmem:[#allocation34 + $0x68] sm:$0xff]
        %v6218 = vld [vmem:[#allocation34 + $0x70] sm:$0xff]
        %v6219 = vld [vmem:[#allocation34 + $0x78] sm:$0xff]
        %v6220 = vld [vmem:[%s51] sm:$0x3]
        %v6222 = vlaneseq
        %v6223 = vshrl.u32 %v6222, 7
        %v6224 = vsub.s32 0, %v6223
        %v6225 = vrot.slane %v6220, %v6224
        %v6226 = vlaneseq
        %v6227 = vshrl.u32 %v6226, 7
        %v6228 = vsub.s32 1, %v6227
        %v6229 = vrot.slane %v6220, %v6228
        %v6248 = vunpack.c.l.b16 %v6204
        %v6249 = vunpack.c.h.b16 %v6204
        %v6250 = vunpack.c.l.b16 %v6205
        %v6251 = vunpack.c.h.b16 %v6205
        %v6252 = vunpack.c.l.b16 %v6206
        %v6253 = vunpack.c.h.b16 %v6206
        %v6254 = vunpack.c.l.b16 %v6207
        %v6255 = vunpack.c.h.b16 %v6207
        %v6256 = vunpack.c.l.b16 %v6208
        %v6257 = vunpack.c.h.b16 %v6208
        %v6258 = vunpack.c.l.b16 %v6209
        %v6259 = vunpack.c.h.b16 %v6209
        %v6260 = vunpack.c.l.b16 %v6210
        %v6261 = vunpack.c.h.b16 %v6210
        %v6262 = vunpack.c.l.b16 %v6211
        %v6263 = vunpack.c.h.b16 %v6211
        %v6264 = vunpack.c.l.b16 %v6212
        %v6265 = vunpack.c.h.b16 %v6212
        %v6266 = vunpack.c.l.b16 %v6213
        %v6267 = vunpack.c.h.b16 %v6213
        %v6268 = vunpack.c.l.b16 %v6214
        %v6269 = vunpack.c.h.b16 %v6214
        %v6270 = vunpack.c.l.b16 %v6215
        %v6271 = vunpack.c.h.b16 %v6215
        %v6272 = vunpack.c.l.b16 %v6216
        %v6273 = vunpack.c.h.b16 %v6216
        %v6274 = vunpack.c.l.b16 %v6217
        %v6275 = vunpack.c.h.b16 %v6217
        %v6276 = vunpack.c.l.b16 %v6218
        %v6277 = vunpack.c.h.b16 %v6218
        %v6278 = vunpack.c.l.b16 %v6219
        %v6279 = vunpack.c.h.b16 %v6219
        %v6280 = vpack.c.b16 %v6250, %v6248
        %v6281 = vpack.c.b16 %v6251, %v6249
        %v6282 = vpack.c.b16 %v6254, %v6252
        %v6283 = vpack.c.b16 %v6255, %v6253
        %v6284 = vpack.c.b16 %v6258, %v6256
        %v6285 = vpack.c.b16 %v6259, %v6257
        %v6286 = vpack.c.b16 %v6262, %v6260
        %v6287 = vpack.c.b16 %v6263, %v6261
        %v6288 = vpack.c.b16 %v6266, %v6264
        %v6289 = vpack.c.b16 %v6267, %v6265
        %v6290 = vpack.c.b16 %v6270, %v6268
        %v6291 = vpack.c.b16 %v6271, %v6269
        %v6292 = vpack.c.b16 %v6274, %v6272
        %v6293 = vpack.c.b16 %v6275, %v6273
        %v6294 = vpack.c.b16 %v6278, %v6276
        %v6295 = vpack.c.b16 %v6279, %v6277
        %6312 = vmatprep.subr.bf16.mxu0 %v6281
        %6313 = vmatpush1.bf16.msra.mxu0 %v6280
        %6314 = vmatprep.subr.bf16.mxu0 %v6283
        %6315 = vmatpush1.bf16.msra.mxu0 %v6282
        %6316 = vmatprep.subr.bf16.mxu0 %v6285
        %6317 = vmatpush1.bf16.msra.mxu0 %v6284
        %6318 = vmatprep.subr.bf16.mxu0 %v6287
        %6319 = vmatpush1.bf16.msra.mxu0 %v6286
        %6320 = vmatprep.subr.bf16.mxu0 %v6289
        %6321 = vmatpush1.bf16.msra.mxu0 %v6288
        %6322 = vmatprep.subr.bf16.mxu0 %v6291
        %6323 = vmatpush1.bf16.msra.mxu0 %v6290
        %6324 = vmatprep.subr.bf16.mxu0 %v6293
        %6325 = vmatpush1.bf16.msra.mxu0 %v6292
        %6326 = vmatprep.subr.bf16.mxu0 %v6295
        %6327 = vmatpush1.bf16.msra.mxu0 %v6294
        %6328 = vmatprep.subr.bf16.mxu0 0
        %6329 = vmatpush1.bf16.msra.mxu0 0
        %6330 = vmatprep.subr.bf16.mxu0 0
        %6331 = vmatpush1.bf16.msra.mxu0 0
        %6332 = vmatprep.subr.bf16.mxu0 0
        %6333 = vmatpush1.bf16.msra.mxu0 0
        %6334 = vmatprep.subr.bf16.mxu0 0
        %6335 = vmatpush1.bf16.msra.mxu0 0
        %6336 = vmatprep.subr.bf16.mxu0 0
        %6337 = vmatpush1.bf16.msra.mxu0 0
        %6338 = vmatprep.subr.bf16.mxu0 0
        %6339 = vmatpush1.bf16.msra.mxu0 0
        %6340 = vmatprep.subr.bf16.mxu0 0
        %6341 = vmatpush1.bf16.msra.mxu0 0
        %6342 = vmatprep.subr.bf16.mxu0 0
        %6343 = vmatpush1.bf16.msra.mxu0 0
        %6344 = vmatprep.mubr.bf16.mxu0 0
        %6345 = vmatmul.mubr.bf16.gmra.mrb[0].mxu0 %v6203
        %v6346 = vpop.f32.mrb[0].mxu0
        %v6347 = vadd.f32 %v6225, %v6346
        %v6348 = vpop.f32.mrb[0].mxu0
        %v6349 = vadd.f32 %v6229, %v6348
        %v6350 = vpop.f32.mrb[0].mxu0
        %v6351 = vadd.f32 %v6225, %v6350
        %v6352 = vpop.f32.mrb[0].mxu0
        %v6353 = vadd.f32 %v6229, %v6352
        %6354 = vdwg.mxu0
        %6355 = vst [vmem:[#allocation5] sm:$0xff] %v6347
        %6356 = vst [vmem:[#allocation5 + $0x8] sm:$0xff] %v6349
        %6357 = vst [vmem:[#allocation5 + $0x10] sm:$0xff] %v6351
        %6358 = vst [vmem:[#allocation5 + $0x18] sm:$0xff] %v6353
        %v6359 = vpack.c.bf16 %v6351, %v6347
        %v6360 = vpack.c.bf16 %v6353, %v6349
        %v6361 = vld [vmem:[#allocation35] sm:$0xf]
        %v6362 = vld [vmem:[#allocation35 + $0x4] sm:$0xf]
        %v6363 = vld [vmem:[#allocation35 + $0x8] sm:$0xf]
        %v6364 = vld [vmem:[#allocation35 + $0xc] sm:$0xf]
        %v6365 = vld [vmem:[#allocation35 + $0x10] sm:$0xf]
        %v6366 = vld [vmem:[#allocation35 + $0x14] sm:$0xf]
        %v6367 = vld [vmem:[#allocation35 + $0x18] sm:$0xf]
        %v6368 = vld [vmem:[#allocation35 + $0x1c] sm:$0xf]
        %v6369 = vld [vmem:[#allocation35 + $0x20] sm:$0xf]
        %v6370 = vld [vmem:[#allocation35 + $0x24] sm:$0xf]
        %v6371 = vld [vmem:[#allocation35 + $0x28] sm:$0xf]
        %v6372 = vld [vmem:[#allocation35 + $0x2c] sm:$0xf]
        %v6373 = vld [vmem:[#allocation35 + $0x30] sm:$0xf]
        %v6374 = vld [vmem:[#allocation35 + $0x34] sm:$0xf]
        %v6375 = vld [vmem:[#allocation35 + $0x38] sm:$0xf]
        %v6376 = vld [vmem:[#allocation35 + $0x3c] sm:$0xf]
        %v6377 = vld [vmem:[#allocation35 + $0x40] sm:$0xf]
        %v6378 = vld [vmem:[#allocation35 + $0x44] sm:$0xf]
        %v6379 = vld [vmem:[#allocation35 + $0x48] sm:$0xf]
        %v6380 = vld [vmem:[#allocation35 + $0x4c] sm:$0xf]
        %v6381 = vld [vmem:[#allocation35 + $0x50] sm:$0xf]
        %v6382 = vld [vmem:[#allocation35 + $0x54] sm:$0xf]
        %v6383 = vld [vmem:[#allocation35 + $0x58] sm:$0xf]
        %v6384 = vld [vmem:[#allocation35 + $0x5c] sm:$0xf]
        %v6385 = vld [vmem:[#allocation35 + $0x60] sm:$0xf]
        %v6386 = vld [vmem:[#allocation35 + $0x64] sm:$0xf]
        %v6387 = vld [vmem:[#allocation35 + $0x68] sm:$0xf]
        %v6388 = vld [vmem:[#allocation35 + $0x6c] sm:$0xf]
        %v6389 = vld [vmem:[#allocation35 + $0x70] sm:$0xf]
        %v6390 = vld [vmem:[#allocation35 + $0x74] sm:$0xf]
        %v6391 = vld [vmem:[#allocation35 + $0x78] sm:$0xf]
        %v6392 = vld [vmem:[#allocation35 + $0x7c] sm:$0xf]
        %v6425 = vunpack.c.l.b16 %v6361
        %v6426 = vunpack.c.l.b16 %v6362
        %v6427 = vunpack.c.l.b16 %v6363
        %v6428 = vunpack.c.l.b16 %v6364
        %v6429 = vunpack.c.l.b16 %v6365
        %v6430 = vunpack.c.l.b16 %v6366
        %v6431 = vunpack.c.l.b16 %v6367
        %v6432 = vunpack.c.l.b16 %v6368
        %v6433 = vunpack.c.l.b16 %v6369
        %v6434 = vunpack.c.l.b16 %v6370
        %v6435 = vunpack.c.l.b16 %v6371
        %v6436 = vunpack.c.l.b16 %v6372
        %v6437 = vunpack.c.l.b16 %v6373
        %v6438 = vunpack.c.l.b16 %v6374
        %v6439 = vunpack.c.l.b16 %v6375
        %v6440 = vunpack.c.l.b16 %v6376
        %v6441 = vunpack.c.l.b16 %v6377
        %v6442 = vunpack.c.l.b16 %v6378
        %v6443 = vunpack.c.l.b16 %v6379
        %v6444 = vunpack.c.l.b16 %v6380
        %v6445 = vunpack.c.l.b16 %v6381
        %v6446 = vunpack.c.l.b16 %v6382
        %v6447 = vunpack.c.l.b16 %v6383
        %v6448 = vunpack.c.l.b16 %v6384
        %v6449 = vunpack.c.l.b16 %v6385
        %v6450 = vunpack.c.l.b16 %v6386
        %v6451 = vunpack.c.l.b16 %v6387
        %v6452 = vunpack.c.l.b16 %v6388
        %v6453 = vunpack.c.l.b16 %v6389
        %v6454 = vunpack.c.l.b16 %v6390
        %v6455 = vunpack.c.l.b16 %v6391
        %v6456 = vunpack.c.l.b16 %v6392
        %v6457 = vpack.c.b16 %v6426, %v6425
        %v6458 = vpack.c.b16 %v6428, %v6427
        %v6459 = vpack.c.b16 %v6430, %v6429
        %v6460 = vpack.c.b16 %v6432, %v6431
        %v6461 = vpack.c.b16 %v6434, %v6433
        %v6462 = vpack.c.b16 %v6436, %v6435
        %v6463 = vpack.c.b16 %v6438, %v6437
        %v6464 = vpack.c.b16 %v6440, %v6439
        %v6465 = vpack.c.b16 %v6442, %v6441
        %v6466 = vpack.c.b16 %v6444, %v6443
        %v6467 = vpack.c.b16 %v6446, %v6445
        %v6468 = vpack.c.b16 %v6448, %v6447
        %v6469 = vpack.c.b16 %v6450, %v6449
        %v6470 = vpack.c.b16 %v6452, %v6451
        %v6471 = vpack.c.b16 %v6454, %v6453
        %v6472 = vpack.c.b16 %v6456, %v6455
        %6489 = vmatprep.subr.bf16.mxu0 0
        %6490 = vmatpush1.bf16.msra.mxu0 %v6457
        %6491 = vmatprep.subr.bf16.mxu0 0
        %6492 = vmatpush1.bf16.msra.mxu0 %v6458
        %6493 = vmatprep.subr.bf16.mxu0 0
        %6494 = vmatpush1.bf16.msra.mxu0 %v6459
        %6495 = vmatprep.subr.bf16.mxu0 0
        %6496 = vmatpush1.bf16.msra.mxu0 %v6460
        %6497 = vmatprep.subr.bf16.mxu0 0
        %6498 = vmatpush1.bf16.msra.mxu0 %v6461
        %6499 = vmatprep.subr.bf16.mxu0 0
        %6500 = vmatpush1.bf16.msra.mxu0 %v6462
        %6501 = vmatprep.subr.bf16.mxu0 0
        %6502 = vmatpush1.bf16.msra.mxu0 %v6463
        %6503 = vmatprep.subr.bf16.mxu0 0
        %6504 = vmatpush1.bf16.msra.mxu0 %v6464
        %6505 = vmatprep.subr.bf16.mxu0 0
        %6506 = vmatpush1.bf16.msra.mxu0 %v6465
        %6507 = vmatprep.subr.bf16.mxu0 0
        %6508 = vmatpush1.bf16.msra.mxu0 %v6466
        %6509 = vmatprep.subr.bf16.mxu0 0
        %6510 = vmatpush1.bf16.msra.mxu0 %v6467
        %6511 = vmatprep.subr.bf16.mxu0 0
        %6512 = vmatpush1.bf16.msra.mxu0 %v6468
        %6513 = vmatprep.subr.bf16.mxu0 0
        %6514 = vmatpush1.bf16.msra.mxu0 %v6469
        %6515 = vmatprep.subr.bf16.mxu0 0
        %6516 = vmatpush1.bf16.msra.mxu0 %v6470
        %6517 = vmatprep.subr.bf16.mxu0 0
        %6518 = vmatpush1.bf16.msra.mxu0 %v6471
        %6519 = vmatprep.subr.bf16.mxu0 0
        %6520 = vmatpush1.bf16.msra.mxu0 %v6472
        %6521 = vmatprep.mubr.bf16.mxu0 %v6360
        %6522 = vmatmul.mubr.bf16.gmra.mrb[0].mxu0 %v6359
        %v6523 = vpop.f32.mrb[0].mxu0
        %v6524 = vadd.f32 0.0, %v6523
        %v6525 = vpop.f32.mrb[0].mxu0
        %v6526 = vpop.f32.mrb[0].mxu0
        %v6527 = vadd.f32 0.0, %v6526
        %v6528 = vpop.f32.mrb[0].mxu0
        %6529 = vdwg.mxu0
        %v6530 = vld [vmem:[#allocation37] sm:$0x1]
        %v6532 = vlaneseq
        %v6533 = vshrl.u32 %v6532, 7
        %v6534 = vsub.s32 0, %v6533
        %v6535 = vrot.slane %v6530, %v6534
        %v6537 = vmul.f32 %v6524, %v6535
        %v6538 = vmul.f32 %v6527, %v6535
        %v6539 = vld [vmem:[#allocation38] sm:$0x1]
        %v6541 = vlaneseq
        %v6542 = vshrl.u32 %v6541, 7
        %v6543 = vsub.s32 0, %v6542
        %v6544 = vrot.slane %v6539, %v6543
        %v6546 = vadd.f32 %v6537, %v6544
        %v6547 = vadd.f32 %v6538, %v6544
        %v6548 = vmax.f32 %v6546, 0.0
        %v6549 = vmax.f32 %v6547, 0.0
        %v6550 = vld [vmem:[#allocation3] sm:$0x7]
        %v6551 = vsel %vm4815, 0, %v6550
        %6552 = vst [vmem:[#allocation3] sm:$0x7] %v6551
        %v6553 = vpack.c.bf16 %v6549, %v6548
        %v6555 = vunpack.c.l.b16 %v6553
        %v6556 = vunpack.c.h.b16 %v6553
        %v6557 = vpack.c.b16 %v6555, %v6555
        %v6558 = vpack.c.b16 %v6556, %v6556
        %v6560 = vshrl.u32 %v6557, 16
        %v6562 = vrot.slane %v6560, 5
        %v6563 = vshll.u32 %v6557, 16
        %v6565 = vrot.slane %v6563, 6
        %v6566 = vor.u32 %v6562, %v6565
        %v6567 = vrot.slane %v6566, 4
        %v6569 = vshrl.u32 %v6558, 16
        %v6571 = vrot.slane %v6569, 5
        %v6572 = vshll.u32 %v6558, 16
        %v6574 = vrot.slane %v6572, 6
        %v6575 = vor.u32 %v6571, %v6574
        %v6576 = vsel %vm4826, %v6567, %v6575
        %v6577 = vrot.slane %v6575, 4
        %v6581 = vld [vmem:[#allocation3] sm:$0xc]
        %v6582 = vsel %vm4851, %v6566, %v6581
        %6583 = vst [vmem:[#allocation3] sm:$0xc] %v6582
        %6584 = vst [vmem:[#allocation3 + $0x4] sm:$0xf] %v6576
        %v6585 = vld [vmem:[#allocation3 + $0x8] sm:$0x7]
        %v6586 = vsel %vm4815, %v6577, %v6585
        %6587 = vst [vmem:[#allocation3 + $0x8] sm:$0x7] %v6586
        %v6588 = vld [vmem:[#allocation3 + $0x8] sm:$0xc]
        %v6589 = vsel %vm4851, 0, %v6588
        %6590 = vst [vmem:[#allocation3 + $0x8] sm:$0xc] %v6589
        %6591 = vst [vmem:[#allocation3 + $0xc] sm:$0x1] 0
        %v6592 = vld [vmem:[#allocation3] sm:$0xf]
        %v6593 = vld [vmem:[#allocation3 + $0x4] sm:$0xf]
        %v6594 = vsel %vm4891, %v6592, 0
        %v6595 = vsel %vm4892, %v6593, 0
        %v6596 = vld [vmem:[%s59] sm:$0xf]
        %v6597 = vld [vmem:[%s59 + $0x4] sm:$0xf]
        %v6598 = vld [vmem:[%s59 + $0x8] sm:$0xf]
        %v6599 = vld [vmem:[%s59 + $0xc] sm:$0xf]
        %v6600 = vld [vmem:[%s59 + $0x10] sm:$0xf]
        %v6601 = vld [vmem:[%s59 + $0x14] sm:$0xf]
        %v6602 = vld [vmem:[%s59 + $0x18] sm:$0xf]
        %v6603 = vld [vmem:[%s59 + $0x1c] sm:$0xf]
        %v6604 = vld [vmem:[%s59 + $0x20] sm:$0xf]
        %v6605 = vld [vmem:[%s59 + $0x24] sm:$0xf]
        %v6606 = vld [vmem:[%s59 + $0x28] sm:$0xf]
        %v6607 = vld [vmem:[%s59 + $0x2c] sm:$0xf]
        %v6608 = vld [vmem:[%s59 + $0x30] sm:$0xf]
        %v6609 = vld [vmem:[%s59 + $0x34] sm:$0xf]
        %v6610 = vld [vmem:[%s59 + $0x38] sm:$0xf]
        %v6611 = vld [vmem:[%s59 + $0x3c] sm:$0xf]
        %v6612 = vld [vmem:[#allocation3 + $0x8] sm:$0x1]
        %s6613 = scalar_lea.vmem %s59, 64
        %v6614 = vld [vmem:[%s6613] sm:$0xf]
        %v6615 = vld [vmem:[%s6613 + $0x4] sm:$0xf]
        %v6616 = vld [vmem:[%s6613 + $0x8] sm:$0xf]
        %v6617 = vld [vmem:[%s6613 + $0xc] sm:$0xf]
        %v6618 = vld [vmem:[%s6613 + $0x10] sm:$0xf]
        %v6619 = vld [vmem:[%s6613 + $0x14] sm:$0xf]
        %v6620 = vld [vmem:[%s6613 + $0x18] sm:$0xf]
        %v6621 = vld [vmem:[%s6613 + $0x1c] sm:$0xf]
        %v6622 = vld [vmem:[%s6613 + $0x20] sm:$0xf]
        %v6623 = vld [vmem:[%s6613 + $0x24] sm:$0xf]
        %v6624 = vld [vmem:[%s6613 + $0x28] sm:$0xf]
        %v6625 = vld [vmem:[%s6613 + $0x2c] sm:$0xf]
        %v6626 = vld [vmem:[%s6613 + $0x30] sm:$0xf]
        %v6627 = vld [vmem:[%s6613 + $0x34] sm:$0xf]
        %v6628 = vld [vmem:[%s6613 + $0x38] sm:$0xf]
        %v6629 = vld [vmem:[%s6613 + $0x3c] sm:$0xf]
        %v6633 = vunpack.c.l.b16 %v6592
        %v6634 = vunpack.c.l.b16 %v6593
        %v6635 = vunpack.c.l.b16 %v6612
        %v6636 = vpack.c.b16 %v6634, %v6633
        %v6637 = vpack.c.b16 %v6635, %v6635
        %v6639 = vshrl.u32 %v6636, 16
        %v6641 = vshll.u32 %v6636, 16
        %v6643 = vrot.slane %v6641, 1
        %v6644 = vor.u32 %v6639, %v6643
        %v6646 = vshll.u32 %v6637, 16
        %v6648 = vrot.slane %v6646, 1
        %v6649 = vsel %vm2739, %v6644, %v6648
        %v6667 = vunpack.c.l.b16 %v6614
        %v6668 = vunpack.c.l.b16 %v6615
        %v6669 = vunpack.c.l.b16 %v6616
        %v6670 = vunpack.c.l.b16 %v6617
        %v6671 = vunpack.c.l.b16 %v6618
        %v6672 = vunpack.c.l.b16 %v6619
        %v6673 = vunpack.c.l.b16 %v6620
        %v6674 = vunpack.c.l.b16 %v6621
        %v6675 = vunpack.c.l.b16 %v6622
        %v6676 = vunpack.c.l.b16 %v6623
        %v6677 = vunpack.c.l.b16 %v6624
        %v6678 = vunpack.c.l.b16 %v6625
        %v6679 = vunpack.c.l.b16 %v6626
        %v6680 = vunpack.c.l.b16 %v6627
        %v6681 = vunpack.c.l.b16 %v6628
        %v6682 = vunpack.c.l.b16 %v6629
        %v6683 = vpack.c.b16 %v6668, %v6667
        %v6684 = vpack.c.b16 %v6670, %v6669
        %v6685 = vpack.c.b16 %v6672, %v6671
        %v6686 = vpack.c.b16 %v6674, %v6673
        %v6687 = vpack.c.b16 %v6676, %v6675
        %v6688 = vpack.c.b16 %v6678, %v6677
        %v6689 = vpack.c.b16 %v6680, %v6679
        %v6690 = vpack.c.b16 %v6682, %v6681
        %6699 = vmatprep.subr.bf16.mxu0 0
        %6700 = vmatpush1.bf16.msra.mxu0 %v6683
        %6701 = vmatprep.subr.bf16.mxu0 0
        %6702 = vmatpush1.bf16.msra.mxu0 %v6684
        %6703 = vmatprep.subr.bf16.mxu0 0
        %6704 = vmatpush1.bf16.msra.mxu0 %v6685
        %6705 = vmatprep.subr.bf16.mxu0 0
        %6706 = vmatpush1.bf16.msra.mxu0 %v6686
        %6707 = vmatprep.subr.bf16.mxu0 0
        %6708 = vmatpush1.bf16.msra.mxu0 %v6687
        %6709 = vmatprep.subr.bf16.mxu0 0
        %6710 = vmatpush1.bf16.msra.mxu0 %v6688
        %6711 = vmatprep.subr.bf16.mxu0 0
        %6712 = vmatpush1.bf16.msra.mxu0 %v6689
        %6713 = vmatprep.subr.bf16.mxu0 0
        %6714 = vmatpush1.bf16.msra.mxu0 %v6690
        %6715 = vmatprep.subr.bf16.mxu0 0
        %6716 = vmatpush1.bf16.msra.mxu0 0
        %6717 = vmatprep.subr.bf16.mxu0 0
        %6718 = vmatpush1.bf16.msra.mxu0 0
        %6719 = vmatprep.subr.bf16.mxu0 0
        %6720 = vmatpush1.bf16.msra.mxu0 0
        %6721 = vmatprep.subr.bf16.mxu0 0
        %6722 = vmatpush1.bf16.msra.mxu0 0
        %6723 = vmatprep.subr.bf16.mxu0 0
        %6724 = vmatpush1.bf16.msra.mxu0 0
        %6725 = vmatprep.subr.bf16.mxu0 0
        %6726 = vmatpush1.bf16.msra.mxu0 0
        %6727 = vmatprep.subr.bf16.mxu0 0
        %6728 = vmatpush1.bf16.msra.mxu0 0
        %6729 = vmatprep.subr.bf16.mxu0 0
        %6730 = vmatpush1.bf16.msra.mxu0 0
        %6731 = vmatprep.mubr.bf16.mxu0 0
        %6732 = vmatmul.mubr.bf16.gmra.mrb[0].mxu0 %v6649
        %v6733 = vpop.f32.mrb[0].mxu0
        %v6734 = vadd.f32 0.0, %v6733
        %v6735 = vpop.f32.mrb[0].mxu0
        %v6736 = vpop.f32.mrb[0].mxu0
        %v6737 = vadd.f32 0.0, %v6736
        %v6738 = vpop.f32.mrb[0].mxu0
        %6739 = vdwg.mxu0
        %v6742 = vunpack.c.l.b16 %v6594
        %v6743 = vunpack.c.l.b16 %v6595
        %v6744 = vpack.c.b16 %v6743, %v6742
        %v6762 = vunpack.c.l.b16 %v6596
        %v6763 = vunpack.c.l.b16 %v6597
        %v6764 = vunpack.c.l.b16 %v6598
        %v6765 = vunpack.c.l.b16 %v6599
        %v6766 = vunpack.c.l.b16 %v6600
        %v6767 = vunpack.c.l.b16 %v6601
        %v6768 = vunpack.c.l.b16 %v6602
        %v6769 = vunpack.c.l.b16 %v6603
        %v6770 = vunpack.c.l.b16 %v6604
        %v6771 = vunpack.c.l.b16 %v6605
        %v6772 = vunpack.c.l.b16 %v6606
        %v6773 = vunpack.c.l.b16 %v6607
        %v6774 = vunpack.c.l.b16 %v6608
        %v6775 = vunpack.c.l.b16 %v6609
        %v6776 = vunpack.c.l.b16 %v6610
        %v6777 = vunpack.c.l.b16 %v6611
        %v6778 = vpack.c.b16 %v6763, %v6762
        %v6779 = vpack.c.b16 %v6765, %v6764
        %v6780 = vpack.c.b16 %v6767, %v6766
        %v6781 = vpack.c.b16 %v6769, %v6768
        %v6782 = vpack.c.b16 %v6771, %v6770
        %v6783 = vpack.c.b16 %v6773, %v6772
        %v6784 = vpack.c.b16 %v6775, %v6774
        %v6785 = vpack.c.b16 %v6777, %v6776
        %6794 = vmatprep.subr.bf16.mxu0 0
        %6795 = vmatpush1.bf16.msra.mxu0 %v6778
        %6796 = vmatprep.subr.bf16.mxu0 0
        %6797 = vmatpush1.bf16.msra.mxu0 %v6779
        %6798 = vmatprep.subr.bf16.mxu0 0
        %6799 = vmatpush1.bf16.msra.mxu0 %v6780
        %6800 = vmatprep.subr.bf16.mxu0 0
        %6801 = vmatpush1.bf16.msra.mxu0 %v6781
        %6802 = vmatprep.subr.bf16.mxu0 0
        %6803 = vmatpush1.bf16.msra.mxu0 %v6782
        %6804 = vmatprep.subr.bf16.mxu0 0
        %6805 = vmatpush1.bf16.msra.mxu0 %v6783
        %6806 = vmatprep.subr.bf16.mxu0 0
        %6807 = vmatpush1.bf16.msra.mxu0 %v6784
        %6808 = vmatprep.subr.bf16.mxu0 0
        %6809 = vmatpush1.bf16.msra.mxu0 %v6785
        %6810 = vmatprep.subr.bf16.mxu0 0
        %6811 = vmatpush1.bf16.msra.mxu0 0
        %6812 = vmatprep.subr.bf16.mxu0 0
        %6813 = vmatpush1.bf16.msra.mxu0 0
        %6814 = vmatprep.subr.bf16.mxu0 0
        %6815 = vmatpush1.bf16.msra.mxu0 0
        %6816 = vmatprep.subr.bf16.mxu0 0
        %6817 = vmatpush1.bf16.msra.mxu0 0
        %6818 = vmatprep.subr.bf16.mxu0 0
        %6819 = vmatpush1.bf16.msra.mxu0 0
        %6820 = vmatprep.subr.bf16.mxu0 0
        %6821 = vmatpush1.bf16.msra.mxu0 0
        %6822 = vmatprep.subr.bf16.mxu0 0
        %6823 = vmatpush1.bf16.msra.mxu0 0
        %6824 = vmatprep.subr.bf16.mxu0 0
        %6825 = vmatpush1.bf16.msra.mxu0 0
        %6826 = vmatprep.mubr.bf16.mxu0 0
        %6827 = vmatmul.mubr.bf16.gmra.mrb[0].mxu0 %v6744
        %v6828 = vpop.f32.mrb[0].mxu0
        %v6829 = vadd.f32 %v6734, %v6828
        %v6830 = vpop.f32.mrb[0].mxu0
        %v6831 = vpop.f32.mrb[0].mxu0
        %v6832 = vadd.f32 %v6737, %v6831
        %v6833 = vpop.f32.mrb[0].mxu0
        %6834 = vdwg.mxu0
        %v6835 = vld [vmem:[#allocation3] sm:$0xe]
        %v6836 = vsel %vm5146, %v6835, 0
        %v6837 = vsel %vm5147, %v6593, 0
        %v6838 = vsel %vm5148, %v6612, 0
        %s6839 = scalar_lea.vmem %s59, 128
        %v6840 = vld [vmem:[%s6839] sm:$0xf]
        %v6841 = vld [vmem:[%s6839 + $0x4] sm:$0xf]
        %v6842 = vld [vmem:[%s6839 + $0x8] sm:$0xf]
        %v6843 = vld [vmem:[%s6839 + $0xc] sm:$0xf]
        %v6844 = vld [vmem:[%s6839 + $0x10] sm:$0xf]
        %v6845 = vld [vmem:[%s6839 + $0x14] sm:$0xf]
        %v6846 = vld [vmem:[%s6839 + $0x18] sm:$0xf]
        %v6847 = vld [vmem:[%s6839 + $0x1c] sm:$0xf]
        %v6848 = vld [vmem:[%s6839 + $0x20] sm:$0xf]
        %v6849 = vld [vmem:[%s6839 + $0x24] sm:$0xf]
        %v6850 = vld [vmem:[%s6839 + $0x28] sm:$0xf]
        %v6851 = vld [vmem:[%s6839 + $0x2c] sm:$0xf]
        %v6852 = vld [vmem:[%s6839 + $0x30] sm:$0xf]
        %v6853 = vld [vmem:[%s6839 + $0x34] sm:$0xf]
        %v6854 = vld [vmem:[%s6839 + $0x38] sm:$0xf]
        %v6855 = vld [vmem:[%s6839 + $0x3c] sm:$0xf]
        %v6859 = vunpack.c.l.b16 %v6836
        %v6860 = vunpack.c.l.b16 %v6837
        %v6861 = vunpack.c.l.b16 %v6838
        %v6862 = vpack.c.b16 %v6860, %v6859
        %v6863 = vpack.c.b16 %v6861, %v6861
        %v6864 = vrot.slane %v6862, 1
        %v6865 = vrot.slane %v6863, 1
        %v6866 = vsel %vm3138, %v6864, %v6865
        %v6884 = vunpack.c.l.b16 %v6840
        %v6885 = vunpack.c.l.b16 %v6841
        %v6886 = vunpack.c.l.b16 %v6842
        %v6887 = vunpack.c.l.b16 %v6843
        %v6888 = vunpack.c.l.b16 %v6844
        %v6889 = vunpack.c.l.b16 %v6845
        %v6890 = vunpack.c.l.b16 %v6846
        %v6891 = vunpack.c.l.b16 %v6847
        %v6892 = vunpack.c.l.b16 %v6848
        %v6893 = vunpack.c.l.b16 %v6849
        %v6894 = vunpack.c.l.b16 %v6850
        %v6895 = vunpack.c.l.b16 %v6851
        %v6896 = vunpack.c.l.b16 %v6852
        %v6897 = vunpack.c.l.b16 %v6853
        %v6898 = vunpack.c.l.b16 %v6854
        %v6899 = vunpack.c.l.b16 %v6855
        %v6900 = vpack.c.b16 %v6885, %v6884
        %v6901 = vpack.c.b16 %v6887, %v6886
        %v6902 = vpack.c.b16 %v6889, %v6888
        %v6903 = vpack.c.b16 %v6891, %v6890
        %v6904 = vpack.c.b16 %v6893, %v6892
        %v6905 = vpack.c.b16 %v6895, %v6894
        %v6906 = vpack.c.b16 %v6897, %v6896
        %v6907 = vpack.c.b16 %v6899, %v6898
        %6916 = vmatprep.subr.bf16.mxu0 0
        %6917 = vmatpush1.bf16.msra.mxu0 %v6900
        %6918 = vmatprep.subr.bf16.mxu0 0
        %6919 = vmatpush1.bf16.msra.mxu0 %v6901
        %6920 = vmatprep.subr.bf16.mxu0 0
        %6921 = vmatpush1.bf16.msra.mxu0 %v6902
        %6922 = vmatprep.subr.bf16.mxu0 0
        %6923 = vmatpush1.bf16.msra.mxu0 %v6903
        %6924 = vmatprep.subr.bf16.mxu0 0
        %6925 = vmatpush1.bf16.msra.mxu0 %v6904
        %6926 = vmatprep.subr.bf16.mxu0 0
        %6927 = vmatpush1.bf16.msra.mxu0 %v6905
        %6928 = vmatprep.subr.bf16.mxu0 0
        %6929 = vmatpush1.bf16.msra.mxu0 %v6906
        %6930 = vmatprep.subr.bf16.mxu0 0
        %6931 = vmatpush1.bf16.msra.mxu0 %v6907
        %6932 = vmatprep.subr.bf16.mxu0 0
        %6933 = vmatpush1.bf16.msra.mxu0 0
        %6934 = vmatprep.subr.bf16.mxu0 0
        %6935 = vmatpush1.bf16.msra.mxu0 0
        %6936 = vmatprep.subr.bf16.mxu0 0
        %6937 = vmatpush1.bf16.msra.mxu0 0
        %6938 = vmatprep.subr.bf16.mxu0 0
        %6939 = vmatpush1.bf16.msra.mxu0 0
        %6940 = vmatprep.subr.bf16.mxu0 0
        %6941 = vmatpush1.bf16.msra.mxu0 0
        %6942 = vmatprep.subr.bf16.mxu0 0
        %6943 = vmatpush1.bf16.msra.mxu0 0
        %6944 = vmatprep.subr.bf16.mxu0 0
        %6945 = vmatpush1.bf16.msra.mxu0 0
        %6946 = vmatprep.subr.bf16.mxu0 0
        %6947 = vmatpush1.bf16.msra.mxu0 0
        %6948 = vmatprep.mubr.bf16.mxu0 0
        %6949 = vmatmul.mubr.bf16.gmra.mrb[0].mxu0 %v6866
        %v6950 = vpop.f32.mrb[0].mxu0
        %v6951 = vadd.f32 0.0, %v6950
        %v6952 = vpop.f32.mrb[0].mxu0
        %v6953 = vpop.f32.mrb[0].mxu0
        %v6954 = vadd.f32 0.0, %v6953
        %v6955 = vpop.f32.mrb[0].mxu0
        %6956 = vdwg.mxu0
        %v6957 = vadd.f32 %v6829, %v6951
        %v6958 = vadd.f32 %v6832, %v6954
        %v6959 = vld [vmem:[#allocation3] sm:$0xc]
        %v6960 = vld [vmem:[#allocation3 + $0x8] sm:$0x3]
        %v6961 = vsel %vm5284, %v6959, 0
        %v6962 = vsel %vm5285, %v6593, 0
        %v6963 = vsel %vm5286, %v6960, 0
        %s6964 = scalar_lea.vmem %s59, 192
        %v6965 = vld [vmem:[%s6964] sm:$0xf]
        %v6966 = vld [vmem:[%s6964 + $0x4] sm:$0xf]
        %v6967 = vld [vmem:[%s6964 + $0x8] sm:$0xf]
        %v6968 = vld [vmem:[%s6964 + $0xc] sm:$0xf]
        %v6969 = vld [vmem:[%s6964 + $0x10] sm:$0xf]
        %v6970 = vld [vmem:[%s6964 + $0x14] sm:$0xf]
        %v6971 = vld [vmem:[%s6964 + $0x18] sm:$0xf]
        %v6972 = vld [vmem:[%s6964 + $0x1c] sm:$0xf]
        %v6973 = vld [vmem:[%s6964 + $0x20] sm:$0xf]
        %v6974 = vld [vmem:[%s6964 + $0x24] sm:$0xf]
        %v6975 = vld [vmem:[%s6964 + $0x28] sm:$0xf]
        %v6976 = vld [vmem:[%s6964 + $0x2c] sm:$0xf]
        %v6977 = vld [vmem:[%s6964 + $0x30] sm:$0xf]
        %v6978 = vld [vmem:[%s6964 + $0x34] sm:$0xf]
        %v6979 = vld [vmem:[%s6964 + $0x38] sm:$0xf]
        %v6980 = vld [vmem:[%s6964 + $0x3c] sm:$0xf]
        %v6984 = vunpack.c.l.b16 %v6961
        %v6985 = vunpack.c.l.b16 %v6962
        %v6986 = vunpack.c.l.b16 %v6963
        %v6987 = vpack.c.b16 %v6985, %v6984
        %v6988 = vpack.c.b16 %v6986, %v6986
        %v6989 = vrot.slane %v6987, 2
        %v6990 = vrot.slane %v6988, 2
        %v6991 = vsel %vm5315, %v6989, %v6990
        %v7009 = vunpack.c.l.b16 %v6965
        %v7010 = vunpack.c.l.b16 %v6966
        %v7011 = vunpack.c.l.b16 %v6967
        %v7012 = vunpack.c.l.b16 %v6968
        %v7013 = vunpack.c.l.b16 %v6969
        %v7014 = vunpack.c.l.b16 %v6970
        %v7015 = vunpack.c.l.b16 %v6971
        %v7016 = vunpack.c.l.b16 %v6972
        %v7017 = vunpack.c.l.b16 %v6973
        %v7018 = vunpack.c.l.b16 %v6974
        %v7019 = vunpack.c.l.b16 %v6975
        %v7020 = vunpack.c.l.b16 %v6976
        %v7021 = vunpack.c.l.b16 %v6977
        %v7022 = vunpack.c.l.b16 %v6978
        %v7023 = vunpack.c.l.b16 %v6979
        %v7024 = vunpack.c.l.b16 %v6980
        %v7025 = vpack.c.b16 %v7010, %v7009
        %v7026 = vpack.c.b16 %v7012, %v7011
        %v7027 = vpack.c.b16 %v7014, %v7013
        %v7028 = vpack.c.b16 %v7016, %v7015
        %v7029 = vpack.c.b16 %v7018, %v7017
        %v7030 = vpack.c.b16 %v7020, %v7019
        %v7031 = vpack.c.b16 %v7022, %v7021
        %v7032 = vpack.c.b16 %v7024, %v7023
        %7041 = vmatprep.subr.bf16.mxu0 0
        %7042 = vmatpush1.bf16.msra.mxu0 %v7025
        %7043 = vmatprep.subr.bf16.mxu0 0
        %7044 = vmatpush1.bf16.msra.mxu0 %v7026
        %7045 = vmatprep.subr.bf16.mxu0 0
        %7046 = vmatpush1.bf16.msra.mxu0 %v7027
        %7047 = vmatprep.subr.bf16.mxu0 0
        %7048 = vmatpush1.bf16.msra.mxu0 %v7028
        %7049 = vmatprep.subr.bf16.mxu0 0
        %7050 = vmatpush1.bf16.msra.mxu0 %v7029
        %7051 = vmatprep.subr.bf16.mxu0 0
        %7052 = vmatpush1.bf16.msra.mxu0 %v7030
        %7053 = vmatprep.subr.bf16.mxu0 0
        %7054 = vmatpush1.bf16.msra.mxu0 %v7031
        %7055 = vmatprep.subr.bf16.mxu0 0
        %7056 = vmatpush1.bf16.msra.mxu0 %v7032
        %7057 = vmatprep.subr.bf16.mxu0 0
        %7058 = vmatpush1.bf16.msra.mxu0 0
        %7059 = vmatprep.subr.bf16.mxu0 0
        %7060 = vmatpush1.bf16.msra.mxu0 0
        %7061 = vmatprep.subr.bf16.mxu0 0
        %7062 = vmatpush1.bf16.msra.mxu0 0
        %7063 = vmatprep.subr.bf16.mxu0 0
        %7064 = vmatpush1.bf16.msra.mxu0 0
        %7065 = vmatprep.subr.bf16.mxu0 0
        %7066 = vmatpush1.bf16.msra.mxu0 0
        %7067 = vmatprep.subr.bf16.mxu0 0
        %7068 = vmatpush1.bf16.msra.mxu0 0
        %7069 = vmatprep.subr.bf16.mxu0 0
        %7070 = vmatpush1.bf16.msra.mxu0 0
        %7071 = vmatprep.subr.bf16.mxu0 0
        %7072 = vmatpush1.bf16.msra.mxu0 0
        %7073 = vmatprep.mubr.bf16.mxu0 0
        %7074 = vmatmul.mubr.bf16.gmra.mrb[0].mxu0 %v6991
        %v7075 = vpop.f32.mrb[0].mxu0
        %v7076 = vadd.f32 0.0, %v7075
        %v7077 = vpop.f32.mrb[0].mxu0
        %v7078 = vpop.f32.mrb[0].mxu0
        %v7079 = vadd.f32 0.0, %v7078
        %v7080 = vpop.f32.mrb[0].mxu0
        %7081 = vdwg.mxu0
        %v7082 = vadd.f32 %v6957, %v7076
        %v7083 = vadd.f32 %v6958, %v7079
        %v7084 = vld [vmem:[#allocation3 + $0x8] sm:$0x7]
        %s7085 = scalar_lea.vmem %s59, 256
        %v7086 = vld [vmem:[%s7085] sm:$0xf]
        %v7087 = vld [vmem:[%s7085 + $0x4] sm:$0xf]
        %v7088 = vld [vmem:[%s7085 + $0x8] sm:$0xf]
        %v7089 = vld [vmem:[%s7085 + $0xc] sm:$0xf]
        %v7090 = vld [vmem:[%s7085 + $0x10] sm:$0xf]
        %v7091 = vld [vmem:[%s7085 + $0x14] sm:$0xf]
        %v7092 = vld [vmem:[%s7085 + $0x18] sm:$0xf]
        %v7093 = vld [vmem:[%s7085 + $0x1c] sm:$0xf]
        %v7094 = vld [vmem:[%s7085 + $0x20] sm:$0xf]
        %v7095 = vld [vmem:[%s7085 + $0x24] sm:$0xf]
        %v7096 = vld [vmem:[%s7085 + $0x28] sm:$0xf]
        %v7097 = vld [vmem:[%s7085 + $0x2c] sm:$0xf]
        %v7098 = vld [vmem:[%s7085 + $0x30] sm:$0xf]
        %v7099 = vld [vmem:[%s7085 + $0x34] sm:$0xf]
        %v7100 = vld [vmem:[%s7085 + $0x38] sm:$0xf]
        %v7101 = vld [vmem:[%s7085 + $0x3c] sm:$0xf]
        %v7104 = vunpack.c.l.b16 %v6959
        %v7105 = vunpack.c.l.b16 %v7084
        %v7106 = vpack.c.b16 %v6634, %v7104
        %v7107 = vpack.c.b16 %v7105, %v7105
        %v7109 = vshrl.u32 %v7106, 16
        %v7111 = vrot.slane %v7109, 2
        %v7112 = vshll.u32 %v7106, 16
        %v7114 = vrot.slane %v7112, 3
        %v7115 = vor.u32 %v7111, %v7114
        %v7117 = vshrl.u32 %v7107, 16
        %v7119 = vrot.slane %v7117, 2
        %v7120 = vshll.u32 %v7107, 16
        %v7122 = vrot.slane %v7120, 3
        %v7123 = vor.u32 %v7119, %v7122
        %v7124 = vsel %vm5435, %v7115, %v7123
        %v7142 = vunpack.c.l.b16 %v7086
        %v7143 = vunpack.c.l.b16 %v7087
        %v7144 = vunpack.c.l.b16 %v7088
        %v7145 = vunpack.c.l.b16 %v7089
        %v7146 = vunpack.c.l.b16 %v7090
        %v7147 = vunpack.c.l.b16 %v7091
        %v7148 = vunpack.c.l.b16 %v7092
        %v7149 = vunpack.c.l.b16 %v7093
        %v7150 = vunpack.c.l.b16 %v7094
        %v7151 = vunpack.c.l.b16 %v7095
        %v7152 = vunpack.c.l.b16 %v7096
        %v7153 = vunpack.c.l.b16 %v7097
        %v7154 = vunpack.c.l.b16 %v7098
        %v7155 = vunpack.c.l.b16 %v7099
        %v7156 = vunpack.c.l.b16 %v7100
        %v7157 = vunpack.c.l.b16 %v7101
        %v7158 = vpack.c.b16 %v7143, %v7142
        %v7159 = vpack.c.b16 %v7145, %v7144
        %v7160 = vpack.c.b16 %v7147, %v7146
        %v7161 = vpack.c.b16 %v7149, %v7148
        %v7162 = vpack.c.b16 %v7151, %v7150
        %v7163 = vpack.c.b16 %v7153, %v7152
        %v7164 = vpack.c.b16 %v7155, %v7154
        %v7165 = vpack.c.b16 %v7157, %v7156
        %7174 = vmatprep.subr.bf16.mxu0 0
        %7175 = vmatpush1.bf16.msra.mxu0 %v7158
        %7176 = vmatprep.subr.bf16.mxu0 0
        %7177 = vmatpush1.bf16.msra.mxu0 %v7159
        %7178 = vmatprep.subr.bf16.mxu0 0
        %7179 = vmatpush1.bf16.msra.mxu0 %v7160
        %7180 = vmatprep.subr.bf16.mxu0 0
        %7181 = vmatpush1.bf16.msra.mxu0 %v7161
        %7182 = vmatprep.subr.bf16.mxu0 0
        %7183 = vmatpush1.bf16.msra.mxu0 %v7162
        %7184 = vmatprep.subr.bf16.mxu0 0
        %7185 = vmatpush1.bf16.msra.mxu0 %v7163
        %7186 = vmatprep.subr.bf16.mxu0 0
        %7187 = vmatpush1.bf16.msra.mxu0 %v7164
        %7188 = vmatprep.subr.bf16.mxu0 0
        %7189 = vmatpush1.bf16.msra.mxu0 %v7165
        %7190 = vmatprep.subr.bf16.mxu0 0
        %7191 = vmatpush1.bf16.msra.mxu0 0
        %7192 = vmatprep.subr.bf16.mxu0 0
        %7193 = vmatpush1.bf16.msra.mxu0 0
        %7194 = vmatprep.subr.bf16.mxu0 0
        %7195 = vmatpush1.bf16.msra.mxu0 0
        %7196 = vmatprep.subr.bf16.mxu0 0
        %7197 = vmatpush1.bf16.msra.mxu0 0
        %7198 = vmatprep.subr.bf16.mxu0 0
        %7199 = vmatpush1.bf16.msra.mxu0 0
        %7200 = vmatprep.subr.bf16.mxu0 0
        %7201 = vmatpush1.bf16.msra.mxu0 0
        %7202 = vmatprep.subr.bf16.mxu0 0
        %7203 = vmatpush1.bf16.msra.mxu0 0
        %7204 = vmatprep.subr.bf16.mxu0 0
        %7205 = vmatpush1.bf16.msra.mxu0 0
        %7206 = vmatprep.mubr.bf16.mxu0 0
        %7207 = vmatmul.mubr.bf16.gmra.mrb[0].mxu0 %v7124
        %v7208 = vpop.f32.mrb[0].mxu0
        %v7209 = vadd.f32 0.0, %v7208
        %v7210 = vpop.f32.mrb[0].mxu0
        %v7211 = vpop.f32.mrb[0].mxu0
        %v7212 = vadd.f32 0.0, %v7211
        %v7213 = vpop.f32.mrb[0].mxu0
        %7214 = vdwg.mxu0
        %v7215 = vadd.f32 %v7082, %v7209
        %v7216 = vadd.f32 %v7083, %v7212
        %v7217 = vld [vmem:[#allocation3] sm:$0x8]
        %v7218 = vsel %vm5553, %v7217, 0
        %v7219 = vsel %vm5554, %v6593, 0
        %v7220 = vsel %vm5555, %v7084, 0
        %s7221 = scalar_lea.vmem %s59, 320
        %v7222 = vld [vmem:[%s7221] sm:$0xf]
        %v7223 = vld [vmem:[%s7221 + $0x4] sm:$0xf]
        %v7224 = vld [vmem:[%s7221 + $0x8] sm:$0xf]
        %v7225 = vld [vmem:[%s7221 + $0xc] sm:$0xf]
        %v7226 = vld [vmem:[%s7221 + $0x10] sm:$0xf]
        %v7227 = vld [vmem:[%s7221 + $0x14] sm:$0xf]
        %v7228 = vld [vmem:[%s7221 + $0x18] sm:$0xf]
        %v7229 = vld [vmem:[%s7221 + $0x1c] sm:$0xf]
        %v7230 = vld [vmem:[%s7221 + $0x20] sm:$0xf]
        %v7231 = vld [vmem:[%s7221 + $0x24] sm:$0xf]
        %v7232 = vld [vmem:[%s7221 + $0x28] sm:$0xf]
        %v7233 = vld [vmem:[%s7221 + $0x2c] sm:$0xf]
        %v7234 = vld [vmem:[%s7221 + $0x30] sm:$0xf]
        %v7235 = vld [vmem:[%s7221 + $0x34] sm:$0xf]
        %v7236 = vld [vmem:[%s7221 + $0x38] sm:$0xf]
        %v7237 = vld [vmem:[%s7221 + $0x3c] sm:$0xf]
        %v7241 = vunpack.c.l.b16 %v7218
        %v7242 = vunpack.c.l.b16 %v7219
        %v7243 = vunpack.c.l.b16 %v7220
        %v7244 = vpack.c.b16 %v7242, %v7241
        %v7245 = vpack.c.b16 %v7243, %v7243
        %v7246 = vrot.slane %v7244, 3
        %v7247 = vrot.slane %v7245, 3
        %v7248 = vsel %vm5584, %v7246, %v7247
        %v7266 = vunpack.c.l.b16 %v7222
        %v7267 = vunpack.c.l.b16 %v7223
        %v7268 = vunpack.c.l.b16 %v7224
        %v7269 = vunpack.c.l.b16 %v7225
        %v7270 = vunpack.c.l.b16 %v7226
        %v7271 = vunpack.c.l.b16 %v7227
        %v7272 = vunpack.c.l.b16 %v7228
        %v7273 = vunpack.c.l.b16 %v7229
        %v7274 = vunpack.c.l.b16 %v7230
        %v7275 = vunpack.c.l.b16 %v7231
        %v7276 = vunpack.c.l.b16 %v7232
        %v7277 = vunpack.c.l.b16 %v7233
        %v7278 = vunpack.c.l.b16 %v7234
        %v7279 = vunpack.c.l.b16 %v7235
        %v7280 = vunpack.c.l.b16 %v7236
        %v7281 = vunpack.c.l.b16 %v7237
        %v7282 = vpack.c.b16 %v7267, %v7266
        %v7283 = vpack.c.b16 %v7269, %v7268
        %v7284 = vpack.c.b16 %v7271, %v7270
        %v7285 = vpack.c.b16 %v7273, %v7272
        %v7286 = vpack.c.b16 %v7275, %v7274
        %v7287 = vpack.c.b16 %v7277, %v7276
        %v7288 = vpack.c.b16 %v7279, %v7278
        %v7289 = vpack.c.b16 %v7281, %v7280
        %7298 = vmatprep.subr.bf16.mxu0 0
        %7299 = vmatpush1.bf16.msra.mxu0 %v7282
        %7300 = vmatprep.subr.bf16.mxu0 0
        %7301 = vmatpush1.bf16.msra.mxu0 %v7283
        %7302 = vmatprep.subr.bf16.mxu0 0
        %7303 = vmatpush1.bf16.msra.mxu0 %v7284
        %7304 = vmatprep.subr.bf16.mxu0 0
        %7305 = vmatpush1.bf16.msra.mxu0 %v7285
        %7306 = vmatprep.subr.bf16.mxu0 0
        %7307 = vmatpush1.bf16.msra.mxu0 %v7286
        %7308 = vmatprep.subr.bf16.mxu0 0
        %7309 = vmatpush1.bf16.msra.mxu0 %v7287
        %7310 = vmatprep.subr.bf16.mxu0 0
        %7311 = vmatpush1.bf16.msra.mxu0 %v7288
        %7312 = vmatprep.subr.bf16.mxu0 0
        %7313 = vmatpush1.bf16.msra.mxu0 %v7289
        %7314 = vmatprep.subr.bf16.mxu0 0
        %7315 = vmatpush1.bf16.msra.mxu0 0
        %7316 = vmatprep.subr.bf16.mxu0 0
        %7317 = vmatpush1.bf16.msra.mxu0 0
        %7318 = vmatprep.subr.bf16.mxu0 0
        %7319 = vmatpush1.bf16.msra.mxu0 0
        %7320 = vmatprep.subr.bf16.mxu0 0
        %7321 = vmatpush1.bf16.msra.mxu0 0
        %7322 = vmatprep.subr.bf16.mxu0 0
        %7323 = vmatpush1.bf16.msra.mxu0 0
        %7324 = vmatprep.subr.bf16.mxu0 0
        %7325 = vmatpush1.bf16.msra.mxu0 0
        %7326 = vmatprep.subr.bf16.mxu0 0
        %7327 = vmatpush1.bf16.msra.mxu0 0
        %7328 = vmatprep.subr.bf16.mxu0 0
        %7329 = vmatpush1.bf16.msra.mxu0 0
        %7330 = vmatprep.mubr.bf16.mxu0 0
        %7331 = vmatmul.mubr.bf16.gmra.mrb[0].mxu0 %v7248
        %v7332 = vpop.f32.mrb[0].mxu0
        %v7333 = vadd.f32 0.0, %v7332
        %v7334 = vpop.f32.mrb[0].mxu0
        %v7335 = vpop.f32.mrb[0].mxu0
        %v7336 = vadd.f32 0.0, %v7335
        %v7337 = vpop.f32.mrb[0].mxu0
        %7338 = vdwg.mxu0
        %v7339 = vadd.f32 %v7215, %v7333
        %v7340 = vadd.f32 %v7216, %v7336
        %v7341 = vld [vmem:[#allocation3 + $0x8] sm:$0xf]
        %v7342 = vsel %vm4891, %v6593, 0
        %v7343 = vsel %vm4892, %v7341, 0
        %s7344 = scalar_lea.vmem %s59, 384
        %v7345 = vld [vmem:[%s7344] sm:$0xf]
        %v7346 = vld [vmem:[%s7344 + $0x4] sm:$0xf]
        %v7347 = vld [vmem:[%s7344 + $0x8] sm:$0xf]
        %v7348 = vld [vmem:[%s7344 + $0xc] sm:$0xf]
        %v7349 = vld [vmem:[%s7344 + $0x10] sm:$0xf]
        %v7350 = vld [vmem:[%s7344 + $0x14] sm:$0xf]
        %v7351 = vld [vmem:[%s7344 + $0x18] sm:$0xf]
        %v7352 = vld [vmem:[%s7344 + $0x1c] sm:$0xf]
        %v7353 = vld [vmem:[%s7344 + $0x20] sm:$0xf]
        %v7354 = vld [vmem:[%s7344 + $0x24] sm:$0xf]
        %v7355 = vld [vmem:[%s7344 + $0x28] sm:$0xf]
        %v7356 = vld [vmem:[%s7344 + $0x2c] sm:$0xf]
        %v7357 = vld [vmem:[%s7344 + $0x30] sm:$0xf]
        %v7358 = vld [vmem:[%s7344 + $0x34] sm:$0xf]
        %v7359 = vld [vmem:[%s7344 + $0x38] sm:$0xf]
        %v7360 = vld [vmem:[%s7344 + $0x3c] sm:$0xf]
        %v7363 = vunpack.c.l.b16 %v7342
        %v7364 = vunpack.c.l.b16 %v7343
        %v7365 = vpack.c.b16 %v7364, %v7363
        %v7383 = vunpack.c.l.b16 %v7345
        %v7384 = vunpack.c.l.b16 %v7346
        %v7385 = vunpack.c.l.b16 %v7347
        %v7386 = vunpack.c.l.b16 %v7348
        %v7387 = vunpack.c.l.b16 %v7349
        %v7388 = vunpack.c.l.b16 %v7350
        %v7389 = vunpack.c.l.b16 %v7351
        %v7390 = vunpack.c.l.b16 %v7352
        %v7391 = vunpack.c.l.b16 %v7353
        %v7392 = vunpack.c.l.b16 %v7354
        %v7393 = vunpack.c.l.b16 %v7355
        %v7394 = vunpack.c.l.b16 %v7356
        %v7395 = vunpack.c.l.b16 %v7357
        %v7396 = vunpack.c.l.b16 %v7358
        %v7397 = vunpack.c.l.b16 %v7359
        %v7398 = vunpack.c.l.b16 %v7360
        %v7399 = vpack.c.b16 %v7384, %v7383
        %v7400 = vpack.c.b16 %v7386, %v7385
        %v7401 = vpack.c.b16 %v7388, %v7387
        %v7402 = vpack.c.b16 %v7390, %v7389
        %v7403 = vpack.c.b16 %v7392, %v7391
        %v7404 = vpack.c.b16 %v7394, %v7393
        %v7405 = vpack.c.b16 %v7396, %v7395
        %v7406 = vpack.c.b16 %v7398, %v7397
        %7415 = vmatprep.subr.bf16.mxu0 0
        %7416 = vmatpush1.bf16.msra.mxu0 %v7399
        %7417 = vmatprep.subr.bf16.mxu0 0
        %7418 = vmatpush1.bf16.msra.mxu0 %v7400
        %7419 = vmatprep.subr.bf16.mxu0 0
        %7420 = vmatpush1.bf16.msra.mxu0 %v7401
        %7421 = vmatprep.subr.bf16.mxu0 0
        %7422 = vmatpush1.bf16.msra.mxu0 %v7402
        %7423 = vmatprep.subr.bf16.mxu0 0
        %7424 = vmatpush1.bf16.msra.mxu0 %v7403
        %7425 = vmatprep.subr.bf16.mxu0 0
        %7426 = vmatpush1.bf16.msra.mxu0 %v7404
        %7427 = vmatprep.subr.bf16.mxu0 0
        %7428 = vmatpush1.bf16.msra.mxu0 %v7405
        %7429 = vmatprep.subr.bf16.mxu0 0
        %7430 = vmatpush1.bf16.msra.mxu0 %v7406
        %7431 = vmatprep.subr.bf16.mxu0 0
        %7432 = vmatpush1.bf16.msra.mxu0 0
        %7433 = vmatprep.subr.bf16.mxu0 0
        %7434 = vmatpush1.bf16.msra.mxu0 0
        %7435 = vmatprep.subr.bf16.mxu0 0
        %7436 = vmatpush1.bf16.msra.mxu0 0
        %7437 = vmatprep.subr.bf16.mxu0 0
        %7438 = vmatpush1.bf16.msra.mxu0 0
        %7439 = vmatprep.subr.bf16.mxu0 0
        %7440 = vmatpush1.bf16.msra.mxu0 0
        %7441 = vmatprep.subr.bf16.mxu0 0
        %7442 = vmatpush1.bf16.msra.mxu0 0
        %7443 = vmatprep.subr.bf16.mxu0 0
        %7444 = vmatpush1.bf16.msra.mxu0 0
        %7445 = vmatprep.subr.bf16.mxu0 0
        %7446 = vmatpush1.bf16.msra.mxu0 0
        %7447 = vmatprep.mubr.bf16.mxu0 0
        %7448 = vmatmul.mubr.bf16.gmra.mrb[0].mxu0 %v7365
        %v7449 = vpop.f32.mrb[0].mxu0
        %v7450 = vadd.f32 0.0, %v7449
        %v7451 = vpop.f32.mrb[0].mxu0
        %v7452 = vpop.f32.mrb[0].mxu0
        %v7453 = vadd.f32 0.0, %v7452
        %v7454 = vpop.f32.mrb[0].mxu0
        %7455 = vdwg.mxu0
        %v7456 = vadd.f32 %v7339, %v7450
        %v7457 = vadd.f32 %v7340, %v7453
        %v7458 = vld [vmem:[#allocation3 + $0x4] sm:$0xf]
        %v7459 = vld [vmem:[#allocation3 + $0x8] sm:$0xf]
        %v7460 = vld [vmem:[#allocation3 + $0xc] sm:$0x1]
        %s7461 = scalar_lea.vmem %s59, 448
        %v7462 = vld [vmem:[%s7461] sm:$0xf]
        %v7463 = vld [vmem:[%s7461 + $0x4] sm:$0xf]
        %v7464 = vld [vmem:[%s7461 + $0x8] sm:$0xf]
        %v7465 = vld [vmem:[%s7461 + $0xc] sm:$0xf]
        %v7466 = vld [vmem:[%s7461 + $0x10] sm:$0xf]
        %v7467 = vld [vmem:[%s7461 + $0x14] sm:$0xf]
        %v7468 = vld [vmem:[%s7461 + $0x18] sm:$0xf]
        %v7469 = vld [vmem:[%s7461 + $0x1c] sm:$0xf]
        %v7470 = vld [vmem:[%s7461 + $0x20] sm:$0xf]
        %v7471 = vld [vmem:[%s7461 + $0x24] sm:$0xf]
        %v7472 = vld [vmem:[%s7461 + $0x28] sm:$0xf]
        %v7473 = vld [vmem:[%s7461 + $0x2c] sm:$0xf]
        %v7474 = vld [vmem:[%s7461 + $0x30] sm:$0xf]
        %v7475 = vld [vmem:[%s7461 + $0x34] sm:$0xf]
        %v7476 = vld [vmem:[%s7461 + $0x38] sm:$0xf]
        %v7477 = vld [vmem:[%s7461 + $0x3c] sm:$0xf]
        %v7481 = vunpack.c.l.b16 %v7458
        %v7482 = vunpack.c.l.b16 %v7459
        %v7483 = vunpack.c.l.b16 %v7460
        %v7484 = vpack.c.b16 %v7482, %v7481
        %v7485 = vpack.c.b16 %v7483, %v7483
        %v7487 = vshrl.u32 %v7484, 16
        %v7489 = vshll.u32 %v7484, 16
        %v7491 = vrot.slane %v7489, 1
        %v7492 = vor.u32 %v7487, %v7491
        %v7494 = vshll.u32 %v7485, 16
        %v7496 = vrot.slane %v7494, 1
        %v7497 = vsel %vm2739, %v7492, %v7496
        %v7515 = vunpack.c.l.b16 %v7462
        %v7516 = vunpack.c.l.b16 %v7463
        %v7517 = vunpack.c.l.b16 %v7464
        %v7518 = vunpack.c.l.b16 %v7465
        %v7519 = vunpack.c.l.b16 %v7466
        %v7520 = vunpack.c.l.b16 %v7467
        %v7521 = vunpack.c.l.b16 %v7468
        %v7522 = vunpack.c.l.b16 %v7469
        %v7523 = vunpack.c.l.b16 %v7470
        %v7524 = vunpack.c.l.b16 %v7471
        %v7525 = vunpack.c.l.b16 %v7472
        %v7526 = vunpack.c.l.b16 %v7473
        %v7527 = vunpack.c.l.b16 %v7474
        %v7528 = vunpack.c.l.b16 %v7475
        %v7529 = vunpack.c.l.b16 %v7476
        %v7530 = vunpack.c.l.b16 %v7477
        %v7531 = vpack.c.b16 %v7516, %v7515
        %v7532 = vpack.c.b16 %v7518, %v7517
        %v7533 = vpack.c.b16 %v7520, %v7519
        %v7534 = vpack.c.b16 %v7522, %v7521
        %v7535 = vpack.c.b16 %v7524, %v7523
        %v7536 = vpack.c.b16 %v7526, %v7525
        %v7537 = vpack.c.b16 %v7528, %v7527
        %v7538 = vpack.c.b16 %v7530, %v7529
        %7547 = vmatprep.subr.bf16.mxu0 0
        %7548 = vmatpush1.bf16.msra.mxu0 %v7531
        %7549 = vmatprep.subr.bf16.mxu0 0
        %7550 = vmatpush1.bf16.msra.mxu0 %v7532
        %7551 = vmatprep.subr.bf16.mxu0 0
        %7552 = vmatpush1.bf16.msra.mxu0 %v7533
        %7553 = vmatprep.subr.bf16.mxu0 0
        %7554 = vmatpush1.bf16.msra.mxu0 %v7534
        %7555 = vmatprep.subr.bf16.mxu0 0
        %7556 = vmatpush1.bf16.msra.mxu0 %v7535
        %7557 = vmatprep.subr.bf16.mxu0 0
        %7558 = vmatpush1.bf16.msra.mxu0 %v7536
        %7559 = vmatprep.subr.bf16.mxu0 0
        %7560 = vmatpush1.bf16.msra.mxu0 %v7537
        %7561 = vmatprep.subr.bf16.mxu0 0
        %7562 = vmatpush1.bf16.msra.mxu0 %v7538
        %7563 = vmatprep.subr.bf16.mxu0 0
        %7564 = vmatpush1.bf16.msra.mxu0 0
        %7565 = vmatprep.subr.bf16.mxu0 0
        %7566 = vmatpush1.bf16.msra.mxu0 0
        %7567 = vmatprep.subr.bf16.mxu0 0
        %7568 = vmatpush1.bf16.msra.mxu0 0
        %7569 = vmatprep.subr.bf16.mxu0 0
        %7570 = vmatpush1.bf16.msra.mxu0 0
        %7571 = vmatprep.subr.bf16.mxu0 0
        %7572 = vmatpush1.bf16.msra.mxu0 0
        %7573 = vmatprep.subr.bf16.mxu0 0
        %7574 = vmatpush1.bf16.msra.mxu0 0
        %7575 = vmatprep.subr.bf16.mxu0 0
        %7576 = vmatpush1.bf16.msra.mxu0 0
        %7577 = vmatprep.subr.bf16.mxu0 0
        %7578 = vmatpush1.bf16.msra.mxu0 0
        %7579 = vmatprep.mubr.bf16.mxu0 0
        %7580 = vmatmul.mubr.bf16.gmra.mrb[0].mxu0 %v7497
        %v7581 = vpop.f32.mrb[0].mxu0
        %v7582 = vadd.f32 0.0, %v7581
        %v7583 = vpop.f32.mrb[0].mxu0
        %v7584 = vpop.f32.mrb[0].mxu0
        %v7585 = vadd.f32 0.0, %v7584
        %v7586 = vpop.f32.mrb[0].mxu0
        %7587 = vdwg.mxu0
        %v7588 = vadd.f32 %v7456, %v7582
        %v7589 = vadd.f32 %v7457, %v7585
        %v7590 = vld [vmem:[#allocation3 + $0x4] sm:$0xe]
        %v7591 = vsel %vm5146, %v7590, 0
        %v7592 = vsel %vm5147, %v7459, 0
        %v7593 = vsel %vm5148, %v7460, 0
        %s7594 = scalar_lea.vmem %s59, 512
        %v7595 = vld [vmem:[%s7594] sm:$0xf]
        %v7596 = vld [vmem:[%s7594 + $0x4] sm:$0xf]
        %v7597 = vld [vmem:[%s7594 + $0x8] sm:$0xf]
        %v7598 = vld [vmem:[%s7594 + $0xc] sm:$0xf]
        %v7599 = vld [vmem:[%s7594 + $0x10] sm:$0xf]
        %v7600 = vld [vmem:[%s7594 + $0x14] sm:$0xf]
        %v7601 = vld [vmem:[%s7594 + $0x18] sm:$0xf]
        %v7602 = vld [vmem:[%s7594 + $0x1c] sm:$0xf]
        %v7603 = vld [vmem:[%s7594 + $0x20] sm:$0xf]
        %v7604 = vld [vmem:[%s7594 + $0x24] sm:$0xf]
        %v7605 = vld [vmem:[%s7594 + $0x28] sm:$0xf]
        %v7606 = vld [vmem:[%s7594 + $0x2c] sm:$0xf]
        %v7607 = vld [vmem:[%s7594 + $0x30] sm:$0xf]
        %v7608 = vld [vmem:[%s7594 + $0x34] sm:$0xf]
        %v7609 = vld [vmem:[%s7594 + $0x38] sm:$0xf]
        %v7610 = vld [vmem:[%s7594 + $0x3c] sm:$0xf]
        %v7614 = vunpack.c.l.b16 %v7591
        %v7615 = vunpack.c.l.b16 %v7592
        %v7616 = vunpack.c.l.b16 %v7593
        %v7617 = vpack.c.b16 %v7615, %v7614
        %v7618 = vpack.c.b16 %v7616, %v7616
        %v7619 = vrot.slane %v7617, 1
        %v7620 = vrot.slane %v7618, 1
        %v7621 = vsel %vm3138, %v7619, %v7620
        %v7639 = vunpack.c.l.b16 %v7595
        %v7640 = vunpack.c.l.b16 %v7596
        %v7641 = vunpack.c.l.b16 %v7597
        %v7642 = vunpack.c.l.b16 %v7598
        %v7643 = vunpack.c.l.b16 %v7599
        %v7644 = vunpack.c.l.b16 %v7600
        %v7645 = vunpack.c.l.b16 %v7601
        %v7646 = vunpack.c.l.b16 %v7602
        %v7647 = vunpack.c.l.b16 %v7603
        %v7648 = vunpack.c.l.b16 %v7604
        %v7649 = vunpack.c.l.b16 %v7605
        %v7650 = vunpack.c.l.b16 %v7606
        %v7651 = vunpack.c.l.b16 %v7607
        %v7652 = vunpack.c.l.b16 %v7608
        %v7653 = vunpack.c.l.b16 %v7609
        %v7654 = vunpack.c.l.b16 %v7610
        %v7655 = vpack.c.b16 %v7640, %v7639
        %v7656 = vpack.c.b16 %v7642, %v7641
        %v7657 = vpack.c.b16 %v7644, %v7643
        %v7658 = vpack.c.b16 %v7646, %v7645
        %v7659 = vpack.c.b16 %v7648, %v7647
        %v7660 = vpack.c.b16 %v7650, %v7649
        %v7661 = vpack.c.b16 %v7652, %v7651
        %v7662 = vpack.c.b16 %v7654, %v7653
        %7671 = vmatprep.subr.bf16.mxu0 0
        %7672 = vmatpush1.bf16.msra.mxu0 %v7655
        %7673 = vmatprep.subr.bf16.mxu0 0
        %7674 = vmatpush1.bf16.msra.mxu0 %v7656
        %7675 = vmatprep.subr.bf16.mxu0 0
        %7676 = vmatpush1.bf16.msra.mxu0 %v7657
        %7677 = vmatprep.subr.bf16.mxu0 0
        %7678 = vmatpush1.bf16.msra.mxu0 %v7658
        %7679 = vmatprep.subr.bf16.mxu0 0
        %7680 = vmatpush1.bf16.msra.mxu0 %v7659
        %7681 = vmatprep.subr.bf16.mxu0 0
        %7682 = vmatpush1.bf16.msra.mxu0 %v7660
        %7683 = vmatprep.subr.bf16.mxu0 0
        %7684 = vmatpush1.bf16.msra.mxu0 %v7661
        %7685 = vmatprep.subr.bf16.mxu0 0
        %7686 = vmatpush1.bf16.msra.mxu0 %v7662
        %7687 = vmatprep.subr.bf16.mxu0 0
        %7688 = vmatpush1.bf16.msra.mxu0 0
        %7689 = vmatprep.subr.bf16.mxu0 0
        %7690 = vmatpush1.bf16.msra.mxu0 0
        %7691 = vmatprep.subr.bf16.mxu0 0
        %7692 = vmatpush1.bf16.msra.mxu0 0
        %7693 = vmatprep.subr.bf16.mxu0 0
        %7694 = vmatpush1.bf16.msra.mxu0 0
        %7695 = vmatprep.subr.bf16.mxu0 0
        %7696 = vmatpush1.bf16.msra.mxu0 0
        %7697 = vmatprep.subr.bf16.mxu0 0
        %7698 = vmatpush1.bf16.msra.mxu0 0
        %7699 = vmatprep.subr.bf16.mxu0 0
        %7700 = vmatpush1.bf16.msra.mxu0 0
        %7701 = vmatprep.subr.bf16.mxu0 0
        %7702 = vmatpush1.bf16.msra.mxu0 0
        %7703 = vmatprep.mubr.bf16.mxu0 0
        %7704 = vmatmul.mubr.bf16.gmra.mrb[0].mxu0 %v7621
        %v7705 = vpop.f32.mrb[0].mxu0
        %v7706 = vadd.f32 0.0, %v7705
        %v7707 = vpop.f32.mrb[0].mxu0
        %v7708 = vpop.f32.mrb[0].mxu0
        %v7709 = vadd.f32 0.0, %v7708
        %v7710 = vpop.f32.mrb[0].mxu0
        %7711 = vdwg.mxu0
        %v7712 = vadd.f32 %v7588, %v7706
        %v7713 = vadd.f32 %v7589, %v7709
        %v7714 = vld [vmem:[#allocation40] sm:$0x1]
        %v7716 = vlaneseq
        %v7717 = vshrl.u32 %v7716, 7
        %v7718 = vsub.s32 0, %v7717
        %v7719 = vrot.slane %v7714, %v7718
        %v7721 = vmul.f32 %v7712, %v7719
        %v7722 = vmul.f32 %v7713, %v7719
        %v7723 = vld [vmem:[#allocation41] sm:$0x1]
        %v7725 = vlaneseq
        %v7726 = vshrl.u32 %v7725, 7
        %v7727 = vsub.s32 0, %v7726
        %v7728 = vrot.slane %v7723, %v7727
        %v7730 = vadd.f32 %v7721, %v7728
        %v7731 = vadd.f32 %v7722, %v7728
        %v7732 = vmax.f32 %v7730, 0.0
        %v7733 = vmax.f32 %v7731, 0.0
        %v7734 = vpack.c.bf16 %v7733, %v7732
        %v7735 = vld [vmem:[%s65] sm:$0xff]
        %v7736 = vld [vmem:[%s65 + $0x8] sm:$0xff]
        %v7737 = vld [vmem:[%s65 + $0x10] sm:$0xff]
        %v7738 = vld [vmem:[%s65 + $0x18] sm:$0xff]
        %v7739 = vld [vmem:[%s65 + $0x20] sm:$0xff]
        %v7740 = vld [vmem:[%s65 + $0x28] sm:$0xff]
        %v7741 = vld [vmem:[%s65 + $0x30] sm:$0xff]
        %v7742 = vld [vmem:[%s65 + $0x38] sm:$0xff]
        %v7743 = vld [vmem:[%s65 + $0x40] sm:$0xff]
        %v7744 = vld [vmem:[%s65 + $0x48] sm:$0xff]
        %v7745 = vld [vmem:[%s65 + $0x50] sm:$0xff]
        %v7746 = vld [vmem:[%s65 + $0x58] sm:$0xff]
        %v7747 = vld [vmem:[%s65 + $0x60] sm:$0xff]
        %v7748 = vld [vmem:[%s65 + $0x68] sm:$0xff]
        %v7749 = vld [vmem:[%s65 + $0x70] sm:$0xff]
        %v7750 = vld [vmem:[%s65 + $0x78] sm:$0xff]
        %v7767 = vunpack.c.l.b16 %v7735
        %v7768 = vunpack.c.h.b16 %v7735
        %v7769 = vunpack.c.l.b16 %v7736
        %v7770 = vunpack.c.h.b16 %v7736
        %v7771 = vunpack.c.l.b16 %v7737
        %v7772 = vunpack.c.h.b16 %v7737
        %v7773 = vunpack.c.l.b16 %v7738
        %v7774 = vunpack.c.h.b16 %v7738
        %v7775 = vunpack.c.l.b16 %v7739
        %v7776 = vunpack.c.h.b16 %v7739
        %v7777 = vunpack.c.l.b16 %v7740
        %v7778 = vunpack.c.h.b16 %v7740
        %v7779 = vunpack.c.l.b16 %v7741
        %v7780 = vunpack.c.h.b16 %v7741
        %v7781 = vunpack.c.l.b16 %v7742
        %v7782 = vunpack.c.h.b16 %v7742
        %v7783 = vunpack.c.l.b16 %v7743
        %v7784 = vunpack.c.h.b16 %v7743
        %v7785 = vunpack.c.l.b16 %v7744
        %v7786 = vunpack.c.h.b16 %v7744
        %v7787 = vunpack.c.l.b16 %v7745
        %v7788 = vunpack.c.h.b16 %v7745
        %v7789 = vunpack.c.l.b16 %v7746
        %v7790 = vunpack.c.h.b16 %v7746
        %v7791 = vunpack.c.l.b16 %v7747
        %v7792 = vunpack.c.h.b16 %v7747
        %v7793 = vunpack.c.l.b16 %v7748
        %v7794 = vunpack.c.h.b16 %v7748
        %v7795 = vunpack.c.l.b16 %v7749
        %v7796 = vunpack.c.h.b16 %v7749
        %v7797 = vunpack.c.l.b16 %v7750
        %v7798 = vunpack.c.h.b16 %v7750
        %v7799 = vpack.c.b16 %v7769, %v7767
        %v7800 = vpack.c.b16 %v7770, %v7768
        %v7801 = vpack.c.b16 %v7773, %v7771
        %v7802 = vpack.c.b16 %v7774, %v7772
        %v7803 = vpack.c.b16 %v7777, %v7775
        %v7804 = vpack.c.b16 %v7778, %v7776
        %v7805 = vpack.c.b16 %v7781, %v7779
        %v7806 = vpack.c.b16 %v7782, %v7780
        %v7807 = vpack.c.b16 %v7785, %v7783
        %v7808 = vpack.c.b16 %v7786, %v7784
        %v7809 = vpack.c.b16 %v7789, %v7787
        %v7810 = vpack.c.b16 %v7790, %v7788
        %v7811 = vpack.c.b16 %v7793, %v7791
        %v7812 = vpack.c.b16 %v7794, %v7792
        %v7813 = vpack.c.b16 %v7797, %v7795
        %v7814 = vpack.c.b16 %v7798, %v7796
        %7831 = vmatprep.subr.bf16.mxu0 %v7800
        %7832 = vmatpush1.bf16.msra.mxu0 %v7799
        %7833 = vmatprep.subr.bf16.mxu0 %v7802
        %7834 = vmatpush1.bf16.msra.mxu0 %v7801
        %7835 = vmatprep.subr.bf16.mxu0 %v7804
        %7836 = vmatpush1.bf16.msra.mxu0 %v7803
        %7837 = vmatprep.subr.bf16.mxu0 %v7806
        %7838 = vmatpush1.bf16.msra.mxu0 %v7805
        %7839 = vmatprep.subr.bf16.mxu0 %v7808
        %7840 = vmatpush1.bf16.msra.mxu0 %v7807
        %7841 = vmatprep.subr.bf16.mxu0 %v7810
        %7842 = vmatpush1.bf16.msra.mxu0 %v7809
        %7843 = vmatprep.subr.bf16.mxu0 %v7812
        %7844 = vmatpush1.bf16.msra.mxu0 %v7811
        %7845 = vmatprep.subr.bf16.mxu0 %v7814
        %7846 = vmatpush1.bf16.msra.mxu0 %v7813
        %7847 = vmatprep.subr.bf16.mxu0 0
        %7848 = vmatpush1.bf16.msra.mxu0 0
        %7849 = vmatprep.subr.bf16.mxu0 0
        %7850 = vmatpush1.bf16.msra.mxu0 0
        %7851 = vmatprep.subr.bf16.mxu0 0
        %7852 = vmatpush1.bf16.msra.mxu0 0
        %7853 = vmatprep.subr.bf16.mxu0 0
        %7854 = vmatpush1.bf16.msra.mxu0 0
        %7855 = vmatprep.subr.bf16.mxu0 0
        %7856 = vmatpush1.bf16.msra.mxu0 0
        %7857 = vmatprep.subr.bf16.mxu0 0
        %7858 = vmatpush1.bf16.msra.mxu0 0
        %7859 = vmatprep.subr.bf16.mxu0 0
        %7860 = vmatpush1.bf16.msra.mxu0 0
        %7861 = vmatprep.subr.bf16.mxu0 0
        %7862 = vmatpush1.bf16.msra.mxu0 0
        %7863 = vmatprep.mubr.bf16.mxu0 0
        %7864 = vmatmul.mubr.bf16.gmra.mrb[0].mxu0 %v7734
        %v7865 = vpop.f32.mrb[0].mxu0
        %v7866 = vadd.f32 0.0, %v7865
        %v7867 = vpop.f32.mrb[0].mxu0
        %v7868 = vadd.f32 0.0, %v7867
        %v7869 = vpop.f32.mrb[0].mxu0
        %v7870 = vadd.f32 0.0, %v7869
        %v7871 = vpop.f32.mrb[0].mxu0
        %v7872 = vadd.f32 0.0, %v7871
        %7873 = vdwg.mxu0
        %v7874 = vld [vmem:[%s67] sm:$0x3]
        %v7876 = vlaneseq
        %v7877 = vshrl.u32 %v7876, 7
        %v7878 = vsub.s32 0, %v7877
        %v7879 = vrot.slane %v7874, %v7878
        %v7880 = vlaneseq
        %v7881 = vshrl.u32 %v7880, 7
        %v7882 = vsub.s32 1, %v7881
        %v7883 = vrot.slane %v7874, %v7882
        %v7886 = vmul.f32 %v7866, %v7879
        %v7887 = vmul.f32 %v7868, %v7883
        %v7888 = vmul.f32 %v7870, %v7879
        %v7889 = vmul.f32 %v7872, %v7883
        %v7890 = vld [vmem:[%s69] sm:$0x3]
        %v7892 = vlaneseq
        %v7893 = vshrl.u32 %v7892, 7
        %v7894 = vsub.s32 0, %v7893
        %v7895 = vrot.slane %v7890, %v7894
        %v7896 = vlaneseq
        %v7897 = vshrl.u32 %v7896, 7
        %v7898 = vsub.s32 1, %v7897
        %v7899 = vrot.slane %v7890, %v7898
        %v7902 = vadd.f32 %v7886, %v7895
        %v7903 = vadd.f32 %v7887, %v7899
        %v7904 = vadd.f32 %v7888, %v7895
        %v7905 = vadd.f32 %v7889, %v7899
        %v7906 = vmax.f32 %v7902, 0.0
        %v7907 = vmax.f32 %v7903, 0.0
        %v7908 = vmax.f32 %v7904, 0.0
        %v7909 = vmax.f32 %v7905, 0.0
        %v7910 = vld [vmem:[#allocation5] sm:$0xff]
        %v7911 = vld [vmem:[#allocation5 + $0x8] sm:$0xff]
        %v7912 = vld [vmem:[#allocation5 + $0x10] sm:$0xff]
        %v7913 = vld [vmem:[#allocation5 + $0x18] sm:$0xff]
        %v7914 = vadd.f32 %v7906, %v7910
        %v7915 = vadd.f32 %v7907, %v7911
        %v7916 = vadd.f32 %v7908, %v7912
        %v7917 = vadd.f32 %v7909, %v7913
        %7918 = vst [vmem:[%s1389] sm:$0xff] %v7914
        %7919 = vst [vmem:[%s1389 + $0x8] sm:$0xff] %v7915
        %7920 = vst [vmem:[%s1389 + $0x10] sm:$0xff] %v7916
        %7921 = vst [vmem:[%s1389 + $0x18] sm:$0xff] %v7917
        %s7922 = smul.u32 2, %s95
        %p7923 = scmp.lt.s32.totalorder %s7922, 3
        %s7924 = scalar_select %p7923, %s7922, 3
        %s7925 = smul.addr %s7924, 2
        %s7926 = smul.addr %s7925, 8
        %s7927 = scalar_lea.vmem %s71, %s7926
        // Predicated region
        $region257: #{front_module.1} parent=159 // pred_check
          %p7928 = pneg %p853
        $region258: #{front_module.1} parent=159 // pred_check_branch
          %7930 = sbr.rel (%p7928) target = $region260
        $region259: #{front_module.1} parent=159 // pred_region
          %s7931 = smul.u32 2, %s95
        $region260: #{front_module.1} parent=159 // pred_fallthru
          _
      $region160: #{front_module.1} parent=5 // pred_fallthru
        _
      %p7932 = scmp.le.s32.totalorder 2, %s90
      // Predicated region
      $region261: #{front_module.1} parent=5 // pred_check
        %p7933 = pneg %p7932
      $region262: #{front_module.1} parent=5 // pred_check_branch
        %7935 = sbr.rel (%p7933) target = $region264
      $region263: #{front_module.1} parent=5 // pred_region
        %s7936 = ssub.s32 %s90, 2
        // Predicated region
        $region265: #{front_module.1} parent=263 // pred_check
          %p7937 = pneg %p859
        $region266: #{front_module.1} parent=263 // pred_check_branch
          %7939 = sbr.rel (%p7937) target = $region268
        $region267: #{front_module.1} parent=263 // pred_region
          %s7940 = smul.u32 2, %s96
          %p7941 = scmp.lt.s32.totalorder %s7940, 3
          %s7942 = scalar_select %p7941, %s7940, 3
          %s7943 = smul.addr %s7942, 2
          %s7944 = smul.addr %s7943, 8
          %s7945 = scalar_lea.vmem %s71, %s7944
        $region268: #{front_module.1} parent=263 // pred_fallthru
          _
      $region264: #{front_module.1} parent=5 // pred_fallthru
        _
    $region6: #{front_module.1} parent=1 // loop_footer
      %s94 = sadd.s32 1, %s90
    $region7: #{front_module.1} parent=1 // loop_footer_branch
      %89 = sbr.rel target = $region3
    $region8: #{front_module.1} parent=1 // loop_exit
      _
    %7946 = vsyncpa [#allocation7], 1
    %s7947 = scalar_lea.sflag [#allocation7], 1
    %7948 = vsyncpa %s7947, 1
    %7949 = vsyncpa [#allocation9], 1
    %7950 = vsyncpa [#allocation12], 1
    %7951 = vsyncpa [#allocation15], 1
    %7952 = vsyncpa [#allocation18], 1
    %7953 = vsyncpa [#allocation21], 1
    %7954 = vsyncpa [#allocation24], 1
    %7955 = vsyncpa [#allocation27], 1
    %7956 = vsyncpa [#allocation30], 1
    %7957 = vsyncpa [#allocation33], 1
    %7958 = vsyncpa [#allocation36], 1
    %7959 = vsyncpa [#allocation39], 1
    %7960 = vsyncpa [#allocation42], 1

</llo_original>
